<compile_context>
chip_gen: v5e
topology: v5e:2x2
jax: 0.10.0
libtpu: 0.0.40
codegen_flags: <defaults>
</compile_context>

<pallas_src>
import jax
import jax.numpy as jnp
from jax.experimental import pallas as pl
from jax.experimental.pallas import tpu as pltpu

EMB = 1280       # self.embedding_size
PROJ = 384       # proj_mlp hidden dim
SUBPROJ = 128    # sub_proj_mlp hidden dim
HID = 512        # hidden / rnn size
ACT_DIM = 49     # actor_temporal output (policy_action_dim)
ACT_PAD = 128    # lane-dense padded actor-head width
NUM_GATES = 4    # LSTM gates i, f, g, o
NEG_INF = -1e30


def actor_act_kernel(fc_ref, fp_ref, h_ref, c_ref,
                     wps_ref, sps_ref, bps_ref,     # fused proj  int8 (1280,512), scale/bias (1,512)
                     wl_hbm, sl_ref, bl_ref,        # fused LSTM  int8 (4,1024,512) in HBM, scale/bias (1,2048)
                     wa_ref, sa_ref, ba_ref,        # actor head  int8 (512,128), scale/bias (1,128)
                     state_ref, hn_ref, cn_ref, probent_ref, logp_ref,
                     wl_buf, wl_sem):
    # ---- stream the 4 LSTM gate-column chunks HBM -> VMEM immediately -------
    copies = []
    for k in range(NUM_GATES):
        cp = pltpu.make_async_copy(wl_hbm.at[k], wl_buf.at[k], wl_sem.at[k])
        cp.start()
        copies.append(cp)

    # ---- fused proj_mlp / sub_proj_mlp (runs under the LSTM-weight DMAs) ----
    x2 = jnp.concatenate([fc_ref[...], fp_ref[...]], axis=0).astype(jnp.bfloat16)  # (2,1280)
    proj = jnp.dot(x2, wps_ref[...].astype(jnp.bfloat16),
                   preferred_element_type=jnp.float32)                             # (2,512) f32
    proj = jnp.maximum(proj * sps_ref[...] + bps_ref[...], 0.0)
    cur = proj[0:1, 0:PROJ]                       # fc @ Wp  -> (1,384)
    pre = proj[1:2, PROJ:PROJ + SUBPROJ]          # fp @ Ws  -> (1,128)
    state = jnp.concatenate([cur, pre], axis=1)   # state_obs_s (1,512)
    state_ref[...] = state

    # ---- fused LSTMCell, one (1024,512) gate chunk at a time (i, f, g, o) ---
    xh = jnp.concatenate([state, h_ref[...]], axis=1).astype(jnp.bfloat16)  # (1,1024)
    sl = sl_ref[...]
    bl = bl_ref[...]
    acts = []
    for k in range(NUM_GATES):
        copies[k].wait()
        wk = wl_buf[k].astype(jnp.bfloat16)       # exact int8 -> bf16 cast (VPU)
        gk = jnp.dot(xh, wk, preferred_element_type=jnp.float32)            # (1,512)
        gk = gk * sl[:, k * HID:(k + 1) * HID] + bl[:, k * HID:(k + 1) * HID]
        acts.append(jnp.tanh(gk) if k == 2 else jax.nn.sigmoid(gk))
    i_g, f_g, g_g, o_g = acts

    c_next = f_g * c_ref[...] + i_g * g_g
    h_next = o_g * jnp.tanh(c_next)
    hn_ref[...] = h_next
    cn_ref[...] = c_next

    # ---- actor_temporal: Linear(512, 49 padded to 128) + softmax + entropy --
    logits = (jnp.dot(h_next.astype(jnp.bfloat16), wa_ref[...].astype(jnp.bfloat16),
                      preferred_element_type=jnp.float32)
              * sa_ref[...] + ba_ref[...])                                   # (1,128)
    lane = jax.lax.broadcasted_iota(jnp.int32, (1, ACT_PAD), 1)
    valid = lane < ACT_DIM
    logits = jnp.where(valid, logits, NEG_INF)
    m = jnp.max(logits, axis=-1, keepdims=True)
    e = jnp.exp(logits - m)
    s = jnp.sum(e, axis=-1, keepdims=True)
    p = e / s                                    # exact probs (padded lanes = 0)
    logp = logits - m - jnp.log(s)               # exact log-probs (finite on valid lanes)
    ent = -jnp.sum(jnp.where(valid, p * logp, 0.0), axis=-1, keepdims=True)  # (1,1)

    out = jnp.where(valid, p, 0.0)
    out = jnp.where(lane == ACT_DIM, ent, out)   # lanes [0:49]=prob, lane 49=entropy
    probent_ref[...] = out
    logp_ref[...] = jnp.where(valid, logp, 0.0)  # lanes [0:49]=log-probs


# ---------------- parameter preparation (done once, reused per call) ---------

def _quantize_cols(w):
    """Per-output-column symmetric int8 quantization."""
    absmax = jnp.max(jnp.abs(w), axis=0, keepdims=True)
    scale = jnp.maximum(absmax, 1e-8) / 127.0
    q = jnp.clip(jnp.round(w / scale), -127, 127).astype(jnp.int8)
    return q, scale.astype(jnp.float32)


def prepare_params(params):
    """Fuse proj/sub_proj and LSTM ih/hh, pad actor head, quantize to int8."""
    (wp, bp, ws, bs, wih, bih, whh, bhh, wa, ba) = params

    wps = jnp.concatenate([wp, ws], axis=1)            # (1280, 512) = [Wp | Ws]
    bps = jnp.concatenate([bp, bs], axis=1)            # (1, 512)
    wps_q, sps = _quantize_cols(wps)

    wl = jnp.concatenate([wih, whh], axis=0)           # (1024, 2048), gate order i,f,g,o
    bl = bih + bhh                                     # (1, 2048)
    wl_q, sl = _quantize_cols(wl)
    # -> (4, 1024, 512): contiguous per-gate column chunks for streaming DMA
    wl_q = jnp.transpose(wl_q.reshape(2 * HID, NUM_GATES, HID), (1, 0, 2))

    wa_pad = jnp.zeros((HID, ACT_PAD), jnp.float32).at[:, :ACT_DIM].set(wa)
    ba_pad = jnp.zeros((1, ACT_PAD), jnp.float32).at[:, :ACT_DIM].set(ba)
    wa_q, sa = _quantize_cols(wa_pad)

    return (wps_q, sps, bps, wl_q, sl, bl, wa_q, sa, ba_pad)


# ---------------- wrapper -----------------------------------------------------

def actor_act(feature_cur, feature_pre, h, c, prepared):
    (wps, sps, bps, wl, sl, bl, wa, sa, ba) = prepared

    flops = 2 * (2 * EMB * HID + (2 * HID) * (4 * HID) + HID * ACT_PAD)
    weight_bytes = EMB * HID + (2 * HID) * (4 * HID) + HID * ACT_PAD       # int8
    bytes_accessed = (weight_bytes
                      + 4 * (2 * HID + 2 * 4 * HID + 2 * ACT_PAD)          # scales + biases
                      + 4 * (2 * EMB + 2 * HID)                            # activations in
                      + 4 * (3 * HID + 2 * ACT_PAD))                       # outputs

    vmem = pl.BlockSpec(memory_space=pltpu.MemorySpace.VMEM)

    state, hn, cn, probent, logp = pl.pallas_call(
        actor_act_kernel,
        out_shape=(
            jax.ShapeDtypeStruct((1, HID), jnp.float32),      # state_obs_s
            jax.ShapeDtypeStruct((1, HID), jnp.float32),      # h_next
            jax.ShapeDtypeStruct((1, HID), jnp.float32),      # c_next
            jax.ShapeDtypeStruct((1, ACT_PAD), jnp.float32),  # [prob_s | entropy | 0...]
            jax.ShapeDtypeStruct((1, ACT_PAD), jnp.float32),  # [log-probs | 0...]
        ),
        in_specs=[vmem, vmem, vmem, vmem,                     # fc, fp, h, c
                  vmem, vmem, vmem,                           # wps, sps, bps
                  pl.BlockSpec(memory_space=pl.ANY),          # wl stays in HBM (streamed)
                  vmem, vmem,                                 # sl, bl
                  vmem, vmem, vmem],                          # wa, sa, ba
        out_specs=(vmem, vmem, vmem, vmem, vmem),
        scratch_shapes=[pltpu.VMEM((NUM_GATES, 2 * HID, HID), jnp.int8),   # 2 MB chunk buffers
                        pltpu.SemaphoreType.DMA((NUM_GATES,))],
        compiler_params=pltpu.CompilerParams(
            vmem_limit_bytes=32 * 1024 * 1024),               # fits v7x 64 MiB physical VMEM
        cost_estimate=pl.CostEstimate(
            flops=flops,
            transcendentals=6 * HID + 2 * ACT_PAD,
            bytes_accessed=bytes_accessed),
    )(feature_cur, feature_pre, h, c, wps, sps, bps, wl, sl, bl, wa, sa, ba)

    prob = probent[:, :ACT_DIM]
    entropy = probent[:, ACT_DIM:ACT_DIM + 1]
    logp = logp[:, :ACT_DIM]
    return state, hn, cn, prob, entropy, logp


# ---------------- parameter init (deterministic, PyTorch-style uniform) ------

def _linear_params(key, fan_in, fan_out):
    kw, kb = jax.random.split(key)
    bound = 1.0 / jnp.sqrt(float(fan_in))
    w = jax.random.uniform(kw, (fan_in, fan_out), jnp.float32, -bound, bound)
    b = jax.random.uniform(kb, (1, fan_out), jnp.float32, -bound, bound)
    return w, b


def init_params(key):
    keys = jax.random.split(key, 5)
    wp, bp = _linear_params(keys[0], EMB, PROJ)        # proj_mlp
    ws, bs = _linear_params(keys[1], EMB, SUBPROJ)     # sub_proj_mlp
    wih, bih = _linear_params(keys[2], HID, 4 * HID)   # LSTMCell input->gates
    whh, bhh = _linear_params(keys[3], HID, 4 * HID)   # LSTMCell hidden->gates
    wa, ba = _linear_params(keys[4], HID, ACT_DIM)     # actor_temporal
    return (wp, bp, ws, bs, wih, bih, whh, bhh, wa, ba)


# ---------------- pure-JAX reference (same int8-quantized weights) -----------

def reference_act(feature_cur, feature_pre, h, c, prepared):
    (wps, sps, bps, wl, sl, bl, wa, sa, ba) = prepared
    f32 = jnp.float32
    x2 = jnp.concatenate([feature_cur, feature_pre], axis=0).astype(jnp.bfloat16)
    proj = jnp.maximum(
        jnp.dot(x2, wps.astype(jnp.bfloat16), preferred_element_type=f32) * sps + bps, 0.0)
    state = jnp.concatenate([proj[0:1, :PROJ], proj[1:2, PROJ:PROJ + SUBPROJ]], axis=1)
    xh = jnp.concatenate([state, h], axis=1).astype(jnp.bfloat16)
    wl2 = jnp.transpose(wl, (1, 0, 2)).reshape(2 * HID, 4 * HID)
    gates = jnp.dot(xh, wl2.astype(jnp.bfloat16), preferred_element_type=f32) * sl + bl
    i = jax.nn.sigmoid(gates[:, 0 * HID:1 * HID])
    f = jax.nn.sigmoid(gates[:, 1 * HID:2 * HID])
    g = jnp.tanh(gates[:, 2 * HID:3 * HID])
    o = jax.nn.sigmoid(gates[:, 3 * HID:4 * HID])
    c_next = f * c + i * g
    h_next = o * jnp.tanh(c_next)
    logits = (jnp.dot(h_next.astype(jnp.bfloat16), wa.astype(jnp.bfloat16),
                      preferred_element_type=f32) * sa + ba)[:, :ACT_DIM]
    p = jax.nn.softmax(logits, axis=-1)
    logp = jax.nn.log_softmax(logits, axis=-1)
    ent = -jnp.sum(p * logp, axis=-1, keepdims=True)
    return state, h_next, c_next, p, ent, logp


if __name__ == "__main__":
    key = jax.random.PRNGKey(0)
    k_in, k_param, k_sample = jax.random.split(key, 3)
    k1, k2, k3, k4 = jax.random.split(k_in, 4)

    # batch = 1 (the module's act() operates on a single step)
    feature_cur = jax.random.normal(k1, (1, EMB), jnp.float32)
    feature_pre = jax.random.normal(k2, (1, EMB), jnp.float32)
    h0 = jax.random.normal(k3, (1, HID), jnp.float32) * 0.1
    c0 = jax.random.normal(k4, (1, HID), jnp.float32) * 0.1

    params = init_params(k_param)
    prepared = prepare_params(params)

    outs = jax.block_until_ready(
        actor_act(feature_cur, feature_pre, h0, c0, prepared))
    state, h_next, c_next, prob_s, entropy, logp_s = outs

    # verify against pure-JAX reference using the same int8-quantized weights
    ref = reference_act(feature_cur, feature_pre, h0, c0, prepared)
    tols = [(5e-4, 5e-4), (5e-4, 5e-4), (5e-4, 5e-4),   # state, h, c
            (2e-3, 2e-3),                               # prob
            (3e-2, 1e-2),                               # entropy
            (5e-3, 5e-3)]                               # log-probs
    for (got, want), (atol, rtol) in zip(zip(outs, ref), tols):
        assert jnp.all(jnp.isfinite(got)), got
        assert jnp.allclose(got, want, atol=atol, rtol=rtol), (got, want)
    assert jnp.allclose(jnp.sum(prob_s), 1.0, atol=1e-3)

    # Categorical sampling / log_prob (stochastic glue, done in plain JAX).
    # Sample from the exact in-kernel log-probs (no log(0) hazard).
    action_s = jax.random.categorical(k_sample, logp_s[0])
    action_s_logprob = logp_s[0, action_s]
    jax.block_until_ready((action_s, action_s_logprob))

    print("KERNEL_OK")
</pallas_src>

<mosaic_0001>
module attributes {stable_mosaic.version = 11 : i64} {
  func.func @actor_act_kernel(%arg0: memref<1x1280xf32, #tpu.memory_space<vmem>>, %arg1: memref<1x1280xf32, #tpu.memory_space<vmem>>, %arg2: memref<1x512xf32, #tpu.memory_space<vmem>>, %arg3: memref<1x512xf32, #tpu.memory_space<vmem>>, %arg4: memref<1280x512xi8, #tpu.memory_space<vmem>>, %arg5: memref<1x512xf32, #tpu.memory_space<vmem>>, %arg6: memref<1x512xf32, #tpu.memory_space<vmem>>, %arg7: memref<4x1024x512xi8, #tpu.memory_space<any>>, %arg8: memref<1x2048xf32, #tpu.memory_space<vmem>>, %arg9: memref<1x2048xf32, #tpu.memory_space<vmem>>, %arg10: memref<512x128xi8, #tpu.memory_space<vmem>>, %arg11: memref<1x128xf32, #tpu.memory_space<vmem>>, %arg12: memref<1x128xf32, #tpu.memory_space<vmem>>, %arg13: memref<1x512xf32, #tpu.memory_space<vmem>>, %arg14: memref<1x512xf32, #tpu.memory_space<vmem>>, %arg15: memref<1x512xf32, #tpu.memory_space<vmem>>, %arg16: memref<1x128xf32, #tpu.memory_space<vmem>>, %arg17: memref<1x128xf32, #tpu.memory_space<vmem>>, %arg18: memref<4x1024x512xi8, #tpu.memory_space<vmem>>, %arg19: memref<4x!tpu.dma_semaphore, #tpu.memory_space<semaphore_mem>>) attributes {dimension_semantics = [], scalar_prefetch = 0 : i64, scratch_operands = 2 : i64, tpu.core_type = #tpu.core_type<tc>} {
    %c0_i32 = arith.constant 0 : i32
    %c0_i32_0 = arith.constant 0 : i32
    %c0_i32_1 = arith.constant 0 : i32
    %c0_i32_2 = arith.constant 0 : i32
    %c0_i32_3 = arith.constant 0 : i32
    %0 = tpu.memref_slice %arg7[%c0_i32, %c0_i32_2, %c0_i32_3] : memref<4x1024x512xi8, #tpu.memory_space<any>> -> memref<1x1024x512xi8, #tpu.memory_space<any>>
    %1 = tpu.memref_squeeze %0 : memref<1x1024x512xi8, #tpu.memory_space<any>> -> memref<1024x512xi8, #tpu.memory_space<any>>
    %c0_i32_4 = arith.constant 0 : i32
    %c0_i32_5 = arith.constant 0 : i32
    %2 = tpu.memref_slice %arg18[%c0_i32_0, %c0_i32_4, %c0_i32_5] : memref<4x1024x512xi8, #tpu.memory_space<vmem>> -> memref<1x1024x512xi8, #tpu.memory_space<vmem>>
    %3 = tpu.memref_squeeze %2 : memref<1x1024x512xi8, #tpu.memory_space<vmem>> -> memref<1024x512xi8, #tpu.memory_space<vmem>>
    %4 = tpu.memref_slice %arg19[%c0_i32_1] : memref<4x!tpu.dma_semaphore, #tpu.memory_space<semaphore_mem>> -> memref<1x!tpu.dma_semaphore, #tpu.memory_space<semaphore_mem>>
    %5 = tpu.memref_squeeze %4 : memref<1x!tpu.dma_semaphore, #tpu.memory_space<semaphore_mem>> -> memref<!tpu.dma_semaphore, #tpu.memory_space<semaphore_mem>>
    tpu.enqueue_dma source(%1 : memref<1024x512xi8, #tpu.memory_space<any>>) target(%3 : memref<1024x512xi8, #tpu.memory_space<vmem>>) target_semaphore(%5 : memref<!tpu.dma_semaphore, #tpu.memory_space<semaphore_mem>>)
    %c1_i32 = arith.constant 1 : i32
    %c1_i32_6 = arith.constant 1 : i32
    %c1_i32_7 = arith.constant 1 : i32
    %c0_i32_8 = arith.constant 0 : i32
    %c0_i32_9 = arith.constant 0 : i32
    %6 = tpu.memref_slice %arg7[%c1_i32, %c0_i32_8, %c0_i32_9] : memref<4x1024x512xi8, #tpu.memory_space<any>> -> memref<1x1024x512xi8, #tpu.memory_space<any>>
    %7 = tpu.memref_squeeze %6 : memref<1x1024x512xi8, #tpu.memory_space<any>> -> memref<1024x512xi8, #tpu.memory_space<any>>
    %c0_i32_10 = arith.constant 0 : i32
    %c0_i32_11 = arith.constant 0 : i32
    %8 = tpu.memref_slice %arg18[%c1_i32_6, %c0_i32_10, %c0_i32_11] : memref<4x1024x512xi8, #tpu.memory_space<vmem>> -> memref<1x1024x512xi8, #tpu.memory_space<vmem>>
    %9 = tpu.memref_squeeze %8 : memref<1x1024x512xi8, #tpu.memory_space<vmem>> -> memref<1024x512xi8, #tpu.memory_space<vmem>>
    %10 = tpu.memref_slice %arg19[%c1_i32_7] : memref<4x!tpu.dma_semaphore, #tpu.memory_space<semaphore_mem>> -> memref<1x!tpu.dma_semaphore, #tpu.memory_space<semaphore_mem>>
    %11 = tpu.memref_squeeze %10 : memref<1x!tpu.dma_semaphore, #tpu.memory_space<semaphore_mem>> -> memref<!tpu.dma_semaphore, #tpu.memory_space<semaphore_mem>>
    tpu.enqueue_dma source(%7 : memref<1024x512xi8, #tpu.memory_space<any>>) target(%9 : memref<1024x512xi8, #tpu.memory_space<vmem>>) target_semaphore(%11 : memref<!tpu.dma_semaphore, #tpu.memory_space<semaphore_mem>>)
    %c2_i32 = arith.constant 2 : i32
    %c2_i32_12 = arith.constant 2 : i32
    %c2_i32_13 = arith.constant 2 : i32
    %c0_i32_14 = arith.constant 0 : i32
    %c0_i32_15 = arith.constant 0 : i32
    %12 = tpu.memref_slice %arg7[%c2_i32, %c0_i32_14, %c0_i32_15] : memref<4x1024x512xi8, #tpu.memory_space<any>> -> memref<1x1024x512xi8, #tpu.memory_space<any>>
    %13 = tpu.memref_squeeze %12 : memref<1x1024x512xi8, #tpu.memory_space<any>> -> memref<1024x512xi8, #tpu.memory_space<any>>
    %c0_i32_16 = arith.constant 0 : i32
    %c0_i32_17 = arith.constant 0 : i32
    %14 = tpu.memref_slice %arg18[%c2_i32_12, %c0_i32_16, %c0_i32_17] : memref<4x1024x512xi8, #tpu.memory_space<vmem>> -> memref<1x1024x512xi8, #tpu.memory_space<vmem>>
    %15 = tpu.memref_squeeze %14 : memref<1x1024x512xi8, #tpu.memory_space<vmem>> -> memref<1024x512xi8, #tpu.memory_space<vmem>>
    %16 = tpu.memref_slice %arg19[%c2_i32_13] : memref<4x!tpu.dma_semaphore, #tpu.memory_space<semaphore_mem>> -> memref<1x!tpu.dma_semaphore, #tpu.memory_space<semaphore_mem>>
    %17 = tpu.memref_squeeze %16 : memref<1x!tpu.dma_semaphore, #tpu.memory_space<semaphore_mem>> -> memref<!tpu.dma_semaphore, #tpu.memory_space<semaphore_mem>>
    tpu.enqueue_dma source(%13 : memref<1024x512xi8, #tpu.memory_space<any>>) target(%15 : memref<1024x512xi8, #tpu.memory_space<vmem>>) target_semaphore(%17 : memref<!tpu.dma_semaphore, #tpu.memory_space<semaphore_mem>>)
    %c3_i32 = arith.constant 3 : i32
    %c3_i32_18 = arith.constant 3 : i32
    %c3_i32_19 = arith.constant 3 : i32
    %c0_i32_20 = arith.constant 0 : i32
    %c0_i32_21 = arith.constant 0 : i32
    %18 = tpu.memref_slice %arg7[%c3_i32, %c0_i32_20, %c0_i32_21] : memref<4x1024x512xi8, #tpu.memory_space<any>> -> memref<1x1024x512xi8, #tpu.memory_space<any>>
    %19 = tpu.memref_squeeze %18 : memref<1x1024x512xi8, #tpu.memory_space<any>> -> memref<1024x512xi8, #tpu.memory_space<any>>
    %c0_i32_22 = arith.constant 0 : i32
    %c0_i32_23 = arith.constant 0 : i32
    %20 = tpu.memref_slice %arg18[%c3_i32_18, %c0_i32_22, %c0_i32_23] : memref<4x1024x512xi8, #tpu.memory_space<vmem>> -> memref<1x1024x512xi8, #tpu.memory_space<vmem>>
    %21 = tpu.memref_squeeze %20 : memref<1x1024x512xi8, #tpu.memory_space<vmem>> -> memref<1024x512xi8, #tpu.memory_space<vmem>>
    %22 = tpu.memref_slice %arg19[%c3_i32_19] : memref<4x!tpu.dma_semaphore, #tpu.memory_space<semaphore_mem>> -> memref<1x!tpu.dma_semaphore, #tpu.memory_space<semaphore_mem>>
    %23 = tpu.memref_squeeze %22 : memref<1x!tpu.dma_semaphore, #tpu.memory_space<semaphore_mem>> -> memref<!tpu.dma_semaphore, #tpu.memory_space<semaphore_mem>>
    tpu.enqueue_dma source(%19 : memref<1024x512xi8, #tpu.memory_space<any>>) target(%21 : memref<1024x512xi8, #tpu.memory_space<vmem>>) target_semaphore(%23 : memref<!tpu.dma_semaphore, #tpu.memory_space<semaphore_mem>>)
    %c0 = arith.constant 0 : index
    %c0_24 = arith.constant 0 : index
    %24 = vector.load %arg0[%c0, %c0_24] : memref<1x1280xf32, #tpu.memory_space<vmem>>, vector<1x1280xf32>
    %c0_25 = arith.constant 0 : index
    %c0_26 = arith.constant 0 : index
    %25 = vector.load %arg1[%c0_25, %c0_26] : memref<1x1280xf32, #tpu.memory_space<vmem>>, vector<1x1280xf32>
    %26 = tpu.concatenate %24, %25 in 0 : vector<1x1280xf32>, vector<1x1280xf32> -> vector<2x1280xf32>
    %27 = arith.truncf %26 : vector<2x1280xf32> to vector<2x1280xbf16>
    %c0_27 = arith.constant 0 : index
    %c0_28 = arith.constant 0 : index
    %28 = vector.load %arg4[%c0_27, %c0_28] : memref<1280x512xi8, #tpu.memory_space<vmem>>, vector<1280x512xi8>
    %29 = arith.sitofp %28 : vector<1280x512xi8> to vector<1280x512xbf16>
    %cst = arith.constant dense<0.000000e+00> : vector<2x512xf32>
    %30 = tpu.matmul %27, %29, %cst {dimension_numbers = #tpu.dot_dimension_numbers<[1], [0], [0], [1], [0, 0, 1, 1], [], []>} : vector<2x1280xbf16>, vector<1280x512xbf16>, vector<2x512xf32> -> vector<2x512xf32>
    %c0_29 = arith.constant 0 : index
    %c0_30 = arith.constant 0 : index
    %31 = vector.load %arg5[%c0_29, %c0_30] : memref<1x512xf32, #tpu.memory_space<vmem>>, vector<1x512xf32>
    %32 = vector.broadcast %31 : vector<1x512xf32> to vector<2x512xf32>
    %33 = arith.mulf %30, %32 : vector<2x512xf32>
    %c0_31 = arith.constant 0 : index
    %c0_32 = arith.constant 0 : index
    %34 = vector.load %arg6[%c0_31, %c0_32] : memref<1x512xf32, #tpu.memory_space<vmem>>, vector<1x512xf32>
    %35 = vector.broadcast %34 : vector<1x512xf32> to vector<2x512xf32>
    %36 = arith.addf %33, %35 : vector<2x512xf32>
    %cst_33 = arith.constant 0.000000e+00 : f32
    %37 = vector.broadcast %cst_33 : f32 to vector<2x512xf32>
    %38 = arith.maximumf %36, %37 : vector<2x512xf32>
    %39 = vector.extract_strided_slice %38 {offsets = [0, 0], sizes = [1, 384], strides = [1, 1]} : vector<2x512xf32> to vector<1x384xf32>
    %40 = vector.extract_strided_slice %38 {offsets = [1, 384], sizes = [1, 128], strides = [1, 1]} : vector<2x512xf32> to vector<1x128xf32>
    %41 = tpu.concatenate %39, %40 in 1 : vector<1x384xf32>, vector<1x128xf32> -> vector<1x512xf32>
    %c0_34 = arith.constant 0 : index
    %c0_35 = arith.constant 0 : index
    %42 = vector.load %arg13[%c0_34, %c0_35] : memref<1x512xf32, #tpu.memory_space<vmem>>, vector<1x512xf32>
    tpu.vector_store %arg13[%c0_34, %c0_35], %41 {strides = array<i32>} : memref<1x512xf32, #tpu.memory_space<vmem>>, vector<1x512xf32>,
    %c0_36 = arith.constant 0 : index
    %c0_37 = arith.constant 0 : index
    %43 = vector.load %arg2[%c0_36, %c0_37] : memref<1x512xf32, #tpu.memory_space<vmem>>, vector<1x512xf32>
    %44 = tpu.concatenate %41, %43 in 1 : vector<1x512xf32>, vector<1x512xf32> -> vector<1x1024xf32>
    %45 = arith.truncf %44 : vector<1x1024xf32> to vector<1x1024xbf16>
    %c0_38 = arith.constant 0 : index
    %c0_39 = arith.constant 0 : index
    %46 = vector.load %arg8[%c0_38, %c0_39] : memref<1x2048xf32, #tpu.memory_space<vmem>>, vector<1x2048xf32>
    %c0_40 = arith.constant 0 : index
    %c0_41 = arith.constant 0 : index
    %47 = vector.load %arg9[%c0_40, %c0_41] : memref<1x2048xf32, #tpu.memory_space<vmem>>, vector<1x2048xf32>
    %c0_i32_42 = arith.constant 0 : i32
    %c0_i32_43 = arith.constant 0 : i32
    %c0_i32_44 = arith.constant 0 : i32
    %c0_i32_45 = arith.constant 0 : i32
    %c0_i32_46 = arith.constant 0 : i32
    %48 = tpu.memref_slice %arg7[%c0_i32_42, %c0_i32_45, %c0_i32_46] : memref<4x1024x512xi8, #tpu.memory_space<any>> -> memref<1x1024x512xi8, #tpu.memory_space<any>>
    %49 = tpu.memref_squeeze %48 : memref<1x1024x512xi8, #tpu.memory_space<any>> -> memref<1024x512xi8, #tpu.memory_space<any>>
    %c0_i32_47 = arith.constant 0 : i32
    %c0_i32_48 = arith.constant 0 : i32
    %50 = tpu.memref_slice %arg18[%c0_i32_43, %c0_i32_47, %c0_i32_48] : memref<4x1024x512xi8, #tpu.memory_space<vmem>> -> memref<1x1024x512xi8, #tpu.memory_space<vmem>>
    %51 = tpu.memref_squeeze %50 : memref<1x1024x512xi8, #tpu.memory_space<vmem>> -> memref<1024x512xi8, #tpu.memory_space<vmem>>
    %52 = tpu.memref_slice %arg19[%c0_i32_44] : memref<4x!tpu.dma_semaphore, #tpu.memory_space<semaphore_mem>> -> memref<1x!tpu.dma_semaphore, #tpu.memory_space<semaphore_mem>>
    %53 = tpu.memref_squeeze %52 : memref<1x!tpu.dma_semaphore, #tpu.memory_space<semaphore_mem>> -> memref<!tpu.dma_semaphore, #tpu.memory_space<semaphore_mem>>
    tpu.wait_dma2 semaphore(%53 : memref<!tpu.dma_semaphore, #tpu.memory_space<semaphore_mem>>) src(%49 : memref<1024x512xi8, #tpu.memory_space<any>>) dst(%51 : memref<1024x512xi8, #tpu.memory_space<vmem>>)
    %c0_49 = arith.constant 0 : index
    %c0_50 = arith.constant 0 : index
    %c0_51 = arith.constant 0 : index
    %54 = vector.load %arg18[%c0_49, %c0_50, %c0_51] : memref<4x1024x512xi8, #tpu.memory_space<vmem>>, vector<1x1024x512xi8>
    %55 = vector.shape_cast %54 : vector<1x1024x512xi8> to vector<1024x512xi8>
    %56 = arith.sitofp %55 : vector<1024x512xi8> to vector<1024x512xbf16>
    %cst_52 = arith.constant dense<0.000000e+00> : vector<1x512xf32>
    %57 = tpu.matmul %45, %56, %cst_52 {dimension_numbers = #tpu.dot_dimension_numbers<[1], [0], [0], [1], [0, 0, 1, 1], [], []>} : vector<1x1024xbf16>, vector<1024x512xbf16>, vector<1x512xf32> -> vector<1x512xf32>
    %58 = vector.extract_strided_slice %46 {offsets = [0, 0], sizes = [1, 512], strides = [1, 1]} : vector<1x2048xf32> to vector<1x512xf32>
    %59 = arith.mulf %57, %58 : vector<1x512xf32>
    %60 = vector.extract_strided_slice %47 {offsets = [0, 0], sizes = [1, 512], strides = [1, 1]} : vector<1x2048xf32> to vector<1x512xf32>
    %61 = arith.addf %59, %60 : vector<1x512xf32>
    %62 = arith.negf %61 : vector<1x512xf32>
    %63 = math.exp %62 : vector<1x512xf32>
    %cst_53 = arith.constant 1.000000e+00 : f32
    %64 = vector.broadcast %cst_53 : f32 to vector<1x512xf32>
    %65 = arith.addf %64, %63 : vector<1x512xf32>
    %66 = arith.divf %64, %65 : vector<1x512xf32>
    %c1_i32_54 = arith.constant 1 : i32
    %c1_i32_55 = arith.constant 1 : i32
    %c1_i32_56 = arith.constant 1 : i32
    %c0_i32_57 = arith.constant 0 : i32
    %c0_i32_58 = arith.constant 0 : i32
    %67 = tpu.memref_slice %arg7[%c1_i32_54, %c0_i32_57, %c0_i32_58] : memref<4x1024x512xi8, #tpu.memory_space<any>> -> memref<1x1024x512xi8, #tpu.memory_space<any>>
    %68 = tpu.memref_squeeze %67 : memref<1x1024x512xi8, #tpu.memory_space<any>> -> memref<1024x512xi8, #tpu.memory_space<any>>
    %c0_i32_59 = arith.constant 0 : i32
    %c0_i32_60 = arith.constant 0 : i32
    %69 = tpu.memref_slice %arg18[%c1_i32_55, %c0_i32_59, %c0_i32_60] : memref<4x1024x512xi8, #tpu.memory_space<vmem>> -> memref<1x1024x512xi8, #tpu.memory_space<vmem>>
    %70 = tpu.memref_squeeze %69 : memref<1x1024x512xi8, #tpu.memory_space<vmem>> -> memref<1024x512xi8, #tpu.memory_space<vmem>>
    %71 = tpu.memref_slice %arg19[%c1_i32_56] : memref<4x!tpu.dma_semaphore, #tpu.memory_space<semaphore_mem>> -> memref<1x!tpu.dma_semaphore, #tpu.memory_space<semaphore_mem>>
    %72 = tpu.memref_squeeze %71 : memref<1x!tpu.dma_semaphore, #tpu.memory_space<semaphore_mem>> -> memref<!tpu.dma_semaphore, #tpu.memory_space<semaphore_mem>>
    tpu.wait_dma2 semaphore(%72 : memref<!tpu.dma_semaphore, #tpu.memory_space<semaphore_mem>>) src(%68 : memref<1024x512xi8, #tpu.memory_space<any>>) dst(%70 : memref<1024x512xi8, #tpu.memory_space<vmem>>)
    %c1 = arith.constant 1 : index
    %c0_61 = arith.constant 0 : index
    %c0_62 = arith.constant 0 : index
    %73 = vector.load %arg18[%c1, %c0_61, %c0_62] : memref<4x1024x512xi8, #tpu.memory_space<vmem>>, vector<1x1024x512xi8>
    %74 = vector.shape_cast %73 : vector<1x1024x512xi8> to vector<1024x512xi8>
    %75 = arith.sitofp %74 : vector<1024x512xi8> to vector<1024x512xbf16>
    %cst_63 = arith.constant dense<0.000000e+00> : vector<1x512xf32>
    %76 = tpu.matmul %45, %75, %cst_63 {dimension_numbers = #tpu.dot_dimension_numbers<[1], [0], [0], [1], [0, 0, 1, 1], [], []>} : vector<1x1024xbf16>, vector<1024x512xbf16>, vector<1x512xf32> -> vector<1x512xf32>
    %77 = vector.extract_strided_slice %46 {offsets = [0, 512], sizes = [1, 512], strides = [1, 1]} : vector<1x2048xf32> to vector<1x512xf32>
    %78 = arith.mulf %76, %77 : vector<1x512xf32>
    %79 = vector.extract_strided_slice %47 {offsets = [0, 512], sizes = [1, 512], strides = [1, 1]} : vector<1x2048xf32> to vector<1x512xf32>
    %80 = arith.addf %78, %79 : vector<1x512xf32>
    %81 = arith.negf %80 : vector<1x512xf32>
    %82 = math.exp %81 : vector<1x512xf32>
    %cst_64 = arith.constant 1.000000e+00 : f32
    %83 = vector.broadcast %cst_64 : f32 to vector<1x512xf32>
    %84 = arith.addf %83, %82 : vector<1x512xf32>
    %85 = arith.divf %83, %84 : vector<1x512xf32>
    %c2_i32_65 = arith.constant 2 : i32
    %c2_i32_66 = arith.constant 2 : i32
    %c2_i32_67 = arith.constant 2 : i32
    %c0_i32_68 = arith.constant 0 : i32
    %c0_i32_69 = arith.constant 0 : i32
    %86 = tpu.memref_slice %arg7[%c2_i32_65, %c0_i32_68, %c0_i32_69] : memref<4x1024x512xi8, #tpu.memory_space<any>> -> memref<1x1024x512xi8, #tpu.memory_space<any>>
    %87 = tpu.memref_squeeze %86 : memref<1x1024x512xi8, #tpu.memory_space<any>> -> memref<1024x512xi8, #tpu.memory_space<any>>
    %c0_i32_70 = arith.constant 0 : i32
    %c0_i32_71 = arith.constant 0 : i32
    %88 = tpu.memref_slice %arg18[%c2_i32_66, %c0_i32_70, %c0_i32_71] : memref<4x1024x512xi8, #tpu.memory_space<vmem>> -> memref<1x1024x512xi8, #tpu.memory_space<vmem>>
    %89 = tpu.memref_squeeze %88 : memref<1x1024x512xi8, #tpu.memory_space<vmem>> -> memref<1024x512xi8, #tpu.memory_space<vmem>>
    %90 = tpu.memref_slice %arg19[%c2_i32_67] : memref<4x!tpu.dma_semaphore, #tpu.memory_space<semaphore_mem>> -> memref<1x!tpu.dma_semaphore, #tpu.memory_space<semaphore_mem>>
    %91 = tpu.memref_squeeze %90 : memref<1x!tpu.dma_semaphore, #tpu.memory_space<semaphore_mem>> -> memref<!tpu.dma_semaphore, #tpu.memory_space<semaphore_mem>>
    tpu.wait_dma2 semaphore(%91 : memref<!tpu.dma_semaphore, #tpu.memory_space<semaphore_mem>>) src(%87 : memref<1024x512xi8, #tpu.memory_space<any>>) dst(%89 : memref<1024x512xi8, #tpu.memory_space<vmem>>)
    %c2 = arith.constant 2 : index
    %c0_72 = arith.constant 0 : index
    %c0_73 = arith.constant 0 : index
    %92 = vector.load %arg18[%c2, %c0_72, %c0_73] : memref<4x1024x512xi8, #tpu.memory_space<vmem>>, vector<1x1024x512xi8>
    %93 = vector.shape_cast %92 : vector<1x1024x512xi8> to vector<1024x512xi8>
    %94 = arith.sitofp %93 : vector<1024x512xi8> to vector<1024x512xbf16>
    %cst_74 = arith.constant dense<0.000000e+00> : vector<1x512xf32>
    %95 = tpu.matmul %45, %94, %cst_74 {dimension_numbers = #tpu.dot_dimension_numbers<[1], [0], [0], [1], [0, 0, 1, 1], [], []>} : vector<1x1024xbf16>, vector<1024x512xbf16>, vector<1x512xf32> -> vector<1x512xf32>
    %96 = vector.extract_strided_slice %46 {offsets = [0, 1024], sizes = [1, 512], strides = [1, 1]} : vector<1x2048xf32> to vector<1x512xf32>
    %97 = arith.mulf %95, %96 : vector<1x512xf32>
    %98 = vector.extract_strided_slice %47 {offsets = [0, 1024], sizes = [1, 512], strides = [1, 1]} : vector<1x2048xf32> to vector<1x512xf32>
    %99 = arith.addf %97, %98 : vector<1x512xf32>
    %100 = math.tanh %99 : vector<1x512xf32>
    %c3_i32_75 = arith.constant 3 : i32
    %c3_i32_76 = arith.constant 3 : i32
    %c3_i32_77 = arith.constant 3 : i32
    %c0_i32_78 = arith.constant 0 : i32
    %c0_i32_79 = arith.constant 0 : i32
    %101 = tpu.memref_slice %arg7[%c3_i32_75, %c0_i32_78, %c0_i32_79] : memref<4x1024x512xi8, #tpu.memory_space<any>> -> memref<1x1024x512xi8, #tpu.memory_space<any>>
    %102 = tpu.memref_squeeze %101 : memref<1x1024x512xi8, #tpu.memory_space<any>> -> memref<1024x512xi8, #tpu.memory_space<any>>
    %c0_i32_80 = arith.constant 0 : i32
    %c0_i32_81 = arith.constant 0 : i32
    %103 = tpu.memref_slice %arg18[%c3_i32_76, %c0_i32_80, %c0_i32_81] : memref<4x1024x512xi8, #tpu.memory_space<vmem>> -> memref<1x1024x512xi8, #tpu.memory_space<vmem>>
    %104 = tpu.memref_squeeze %103 : memref<1x1024x512xi8, #tpu.memory_space<vmem>> -> memref<1024x512xi8, #tpu.memory_space<vmem>>
    %105 = tpu.memref_slice %arg19[%c3_i32_77] : memref<4x!tpu.dma_semaphore, #tpu.memory_space<semaphore_mem>> -> memref<1x!tpu.dma_semaphore, #tpu.memory_space<semaphore_mem>>
    %106 = tpu.memref_squeeze %105 : memref<1x!tpu.dma_semaphore, #tpu.memory_space<semaphore_mem>> -> memref<!tpu.dma_semaphore, #tpu.memory_space<semaphore_mem>>
    tpu.wait_dma2 semaphore(%106 : memref<!tpu.dma_semaphore, #tpu.memory_space<semaphore_mem>>) src(%102 : memref<1024x512xi8, #tpu.memory_space<any>>) dst(%104 : memref<1024x512xi8, #tpu.memory_space<vmem>>)
    %c3 = arith.constant 3 : index
    %c0_82 = arith.constant 0 : index
    %c0_83 = arith.constant 0 : index
    %107 = vector.load %arg18[%c3, %c0_82, %c0_83] : memref<4x1024x512xi8, #tpu.memory_space<vmem>>, vector<1x1024x512xi8>
    %108 = vector.shape_cast %107 : vector<1x1024x512xi8> to vector<1024x512xi8>
    %109 = arith.sitofp %108 : vector<1024x512xi8> to vector<1024x512xbf16>
    %cst_84 = arith.constant dense<0.000000e+00> : vector<1x512xf32>
    %110 = tpu.matmul %45, %109, %cst_84 {dimension_numbers = #tpu.dot_dimension_numbers<[1], [0], [0], [1], [0, 0, 1, 1], [], []>} : vector<1x1024xbf16>, vector<1024x512xbf16>, vector<1x512xf32> -> vector<1x512xf32>
    %111 = vector.extract_strided_slice %46 {offsets = [0, 1536], sizes = [1, 512], strides = [1, 1]} : vector<1x2048xf32> to vector<1x512xf32>
    %112 = arith.mulf %110, %111 : vector<1x512xf32>
    %113 = vector.extract_strided_slice %47 {offsets = [0, 1536], sizes = [1, 512], strides = [1, 1]} : vector<1x2048xf32> to vector<1x512xf32>
    %114 = arith.addf %112, %113 : vector<1x512xf32>
    %115 = arith.negf %114 : vector<1x512xf32>
    %116 = math.exp %115 : vector<1x512xf32>
    %cst_85 = arith.constant 1.000000e+00 : f32
    %117 = vector.broadcast %cst_85 : f32 to vector<1x512xf32>
    %118 = arith.addf %117, %116 : vector<1x512xf32>
    %119 = arith.divf %117, %118 : vector<1x512xf32>
    %c0_86 = arith.constant 0 : index
    %c0_87 = arith.constant 0 : index
    %120 = vector.load %arg3[%c0_86, %c0_87] : memref<1x512xf32, #tpu.memory_space<vmem>>, vector<1x512xf32>
    %121 = arith.mulf %85, %120 : vector<1x512xf32>
    %122 = arith.mulf %66, %100 : vector<1x512xf32>
    %123 = arith.addf %121, %122 : vector<1x512xf32>
    %124 = math.tanh %123 : vector<1x512xf32>
    %125 = arith.mulf %119, %124 : vector<1x512xf32>
    %c0_88 = arith.constant 0 : index
    %c0_89 = arith.constant 0 : index
    %126 = vector.load %arg14[%c0_88, %c0_89] : memref<1x512xf32, #tpu.memory_space<vmem>>, vector<1x512xf32>
    tpu.vector_store %arg14[%c0_88, %c0_89], %125 {strides = array<i32>} : memref<1x512xf32, #tpu.memory_space<vmem>>, vector<1x512xf32>,
    %c0_90 = arith.constant 0 : index
    %c0_91 = arith.constant 0 : index
    %127 = vector.load %arg15[%c0_90, %c0_91] : memref<1x512xf32, #tpu.memory_space<vmem>>, vector<1x512xf32>
    tpu.vector_store %arg15[%c0_90, %c0_91], %123 {strides = array<i32>} : memref<1x512xf32, #tpu.memory_space<vmem>>, vector<1x512xf32>,
    %128 = arith.truncf %125 : vector<1x512xf32> to vector<1x512xbf16>
    %c0_92 = arith.constant 0 : index
    %c0_93 = arith.constant 0 : index
    %129 = vector.load %arg10[%c0_92, %c0_93] : memref<512x128xi8, #tpu.memory_space<vmem>>, vector<512x128xi8>
    %130 = arith.sitofp %129 : vector<512x128xi8> to vector<512x128xbf16>
    %cst_94 = arith.constant dense<0.000000e+00> : vector<1x128xf32>
    %131 = tpu.matmul %128, %130, %cst_94 {dimension_numbers = #tpu.dot_dimension_numbers<[1], [0], [0], [1], [0, 0, 1, 1], [], []>} : vector<1x512xbf16>, vector<512x128xbf16>, vector<1x128xf32> -> vector<1x128xf32>
    %c0_95 = arith.constant 0 : index
    %c0_96 = arith.constant 0 : index
    %132 = vector.load %arg11[%c0_95, %c0_96] : memref<1x128xf32, #tpu.memory_space<vmem>>, vector<1x128xf32>
    %133 = arith.mulf %131, %132 : vector<1x128xf32>
    %c0_97 = arith.constant 0 : index
    %c0_98 = arith.constant 0 : index
    %134 = vector.load %arg12[%c0_97, %c0_98] : memref<1x128xf32, #tpu.memory_space<vmem>>, vector<1x128xf32>
    %135 = arith.addf %133, %134 : vector<1x128xf32>
    %136 = tpu.iota {dimensions = array<i32: 1>} : vector<1x128xi32>
    %c49_i32 = arith.constant 49 : i32
    %137 = vector.broadcast %c49_i32 : i32 to vector<1x128xi32>
    %138 = arith.cmpi slt, %136, %137 : vector<1x128xi32>
    %cst_99 = arith.constant -1.000000e+30 : f32
    %139 = vector.broadcast %cst_99 : f32 to vector<1x128xf32>
    %140 = arith.select %138, %135, %139 : vector<1x128xi1>, vector<1x128xf32>
    %cst_100 = arith.constant dense<0xFF800000> : vector<1xf32>
    %141 = vector.multi_reduction <maximumf>, %140, %cst_100 [1] : vector<1x128xf32> to vector<1xf32>
    %142 = vector.shape_cast %141 : vector<1xf32> to vector<1x1xf32>
    %143 = vector.broadcast %142 : vector<1x1xf32> to vector<1x128xf32>
    %144 = arith.subf %140, %143 : vector<1x128xf32>
    %145 = math.exp %144 : vector<1x128xf32>
    %cst_101 = arith.constant dense<0.000000e+00> : vector<1xf32>
    %146 = vector.multi_reduction <add>, %145, %cst_101 [1] : vector<1x128xf32> to vector<1xf32>
    %147 = vector.shape_cast %146 : vector<1xf32> to vector<1x1xf32>
    %148 = vector.broadcast %147 : vector<1x1xf32> to vector<1x128xf32>
    %149 = arith.divf %145, %148 : vector<1x128xf32>
    %150 = vector.broadcast %142 : vector<1x1xf32> to vector<1x128xf32>
    %151 = arith.subf %140, %150 : vector<1x128xf32>
    %152 = math.log %147 : vector<1x1xf32>
    %153 = vector.broadcast %152 : vector<1x1xf32> to vector<1x128xf32>
    %154 = arith.subf %151, %153 : vector<1x128xf32>
    %155 = arith.mulf %149, %154 : vector<1x128xf32>
    %cst_102 = arith.constant 0.000000e+00 : f32
    %156 = vector.broadcast %cst_102 : f32 to vector<1x128xf32>
    %157 = arith.select %138, %155, %156 : vector<1x128xi1>, vector<1x128xf32>
    %cst_103 = arith.constant dense<0.000000e+00> : vector<1xf32>
    %158 = vector.multi_reduction <add>, %157, %cst_103 [1] : vector<1x128xf32> to vector<1xf32>
    %159 = vector.shape_cast %158 : vector<1xf32> to vector<1x1xf32>
    %cst_104 = arith.constant 0.000000e+00 : f32
    %160 = vector.broadcast %cst_104 : f32 to vector<1x1xf32>
    %161 = arith.subf %160, %159 : vector<1x1xf32>
    %cst_105 = arith.constant 0.000000e+00 : f32
    %162 = vector.broadcast %cst_105 : f32 to vector<1x128xf32>
    %163 = arith.select %138, %149, %162 : vector<1x128xi1>, vector<1x128xf32>
    %c49_i32_106 = arith.constant 49 : i32
    %164 = vector.broadcast %c49_i32_106 : i32 to vector<1x128xi32>
    %165 = arith.cmpi eq, %136, %164 : vector<1x128xi32>
    %166 = vector.shape_cast %161 : vector<1x1xf32> to vector<1x1xf32>
    %167 = vector.broadcast %166 : vector<1x1xf32> to vector<1x128xf32>
    %168 = arith.select %165, %167, %163 : vector<1x128xi1>, vector<1x128xf32>
    %c0_107 = arith.constant 0 : index
    %c0_108 = arith.constant 0 : index
    %169 = vector.load %arg16[%c0_107, %c0_108] : memref<1x128xf32, #tpu.memory_space<vmem>>, vector<1x128xf32>
    tpu.vector_store %arg16[%c0_107, %c0_108], %168 {strides = array<i32>} : memref<1x128xf32, #tpu.memory_space<vmem>>, vector<1x128xf32>,
    %cst_109 = arith.constant 0.000000e+00 : f32
    %170 = vector.broadcast %cst_109 : f32 to vector<1x128xf32>
    %171 = arith.select %138, %154, %170 : vector<1x128xi1>, vector<1x128xf32>
    %c0_110 = arith.constant 0 : index
    %c0_111 = arith.constant 0 : index
    %172 = vector.load %arg17[%c0_110, %c0_111] : memref<1x128xf32, #tpu.memory_space<vmem>>, vector<1x128xf32>
    tpu.vector_store %arg17[%c0_110, %c0_111], %171 {strides = array<i32>} : memref<1x128xf32, #tpu.memory_space<vmem>>, vector<1x128xf32>,
    return
  }
}

</mosaic_0001>

<llo_original>
// kernel: tpu_custom_call.1
$region0: #{tpu_custom_call.1}
  #allocation0 [shape = 'u32[]', space=smem, size = 0x4, offset = 0x4, fixed_abs, tag = 'smem constant byte address 0x4 - core index']
  #allocation1 [shape = 'u32[72,128]{1,0:T(1,128)}', space=vmem, size = 0x9000, scoped, tag = 'internal scratch']
  #allocation2 [shape = 's8[4,1024,512]{2,1,0:T(32,128)(4,1)}', space=vmem, size = 0x200000, scoped, tag = 'scratch operand']
  #allocation3 [shape = 's32[4]{0}', space=sflag, size = 0x10, scoped, tag = 'scratch operand']
  #allocation31 [shape = 's32[]', space=sflag, size = 0x4, offset = 0, fixed_abs, tag = 'sflag constant byte address 0x0 - dummy sync flag']
  #allocation32 [shape = 's32[]', space=sflag, size = 0x4, offset = 0, fixed_abs, tag = 'sflag constant byte address 0x0 - dummy sync flag']
  #allocation33 [shape = 'u32[]', space=smem, size = 0x4, offset = 0x44, fixed_abs, tag = 'smem constant byte address 0x44 - assertion arg 0']
  #allocation34 [shape = 'u32[]', space=smem, size = 0x4, offset = 0x48, fixed_abs, tag = 'smem constant byte address 0x48 - assertion arg 1']
  #allocation35 [shape = 's32[]', space=sflag, size = 0x4, offset = 0, fixed_abs, tag = 'sflag constant byte address 0x0 - dummy sync flag']
  #allocation36 [shape = 's32[]', space=sflag, size = 0x4, offset = 0, fixed_abs, tag = 'sflag constant byte address 0x0 - dummy sync flag']
  #allocation37 [shape = 's32[]', space=sflag, size = 0x4, offset = 0, fixed_abs, tag = 'sflag constant byte address 0x0 - dummy sync flag']
  #allocation38 [shape = 's32[]', space=sflag, size = 0x4, offset = 0, fixed_abs, tag = 'sflag constant byte address 0x0 - dummy sync flag']
  #allocation39 [shape = 's32[]', space=sflag, size = 0x4, offset = 0, fixed_abs, tag = 'sflag constant byte address 0x0 - dummy sync flag']
  #allocation40 [shape = 's32[]', space=sflag, size = 0x4, offset = 0, fixed_abs, tag = 'sflag constant byte address 0x0 - dummy sync flag']
  %s0 = inlined_call_operand.hbm [shape: f32[1,1280], index: 0, kind: input, shape index: {}]
  %s1 = inlined_call_operand.hbm [shape: f32[1,1280], index: 1, kind: input, shape index: {}]
  %s2 = inlined_call_operand.hbm [shape: f32[1,512], index: 2, kind: input, shape index: {}]
  %s3 = inlined_call_operand.hbm [shape: f32[1,512], index: 3, kind: input, shape index: {}]
  %s4 = inlined_call_operand.hbm [shape: s8[1280,512], index: 4, kind: input, shape index: {}]
  %s5 = inlined_call_operand.hbm [shape: f32[1,512], index: 5, kind: input, shape index: {}]
  %s6 = inlined_call_operand.hbm [shape: f32[1,512], index: 6, kind: input, shape index: {}]
  %s7 = inlined_call_operand.hbm [shape: s8[4,1024,512], index: 7, kind: input, shape index: {}]
  %s8 = inlined_call_operand.hbm [shape: f32[1,2048], index: 8, kind: input, shape index: {}]
  %s9 = inlined_call_operand.hbm [shape: f32[1,2048], index: 9, kind: input, shape index: {}]
  %s10 = inlined_call_operand.hbm [shape: s8[512,128], index: 10, kind: input, shape index: {}]
  %s11 = inlined_call_operand.hbm [shape: f32[1,128], index: 11, kind: input, shape index: {}]
  %s12 = inlined_call_operand.hbm [shape: f32[1,128], index: 12, kind: input, shape index: {}]
  %s13 = inlined_call_operand.hbm [shape: f32[1,512], index: 13, kind: output, shape index: {0}]
  %s14 = inlined_call_operand.hbm [shape: f32[1,512], index: 14, kind: output, shape index: {1}]
  %s15 = inlined_call_operand.hbm [shape: f32[1,512], index: 15, kind: output, shape index: {2}]
  %s16 = inlined_call_operand.hbm [shape: f32[1,128], index: 16, kind: output, shape index: {3}]
  %s17 = inlined_call_operand.hbm [shape: f32[1,128], index: 17, kind: output, shape index: {4}]
  %18 = xla_tuple %s13, %s14, %s15, %s16, %s17
  %s19 = sld [smem:[#allocation0]]
  $region154: #{tpu_custom_call.1} parent=0
    _
  %s21 = ssub.s32 1, %s19
  %s22 = scalar_select 0, %s21, %s19
  $region1: #{tpu_custom_call.1} parent=0
    #allocation4 [shape = 'u8[5120]{0}', space=vmem, size = 0x1400, scoped, tag = 'input window, operand 0, single buffered']
    #allocation5 [shape = 's32[1]{0}', space=sflag, size = 0x4, scoped, tag = 'scoped memory for tpu_custom_call.1']
    #allocation6 [shape = 's32[1]{0}', space=sflag, size = 0x4, scoped, tag = 'scoped memory for tpu_custom_call.1']
    #allocation7 [shape = 'u8[5120]{0}', space=vmem, size = 0x1400, scoped, tag = 'input window, operand 1, single buffered']
    #allocation8 [shape = 's32[1]{0}', space=sflag, size = 0x4, scoped, tag = 'scoped memory for tpu_custom_call.1']
    #allocation9 [shape = 'u8[2048]{0}', space=vmem, size = 0x800, scoped, tag = 'input window, operand 2, single buffered']
    #allocation10 [shape = 'u8[2048]{0}', space=vmem, size = 0x800, scoped, tag = 'input window, operand 3, single buffered']
    #allocation11 [shape = 's32[1]{0}', space=sflag, size = 0x4, scoped, tag = 'scoped memory for tpu_custom_call.1']
    #allocation12 [shape = 'u8[655360]{0}', space=vmem, size = 0xa0000, scoped, tag = 'input window, operand 4, single buffered']
    #allocation13 [shape = 'u8[2048]{0}', space=vmem, size = 0x800, scoped, tag = 'input window, operand 5, single buffered']
    #allocation14 [shape = 's32[1]{0}', space=sflag, size = 0x4, scoped, tag = 'scoped memory for tpu_custom_call.1']
    #allocation15 [shape = 'u8[2048]{0}', space=vmem, size = 0x800, scoped, tag = 'input window, operand 6, single buffered']
    #allocation16 [shape = 'u8[8192]{0}', space=vmem, size = 0x2000, scoped, tag = 'input window, operand 8, single buffered']
    #allocation17 [shape = 's32[1]{0}', space=sflag, size = 0x4, scoped, tag = 'scoped memory for tpu_custom_call.1']
    #allocation18 [shape = 'u8[8192]{0}', space=vmem, size = 0x2000, scoped, tag = 'input window, operand 9, single buffered']
    #allocation19 [shape = 'u8[65536]{0}', space=vmem, size = 0x10000, scoped, tag = 'input window, operand 10, single buffered']
    #allocation20 [shape = 's32[1]{0}', space=sflag, size = 0x4, scoped, tag = 'scoped memory for tpu_custom_call.1']
    #allocation21 [shape = 'u8[512]{0}', space=vmem, size = 0x400, scoped, tag = 'input window, operand 11, single buffered']
    #allocation22 [shape = 'u8[512]{0}', space=vmem, size = 0x400, scoped, tag = 'input window, operand 12, single buffered']
    #allocation23 [shape = 's32[1]{0}', space=sflag, size = 0x4, scoped, tag = 'scoped memory for tpu_custom_call.1']
    #allocation24 [shape = 'u8[2048]{0}', space=vmem, size = 0x800, scoped, tag = 'output window, operand 0, single buffered']
    #allocation25 [shape = 'u8[2048]{0}', space=vmem, size = 0x800, scoped, tag = 'output window, operand 1, single buffered']
    #allocation26 [shape = 's32[1]{0}', space=sflag, size = 0x4, scoped, tag = 'scoped memory for tpu_custom_call.1']
    #allocation27 [shape = 'u8[2048]{0}', space=vmem, size = 0x800, scoped, tag = 'output window, operand 2, single buffered']
    #allocation28 [shape = 'u8[512]{0}', space=vmem, size = 0x400, scoped, tag = 'output window, operand 3, single buffered']
    #allocation29 [shape = 's32[1]{0}', space=sflag, size = 0x4, scoped, tag = 'scoped memory for tpu_custom_call.1']
    #allocation30 [shape = 'u8[512]{0}', space=vmem, size = 0x400, scoped, tag = 'output window, operand 4, single buffered']
    %23 = vsyncpa [#allocation5], 0
    %24 = vsyncpa [#allocation8], 0
    %25 = vsyncpa [#allocation11], 0
    %26 = vsyncpa [#allocation14], 0
    %27 = vsyncpa [#allocation17], 0
    %28 = vsyncpa [#allocation20], 0
    %29 = vsyncpa [#allocation23], 0
    %30 = vsyncpa [#allocation6], 0
    %31 = vsyncpa [#allocation26], 0
    %32 = vsyncpa [#allocation29], 0
    // Predicated region
    $region2: #{tpu_custom_call.1} parent=1 // pred_check
      _
    $region3: #{tpu_custom_call.1} parent=1 // pred_check_branch
      %34 = sbr.rel (0) target = $region5
    $region4: #{tpu_custom_call.1} parent=1 // pred_region
      %36 = vsyncadd [#allocation5], 0
      %s38 = sshll.u32 %s0, 4
      %s39 = int_to_ptr.hbm [resolvable:$true] %s38
      %s40 = sshll.u32 [#allocation4], 4
      %s41 = int_to_ptr.vmem [resolvable:$true] %s40
      %43 = dma.hbm_to_vmem [thread:$0]  %s39, 160, %s41, [#allocation5]
    $region5: #{tpu_custom_call.1} parent=1 // pred_fallthru
      _
    // Predicated region
    $region6: #{tpu_custom_call.1} parent=1 // pred_check
      _
    $region7: #{tpu_custom_call.1} parent=1 // pred_check_branch
      %45 = sbr.rel (0) target = $region9
    $region8: #{tpu_custom_call.1} parent=1 // pred_region
      %47 = vsyncadd [#allocation8], 0
      %s49 = sshll.u32 %s1, 4
      %s50 = int_to_ptr.hbm [resolvable:$true] %s49
      %s51 = sshll.u32 [#allocation7], 4
      %s52 = int_to_ptr.vmem [resolvable:$true] %s51
      %54 = dma.hbm_to_vmem [thread:$0]  %s50, 160, %s52, [#allocation8]
    $region9: #{tpu_custom_call.1} parent=1 // pred_fallthru
      _
    // Predicated region
    $region10: #{tpu_custom_call.1} parent=1 // pred_check
      _
    $region11: #{tpu_custom_call.1} parent=1 // pred_check_branch
      %56 = sbr.rel (0) target = $region13
    $region12: #{tpu_custom_call.1} parent=1 // pred_region
      %58 = vsyncadd [#allocation8], 0
      %s60 = sshll.u32 %s2, 4
      %s61 = int_to_ptr.hbm [resolvable:$true] %s60
      %s62 = sshll.u32 [#allocation9], 4
      %s63 = int_to_ptr.vmem [resolvable:$true] %s62
      %65 = dma.hbm_to_vmem [thread:$0]  %s61, 64, %s63, [#allocation8]
    $region13: #{tpu_custom_call.1} parent=1 // pred_fallthru
      _
    // Predicated region
    $region14: #{tpu_custom_call.1} parent=1 // pred_check
      _
    $region15: #{tpu_custom_call.1} parent=1 // pred_check_branch
      %67 = sbr.rel (0) target = $region17
    $region16: #{tpu_custom_call.1} parent=1 // pred_region
      %69 = vsyncadd [#allocation11], 0
      %s71 = sshll.u32 %s3, 4
      %s72 = int_to_ptr.hbm [resolvable:$true] %s71
      %s73 = sshll.u32 [#allocation10], 4
      %s74 = int_to_ptr.vmem [resolvable:$true] %s73
      %76 = dma.hbm_to_vmem [thread:$0]  %s72, 64, %s74, [#allocation11]
    $region17: #{tpu_custom_call.1} parent=1 // pred_fallthru
      _
    // Predicated region
    $region18: #{tpu_custom_call.1} parent=1 // pred_check
      _
    $region19: #{tpu_custom_call.1} parent=1 // pred_check_branch
      %78 = sbr.rel (0) target = $region21
    $region20: #{tpu_custom_call.1} parent=1 // pred_region
      %80 = vsyncadd [#allocation11], 0
      %s81 = sshll.u32 %s4, 4
      %s82 = int_to_ptr.hbm [resolvable:$true] %s81
      %s83 = sshll.u32 [#allocation12], 4
      %s84 = int_to_ptr.vmem [resolvable:$true] %s83
      %89 = dma.hbm_to_vmem [thread:$0]  %s82, 20480, %s84, [#allocation11], 512, 512, 32
    $region21: #{tpu_custom_call.1} parent=1 // pred_fallthru
      _
    // Predicated region
    $region22: #{tpu_custom_call.1} parent=1 // pred_check
      _
    $region23: #{tpu_custom_call.1} parent=1 // pred_check_branch
      %91 = sbr.rel (0) target = $region25
    $region24: #{tpu_custom_call.1} parent=1 // pred_region
      %93 = vsyncadd [#allocation14], 0
      %s95 = sshll.u32 %s5, 4
      %s96 = int_to_ptr.hbm [resolvable:$true] %s95
      %s97 = sshll.u32 [#allocation13], 4
      %s98 = int_to_ptr.vmem [resolvable:$true] %s97
      %100 = dma.hbm_to_vmem [thread:$0]  %s96, 64, %s98, [#allocation14]
    $region25: #{tpu_custom_call.1} parent=1 // pred_fallthru
      _
    // Predicated region
    $region26: #{tpu_custom_call.1} parent=1 // pred_check
      _
    $region27: #{tpu_custom_call.1} parent=1 // pred_check_branch
      %102 = sbr.rel (0) target = $region29
    $region28: #{tpu_custom_call.1} parent=1 // pred_region
      %104 = vsyncadd [#allocation14], 0
      %s106 = sshll.u32 %s6, 4
      %s107 = int_to_ptr.hbm [resolvable:$true] %s106
      %s108 = sshll.u32 [#allocation15], 4
      %s109 = int_to_ptr.vmem [resolvable:$true] %s108
      %111 = dma.hbm_to_vmem [thread:$0]  %s107, 64, %s109, [#allocation14]
    $region29: #{tpu_custom_call.1} parent=1 // pred_fallthru
      _
    // Predicated region
    $region30: #{tpu_custom_call.1} parent=1 // pred_check
      _
    $region31: #{tpu_custom_call.1} parent=1 // pred_check_branch
      %113 = sbr.rel (0) target = $region33
    $region32: #{tpu_custom_call.1} parent=1 // pred_region
      %115 = vsyncadd [#allocation17], 0
      %s117 = sshll.u32 %s8, 4
      %s118 = int_to_ptr.hbm [resolvable:$true] %s117
      %s119 = sshll.u32 [#allocation16], 4
      %s120 = int_to_ptr.vmem [resolvable:$true] %s119
      %122 = dma.hbm_to_vmem [thread:$0]  %s118, 256, %s120, [#allocation17]
    $region33: #{tpu_custom_call.1} parent=1 // pred_fallthru
      _
    // Predicated region
    $region34: #{tpu_custom_call.1} parent=1 // pred_check
      _
    $region35: #{tpu_custom_call.1} parent=1 // pred_check_branch
      %124 = sbr.rel (0) target = $region37
    $region36: #{tpu_custom_call.1} parent=1 // pred_region
      %126 = vsyncadd [#allocation17], 0
      %s128 = sshll.u32 %s9, 4
      %s129 = int_to_ptr.hbm [resolvable:$true] %s128
      %s130 = sshll.u32 [#allocation18], 4
      %s131 = int_to_ptr.vmem [resolvable:$true] %s130
      %133 = dma.hbm_to_vmem [thread:$0]  %s129, 256, %s131, [#allocation17]
    $region37: #{tpu_custom_call.1} parent=1 // pred_fallthru
      _
    // Predicated region
    $region38: #{tpu_custom_call.1} parent=1 // pred_check
      _
    $region39: #{tpu_custom_call.1} parent=1 // pred_check_branch
      %135 = sbr.rel (0) target = $region41
    $region40: #{tpu_custom_call.1} parent=1 // pred_region
      %137 = vsyncadd [#allocation20], 0
      %s138 = sshll.u32 %s10, 4
      %s139 = int_to_ptr.hbm [resolvable:$true] %s138
      %s140 = sshll.u32 [#allocation19], 4
      %s141 = int_to_ptr.vmem [resolvable:$true] %s140
      %146 = dma.hbm_to_vmem [thread:$0]  %s139, 2048, %s141, [#allocation20], 128, 128, 8
    $region41: #{tpu_custom_call.1} parent=1 // pred_fallthru
      _
    // Predicated region
    $region42: #{tpu_custom_call.1} parent=1 // pred_check
      _
    $region43: #{tpu_custom_call.1} parent=1 // pred_check_branch
      %148 = sbr.rel (0) target = $region45
    $region44: #{tpu_custom_call.1} parent=1 // pred_region
      %150 = vsyncadd [#allocation20], 0
      %s152 = sshll.u32 %s11, 4
      %s153 = int_to_ptr.hbm [resolvable:$true] %s152
      %s154 = sshll.u32 [#allocation21], 4
      %s155 = int_to_ptr.vmem [resolvable:$true] %s154
      %157 = dma.hbm_to_vmem [thread:$0]  %s153, 16, %s155, [#allocation20]
    $region45: #{tpu_custom_call.1} parent=1 // pred_fallthru
      _
    // Predicated region
    $region46: #{tpu_custom_call.1} parent=1 // pred_check
      _
    $region47: #{tpu_custom_call.1} parent=1 // pred_check_branch
      %159 = sbr.rel (0) target = $region49
    $region48: #{tpu_custom_call.1} parent=1 // pred_region
      %161 = vsyncadd [#allocation23], 0
      %s163 = sshll.u32 %s12, 4
      %s164 = int_to_ptr.hbm [resolvable:$true] %s163
      %s165 = sshll.u32 [#allocation22], 4
      %s166 = int_to_ptr.vmem [resolvable:$true] %s165
      %168 = dma.hbm_to_vmem [thread:$0]  %s164, 16, %s166, [#allocation23]
    $region49: #{tpu_custom_call.1} parent=1 // pred_fallthru
      _
    // Predicated region
    $region50: #{tpu_custom_call.1} parent=1 // pred_check
      _
    $region51: #{tpu_custom_call.1} parent=1 // pred_check_branch
      %170 = sbr.rel (0) target = $region53
    $region52: #{tpu_custom_call.1} parent=1 // pred_region
      %172 = dma.done [#allocation5], 160
    $region53: #{tpu_custom_call.1} parent=1 // pred_fallthru
      _
    // Predicated region
    $region54: #{tpu_custom_call.1} parent=1 // pred_check
      _
    $region55: #{tpu_custom_call.1} parent=1 // pred_check_branch
      %174 = sbr.rel (0) target = $region57
    $region56: #{tpu_custom_call.1} parent=1 // pred_region
      %176 = dma.done [#allocation8], 160
    $region57: #{tpu_custom_call.1} parent=1 // pred_fallthru
      _
    // Predicated region
    $region58: #{tpu_custom_call.1} parent=1 // pred_check
      _
    $region59: #{tpu_custom_call.1} parent=1 // pred_check_branch
      %178 = sbr.rel (0) target = $region61
    $region60: #{tpu_custom_call.1} parent=1 // pred_region
      %180 = dma.done [#allocation8], 64
    $region61: #{tpu_custom_call.1} parent=1 // pred_fallthru
      _
    // Predicated region
    $region62: #{tpu_custom_call.1} parent=1 // pred_check
      _
    $region63: #{tpu_custom_call.1} parent=1 // pred_check_branch
      %182 = sbr.rel (0) target = $region65
    $region64: #{tpu_custom_call.1} parent=1 // pred_region
      %184 = dma.done [#allocation11], 64
    $region65: #{tpu_custom_call.1} parent=1 // pred_fallthru
      _
    // Predicated region
    $region66: #{tpu_custom_call.1} parent=1 // pred_check
      _
    $region67: #{tpu_custom_call.1} parent=1 // pred_check_branch
      %186 = sbr.rel (0) target = $region69
    $region68: #{tpu_custom_call.1} parent=1 // pred_region
      %188 = dma.done [#allocation11], 20480
    $region69: #{tpu_custom_call.1} parent=1 // pred_fallthru
      _
    // Predicated region
    $region70: #{tpu_custom_call.1} parent=1 // pred_check
      _
    $region71: #{tpu_custom_call.1} parent=1 // pred_check_branch
      %190 = sbr.rel (0) target = $region73
    $region72: #{tpu_custom_call.1} parent=1 // pred_region
      %192 = dma.done [#allocation14], 64
    $region73: #{tpu_custom_call.1} parent=1 // pred_fallthru
      _
    // Predicated region
    $region74: #{tpu_custom_call.1} parent=1 // pred_check
      _
    $region75: #{tpu_custom_call.1} parent=1 // pred_check_branch
      %194 = sbr.rel (0) target = $region77
    $region76: #{tpu_custom_call.1} parent=1 // pred_region
      %196 = dma.done [#allocation14], 64
    $region77: #{tpu_custom_call.1} parent=1 // pred_fallthru
      _
    // Predicated region
    $region78: #{tpu_custom_call.1} parent=1 // pred_check
      _
    $region79: #{tpu_custom_call.1} parent=1 // pred_check_branch
      %198 = sbr.rel (0) target = $region81
    $region80: #{tpu_custom_call.1} parent=1 // pred_region
      %200 = dma.done [#allocation17], 256
    $region81: #{tpu_custom_call.1} parent=1 // pred_fallthru
      _
    // Predicated region
    $region82: #{tpu_custom_call.1} parent=1 // pred_check
      _
    $region83: #{tpu_custom_call.1} parent=1 // pred_check_branch
      %202 = sbr.rel (0) target = $region85
    $region84: #{tpu_custom_call.1} parent=1 // pred_region
      %204 = dma.done [#allocation17], 256
    $region85: #{tpu_custom_call.1} parent=1 // pred_fallthru
      _
    // Predicated region
    $region86: #{tpu_custom_call.1} parent=1 // pred_check
      _
    $region87: #{tpu_custom_call.1} parent=1 // pred_check_branch
      %206 = sbr.rel (0) target = $region89
    $region88: #{tpu_custom_call.1} parent=1 // pred_region
      %208 = dma.done [#allocation20], 2048
    $region89: #{tpu_custom_call.1} parent=1 // pred_fallthru
      _
    // Predicated region
    $region90: #{tpu_custom_call.1} parent=1 // pred_check
      _
    $region91: #{tpu_custom_call.1} parent=1 // pred_check_branch
      %210 = sbr.rel (0) target = $region93
    $region92: #{tpu_custom_call.1} parent=1 // pred_region
      %212 = dma.done [#allocation20], 16
    $region93: #{tpu_custom_call.1} parent=1 // pred_fallthru
      _
    // Predicated region
    $region94: #{tpu_custom_call.1} parent=1 // pred_check
      _
    $region95: #{tpu_custom_call.1} parent=1 // pred_check_branch
      %214 = sbr.rel (0) target = $region97
    $region96: #{tpu_custom_call.1} parent=1 // pred_region
      %216 = dma.done [#allocation23], 16
    $region97: #{tpu_custom_call.1} parent=1 // pred_fallthru
      _
    // Predicated region
    $region98: #{tpu_custom_call.1} parent=1 // pred_check
      _
    $region99: #{tpu_custom_call.1} parent=1 // pred_check_branch
      %218 = sbr.rel target = $region101
    $region100: #{tpu_custom_call.1} parent=1 // pred_region
      %219 = sst [smem:[#allocation33]] [#allocation32]
      %220 = sst [smem:[#allocation34]] [#allocation31]
    $region101: #{tpu_custom_call.1} parent=1 // pred_fallthru
      _
    %222 = shalt.err (0)
    %s224 = sshll.u32 %s7, 4
    %s225 = int_to_ptr.hbm [resolvable:$true] %s224
    %s226 = sshll.u32 [#allocation2], 4
    %s227 = int_to_ptr.vmem [resolvable:$true] %s226
    %229 = dma.hbm_to_vmem [thread:$0]  %s225, 16384, %s227, [#allocation3]
    %s230 = scalar_lea.hbm %s7, 1024
    %s231 = scalar_lea.vmem [#allocation2], 1024
    %s232 = scalar_lea.sflag [#allocation3], 1
    // Predicated region
    $region102: #{tpu_custom_call.1} parent=1 // pred_check
      _
    $region103: #{tpu_custom_call.1} parent=1 // pred_check_branch
      %234 = sbr.rel target = $region105
    $region104: #{tpu_custom_call.1} parent=1 // pred_region
      %235 = sst [smem:[#allocation33]] [#allocation36]
      %236 = sst [smem:[#allocation34]] [#allocation35]
    $region105: #{tpu_custom_call.1} parent=1 // pred_fallthru
      _
    %238 = shalt.err (0)
    %s240 = sshll.u32 %s230, 4
    %s241 = int_to_ptr.hbm [resolvable:$true] %s240
    %s242 = sshll.u32 %s231, 4
    %s243 = int_to_ptr.vmem [resolvable:$true] %s242
    %245 = dma.hbm_to_vmem [thread:$0]  %s241, 16384, %s243, %s232
    %s246 = scalar_lea.hbm %s7, 2048
    %s247 = scalar_lea.vmem [#allocation2], 2048
    %s248 = scalar_lea.sflag [#allocation3], 2
    // Predicated region
    $region106: #{tpu_custom_call.1} parent=1 // pred_check
      _
    $region107: #{tpu_custom_call.1} parent=1 // pred_check_branch
      %250 = sbr.rel target = $region109
    $region108: #{tpu_custom_call.1} parent=1 // pred_region
      %251 = sst [smem:[#allocation33]] [#allocation38]
      %252 = sst [smem:[#allocation34]] [#allocation37]
    $region109: #{tpu_custom_call.1} parent=1 // pred_fallthru
      _
    %254 = shalt.err (0)
    %s256 = sshll.u32 %s246, 4
    %s257 = int_to_ptr.hbm [resolvable:$true] %s256
    %s258 = sshll.u32 %s247, 4
    %s259 = int_to_ptr.vmem [resolvable:$true] %s258
    %261 = dma.hbm_to_vmem [thread:$0]  %s257, 16384, %s259, %s248
    %s262 = scalar_lea.hbm %s7, 3072
    %s263 = scalar_lea.vmem [#allocation2], 3072
    %s264 = scalar_lea.sflag [#allocation3], 3
    // Predicated region
    $region110: #{tpu_custom_call.1} parent=1 // pred_check
      _
    $region111: #{tpu_custom_call.1} parent=1 // pred_check_branch
      %266 = sbr.rel target = $region113
    $region112: #{tpu_custom_call.1} parent=1 // pred_region
      %267 = sst [smem:[#allocation33]] [#allocation40]
      %268 = sst [smem:[#allocation34]] [#allocation39]
    $region113: #{tpu_custom_call.1} parent=1 // pred_fallthru
      _
    %270 = shalt.err (0)
    %s272 = sshll.u32 %s262, 4
    %s273 = int_to_ptr.hbm [resolvable:$true] %s272
    %s274 = sshll.u32 %s263, 4
    %s275 = int_to_ptr.vmem [resolvable:$true] %s274
    %277 = dma.hbm_to_vmem [thread:$0]  %s273, 16384, %s275, %s264
    %v278 = vld [vmem:[#allocation4] sm:$0xff]
    %v279 = vld [vmem:[#allocation4 + $0x8] sm:$0x3]
    %v280 = vld [vmem:[#allocation7] sm:$0xff]
    %v281 = vld [vmem:[#allocation7 + $0x8] sm:$0x3]
    %v284 = vperm.slane %v278, 0
    %v285 = vperm.slane %v278, 1
    %v286 = vperm.slane %v278, 2
    %v287 = vperm.slane %v278, 3
    %v288 = vperm.slane %v278, 4
    %v289 = vperm.slane %v278, 5
    %v290 = vperm.slane %v278, 6
    %v291 = vperm.slane %v278, 7
    %v292 = vperm.slane %v279, 0
    %v293 = vperm.slane %v279, 1
    %v306 = vperm.slane %v280, 0
    %v307 = vperm.slane %v280, 1
    %v308 = vperm.slane %v280, 2
    %v309 = vperm.slane %v280, 3
    %v310 = vperm.slane %v280, 4
    %v311 = vperm.slane %v280, 5
    %v312 = vperm.slane %v280, 6
    %v313 = vperm.slane %v280, 7
    %v314 = vperm.slane %v281, 0
    %v315 = vperm.slane %v281, 1
    %vm326 = vcmask 1040384
    %v327 = vsel %vm326, %v284, %v306
    %v328 = vsel %vm326, %v285, %v307
    %v329 = vsel %vm326, %v286, %v308
    %v330 = vsel %vm326, %v287, %v309
    %v331 = vsel %vm326, %v288, %v310
    %v332 = vsel %vm326, %v289, %v311
    %v333 = vsel %vm326, %v290, %v312
    %v334 = vsel %vm326, %v291, %v313
    %v335 = vsel %vm326, %v292, %v314
    %v336 = vsel %vm326, %v293, %v315
    %v337 = vpack.c.bf16 %v327, %v327
    %v338 = vpack.c.bf16 %v328, %v328
    %v339 = vpack.c.bf16 %v329, %v329
    %v340 = vpack.c.bf16 %v330, %v330
    %v341 = vpack.c.bf16 %v331, %v331
    %v342 = vpack.c.bf16 %v332, %v332
    %v343 = vpack.c.bf16 %v333, %v333
    %v344 = vpack.c.bf16 %v334, %v334
    %v345 = vpack.c.bf16 %v335, %v335
    %v346 = vpack.c.bf16 %v336, %v336
    %v347 = vld [vmem:[#allocation12] sm:$0xff]
    %v348 = vld [vmem:[#allocation12 + $0x8] sm:$0xff]
    %v349 = vld [vmem:[#allocation12 + $0x10] sm:$0xff]
    %v350 = vld [vmem:[#allocation12 + $0x18] sm:$0xff]
    %v351 = vld [vmem:[#allocation12 + $0x20] sm:$0xff]
    %v352 = vld [vmem:[#allocation12 + $0x28] sm:$0xff]
    %v353 = vld [vmem:[#allocation12 + $0x30] sm:$0xff]
    %v354 = vld [vmem:[#allocation12 + $0x38] sm:$0xff]
    %v355 = vld [vmem:[#allocation12 + $0x40] sm:$0xff]
    %v356 = vld [vmem:[#allocation12 + $0x48] sm:$0xff]
    %v357 = vld [vmem:[#allocation12 + $0x50] sm:$0xff]
    %v358 = vld [vmem:[#allocation12 + $0x58] sm:$0xff]
    %v359 = vld [vmem:[#allocation12 + $0x60] sm:$0xff]
    %v360 = vld [vmem:[#allocation12 + $0x68] sm:$0xff]
    %v361 = vld [vmem:[#allocation12 + $0x70] sm:$0xff]
    %v362 = vld [vmem:[#allocation12 + $0x78] sm:$0xff]
    %v363 = vld [vmem:[#allocation12 + $0x80] sm:$0xff]
    %v364 = vld [vmem:[#allocation12 + $0x88] sm:$0xff]
    %v365 = vld [vmem:[#allocation12 + $0x90] sm:$0xff]
    %v366 = vld [vmem:[#allocation12 + $0x98] sm:$0xff]
    %v367 = vld [vmem:[#allocation12 + $0xa0] sm:$0xff]
    %v368 = vld [vmem:[#allocation12 + $0xa8] sm:$0xff]
    %v369 = vld [vmem:[#allocation12 + $0xb0] sm:$0xff]
    %v370 = vld [vmem:[#allocation12 + $0xb8] sm:$0xff]
    %v371 = vld [vmem:[#allocation12 + $0xc0] sm:$0xff]
    %v372 = vld [vmem:[#allocation12 + $0xc8] sm:$0xff]
    %v373 = vld [vmem:[#allocation12 + $0xd0] sm:$0xff]
    %v374 = vld [vmem:[#allocation12 + $0xd8] sm:$0xff]
    %v375 = vld [vmem:[#allocation12 + $0xe0] sm:$0xff]
    %v376 = vld [vmem:[#allocation12 + $0xe8] sm:$0xff]
    %v377 = vld [vmem:[#allocation12 + $0xf0] sm:$0xff]
    %v378 = vld [vmem:[#allocation12 + $0xf8] sm:$0xff]
    %v379 = vld [vmem:[#allocation12 + $0x100] sm:$0xff]
    %v380 = vld [vmem:[#allocation12 + $0x108] sm:$0xff]
    %v381 = vld [vmem:[#allocation12 + $0x110] sm:$0xff]
    %v382 = vld [vmem:[#allocation12 + $0x118] sm:$0xff]
    %v383 = vld [vmem:[#allocation12 + $0x120] sm:$0xff]
    %v384 = vld [vmem:[#allocation12 + $0x128] sm:$0xff]
    %v385 = vld [vmem:[#allocation12 + $0x130] sm:$0xff]
    %v386 = vld [vmem:[#allocation12 + $0x138] sm:$0xff]
    %v387 = vld [vmem:[#allocation12 + $0x140] sm:$0xff]
    %v388 = vld [vmem:[#allocation12 + $0x148] sm:$0xff]
    %v389 = vld [vmem:[#allocation12 + $0x150] sm:$0xff]
    %v390 = vld [vmem:[#allocation12 + $0x158] sm:$0xff]
    %v391 = vld [vmem:[#allocation12 + $0x160] sm:$0xff]
    %v392 = vld [vmem:[#allocation12 + $0x168] sm:$0xff]
    %v393 = vld [vmem:[#allocation12 + $0x170] sm:$0xff]
    %v394 = vld [vmem:[#allocation12 + $0x178] sm:$0xff]
    %v395 = vld [vmem:[#allocation12 + $0x180] sm:$0xff]
    %v396 = vld [vmem:[#allocation12 + $0x188] sm:$0xff]
    %v397 = vld [vmem:[#allocation12 + $0x190] sm:$0xff]
    %v398 = vld [vmem:[#allocation12 + $0x198] sm:$0xff]
    %v399 = vld [vmem:[#allocation12 + $0x1a0] sm:$0xff]
    %v400 = vld [vmem:[#allocation12 + $0x1a8] sm:$0xff]
    %v401 = vld [vmem:[#allocation12 + $0x1b0] sm:$0xff]
    %v402 = vld [vmem:[#allocation12 + $0x1b8] sm:$0xff]
    %v403 = vld [vmem:[#allocation12 + $0x1c0] sm:$0xff]
    %v404 = vld [vmem:[#allocation12 + $0x1c8] sm:$0xff]
    %v405 = vld [vmem:[#allocation12 + $0x1d0] sm:$0xff]
    %v406 = vld [vmem:[#allocation12 + $0x1d8] sm:$0xff]
    %v407 = vld [vmem:[#allocation12 + $0x1e0] sm:$0xff]
    %v408 = vld [vmem:[#allocation12 + $0x1e8] sm:$0xff]
    %v409 = vld [vmem:[#allocation12 + $0x1f0] sm:$0xff]
    %v410 = vld [vmem:[#allocation12 + $0x1f8] sm:$0xff]
    %v411 = vld [vmem:[#allocation12 + $0x200] sm:$0xff]
    %v412 = vld [vmem:[#allocation12 + $0x208] sm:$0xff]
    %v413 = vld [vmem:[#allocation12 + $0x210] sm:$0xff]
    %v414 = vld [vmem:[#allocation12 + $0x218] sm:$0xff]
    %v415 = vld [vmem:[#allocation12 + $0x220] sm:$0xff]
    %v416 = vld [vmem:[#allocation12 + $0x228] sm:$0xff]
    %v417 = vld [vmem:[#allocation12 + $0x230] sm:$0xff]
    %v418 = vld [vmem:[#allocation12 + $0x238] sm:$0xff]
    %v419 = vld [vmem:[#allocation12 + $0x240] sm:$0xff]
    %v420 = vld [vmem:[#allocation12 + $0x248] sm:$0xff]
    %v421 = vld [vmem:[#allocation12 + $0x250] sm:$0xff]
    %v422 = vld [vmem:[#allocation12 + $0x258] sm:$0xff]
    %v423 = vld [vmem:[#allocation12 + $0x260] sm:$0xff]
    %v424 = vld [vmem:[#allocation12 + $0x268] sm:$0xff]
    %v425 = vld [vmem:[#allocation12 + $0x270] sm:$0xff]
    %v426 = vld [vmem:[#allocation12 + $0x278] sm:$0xff]
    %v427 = vld [vmem:[#allocation12 + $0x280] sm:$0xff]
    %v428 = vld [vmem:[#allocation12 + $0x288] sm:$0xff]
    %v429 = vld [vmem:[#allocation12 + $0x290] sm:$0xff]
    %v430 = vld [vmem:[#allocation12 + $0x298] sm:$0xff]
    %v431 = vld [vmem:[#allocation12 + $0x2a0] sm:$0xff]
    %v432 = vld [vmem:[#allocation12 + $0x2a8] sm:$0xff]
    %v433 = vld [vmem:[#allocation12 + $0x2b0] sm:$0xff]
    %v434 = vld [vmem:[#allocation12 + $0x2b8] sm:$0xff]
    %v435 = vld [vmem:[#allocation12 + $0x2c0] sm:$0xff]
    %v436 = vld [vmem:[#allocation12 + $0x2c8] sm:$0xff]
    %v437 = vld [vmem:[#allocation12 + $0x2d0] sm:$0xff]
    %v438 = vld [vmem:[#allocation12 + $0x2d8] sm:$0xff]
    %v439 = vld [vmem:[#allocation12 + $0x2e0] sm:$0xff]
    %v440 = vld [vmem:[#allocation12 + $0x2e8] sm:$0xff]
    %v441 = vld [vmem:[#allocation12 + $0x2f0] sm:$0xff]
    %v442 = vld [vmem:[#allocation12 + $0x2f8] sm:$0xff]
    %v443 = vld [vmem:[#allocation12 + $0x300] sm:$0xff]
    %v444 = vld [vmem:[#allocation12 + $0x308] sm:$0xff]
    %v445 = vld [vmem:[#allocation12 + $0x310] sm:$0xff]
    %v446 = vld [vmem:[#allocation12 + $0x318] sm:$0xff]
    %v447 = vld [vmem:[#allocation12 + $0x320] sm:$0xff]
    %v448 = vld [vmem:[#allocation12 + $0x328] sm:$0xff]
    %v449 = vld [vmem:[#allocation12 + $0x330] sm:$0xff]
    %v450 = vld [vmem:[#allocation12 + $0x338] sm:$0xff]
    %v451 = vld [vmem:[#allocation12 + $0x340] sm:$0xff]
    %v452 = vld [vmem:[#allocation12 + $0x348] sm:$0xff]
    %v453 = vld [vmem:[#allocation12 + $0x350] sm:$0xff]
    %v454 = vld [vmem:[#allocation12 + $0x358] sm:$0xff]
    %v455 = vld [vmem:[#allocation12 + $0x360] sm:$0xff]
    %v456 = vld [vmem:[#allocation12 + $0x368] sm:$0xff]
    %v457 = vld [vmem:[#allocation12 + $0x370] sm:$0xff]
    %v458 = vld [vmem:[#allocation12 + $0x378] sm:$0xff]
    %v459 = vld [vmem:[#allocation12 + $0x380] sm:$0xff]
    %v460 = vld [vmem:[#allocation12 + $0x388] sm:$0xff]
    %v461 = vld [vmem:[#allocation12 + $0x390] sm:$0xff]
    %v462 = vld [vmem:[#allocation12 + $0x398] sm:$0xff]
    %v463 = vld [vmem:[#allocation12 + $0x3a0] sm:$0xff]
    %v464 = vld [vmem:[#allocation12 + $0x3a8] sm:$0xff]
    %v465 = vld [vmem:[#allocation12 + $0x3b0] sm:$0xff]
    %v466 = vld [vmem:[#allocation12 + $0x3b8] sm:$0xff]
    %v467 = vld [vmem:[#allocation12 + $0x3c0] sm:$0xff]
    %v468 = vld [vmem:[#allocation12 + $0x3c8] sm:$0xff]
    %v469 = vld [vmem:[#allocation12 + $0x3d0] sm:$0xff]
    %v470 = vld [vmem:[#allocation12 + $0x3d8] sm:$0xff]
    %v471 = vld [vmem:[#allocation12 + $0x3e0] sm:$0xff]
    %v472 = vld [vmem:[#allocation12 + $0x3e8] sm:$0xff]
    %v473 = vld [vmem:[#allocation12 + $0x3f0] sm:$0xff]
    %v474 = vld [vmem:[#allocation12 + $0x3f8] sm:$0xff]
    %v475 = vld [vmem:[#allocation12 + $0x400] sm:$0xff]
    %v476 = vld [vmem:[#allocation12 + $0x408] sm:$0xff]
    %v477 = vld [vmem:[#allocation12 + $0x410] sm:$0xff]
    %v478 = vld [vmem:[#allocation12 + $0x418] sm:$0xff]
    %v479 = vld [vmem:[#allocation12 + $0x420] sm:$0xff]
    %v480 = vld [vmem:[#allocation12 + $0x428] sm:$0xff]
    %v481 = vld [vmem:[#allocation12 + $0x430] sm:$0xff]
    %v482 = vld [vmem:[#allocation12 + $0x438] sm:$0xff]
    %v483 = vld [vmem:[#allocation12 + $0x440] sm:$0xff]
    %v484 = vld [vmem:[#allocation12 + $0x448] sm:$0xff]
    %v485 = vld [vmem:[#allocation12 + $0x450] sm:$0xff]
    %v486 = vld [vmem:[#allocation12 + $0x458] sm:$0xff]
    %v487 = vld [vmem:[#allocation12 + $0x460] sm:$0xff]
    %v488 = vld [vmem:[#allocation12 + $0x468] sm:$0xff]
    %v489 = vld [vmem:[#allocation12 + $0x470] sm:$0xff]
    %v490 = vld [vmem:[#allocation12 + $0x478] sm:$0xff]
    %v491 = vld [vmem:[#allocation12 + $0x480] sm:$0xff]
    %v492 = vld [vmem:[#allocation12 + $0x488] sm:$0xff]
    %v493 = vld [vmem:[#allocation12 + $0x490] sm:$0xff]
    %v494 = vld [vmem:[#allocation12 + $0x498] sm:$0xff]
    %v495 = vld [vmem:[#allocation12 + $0x4a0] sm:$0xff]
    %v496 = vld [vmem:[#allocation12 + $0x4a8] sm:$0xff]
    %v497 = vld [vmem:[#allocation12 + $0x4b0] sm:$0xff]
    %v498 = vld [vmem:[#allocation12 + $0x4b8] sm:$0xff]
    %v499 = vld [vmem:[#allocation12 + $0x4c0] sm:$0xff]
    %v500 = vld [vmem:[#allocation12 + $0x4c8] sm:$0xff]
    %v501 = vld [vmem:[#allocation12 + $0x4d0] sm:$0xff]
    %v502 = vld [vmem:[#allocation12 + $0x4d8] sm:$0xff]
    %v503 = vld [vmem:[#allocation12 + $0x4e0] sm:$0xff]
    %v504 = vld [vmem:[#allocation12 + $0x4e8] sm:$0xff]
    %v505 = vld [vmem:[#allocation12 + $0x4f0] sm:$0xff]
    %v506 = vld [vmem:[#allocation12 + $0x4f8] sm:$0xff]
    %v507 = vunpack.c.0.s8 %v347
    %v508 = vunpack.c.0.s8 %v348
    %v509 = vunpack.c.0.s8 %v349
    %v510 = vunpack.c.0.s8 %v350
    %v511 = vunpack.c.1.s8 %v347
    %v512 = vunpack.c.1.s8 %v348
    %v513 = vunpack.c.1.s8 %v349
    %v514 = vunpack.c.1.s8 %v350
    %v515 = vunpack.c.2.s8 %v347
    %v516 = vunpack.c.2.s8 %v348
    %v517 = vunpack.c.2.s8 %v349
    %v518 = vunpack.c.2.s8 %v350
    %v519 = vunpack.c.3.s8 %v347
    %v520 = vunpack.c.3.s8 %v348
    %v521 = vunpack.c.3.s8 %v349
    %v522 = vunpack.c.3.s8 %v350
    %v523 = vunpack.c.0.s8 %v351
    %v524 = vunpack.c.0.s8 %v352
    %v525 = vunpack.c.0.s8 %v353
    %v526 = vunpack.c.0.s8 %v354
    %v527 = vunpack.c.1.s8 %v351
    %v528 = vunpack.c.1.s8 %v352
    %v529 = vunpack.c.1.s8 %v353
    %v530 = vunpack.c.1.s8 %v354
    %v531 = vunpack.c.2.s8 %v351
    %v532 = vunpack.c.2.s8 %v352
    %v533 = vunpack.c.2.s8 %v353
    %v534 = vunpack.c.2.s8 %v354
    %v535 = vunpack.c.3.s8 %v351
    %v536 = vunpack.c.3.s8 %v352
    %v537 = vunpack.c.3.s8 %v353
    %v538 = vunpack.c.3.s8 %v354
    %v539 = vunpack.c.0.s8 %v355
    %v540 = vunpack.c.0.s8 %v356
    %v541 = vunpack.c.0.s8 %v357
    %v542 = vunpack.c.0.s8 %v358
    %v543 = vunpack.c.1.s8 %v355
    %v544 = vunpack.c.1.s8 %v356
    %v545 = vunpack.c.1.s8 %v357
    %v546 = vunpack.c.1.s8 %v358
    %v547 = vunpack.c.2.s8 %v355
    %v548 = vunpack.c.2.s8 %v356
    %v549 = vunpack.c.2.s8 %v357
    %v550 = vunpack.c.2.s8 %v358
    %v551 = vunpack.c.3.s8 %v355
    %v552 = vunpack.c.3.s8 %v356
    %v553 = vunpack.c.3.s8 %v357
    %v554 = vunpack.c.3.s8 %v358
    %v555 = vunpack.c.0.s8 %v359
    %v556 = vunpack.c.0.s8 %v360
    %v557 = vunpack.c.0.s8 %v361
    %v558 = vunpack.c.0.s8 %v362
    %v559 = vunpack.c.1.s8 %v359
    %v560 = vunpack.c.1.s8 %v360
    %v561 = vunpack.c.1.s8 %v361
    %v562 = vunpack.c.1.s8 %v362
    %v563 = vunpack.c.2.s8 %v359
    %v564 = vunpack.c.2.s8 %v360
    %v565 = vunpack.c.2.s8 %v361
    %v566 = vunpack.c.2.s8 %v362
    %v567 = vunpack.c.3.s8 %v359
    %v568 = vunpack.c.3.s8 %v360
    %v569 = vunpack.c.3.s8 %v361
    %v570 = vunpack.c.3.s8 %v362
    %v571 = vunpack.c.0.s8 %v363
    %v572 = vunpack.c.0.s8 %v364
    %v573 = vunpack.c.0.s8 %v365
    %v574 = vunpack.c.0.s8 %v366
    %v575 = vunpack.c.1.s8 %v363
    %v576 = vunpack.c.1.s8 %v364
    %v577 = vunpack.c.1.s8 %v365
    %v578 = vunpack.c.1.s8 %v366
    %v579 = vunpack.c.2.s8 %v363
    %v580 = vunpack.c.2.s8 %v364
    %v581 = vunpack.c.2.s8 %v365
    %v582 = vunpack.c.2.s8 %v366
    %v583 = vunpack.c.3.s8 %v363
    %v584 = vunpack.c.3.s8 %v364
    %v585 = vunpack.c.3.s8 %v365
    %v586 = vunpack.c.3.s8 %v366
    %v587 = vunpack.c.0.s8 %v367
    %v588 = vunpack.c.0.s8 %v368
    %v589 = vunpack.c.0.s8 %v369
    %v590 = vunpack.c.0.s8 %v370
    %v591 = vunpack.c.1.s8 %v367
    %v592 = vunpack.c.1.s8 %v368
    %v593 = vunpack.c.1.s8 %v369
    %v594 = vunpack.c.1.s8 %v370
    %v595 = vunpack.c.2.s8 %v367
    %v596 = vunpack.c.2.s8 %v368
    %v597 = vunpack.c.2.s8 %v369
    %v598 = vunpack.c.2.s8 %v370
    %v599 = vunpack.c.3.s8 %v367
    %v600 = vunpack.c.3.s8 %v368
    %v601 = vunpack.c.3.s8 %v369
    %v602 = vunpack.c.3.s8 %v370
    %v603 = vunpack.c.0.s8 %v371
    %v604 = vunpack.c.0.s8 %v372
    %v605 = vunpack.c.0.s8 %v373
    %v606 = vunpack.c.0.s8 %v374
    %v607 = vunpack.c.1.s8 %v371
    %v608 = vunpack.c.1.s8 %v372
    %v609 = vunpack.c.1.s8 %v373
    %v610 = vunpack.c.1.s8 %v374
    %v611 = vunpack.c.2.s8 %v371
    %v612 = vunpack.c.2.s8 %v372
    %v613 = vunpack.c.2.s8 %v373
    %v614 = vunpack.c.2.s8 %v374
    %v615 = vunpack.c.3.s8 %v371
    %v616 = vunpack.c.3.s8 %v372
    %v617 = vunpack.c.3.s8 %v373
    %v618 = vunpack.c.3.s8 %v374
    %v619 = vunpack.c.0.s8 %v375
    %v620 = vunpack.c.0.s8 %v376
    %v621 = vunpack.c.0.s8 %v377
    %v622 = vunpack.c.0.s8 %v378
    %v623 = vunpack.c.1.s8 %v375
    %v624 = vunpack.c.1.s8 %v376
    %v625 = vunpack.c.1.s8 %v377
    %v626 = vunpack.c.1.s8 %v378
    %v627 = vunpack.c.2.s8 %v375
    %v628 = vunpack.c.2.s8 %v376
    %v629 = vunpack.c.2.s8 %v377
    %v630 = vunpack.c.2.s8 %v378
    %v631 = vunpack.c.3.s8 %v375
    %v632 = vunpack.c.3.s8 %v376
    %v633 = vunpack.c.3.s8 %v377
    %v634 = vunpack.c.3.s8 %v378
    %v635 = vunpack.c.0.s8 %v379
    %v636 = vunpack.c.0.s8 %v380
    %v637 = vunpack.c.0.s8 %v381
    %v638 = vunpack.c.0.s8 %v382
    %v639 = vunpack.c.1.s8 %v379
    %v640 = vunpack.c.1.s8 %v380
    %v641 = vunpack.c.1.s8 %v381
    %v642 = vunpack.c.1.s8 %v382
    %v643 = vunpack.c.2.s8 %v379
    %v644 = vunpack.c.2.s8 %v380
    %v645 = vunpack.c.2.s8 %v381
    %v646 = vunpack.c.2.s8 %v382
    %v647 = vunpack.c.3.s8 %v379
    %v648 = vunpack.c.3.s8 %v380
    %v649 = vunpack.c.3.s8 %v381
    %v650 = vunpack.c.3.s8 %v382
    %v651 = vunpack.c.0.s8 %v383
    %v652 = vunpack.c.0.s8 %v384
    %v653 = vunpack.c.0.s8 %v385
    %v654 = vunpack.c.0.s8 %v386
    %v655 = vunpack.c.1.s8 %v383
    %v656 = vunpack.c.1.s8 %v384
    %v657 = vunpack.c.1.s8 %v385
    %v658 = vunpack.c.1.s8 %v386
    %v659 = vunpack.c.2.s8 %v383
    %v660 = vunpack.c.2.s8 %v384
    %v661 = vunpack.c.2.s8 %v385
    %v662 = vunpack.c.2.s8 %v386
    %v663 = vunpack.c.3.s8 %v383
    %v664 = vunpack.c.3.s8 %v384
    %v665 = vunpack.c.3.s8 %v385
    %v666 = vunpack.c.3.s8 %v386
    %v667 = vunpack.c.0.s8 %v387
    %v668 = vunpack.c.0.s8 %v388
    %v669 = vunpack.c.0.s8 %v389
    %v670 = vunpack.c.0.s8 %v390
    %v671 = vunpack.c.1.s8 %v387
    %v672 = vunpack.c.1.s8 %v388
    %v673 = vunpack.c.1.s8 %v389
    %v674 = vunpack.c.1.s8 %v390
    %v675 = vunpack.c.2.s8 %v387
    %v676 = vunpack.c.2.s8 %v388
    %v677 = vunpack.c.2.s8 %v389
    %v678 = vunpack.c.2.s8 %v390
    %v679 = vunpack.c.3.s8 %v387
    %v680 = vunpack.c.3.s8 %v388
    %v681 = vunpack.c.3.s8 %v389
    %v682 = vunpack.c.3.s8 %v390
    %v683 = vunpack.c.0.s8 %v391
    %v684 = vunpack.c.0.s8 %v392
    %v685 = vunpack.c.0.s8 %v393
    %v686 = vunpack.c.0.s8 %v394
    %v687 = vunpack.c.1.s8 %v391
    %v688 = vunpack.c.1.s8 %v392
    %v689 = vunpack.c.1.s8 %v393
    %v690 = vunpack.c.1.s8 %v394
    %v691 = vunpack.c.2.s8 %v391
    %v692 = vunpack.c.2.s8 %v392
    %v693 = vunpack.c.2.s8 %v393
    %v694 = vunpack.c.2.s8 %v394
    %v695 = vunpack.c.3.s8 %v391
    %v696 = vunpack.c.3.s8 %v392
    %v697 = vunpack.c.3.s8 %v393
    %v698 = vunpack.c.3.s8 %v394
    %v699 = vunpack.c.0.s8 %v395
    %v700 = vunpack.c.0.s8 %v396
    %v701 = vunpack.c.0.s8 %v397
    %v702 = vunpack.c.0.s8 %v398
    %v703 = vunpack.c.1.s8 %v395
    %v704 = vunpack.c.1.s8 %v396
    %v705 = vunpack.c.1.s8 %v397
    %v706 = vunpack.c.1.s8 %v398
    %v707 = vunpack.c.2.s8 %v395
    %v708 = vunpack.c.2.s8 %v396
    %v709 = vunpack.c.2.s8 %v397
    %v710 = vunpack.c.2.s8 %v398
    %v711 = vunpack.c.3.s8 %v395
    %v712 = vunpack.c.3.s8 %v396
    %v713 = vunpack.c.3.s8 %v397
    %v714 = vunpack.c.3.s8 %v398
    %v715 = vunpack.c.0.s8 %v399
    %v716 = vunpack.c.0.s8 %v400
    %v717 = vunpack.c.0.s8 %v401
    %v718 = vunpack.c.0.s8 %v402
    %v719 = vunpack.c.1.s8 %v399
    %v720 = vunpack.c.1.s8 %v400
    %v721 = vunpack.c.1.s8 %v401
    %v722 = vunpack.c.1.s8 %v402
    %v723 = vunpack.c.2.s8 %v399
    %v724 = vunpack.c.2.s8 %v400
    %v725 = vunpack.c.2.s8 %v401
    %v726 = vunpack.c.2.s8 %v402
    %v727 = vunpack.c.3.s8 %v399
    %v728 = vunpack.c.3.s8 %v400
    %v729 = vunpack.c.3.s8 %v401
    %v730 = vunpack.c.3.s8 %v402
    %v731 = vunpack.c.0.s8 %v403
    %v732 = vunpack.c.0.s8 %v404
    %v733 = vunpack.c.0.s8 %v405
    %v734 = vunpack.c.0.s8 %v406
    %v735 = vunpack.c.1.s8 %v403
    %v736 = vunpack.c.1.s8 %v404
    %v737 = vunpack.c.1.s8 %v405
    %v738 = vunpack.c.1.s8 %v406
    %v739 = vunpack.c.2.s8 %v403
    %v740 = vunpack.c.2.s8 %v404
    %v741 = vunpack.c.2.s8 %v405
    %v742 = vunpack.c.2.s8 %v406
    %v743 = vunpack.c.3.s8 %v403
    %v744 = vunpack.c.3.s8 %v404
    %v745 = vunpack.c.3.s8 %v405
    %v746 = vunpack.c.3.s8 %v406
    %v747 = vunpack.c.0.s8 %v407
    %v748 = vunpack.c.0.s8 %v408
    %v749 = vunpack.c.0.s8 %v409
    %v750 = vunpack.c.0.s8 %v410
    %v751 = vunpack.c.1.s8 %v407
    %v752 = vunpack.c.1.s8 %v408
    %v753 = vunpack.c.1.s8 %v409
    %v754 = vunpack.c.1.s8 %v410
    %v755 = vunpack.c.2.s8 %v407
    %v756 = vunpack.c.2.s8 %v408
    %v757 = vunpack.c.2.s8 %v409
    %v758 = vunpack.c.2.s8 %v410
    %v759 = vunpack.c.3.s8 %v407
    %v760 = vunpack.c.3.s8 %v408
    %v761 = vunpack.c.3.s8 %v409
    %v762 = vunpack.c.3.s8 %v410
    %v763 = vunpack.c.0.s8 %v411
    %v764 = vunpack.c.0.s8 %v412
    %v765 = vunpack.c.0.s8 %v413
    %v766 = vunpack.c.0.s8 %v414
    %v767 = vunpack.c.1.s8 %v411
    %v768 = vunpack.c.1.s8 %v412
    %v769 = vunpack.c.1.s8 %v413
    %v770 = vunpack.c.1.s8 %v414
    %v771 = vunpack.c.2.s8 %v411
    %v772 = vunpack.c.2.s8 %v412
    %v773 = vunpack.c.2.s8 %v413
    %v774 = vunpack.c.2.s8 %v414
    %v775 = vunpack.c.3.s8 %v411
    %v776 = vunpack.c.3.s8 %v412
    %v777 = vunpack.c.3.s8 %v413
    %v778 = vunpack.c.3.s8 %v414
    %v779 = vunpack.c.0.s8 %v415
    %v780 = vunpack.c.0.s8 %v416
    %v781 = vunpack.c.0.s8 %v417
    %v782 = vunpack.c.0.s8 %v418
    %v783 = vunpack.c.1.s8 %v415
    %v784 = vunpack.c.1.s8 %v416
    %v785 = vunpack.c.1.s8 %v417
    %v786 = vunpack.c.1.s8 %v418
    %v787 = vunpack.c.2.s8 %v415
    %v788 = vunpack.c.2.s8 %v416
    %v789 = vunpack.c.2.s8 %v417
    %v790 = vunpack.c.2.s8 %v418
    %v791 = vunpack.c.3.s8 %v415
    %v792 = vunpack.c.3.s8 %v416
    %v793 = vunpack.c.3.s8 %v417
    %v794 = vunpack.c.3.s8 %v418
    %v795 = vunpack.c.0.s8 %v419
    %v796 = vunpack.c.0.s8 %v420
    %v797 = vunpack.c.0.s8 %v421
    %v798 = vunpack.c.0.s8 %v422
    %v799 = vunpack.c.1.s8 %v419
    %v800 = vunpack.c.1.s8 %v420
    %v801 = vunpack.c.1.s8 %v421
    %v802 = vunpack.c.1.s8 %v422
    %v803 = vunpack.c.2.s8 %v419
    %v804 = vunpack.c.2.s8 %v420
    %v805 = vunpack.c.2.s8 %v421
    %v806 = vunpack.c.2.s8 %v422
    %v807 = vunpack.c.3.s8 %v419
    %v808 = vunpack.c.3.s8 %v420
    %v809 = vunpack.c.3.s8 %v421
    %v810 = vunpack.c.3.s8 %v422
    %v811 = vunpack.c.0.s8 %v423
    %v812 = vunpack.c.0.s8 %v424
    %v813 = vunpack.c.0.s8 %v425
    %v814 = vunpack.c.0.s8 %v426
    %v815 = vunpack.c.1.s8 %v423
    %v816 = vunpack.c.1.s8 %v424
    %v817 = vunpack.c.1.s8 %v425
    %v818 = vunpack.c.1.s8 %v426
    %v819 = vunpack.c.2.s8 %v423
    %v820 = vunpack.c.2.s8 %v424
    %v821 = vunpack.c.2.s8 %v425
    %v822 = vunpack.c.2.s8 %v426
    %v823 = vunpack.c.3.s8 %v423
    %v824 = vunpack.c.3.s8 %v424
    %v825 = vunpack.c.3.s8 %v425
    %v826 = vunpack.c.3.s8 %v426
    %v827 = vunpack.c.0.s8 %v427
    %v828 = vunpack.c.0.s8 %v428
    %v829 = vunpack.c.0.s8 %v429
    %v830 = vunpack.c.0.s8 %v430
    %v831 = vunpack.c.1.s8 %v427
    %v832 = vunpack.c.1.s8 %v428
    %v833 = vunpack.c.1.s8 %v429
    %v834 = vunpack.c.1.s8 %v430
    %v835 = vunpack.c.2.s8 %v427
    %v836 = vunpack.c.2.s8 %v428
    %v837 = vunpack.c.2.s8 %v429
    %v838 = vunpack.c.2.s8 %v430
    %v839 = vunpack.c.3.s8 %v427
    %v840 = vunpack.c.3.s8 %v428
    %v841 = vunpack.c.3.s8 %v429
    %v842 = vunpack.c.3.s8 %v430
    %v843 = vunpack.c.0.s8 %v431
    %v844 = vunpack.c.0.s8 %v432
    %v845 = vunpack.c.0.s8 %v433
    %v846 = vunpack.c.0.s8 %v434
    %v847 = vunpack.c.1.s8 %v431
    %v848 = vunpack.c.1.s8 %v432
    %v849 = vunpack.c.1.s8 %v433
    %v850 = vunpack.c.1.s8 %v434
    %v851 = vunpack.c.2.s8 %v431
    %v852 = vunpack.c.2.s8 %v432
    %v853 = vunpack.c.2.s8 %v433
    %v854 = vunpack.c.2.s8 %v434
    %v855 = vunpack.c.3.s8 %v431
    %v856 = vunpack.c.3.s8 %v432
    %v857 = vunpack.c.3.s8 %v433
    %v858 = vunpack.c.3.s8 %v434
    %v859 = vunpack.c.0.s8 %v435
    %v860 = vunpack.c.0.s8 %v436
    %v861 = vunpack.c.0.s8 %v437
    %v862 = vunpack.c.0.s8 %v438
    %v863 = vunpack.c.1.s8 %v435
    %v864 = vunpack.c.1.s8 %v436
    %v865 = vunpack.c.1.s8 %v437
    %v866 = vunpack.c.1.s8 %v438
    %v867 = vunpack.c.2.s8 %v435
    %v868 = vunpack.c.2.s8 %v436
    %v869 = vunpack.c.2.s8 %v437
    %v870 = vunpack.c.2.s8 %v438
    %v871 = vunpack.c.3.s8 %v435
    %v872 = vunpack.c.3.s8 %v436
    %v873 = vunpack.c.3.s8 %v437
    %v874 = vunpack.c.3.s8 %v438
    %v875 = vunpack.c.0.s8 %v439
    %v876 = vunpack.c.0.s8 %v440
    %v877 = vunpack.c.0.s8 %v441
    %v878 = vunpack.c.0.s8 %v442
    %v879 = vunpack.c.1.s8 %v439
    %v880 = vunpack.c.1.s8 %v440
    %v881 = vunpack.c.1.s8 %v441
    %v882 = vunpack.c.1.s8 %v442
    %v883 = vunpack.c.2.s8 %v439
    %v884 = vunpack.c.2.s8 %v440
    %v885 = vunpack.c.2.s8 %v441
    %v886 = vunpack.c.2.s8 %v442
    %v887 = vunpack.c.3.s8 %v439
    %v888 = vunpack.c.3.s8 %v440
    %v889 = vunpack.c.3.s8 %v441
    %v890 = vunpack.c.3.s8 %v442
    %v891 = vunpack.c.0.s8 %v443
    %v892 = vunpack.c.0.s8 %v444
    %v893 = vunpack.c.0.s8 %v445
    %v894 = vunpack.c.0.s8 %v446
    %v895 = vunpack.c.1.s8 %v443
    %v896 = vunpack.c.1.s8 %v444
    %v897 = vunpack.c.1.s8 %v445
    %v898 = vunpack.c.1.s8 %v446
    %v899 = vunpack.c.2.s8 %v443
    %v900 = vunpack.c.2.s8 %v444
    %v901 = vunpack.c.2.s8 %v445
    %v902 = vunpack.c.2.s8 %v446
    %v903 = vunpack.c.3.s8 %v443
    %v904 = vunpack.c.3.s8 %v444
    %v905 = vunpack.c.3.s8 %v445
    %v906 = vunpack.c.3.s8 %v446
    %v907 = vunpack.c.0.s8 %v447
    %v908 = vunpack.c.0.s8 %v448
    %v909 = vunpack.c.0.s8 %v449
    %v910 = vunpack.c.0.s8 %v450
    %v911 = vunpack.c.1.s8 %v447
    %v912 = vunpack.c.1.s8 %v448
    %v913 = vunpack.c.1.s8 %v449
    %v914 = vunpack.c.1.s8 %v450
    %v915 = vunpack.c.2.s8 %v447
    %v916 = vunpack.c.2.s8 %v448
    %v917 = vunpack.c.2.s8 %v449
    %v918 = vunpack.c.2.s8 %v450
    %v919 = vunpack.c.3.s8 %v447
    %v920 = vunpack.c.3.s8 %v448
    %v921 = vunpack.c.3.s8 %v449
    %v922 = vunpack.c.3.s8 %v450
    %v923 = vunpack.c.0.s8 %v451
    %v924 = vunpack.c.0.s8 %v452
    %v925 = vunpack.c.0.s8 %v453
    %v926 = vunpack.c.0.s8 %v454
    %v927 = vunpack.c.1.s8 %v451
    %v928 = vunpack.c.1.s8 %v452
    %v929 = vunpack.c.1.s8 %v453
    %v930 = vunpack.c.1.s8 %v454
    %v931 = vunpack.c.2.s8 %v451
    %v932 = vunpack.c.2.s8 %v452
    %v933 = vunpack.c.2.s8 %v453
    %v934 = vunpack.c.2.s8 %v454
    %v935 = vunpack.c.3.s8 %v451
    %v936 = vunpack.c.3.s8 %v452
    %v937 = vunpack.c.3.s8 %v453
    %v938 = vunpack.c.3.s8 %v454
    %v939 = vunpack.c.0.s8 %v455
    %v940 = vunpack.c.0.s8 %v456
    %v941 = vunpack.c.0.s8 %v457
    %v942 = vunpack.c.0.s8 %v458
    %v943 = vunpack.c.1.s8 %v455
    %v944 = vunpack.c.1.s8 %v456
    %v945 = vunpack.c.1.s8 %v457
    %v946 = vunpack.c.1.s8 %v458
    %v947 = vunpack.c.2.s8 %v455
    %v948 = vunpack.c.2.s8 %v456
    %v949 = vunpack.c.2.s8 %v457
    %v950 = vunpack.c.2.s8 %v458
    %v951 = vunpack.c.3.s8 %v455
    %v952 = vunpack.c.3.s8 %v456
    %v953 = vunpack.c.3.s8 %v457
    %v954 = vunpack.c.3.s8 %v458
    %v955 = vunpack.c.0.s8 %v459
    %v956 = vunpack.c.0.s8 %v460
    %v957 = vunpack.c.0.s8 %v461
    %v958 = vunpack.c.0.s8 %v462
    %v959 = vunpack.c.1.s8 %v459
    %v960 = vunpack.c.1.s8 %v460
    %v961 = vunpack.c.1.s8 %v461
    %v962 = vunpack.c.1.s8 %v462
    %v963 = vunpack.c.2.s8 %v459
    %v964 = vunpack.c.2.s8 %v460
    %v965 = vunpack.c.2.s8 %v461
    %v966 = vunpack.c.2.s8 %v462
    %v967 = vunpack.c.3.s8 %v459
    %v968 = vunpack.c.3.s8 %v460
    %v969 = vunpack.c.3.s8 %v461
    %v970 = vunpack.c.3.s8 %v462
    %v971 = vunpack.c.0.s8 %v463
    %v972 = vunpack.c.0.s8 %v464
    %v973 = vunpack.c.0.s8 %v465
    %v974 = vunpack.c.0.s8 %v466
    %v975 = vunpack.c.1.s8 %v463
    %v976 = vunpack.c.1.s8 %v464
    %v977 = vunpack.c.1.s8 %v465
    %v978 = vunpack.c.1.s8 %v466
    %v979 = vunpack.c.2.s8 %v463
    %v980 = vunpack.c.2.s8 %v464
    %v981 = vunpack.c.2.s8 %v465
    %v982 = vunpack.c.2.s8 %v466
    %v983 = vunpack.c.3.s8 %v463
    %v984 = vunpack.c.3.s8 %v464
    %v985 = vunpack.c.3.s8 %v465
    %v986 = vunpack.c.3.s8 %v466
    %v987 = vunpack.c.0.s8 %v467
    %v988 = vunpack.c.0.s8 %v468
    %v989 = vunpack.c.0.s8 %v469
    %v990 = vunpack.c.0.s8 %v470
    %v991 = vunpack.c.1.s8 %v467
    %v992 = vunpack.c.1.s8 %v468
    %v993 = vunpack.c.1.s8 %v469
    %v994 = vunpack.c.1.s8 %v470
    %v995 = vunpack.c.2.s8 %v467
    %v996 = vunpack.c.2.s8 %v468
    %v997 = vunpack.c.2.s8 %v469
    %v998 = vunpack.c.2.s8 %v470
    %v999 = vunpack.c.3.s8 %v467
    %v1000 = vunpack.c.3.s8 %v468
    %v1001 = vunpack.c.3.s8 %v469
    %v1002 = vunpack.c.3.s8 %v470
    %v1003 = vunpack.c.0.s8 %v471
    %v1004 = vunpack.c.0.s8 %v472
    %v1005 = vunpack.c.0.s8 %v473
    %v1006 = vunpack.c.0.s8 %v474
    %v1007 = vunpack.c.1.s8 %v471
    %v1008 = vunpack.c.1.s8 %v472
    %v1009 = vunpack.c.1.s8 %v473
    %v1010 = vunpack.c.1.s8 %v474
    %v1011 = vunpack.c.2.s8 %v471
    %v1012 = vunpack.c.2.s8 %v472
    %v1013 = vunpack.c.2.s8 %v473
    %v1014 = vunpack.c.2.s8 %v474
    %v1015 = vunpack.c.3.s8 %v471
    %v1016 = vunpack.c.3.s8 %v472
    %v1017 = vunpack.c.3.s8 %v473
    %v1018 = vunpack.c.3.s8 %v474
    %v1019 = vunpack.c.0.s8 %v475
    %v1020 = vunpack.c.0.s8 %v476
    %v1021 = vunpack.c.0.s8 %v477
    %v1022 = vunpack.c.0.s8 %v478
    %v1023 = vunpack.c.1.s8 %v475
    %v1024 = vunpack.c.1.s8 %v476
    %v1025 = vunpack.c.1.s8 %v477
    %v1026 = vunpack.c.1.s8 %v478
    %v1027 = vunpack.c.2.s8 %v475
    %v1028 = vunpack.c.2.s8 %v476
    %v1029 = vunpack.c.2.s8 %v477
    %v1030 = vunpack.c.2.s8 %v478
    %v1031 = vunpack.c.3.s8 %v475
    %v1032 = vunpack.c.3.s8 %v476
    %v1033 = vunpack.c.3.s8 %v477
    %v1034 = vunpack.c.3.s8 %v478
    %v1035 = vunpack.c.0.s8 %v479
    %v1036 = vunpack.c.0.s8 %v480
    %v1037 = vunpack.c.0.s8 %v481
    %v1038 = vunpack.c.0.s8 %v482
    %v1039 = vunpack.c.1.s8 %v479
    %v1040 = vunpack.c.1.s8 %v480
    %v1041 = vunpack.c.1.s8 %v481
    %v1042 = vunpack.c.1.s8 %v482
    %v1043 = vunpack.c.2.s8 %v479
    %v1044 = vunpack.c.2.s8 %v480
    %v1045 = vunpack.c.2.s8 %v481
    %v1046 = vunpack.c.2.s8 %v482
    %v1047 = vunpack.c.3.s8 %v479
    %v1048 = vunpack.c.3.s8 %v480
    %v1049 = vunpack.c.3.s8 %v481
    %v1050 = vunpack.c.3.s8 %v482
    %v1051 = vunpack.c.0.s8 %v483
    %v1052 = vunpack.c.0.s8 %v484
    %v1053 = vunpack.c.0.s8 %v485
    %v1054 = vunpack.c.0.s8 %v486
    %v1055 = vunpack.c.1.s8 %v483
    %v1056 = vunpack.c.1.s8 %v484
    %v1057 = vunpack.c.1.s8 %v485
    %v1058 = vunpack.c.1.s8 %v486
    %v1059 = vunpack.c.2.s8 %v483
    %v1060 = vunpack.c.2.s8 %v484
    %v1061 = vunpack.c.2.s8 %v485
    %v1062 = vunpack.c.2.s8 %v486
    %v1063 = vunpack.c.3.s8 %v483
    %v1064 = vunpack.c.3.s8 %v484
    %v1065 = vunpack.c.3.s8 %v485
    %v1066 = vunpack.c.3.s8 %v486
    %v1067 = vunpack.c.0.s8 %v487
    %v1068 = vunpack.c.0.s8 %v488
    %v1069 = vunpack.c.0.s8 %v489
    %v1070 = vunpack.c.0.s8 %v490
    %v1071 = vunpack.c.1.s8 %v487
    %v1072 = vunpack.c.1.s8 %v488
    %v1073 = vunpack.c.1.s8 %v489
    %v1074 = vunpack.c.1.s8 %v490
    %v1075 = vunpack.c.2.s8 %v487
    %v1076 = vunpack.c.2.s8 %v488
    %v1077 = vunpack.c.2.s8 %v489
    %v1078 = vunpack.c.2.s8 %v490
    %v1079 = vunpack.c.3.s8 %v487
    %v1080 = vunpack.c.3.s8 %v488
    %v1081 = vunpack.c.3.s8 %v489
    %v1082 = vunpack.c.3.s8 %v490
    %v1083 = vunpack.c.0.s8 %v491
    %v1084 = vunpack.c.0.s8 %v492
    %v1085 = vunpack.c.0.s8 %v493
    %v1086 = vunpack.c.0.s8 %v494
    %v1087 = vunpack.c.1.s8 %v491
    %v1088 = vunpack.c.1.s8 %v492
    %v1089 = vunpack.c.1.s8 %v493
    %v1090 = vunpack.c.1.s8 %v494
    %v1091 = vunpack.c.2.s8 %v491
    %v1092 = vunpack.c.2.s8 %v492
    %v1093 = vunpack.c.2.s8 %v493
    %v1094 = vunpack.c.2.s8 %v494
    %v1095 = vunpack.c.3.s8 %v491
    %v1096 = vunpack.c.3.s8 %v492
    %v1097 = vunpack.c.3.s8 %v493
    %v1098 = vunpack.c.3.s8 %v494
    %v1099 = vunpack.c.0.s8 %v495
    %v1100 = vunpack.c.0.s8 %v496
    %v1101 = vunpack.c.0.s8 %v497
    %v1102 = vunpack.c.0.s8 %v498
    %v1103 = vunpack.c.1.s8 %v495
    %v1104 = vunpack.c.1.s8 %v496
    %v1105 = vunpack.c.1.s8 %v497
    %v1106 = vunpack.c.1.s8 %v498
    %v1107 = vunpack.c.2.s8 %v495
    %v1108 = vunpack.c.2.s8 %v496
    %v1109 = vunpack.c.2.s8 %v497
    %v1110 = vunpack.c.2.s8 %v498
    %v1111 = vunpack.c.3.s8 %v495
    %v1112 = vunpack.c.3.s8 %v496
    %v1113 = vunpack.c.3.s8 %v497
    %v1114 = vunpack.c.3.s8 %v498
    %v1115 = vunpack.c.0.s8 %v499
    %v1116 = vunpack.c.0.s8 %v500
    %v1117 = vunpack.c.0.s8 %v501
    %v1118 = vunpack.c.0.s8 %v502
    %v1119 = vunpack.c.1.s8 %v499
    %v1120 = vunpack.c.1.s8 %v500
    %v1121 = vunpack.c.1.s8 %v501
    %v1122 = vunpack.c.1.s8 %v502
    %v1123 = vunpack.c.2.s8 %v499
    %v1124 = vunpack.c.2.s8 %v500
    %v1125 = vunpack.c.2.s8 %v501
    %v1126 = vunpack.c.2.s8 %v502
    %v1127 = vunpack.c.3.s8 %v499
    %v1128 = vunpack.c.3.s8 %v500
    %v1129 = vunpack.c.3.s8 %v501
    %v1130 = vunpack.c.3.s8 %v502
    %v1131 = vunpack.c.0.s8 %v503
    %v1132 = vunpack.c.0.s8 %v504
    %v1133 = vunpack.c.0.s8 %v505
    %v1134 = vunpack.c.0.s8 %v506
    %v1135 = vunpack.c.1.s8 %v503
    %v1136 = vunpack.c.1.s8 %v504
    %v1137 = vunpack.c.1.s8 %v505
    %v1138 = vunpack.c.1.s8 %v506
    %v1139 = vunpack.c.2.s8 %v503
    %v1140 = vunpack.c.2.s8 %v504
    %v1141 = vunpack.c.2.s8 %v505
    %v1142 = vunpack.c.2.s8 %v506
    %v1143 = vunpack.c.3.s8 %v503
    %v1144 = vunpack.c.3.s8 %v504
    %v1145 = vunpack.c.3.s8 %v505
    %v1146 = vunpack.c.3.s8 %v506
    %v1147 = vcvt.s32.f32 %v507
    %v1148 = vcvt.s32.f32 %v508
    %v1149 = vcvt.s32.f32 %v509
    %v1150 = vcvt.s32.f32 %v510
    %v1151 = vcvt.s32.f32 %v511
    %v1152 = vcvt.s32.f32 %v512
    %v1153 = vcvt.s32.f32 %v513
    %v1154 = vcvt.s32.f32 %v514
    %v1155 = vcvt.s32.f32 %v515
    %v1156 = vcvt.s32.f32 %v516
    %v1157 = vcvt.s32.f32 %v517
    %v1158 = vcvt.s32.f32 %v518
    %v1159 = vcvt.s32.f32 %v519
    %v1160 = vcvt.s32.f32 %v520
    %v1161 = vcvt.s32.f32 %v521
    %v1162 = vcvt.s32.f32 %v522
    %v1163 = vcvt.s32.f32 %v523
    %v1164 = vcvt.s32.f32 %v524
    %v1165 = vcvt.s32.f32 %v525
    %v1166 = vcvt.s32.f32 %v526
    %v1167 = vcvt.s32.f32 %v527
    %v1168 = vcvt.s32.f32 %v528
    %v1169 = vcvt.s32.f32 %v529
    %v1170 = vcvt.s32.f32 %v530
    %v1171 = vcvt.s32.f32 %v531
    %v1172 = vcvt.s32.f32 %v532
    %v1173 = vcvt.s32.f32 %v533
    %v1174 = vcvt.s32.f32 %v534
    %v1175 = vcvt.s32.f32 %v535
    %v1176 = vcvt.s32.f32 %v536
    %v1177 = vcvt.s32.f32 %v537
    %v1178 = vcvt.s32.f32 %v538
    %v1179 = vcvt.s32.f32 %v539
    %v1180 = vcvt.s32.f32 %v540
    %v1181 = vcvt.s32.f32 %v541
    %v1182 = vcvt.s32.f32 %v542
    %v1183 = vcvt.s32.f32 %v543
    %v1184 = vcvt.s32.f32 %v544
    %v1185 = vcvt.s32.f32 %v545
    %v1186 = vcvt.s32.f32 %v546
    %v1187 = vcvt.s32.f32 %v547
    %v1188 = vcvt.s32.f32 %v548
    %v1189 = vcvt.s32.f32 %v549
    %v1190 = vcvt.s32.f32 %v550
    %v1191 = vcvt.s32.f32 %v551
    %v1192 = vcvt.s32.f32 %v552
    %v1193 = vcvt.s32.f32 %v553
    %v1194 = vcvt.s32.f32 %v554
    %v1195 = vcvt.s32.f32 %v555
    %v1196 = vcvt.s32.f32 %v556
    %v1197 = vcvt.s32.f32 %v557
    %v1198 = vcvt.s32.f32 %v558
    %v1199 = vcvt.s32.f32 %v559
    %v1200 = vcvt.s32.f32 %v560
    %v1201 = vcvt.s32.f32 %v561
    %v1202 = vcvt.s32.f32 %v562
    %v1203 = vcvt.s32.f32 %v563
    %v1204 = vcvt.s32.f32 %v564
    %v1205 = vcvt.s32.f32 %v565
    %v1206 = vcvt.s32.f32 %v566
    %v1207 = vcvt.s32.f32 %v567
    %v1208 = vcvt.s32.f32 %v568
    %v1209 = vcvt.s32.f32 %v569
    %v1210 = vcvt.s32.f32 %v570
    %v1211 = vcvt.s32.f32 %v571
    %v1212 = vcvt.s32.f32 %v572
    %v1213 = vcvt.s32.f32 %v573
    %v1214 = vcvt.s32.f32 %v574
    %v1215 = vcvt.s32.f32 %v575
    %v1216 = vcvt.s32.f32 %v576
    %v1217 = vcvt.s32.f32 %v577
    %v1218 = vcvt.s32.f32 %v578
    %v1219 = vcvt.s32.f32 %v579
    %v1220 = vcvt.s32.f32 %v580
    %v1221 = vcvt.s32.f32 %v581
    %v1222 = vcvt.s32.f32 %v582
    %v1223 = vcvt.s32.f32 %v583
    %v1224 = vcvt.s32.f32 %v584
    %v1225 = vcvt.s32.f32 %v585
    %v1226 = vcvt.s32.f32 %v586
    %v1227 = vcvt.s32.f32 %v587
    %v1228 = vcvt.s32.f32 %v588
    %v1229 = vcvt.s32.f32 %v589
    %v1230 = vcvt.s32.f32 %v590
    %v1231 = vcvt.s32.f32 %v591
    %v1232 = vcvt.s32.f32 %v592
    %v1233 = vcvt.s32.f32 %v593
    %v1234 = vcvt.s32.f32 %v594
    %v1235 = vcvt.s32.f32 %v595
    %v1236 = vcvt.s32.f32 %v596
    %v1237 = vcvt.s32.f32 %v597
    %v1238 = vcvt.s32.f32 %v598
    %v1239 = vcvt.s32.f32 %v599
    %v1240 = vcvt.s32.f32 %v600
    %v1241 = vcvt.s32.f32 %v601
    %v1242 = vcvt.s32.f32 %v602
    %v1243 = vcvt.s32.f32 %v603
    %v1244 = vcvt.s32.f32 %v604
    %v1245 = vcvt.s32.f32 %v605
    %v1246 = vcvt.s32.f32 %v606
    %v1247 = vcvt.s32.f32 %v607
    %v1248 = vcvt.s32.f32 %v608
    %v1249 = vcvt.s32.f32 %v609
    %v1250 = vcvt.s32.f32 %v610
    %v1251 = vcvt.s32.f32 %v611
    %v1252 = vcvt.s32.f32 %v612
    %v1253 = vcvt.s32.f32 %v613
    %v1254 = vcvt.s32.f32 %v614
    %v1255 = vcvt.s32.f32 %v615
    %v1256 = vcvt.s32.f32 %v616
    %v1257 = vcvt.s32.f32 %v617
    %v1258 = vcvt.s32.f32 %v618
    %v1259 = vcvt.s32.f32 %v619
    %v1260 = vcvt.s32.f32 %v620
    %v1261 = vcvt.s32.f32 %v621
    %v1262 = vcvt.s32.f32 %v622
    %v1263 = vcvt.s32.f32 %v623
    %v1264 = vcvt.s32.f32 %v624
    %v1265 = vcvt.s32.f32 %v625
    %v1266 = vcvt.s32.f32 %v626
    %v1267 = vcvt.s32.f32 %v627
    %v1268 = vcvt.s32.f32 %v628
    %v1269 = vcvt.s32.f32 %v629
    %v1270 = vcvt.s32.f32 %v630
    %v1271 = vcvt.s32.f32 %v631
    %v1272 = vcvt.s32.f32 %v632
    %v1273 = vcvt.s32.f32 %v633
    %v1274 = vcvt.s32.f32 %v634
    %v1275 = vcvt.s32.f32 %v635
    %v1276 = vcvt.s32.f32 %v636
    %v1277 = vcvt.s32.f32 %v637
    %v1278 = vcvt.s32.f32 %v638
    %v1279 = vcvt.s32.f32 %v639
    %v1280 = vcvt.s32.f32 %v640
    %v1281 = vcvt.s32.f32 %v641
    %v1282 = vcvt.s32.f32 %v642
    %v1283 = vcvt.s32.f32 %v643
    %v1284 = vcvt.s32.f32 %v644
    %v1285 = vcvt.s32.f32 %v645
    %v1286 = vcvt.s32.f32 %v646
    %v1287 = vcvt.s32.f32 %v647
    %v1288 = vcvt.s32.f32 %v648
    %v1289 = vcvt.s32.f32 %v649
    %v1290 = vcvt.s32.f32 %v650
    %v1291 = vcvt.s32.f32 %v651
    %v1292 = vcvt.s32.f32 %v652
    %v1293 = vcvt.s32.f32 %v653
    %v1294 = vcvt.s32.f32 %v654
    %v1295 = vcvt.s32.f32 %v655
    %v1296 = vcvt.s32.f32 %v656
    %v1297 = vcvt.s32.f32 %v657
    %v1298 = vcvt.s32.f32 %v658
    %v1299 = vcvt.s32.f32 %v659
    %v1300 = vcvt.s32.f32 %v660
    %v1301 = vcvt.s32.f32 %v661
    %v1302 = vcvt.s32.f32 %v662
    %v1303 = vcvt.s32.f32 %v663
    %v1304 = vcvt.s32.f32 %v664
    %v1305 = vcvt.s32.f32 %v665
    %v1306 = vcvt.s32.f32 %v666
    %v1307 = vcvt.s32.f32 %v667
    %v1308 = vcvt.s32.f32 %v668
    %v1309 = vcvt.s32.f32 %v669
    %v1310 = vcvt.s32.f32 %v670
    %v1311 = vcvt.s32.f32 %v671
    %v1312 = vcvt.s32.f32 %v672
    %v1313 = vcvt.s32.f32 %v673
    %v1314 = vcvt.s32.f32 %v674
    %v1315 = vcvt.s32.f32 %v675
    %v1316 = vcvt.s32.f32 %v676
    %v1317 = vcvt.s32.f32 %v677
    %v1318 = vcvt.s32.f32 %v678
    %v1319 = vcvt.s32.f32 %v679
    %v1320 = vcvt.s32.f32 %v680
    %v1321 = vcvt.s32.f32 %v681
    %v1322 = vcvt.s32.f32 %v682
    %v1323 = vcvt.s32.f32 %v683
    %v1324 = vcvt.s32.f32 %v684
    %v1325 = vcvt.s32.f32 %v685
    %v1326 = vcvt.s32.f32 %v686
    %v1327 = vcvt.s32.f32 %v687
    %v1328 = vcvt.s32.f32 %v688
    %v1329 = vcvt.s32.f32 %v689
    %v1330 = vcvt.s32.f32 %v690
    %v1331 = vcvt.s32.f32 %v691
    %v1332 = vcvt.s32.f32 %v692
    %v1333 = vcvt.s32.f32 %v693
    %v1334 = vcvt.s32.f32 %v694
    %v1335 = vcvt.s32.f32 %v695
    %v1336 = vcvt.s32.f32 %v696
    %v1337 = vcvt.s32.f32 %v697
    %v1338 = vcvt.s32.f32 %v698
    %v1339 = vcvt.s32.f32 %v699
    %v1340 = vcvt.s32.f32 %v700
    %v1341 = vcvt.s32.f32 %v701
    %v1342 = vcvt.s32.f32 %v702
    %v1343 = vcvt.s32.f32 %v703
    %v1344 = vcvt.s32.f32 %v704
    %v1345 = vcvt.s32.f32 %v705
    %v1346 = vcvt.s32.f32 %v706
    %v1347 = vcvt.s32.f32 %v707
    %v1348 = vcvt.s32.f32 %v708
    %v1349 = vcvt.s32.f32 %v709
    %v1350 = vcvt.s32.f32 %v710
    %v1351 = vcvt.s32.f32 %v711
    %v1352 = vcvt.s32.f32 %v712
    %v1353 = vcvt.s32.f32 %v713
    %v1354 = vcvt.s32.f32 %v714
    %v1355 = vcvt.s32.f32 %v715
    %v1356 = vcvt.s32.f32 %v716
    %v1357 = vcvt.s32.f32 %v717
    %v1358 = vcvt.s32.f32 %v718
    %v1359 = vcvt.s32.f32 %v719
    %v1360 = vcvt.s32.f32 %v720
    %v1361 = vcvt.s32.f32 %v721
    %v1362 = vcvt.s32.f32 %v722
    %v1363 = vcvt.s32.f32 %v723
    %v1364 = vcvt.s32.f32 %v724
    %v1365 = vcvt.s32.f32 %v725
    %v1366 = vcvt.s32.f32 %v726
    %v1367 = vcvt.s32.f32 %v727
    %v1368 = vcvt.s32.f32 %v728
    %v1369 = vcvt.s32.f32 %v729
    %v1370 = vcvt.s32.f32 %v730
    %v1371 = vcvt.s32.f32 %v731
    %v1372 = vcvt.s32.f32 %v732
    %v1373 = vcvt.s32.f32 %v733
    %v1374 = vcvt.s32.f32 %v734
    %v1375 = vcvt.s32.f32 %v735
    %v1376 = vcvt.s32.f32 %v736
    %v1377 = vcvt.s32.f32 %v737
    %v1378 = vcvt.s32.f32 %v738
    %v1379 = vcvt.s32.f32 %v739
    %v1380 = vcvt.s32.f32 %v740
    %v1381 = vcvt.s32.f32 %v741
    %v1382 = vcvt.s32.f32 %v742
    %v1383 = vcvt.s32.f32 %v743
    %v1384 = vcvt.s32.f32 %v744
    %v1385 = vcvt.s32.f32 %v745
    %v1386 = vcvt.s32.f32 %v746
    %v1387 = vcvt.s32.f32 %v747
    %v1388 = vcvt.s32.f32 %v748
    %v1389 = vcvt.s32.f32 %v749
    %v1390 = vcvt.s32.f32 %v750
    %v1391 = vcvt.s32.f32 %v751
    %v1392 = vcvt.s32.f32 %v752
    %v1393 = vcvt.s32.f32 %v753
    %v1394 = vcvt.s32.f32 %v754
    %v1395 = vcvt.s32.f32 %v755
    %v1396 = vcvt.s32.f32 %v756
    %v1397 = vcvt.s32.f32 %v757
    %v1398 = vcvt.s32.f32 %v758
    %v1399 = vcvt.s32.f32 %v759
    %v1400 = vcvt.s32.f32 %v760
    %v1401 = vcvt.s32.f32 %v761
    %v1402 = vcvt.s32.f32 %v762
    %v1403 = vcvt.s32.f32 %v763
    %v1404 = vcvt.s32.f32 %v764
    %v1405 = vcvt.s32.f32 %v765
    %v1406 = vcvt.s32.f32 %v766
    %v1407 = vcvt.s32.f32 %v767
    %v1408 = vcvt.s32.f32 %v768
    %v1409 = vcvt.s32.f32 %v769
    %v1410 = vcvt.s32.f32 %v770
    %v1411 = vcvt.s32.f32 %v771
    %v1412 = vcvt.s32.f32 %v772
    %v1413 = vcvt.s32.f32 %v773
    %v1414 = vcvt.s32.f32 %v774
    %v1415 = vcvt.s32.f32 %v775
    %v1416 = vcvt.s32.f32 %v776
    %v1417 = vcvt.s32.f32 %v777
    %v1418 = vcvt.s32.f32 %v778
    %v1419 = vcvt.s32.f32 %v779
    %v1420 = vcvt.s32.f32 %v780
    %v1421 = vcvt.s32.f32 %v781
    %v1422 = vcvt.s32.f32 %v782
    %v1423 = vcvt.s32.f32 %v783
    %v1424 = vcvt.s32.f32 %v784
    %v1425 = vcvt.s32.f32 %v785
    %v1426 = vcvt.s32.f32 %v786
    %v1427 = vcvt.s32.f32 %v787
    %v1428 = vcvt.s32.f32 %v788
    %v1429 = vcvt.s32.f32 %v789
    %v1430 = vcvt.s32.f32 %v790
    %v1431 = vcvt.s32.f32 %v791
    %v1432 = vcvt.s32.f32 %v792
    %v1433 = vcvt.s32.f32 %v793
    %v1434 = vcvt.s32.f32 %v794
    %v1435 = vcvt.s32.f32 %v795
    %v1436 = vcvt.s32.f32 %v796
    %v1437 = vcvt.s32.f32 %v797
    %v1438 = vcvt.s32.f32 %v798
    %v1439 = vcvt.s32.f32 %v799
    %v1440 = vcvt.s32.f32 %v800
    %v1441 = vcvt.s32.f32 %v801
    %v1442 = vcvt.s32.f32 %v802
    %v1443 = vcvt.s32.f32 %v803
    %v1444 = vcvt.s32.f32 %v804
    %v1445 = vcvt.s32.f32 %v805
    %v1446 = vcvt.s32.f32 %v806
    %v1447 = vcvt.s32.f32 %v807
    %v1448 = vcvt.s32.f32 %v808
    %v1449 = vcvt.s32.f32 %v809
    %v1450 = vcvt.s32.f32 %v810
    %v1451 = vcvt.s32.f32 %v811
    %v1452 = vcvt.s32.f32 %v812
    %v1453 = vcvt.s32.f32 %v813
    %v1454 = vcvt.s32.f32 %v814
    %v1455 = vcvt.s32.f32 %v815
    %v1456 = vcvt.s32.f32 %v816
    %v1457 = vcvt.s32.f32 %v817
    %v1458 = vcvt.s32.f32 %v818
    %v1459 = vcvt.s32.f32 %v819
    %v1460 = vcvt.s32.f32 %v820
    %v1461 = vcvt.s32.f32 %v821
    %v1462 = vcvt.s32.f32 %v822
    %v1463 = vcvt.s32.f32 %v823
    %v1464 = vcvt.s32.f32 %v824
    %v1465 = vcvt.s32.f32 %v825
    %v1466 = vcvt.s32.f32 %v826
    %v1467 = vcvt.s32.f32 %v827
    %v1468 = vcvt.s32.f32 %v828
    %v1469 = vcvt.s32.f32 %v829
    %v1470 = vcvt.s32.f32 %v830
    %v1471 = vcvt.s32.f32 %v831
    %v1472 = vcvt.s32.f32 %v832
    %v1473 = vcvt.s32.f32 %v833
    %v1474 = vcvt.s32.f32 %v834
    %v1475 = vcvt.s32.f32 %v835
    %v1476 = vcvt.s32.f32 %v836
    %v1477 = vcvt.s32.f32 %v837
    %v1478 = vcvt.s32.f32 %v838
    %v1479 = vcvt.s32.f32 %v839
    %v1480 = vcvt.s32.f32 %v840
    %v1481 = vcvt.s32.f32 %v841
    %v1482 = vcvt.s32.f32 %v842
    %v1483 = vcvt.s32.f32 %v843
    %v1484 = vcvt.s32.f32 %v844
    %v1485 = vcvt.s32.f32 %v845
    %v1486 = vcvt.s32.f32 %v846
    %v1487 = vcvt.s32.f32 %v847
    %v1488 = vcvt.s32.f32 %v848
    %v1489 = vcvt.s32.f32 %v849
    %v1490 = vcvt.s32.f32 %v850
    %v1491 = vcvt.s32.f32 %v851
    %v1492 = vcvt.s32.f32 %v852
    %v1493 = vcvt.s32.f32 %v853
    %v1494 = vcvt.s32.f32 %v854
    %v1495 = vcvt.s32.f32 %v855
    %v1496 = vcvt.s32.f32 %v856
    %v1497 = vcvt.s32.f32 %v857
    %v1498 = vcvt.s32.f32 %v858
    %v1499 = vcvt.s32.f32 %v859
    %v1500 = vcvt.s32.f32 %v860
    %v1501 = vcvt.s32.f32 %v861
    %v1502 = vcvt.s32.f32 %v862
    %v1503 = vcvt.s32.f32 %v863
    %v1504 = vcvt.s32.f32 %v864
    %v1505 = vcvt.s32.f32 %v865
    %v1506 = vcvt.s32.f32 %v866
    %v1507 = vcvt.s32.f32 %v867
    %v1508 = vcvt.s32.f32 %v868
    %v1509 = vcvt.s32.f32 %v869
    %v1510 = vcvt.s32.f32 %v870
    %v1511 = vcvt.s32.f32 %v871
    %v1512 = vcvt.s32.f32 %v872
    %v1513 = vcvt.s32.f32 %v873
    %v1514 = vcvt.s32.f32 %v874
    %v1515 = vcvt.s32.f32 %v875
    %v1516 = vcvt.s32.f32 %v876
    %v1517 = vcvt.s32.f32 %v877
    %v1518 = vcvt.s32.f32 %v878
    %v1519 = vcvt.s32.f32 %v879
    %v1520 = vcvt.s32.f32 %v880
    %v1521 = vcvt.s32.f32 %v881
    %v1522 = vcvt.s32.f32 %v882
    %v1523 = vcvt.s32.f32 %v883
    %v1524 = vcvt.s32.f32 %v884
    %v1525 = vcvt.s32.f32 %v885
    %v1526 = vcvt.s32.f32 %v886
    %v1527 = vcvt.s32.f32 %v887
    %v1528 = vcvt.s32.f32 %v888
    %v1529 = vcvt.s32.f32 %v889
    %v1530 = vcvt.s32.f32 %v890
    %v1531 = vcvt.s32.f32 %v891
    %v1532 = vcvt.s32.f32 %v892
    %v1533 = vcvt.s32.f32 %v893
    %v1534 = vcvt.s32.f32 %v894
    %v1535 = vcvt.s32.f32 %v895
    %v1536 = vcvt.s32.f32 %v896
    %v1537 = vcvt.s32.f32 %v897
    %v1538 = vcvt.s32.f32 %v898
    %v1539 = vcvt.s32.f32 %v899
    %v1540 = vcvt.s32.f32 %v900
    %v1541 = vcvt.s32.f32 %v901
    %v1542 = vcvt.s32.f32 %v902
    %v1543 = vcvt.s32.f32 %v903
    %v1544 = vcvt.s32.f32 %v904
    %v1545 = vcvt.s32.f32 %v905
    %v1546 = vcvt.s32.f32 %v906
    %v1547 = vcvt.s32.f32 %v907
    %v1548 = vcvt.s32.f32 %v908
    %v1549 = vcvt.s32.f32 %v909
    %v1550 = vcvt.s32.f32 %v910
    %v1551 = vcvt.s32.f32 %v911
    %v1552 = vcvt.s32.f32 %v912
    %v1553 = vcvt.s32.f32 %v913
    %v1554 = vcvt.s32.f32 %v914
    %v1555 = vcvt.s32.f32 %v915
    %v1556 = vcvt.s32.f32 %v916
    %v1557 = vcvt.s32.f32 %v917
    %v1558 = vcvt.s32.f32 %v918
    %v1559 = vcvt.s32.f32 %v919
    %v1560 = vcvt.s32.f32 %v920
    %v1561 = vcvt.s32.f32 %v921
    %v1562 = vcvt.s32.f32 %v922
    %v1563 = vcvt.s32.f32 %v923
    %v1564 = vcvt.s32.f32 %v924
    %v1565 = vcvt.s32.f32 %v925
    %v1566 = vcvt.s32.f32 %v926
    %v1567 = vcvt.s32.f32 %v927
    %v1568 = vcvt.s32.f32 %v928
    %v1569 = vcvt.s32.f32 %v929
    %v1570 = vcvt.s32.f32 %v930
    %v1571 = vcvt.s32.f32 %v931
    %v1572 = vcvt.s32.f32 %v932
    %v1573 = vcvt.s32.f32 %v933
    %v1574 = vcvt.s32.f32 %v934
    %v1575 = vcvt.s32.f32 %v935
    %v1576 = vcvt.s32.f32 %v936
    %v1577 = vcvt.s32.f32 %v937
    %v1578 = vcvt.s32.f32 %v938
    %v1579 = vcvt.s32.f32 %v939
    %v1580 = vcvt.s32.f32 %v940
    %v1581 = vcvt.s32.f32 %v941
    %v1582 = vcvt.s32.f32 %v942
    %v1583 = vcvt.s32.f32 %v943
    %v1584 = vcvt.s32.f32 %v944
    %v1585 = vcvt.s32.f32 %v945
    %v1586 = vcvt.s32.f32 %v946
    %v1587 = vcvt.s32.f32 %v947
    %v1588 = vcvt.s32.f32 %v948
    %v1589 = vcvt.s32.f32 %v949
    %v1590 = vcvt.s32.f32 %v950
    %v1591 = vcvt.s32.f32 %v951
    %v1592 = vcvt.s32.f32 %v952
    %v1593 = vcvt.s32.f32 %v953
    %v1594 = vcvt.s32.f32 %v954
    %v1595 = vcvt.s32.f32 %v955
    %v1596 = vcvt.s32.f32 %v956
    %v1597 = vcvt.s32.f32 %v957
    %v1598 = vcvt.s32.f32 %v958
    %v1599 = vcvt.s32.f32 %v959
    %v1600 = vcvt.s32.f32 %v960
    %v1601 = vcvt.s32.f32 %v961
    %v1602 = vcvt.s32.f32 %v962
    %v1603 = vcvt.s32.f32 %v963
    %v1604 = vcvt.s32.f32 %v964
    %v1605 = vcvt.s32.f32 %v965
    %v1606 = vcvt.s32.f32 %v966
    %v1607 = vcvt.s32.f32 %v967
    %v1608 = vcvt.s32.f32 %v968
    %v1609 = vcvt.s32.f32 %v969
    %v1610 = vcvt.s32.f32 %v970
    %v1611 = vcvt.s32.f32 %v971
    %v1612 = vcvt.s32.f32 %v972
    %v1613 = vcvt.s32.f32 %v973
    %v1614 = vcvt.s32.f32 %v974
    %v1615 = vcvt.s32.f32 %v975
    %v1616 = vcvt.s32.f32 %v976
    %v1617 = vcvt.s32.f32 %v977
    %v1618 = vcvt.s32.f32 %v978
    %v1619 = vcvt.s32.f32 %v979
    %v1620 = vcvt.s32.f32 %v980
    %v1621 = vcvt.s32.f32 %v981
    %v1622 = vcvt.s32.f32 %v982
    %v1623 = vcvt.s32.f32 %v983
    %v1624 = vcvt.s32.f32 %v984
    %v1625 = vcvt.s32.f32 %v985
    %v1626 = vcvt.s32.f32 %v986
    %v1627 = vcvt.s32.f32 %v987
    %v1628 = vcvt.s32.f32 %v988
    %v1629 = vcvt.s32.f32 %v989
    %v1630 = vcvt.s32.f32 %v990
    %v1631 = vcvt.s32.f32 %v991
    %v1632 = vcvt.s32.f32 %v992
    %v1633 = vcvt.s32.f32 %v993
    %v1634 = vcvt.s32.f32 %v994
    %v1635 = vcvt.s32.f32 %v995
    %v1636 = vcvt.s32.f32 %v996
    %v1637 = vcvt.s32.f32 %v997
    %v1638 = vcvt.s32.f32 %v998
    %v1639 = vcvt.s32.f32 %v999
    %v1640 = vcvt.s32.f32 %v1000
    %v1641 = vcvt.s32.f32 %v1001
    %v1642 = vcvt.s32.f32 %v1002
    %v1643 = vcvt.s32.f32 %v1003
    %v1644 = vcvt.s32.f32 %v1004
    %v1645 = vcvt.s32.f32 %v1005
    %v1646 = vcvt.s32.f32 %v1006
    %v1647 = vcvt.s32.f32 %v1007
    %v1648 = vcvt.s32.f32 %v1008
    %v1649 = vcvt.s32.f32 %v1009
    %v1650 = vcvt.s32.f32 %v1010
    %v1651 = vcvt.s32.f32 %v1011
    %v1652 = vcvt.s32.f32 %v1012
    %v1653 = vcvt.s32.f32 %v1013
    %v1654 = vcvt.s32.f32 %v1014
    %v1655 = vcvt.s32.f32 %v1015
    %v1656 = vcvt.s32.f32 %v1016
    %v1657 = vcvt.s32.f32 %v1017
    %v1658 = vcvt.s32.f32 %v1018
    %v1659 = vcvt.s32.f32 %v1019
    %v1660 = vcvt.s32.f32 %v1020
    %v1661 = vcvt.s32.f32 %v1021
    %v1662 = vcvt.s32.f32 %v1022
    %v1663 = vcvt.s32.f32 %v1023
    %v1664 = vcvt.s32.f32 %v1024
    %v1665 = vcvt.s32.f32 %v1025
    %v1666 = vcvt.s32.f32 %v1026
    %v1667 = vcvt.s32.f32 %v1027
    %v1668 = vcvt.s32.f32 %v1028
    %v1669 = vcvt.s32.f32 %v1029
    %v1670 = vcvt.s32.f32 %v1030
    %v1671 = vcvt.s32.f32 %v1031
    %v1672 = vcvt.s32.f32 %v1032
    %v1673 = vcvt.s32.f32 %v1033
    %v1674 = vcvt.s32.f32 %v1034
    %v1675 = vcvt.s32.f32 %v1035
    %v1676 = vcvt.s32.f32 %v1036
    %v1677 = vcvt.s32.f32 %v1037
    %v1678 = vcvt.s32.f32 %v1038
    %v1679 = vcvt.s32.f32 %v1039
    %v1680 = vcvt.s32.f32 %v1040
    %v1681 = vcvt.s32.f32 %v1041
    %v1682 = vcvt.s32.f32 %v1042
    %v1683 = vcvt.s32.f32 %v1043
    %v1684 = vcvt.s32.f32 %v1044
    %v1685 = vcvt.s32.f32 %v1045
    %v1686 = vcvt.s32.f32 %v1046
    %v1687 = vcvt.s32.f32 %v1047
    %v1688 = vcvt.s32.f32 %v1048
    %v1689 = vcvt.s32.f32 %v1049
    %v1690 = vcvt.s32.f32 %v1050
    %v1691 = vcvt.s32.f32 %v1051
    %v1692 = vcvt.s32.f32 %v1052
    %v1693 = vcvt.s32.f32 %v1053
    %v1694 = vcvt.s32.f32 %v1054
    %v1695 = vcvt.s32.f32 %v1055
    %v1696 = vcvt.s32.f32 %v1056
    %v1697 = vcvt.s32.f32 %v1057
    %v1698 = vcvt.s32.f32 %v1058
    %v1699 = vcvt.s32.f32 %v1059
    %v1700 = vcvt.s32.f32 %v1060
    %v1701 = vcvt.s32.f32 %v1061
    %v1702 = vcvt.s32.f32 %v1062
    %v1703 = vcvt.s32.f32 %v1063
    %v1704 = vcvt.s32.f32 %v1064
    %v1705 = vcvt.s32.f32 %v1065
    %v1706 = vcvt.s32.f32 %v1066
    %v1707 = vcvt.s32.f32 %v1067
    %v1708 = vcvt.s32.f32 %v1068
    %v1709 = vcvt.s32.f32 %v1069
    %v1710 = vcvt.s32.f32 %v1070
    %v1711 = vcvt.s32.f32 %v1071
    %v1712 = vcvt.s32.f32 %v1072
    %v1713 = vcvt.s32.f32 %v1073
    %v1714 = vcvt.s32.f32 %v1074
    %v1715 = vcvt.s32.f32 %v1075
    %v1716 = vcvt.s32.f32 %v1076
    %v1717 = vcvt.s32.f32 %v1077
    %v1718 = vcvt.s32.f32 %v1078
    %v1719 = vcvt.s32.f32 %v1079
    %v1720 = vcvt.s32.f32 %v1080
    %v1721 = vcvt.s32.f32 %v1081
    %v1722 = vcvt.s32.f32 %v1082
    %v1723 = vcvt.s32.f32 %v1083
    %v1724 = vcvt.s32.f32 %v1084
    %v1725 = vcvt.s32.f32 %v1085
    %v1726 = vcvt.s32.f32 %v1086
    %v1727 = vcvt.s32.f32 %v1087
    %v1728 = vcvt.s32.f32 %v1088
    %v1729 = vcvt.s32.f32 %v1089
    %v1730 = vcvt.s32.f32 %v1090
    %v1731 = vcvt.s32.f32 %v1091
    %v1732 = vcvt.s32.f32 %v1092
    %v1733 = vcvt.s32.f32 %v1093
    %v1734 = vcvt.s32.f32 %v1094
    %v1735 = vcvt.s32.f32 %v1095
    %v1736 = vcvt.s32.f32 %v1096
    %v1737 = vcvt.s32.f32 %v1097
    %v1738 = vcvt.s32.f32 %v1098
    %v1739 = vcvt.s32.f32 %v1099
    %v1740 = vcvt.s32.f32 %v1100
    %v1741 = vcvt.s32.f32 %v1101
    %v1742 = vcvt.s32.f32 %v1102
    %v1743 = vcvt.s32.f32 %v1103
    %v1744 = vcvt.s32.f32 %v1104
    %v1745 = vcvt.s32.f32 %v1105
    %v1746 = vcvt.s32.f32 %v1106
    %v1747 = vcvt.s32.f32 %v1107
    %v1748 = vcvt.s32.f32 %v1108
    %v1749 = vcvt.s32.f32 %v1109
    %v1750 = vcvt.s32.f32 %v1110
    %v1751 = vcvt.s32.f32 %v1111
    %v1752 = vcvt.s32.f32 %v1112
    %v1753 = vcvt.s32.f32 %v1113
    %v1754 = vcvt.s32.f32 %v1114
    %v1755 = vcvt.s32.f32 %v1115
    %v1756 = vcvt.s32.f32 %v1116
    %v1757 = vcvt.s32.f32 %v1117
    %v1758 = vcvt.s32.f32 %v1118
    %v1759 = vcvt.s32.f32 %v1119
    %v1760 = vcvt.s32.f32 %v1120
    %v1761 = vcvt.s32.f32 %v1121
    %v1762 = vcvt.s32.f32 %v1122
    %v1763 = vcvt.s32.f32 %v1123
    %v1764 = vcvt.s32.f32 %v1124
    %v1765 = vcvt.s32.f32 %v1125
    %v1766 = vcvt.s32.f32 %v1126
    %v1767 = vcvt.s32.f32 %v1127
    %v1768 = vcvt.s32.f32 %v1128
    %v1769 = vcvt.s32.f32 %v1129
    %v1770 = vcvt.s32.f32 %v1130
    %v1771 = vcvt.s32.f32 %v1131
    %v1772 = vcvt.s32.f32 %v1132
    %v1773 = vcvt.s32.f32 %v1133
    %v1774 = vcvt.s32.f32 %v1134
    %v1775 = vcvt.s32.f32 %v1135
    %v1776 = vcvt.s32.f32 %v1136
    %v1777 = vcvt.s32.f32 %v1137
    %v1778 = vcvt.s32.f32 %v1138
    %v1779 = vcvt.s32.f32 %v1139
    %v1780 = vcvt.s32.f32 %v1140
    %v1781 = vcvt.s32.f32 %v1141
    %v1782 = vcvt.s32.f32 %v1142
    %v1783 = vcvt.s32.f32 %v1143
    %v1784 = vcvt.s32.f32 %v1144
    %v1785 = vcvt.s32.f32 %v1145
    %v1786 = vcvt.s32.f32 %v1146
    %v1787 = vpack.c.bf16 %v1151, %v1147
    %v1788 = vpack.c.bf16 %v1152, %v1148
    %v1789 = vpack.c.bf16 %v1153, %v1149
    %v1790 = vpack.c.bf16 %v1154, %v1150
    %v1791 = vpack.c.bf16 %v1159, %v1155
    %v1792 = vpack.c.bf16 %v1160, %v1156
    %v1793 = vpack.c.bf16 %v1161, %v1157
    %v1794 = vpack.c.bf16 %v1162, %v1158
    %v1795 = vpack.c.bf16 %v1167, %v1163
    %v1796 = vpack.c.bf16 %v1168, %v1164
    %v1797 = vpack.c.bf16 %v1169, %v1165
    %v1798 = vpack.c.bf16 %v1170, %v1166
    %v1799 = vpack.c.bf16 %v1175, %v1171
    %v1800 = vpack.c.bf16 %v1176, %v1172
    %v1801 = vpack.c.bf16 %v1177, %v1173
    %v1802 = vpack.c.bf16 %v1178, %v1174
    %v1803 = vpack.c.bf16 %v1183, %v1179
    %v1804 = vpack.c.bf16 %v1184, %v1180
    %v1805 = vpack.c.bf16 %v1185, %v1181
    %v1806 = vpack.c.bf16 %v1186, %v1182
    %v1807 = vpack.c.bf16 %v1191, %v1187
    %v1808 = vpack.c.bf16 %v1192, %v1188
    %v1809 = vpack.c.bf16 %v1193, %v1189
    %v1810 = vpack.c.bf16 %v1194, %v1190
    %v1811 = vpack.c.bf16 %v1199, %v1195
    %v1812 = vpack.c.bf16 %v1200, %v1196
    %v1813 = vpack.c.bf16 %v1201, %v1197
    %v1814 = vpack.c.bf16 %v1202, %v1198
    %v1815 = vpack.c.bf16 %v1207, %v1203
    %v1816 = vpack.c.bf16 %v1208, %v1204
    %v1817 = vpack.c.bf16 %v1209, %v1205
    %v1818 = vpack.c.bf16 %v1210, %v1206
    %v1819 = vpack.c.bf16 %v1215, %v1211
    %v1820 = vpack.c.bf16 %v1216, %v1212
    %v1821 = vpack.c.bf16 %v1217, %v1213
    %v1822 = vpack.c.bf16 %v1218, %v1214
    %v1823 = vpack.c.bf16 %v1223, %v1219
    %v1824 = vpack.c.bf16 %v1224, %v1220
    %v1825 = vpack.c.bf16 %v1225, %v1221
    %v1826 = vpack.c.bf16 %v1226, %v1222
    %v1827 = vpack.c.bf16 %v1231, %v1227
    %v1828 = vpack.c.bf16 %v1232, %v1228
    %v1829 = vpack.c.bf16 %v1233, %v1229
    %v1830 = vpack.c.bf16 %v1234, %v1230
    %v1831 = vpack.c.bf16 %v1239, %v1235
    %v1832 = vpack.c.bf16 %v1240, %v1236
    %v1833 = vpack.c.bf16 %v1241, %v1237
    %v1834 = vpack.c.bf16 %v1242, %v1238
    %v1835 = vpack.c.bf16 %v1247, %v1243
    %v1836 = vpack.c.bf16 %v1248, %v1244
    %v1837 = vpack.c.bf16 %v1249, %v1245
    %v1838 = vpack.c.bf16 %v1250, %v1246
    %v1839 = vpack.c.bf16 %v1255, %v1251
    %v1840 = vpack.c.bf16 %v1256, %v1252
    %v1841 = vpack.c.bf16 %v1257, %v1253
    %v1842 = vpack.c.bf16 %v1258, %v1254
    %v1843 = vpack.c.bf16 %v1263, %v1259
    %v1844 = vpack.c.bf16 %v1264, %v1260
    %v1845 = vpack.c.bf16 %v1265, %v1261
    %v1846 = vpack.c.bf16 %v1266, %v1262
    %v1847 = vpack.c.bf16 %v1271, %v1267
    %v1848 = vpack.c.bf16 %v1272, %v1268
    %v1849 = vpack.c.bf16 %v1273, %v1269
    %v1850 = vpack.c.bf16 %v1274, %v1270
    %v1851 = vpack.c.bf16 %v1279, %v1275
    %v1852 = vpack.c.bf16 %v1280, %v1276
    %v1853 = vpack.c.bf16 %v1281, %v1277
    %v1854 = vpack.c.bf16 %v1282, %v1278
    %v1855 = vpack.c.bf16 %v1287, %v1283
    %v1856 = vpack.c.bf16 %v1288, %v1284
    %v1857 = vpack.c.bf16 %v1289, %v1285
    %v1858 = vpack.c.bf16 %v1290, %v1286
    %v1859 = vpack.c.bf16 %v1295, %v1291
    %v1860 = vpack.c.bf16 %v1296, %v1292
    %v1861 = vpack.c.bf16 %v1297, %v1293
    %v1862 = vpack.c.bf16 %v1298, %v1294
    %v1863 = vpack.c.bf16 %v1303, %v1299
    %v1864 = vpack.c.bf16 %v1304, %v1300
    %v1865 = vpack.c.bf16 %v1305, %v1301
    %v1866 = vpack.c.bf16 %v1306, %v1302
    %v1867 = vpack.c.bf16 %v1311, %v1307
    %v1868 = vpack.c.bf16 %v1312, %v1308
    %v1869 = vpack.c.bf16 %v1313, %v1309
    %v1870 = vpack.c.bf16 %v1314, %v1310
    %v1871 = vpack.c.bf16 %v1319, %v1315
    %v1872 = vpack.c.bf16 %v1320, %v1316
    %v1873 = vpack.c.bf16 %v1321, %v1317
    %v1874 = vpack.c.bf16 %v1322, %v1318
    %v1875 = vpack.c.bf16 %v1327, %v1323
    %v1876 = vpack.c.bf16 %v1328, %v1324
    %v1877 = vpack.c.bf16 %v1329, %v1325
    %v1878 = vpack.c.bf16 %v1330, %v1326
    %v1879 = vpack.c.bf16 %v1335, %v1331
    %v1880 = vpack.c.bf16 %v1336, %v1332
    %v1881 = vpack.c.bf16 %v1337, %v1333
    %v1882 = vpack.c.bf16 %v1338, %v1334
    %v1883 = vpack.c.bf16 %v1343, %v1339
    %v1884 = vpack.c.bf16 %v1344, %v1340
    %v1885 = vpack.c.bf16 %v1345, %v1341
    %v1886 = vpack.c.bf16 %v1346, %v1342
    %v1887 = vpack.c.bf16 %v1351, %v1347
    %v1888 = vpack.c.bf16 %v1352, %v1348
    %v1889 = vpack.c.bf16 %v1353, %v1349
    %v1890 = vpack.c.bf16 %v1354, %v1350
    %v1891 = vpack.c.bf16 %v1359, %v1355
    %v1892 = vpack.c.bf16 %v1360, %v1356
    %v1893 = vpack.c.bf16 %v1361, %v1357
    %v1894 = vpack.c.bf16 %v1362, %v1358
    %v1895 = vpack.c.bf16 %v1367, %v1363
    %v1896 = vpack.c.bf16 %v1368, %v1364
    %v1897 = vpack.c.bf16 %v1369, %v1365
    %v1898 = vpack.c.bf16 %v1370, %v1366
    %v1899 = vpack.c.bf16 %v1375, %v1371
    %v1900 = vpack.c.bf16 %v1376, %v1372
    %v1901 = vpack.c.bf16 %v1377, %v1373
    %v1902 = vpack.c.bf16 %v1378, %v1374
    %v1903 = vpack.c.bf16 %v1383, %v1379
    %v1904 = vpack.c.bf16 %v1384, %v1380
    %v1905 = vpack.c.bf16 %v1385, %v1381
    %v1906 = vpack.c.bf16 %v1386, %v1382
    %v1907 = vpack.c.bf16 %v1391, %v1387
    %v1908 = vpack.c.bf16 %v1392, %v1388
    %v1909 = vpack.c.bf16 %v1393, %v1389
    %v1910 = vpack.c.bf16 %v1394, %v1390
    %v1911 = vpack.c.bf16 %v1399, %v1395
    %v1912 = vpack.c.bf16 %v1400, %v1396
    %v1913 = vpack.c.bf16 %v1401, %v1397
    %v1914 = vpack.c.bf16 %v1402, %v1398
    %v1915 = vpack.c.bf16 %v1407, %v1403
    %v1916 = vpack.c.bf16 %v1408, %v1404
    %v1917 = vpack.c.bf16 %v1409, %v1405
    %v1918 = vpack.c.bf16 %v1410, %v1406
    %v1919 = vpack.c.bf16 %v1415, %v1411
    %v1920 = vpack.c.bf16 %v1416, %v1412
    %v1921 = vpack.c.bf16 %v1417, %v1413
    %v1922 = vpack.c.bf16 %v1418, %v1414
    %v1923 = vpack.c.bf16 %v1423, %v1419
    %v1924 = vpack.c.bf16 %v1424, %v1420
    %v1925 = vpack.c.bf16 %v1425, %v1421
    %v1926 = vpack.c.bf16 %v1426, %v1422
    %v1927 = vpack.c.bf16 %v1431, %v1427
    %v1928 = vpack.c.bf16 %v1432, %v1428
    %v1929 = vpack.c.bf16 %v1433, %v1429
    %v1930 = vpack.c.bf16 %v1434, %v1430
    %v1931 = vpack.c.bf16 %v1439, %v1435
    %v1932 = vpack.c.bf16 %v1440, %v1436
    %v1933 = vpack.c.bf16 %v1441, %v1437
    %v1934 = vpack.c.bf16 %v1442, %v1438
    %v1935 = vpack.c.bf16 %v1447, %v1443
    %v1936 = vpack.c.bf16 %v1448, %v1444
    %v1937 = vpack.c.bf16 %v1449, %v1445
    %v1938 = vpack.c.bf16 %v1450, %v1446
    %v1939 = vpack.c.bf16 %v1455, %v1451
    %v1940 = vpack.c.bf16 %v1456, %v1452
    %v1941 = vpack.c.bf16 %v1457, %v1453
    %v1942 = vpack.c.bf16 %v1458, %v1454
    %v1943 = vpack.c.bf16 %v1463, %v1459
    %v1944 = vpack.c.bf16 %v1464, %v1460
    %v1945 = vpack.c.bf16 %v1465, %v1461
    %v1946 = vpack.c.bf16 %v1466, %v1462
    %v1947 = vpack.c.bf16 %v1471, %v1467
    %v1948 = vpack.c.bf16 %v1472, %v1468
    %v1949 = vpack.c.bf16 %v1473, %v1469
    %v1950 = vpack.c.bf16 %v1474, %v1470
    %v1951 = vpack.c.bf16 %v1479, %v1475
    %v1952 = vpack.c.bf16 %v1480, %v1476
    %v1953 = vpack.c.bf16 %v1481, %v1477
    %v1954 = vpack.c.bf16 %v1482, %v1478
    %v1955 = vpack.c.bf16 %v1487, %v1483
    %v1956 = vpack.c.bf16 %v1488, %v1484
    %v1957 = vpack.c.bf16 %v1489, %v1485
    %v1958 = vpack.c.bf16 %v1490, %v1486
    %v1959 = vpack.c.bf16 %v1495, %v1491
    %v1960 = vpack.c.bf16 %v1496, %v1492
    %v1961 = vpack.c.bf16 %v1497, %v1493
    %v1962 = vpack.c.bf16 %v1498, %v1494
    %v1963 = vpack.c.bf16 %v1503, %v1499
    %v1964 = vpack.c.bf16 %v1504, %v1500
    %v1965 = vpack.c.bf16 %v1505, %v1501
    %v1966 = vpack.c.bf16 %v1506, %v1502
    %v1967 = vpack.c.bf16 %v1511, %v1507
    %v1968 = vpack.c.bf16 %v1512, %v1508
    %v1969 = vpack.c.bf16 %v1513, %v1509
    %v1970 = vpack.c.bf16 %v1514, %v1510
    %v1971 = vpack.c.bf16 %v1519, %v1515
    %v1972 = vpack.c.bf16 %v1520, %v1516
    %v1973 = vpack.c.bf16 %v1521, %v1517
    %v1974 = vpack.c.bf16 %v1522, %v1518
    %v1975 = vpack.c.bf16 %v1527, %v1523
    %v1976 = vpack.c.bf16 %v1528, %v1524
    %v1977 = vpack.c.bf16 %v1529, %v1525
    %v1978 = vpack.c.bf16 %v1530, %v1526
    %v1979 = vpack.c.bf16 %v1535, %v1531
    %v1980 = vpack.c.bf16 %v1536, %v1532
    %v1981 = vpack.c.bf16 %v1537, %v1533
    %v1982 = vpack.c.bf16 %v1538, %v1534
    %v1983 = vpack.c.bf16 %v1543, %v1539
    %v1984 = vpack.c.bf16 %v1544, %v1540
    %v1985 = vpack.c.bf16 %v1545, %v1541
    %v1986 = vpack.c.bf16 %v1546, %v1542
    %v1987 = vpack.c.bf16 %v1551, %v1547
    %v1988 = vpack.c.bf16 %v1552, %v1548
    %v1989 = vpack.c.bf16 %v1553, %v1549
    %v1990 = vpack.c.bf16 %v1554, %v1550
    %v1991 = vpack.c.bf16 %v1559, %v1555
    %v1992 = vpack.c.bf16 %v1560, %v1556
    %v1993 = vpack.c.bf16 %v1561, %v1557
    %v1994 = vpack.c.bf16 %v1562, %v1558
    %v1995 = vpack.c.bf16 %v1567, %v1563
    %v1996 = vpack.c.bf16 %v1568, %v1564
    %v1997 = vpack.c.bf16 %v1569, %v1565
    %v1998 = vpack.c.bf16 %v1570, %v1566
    %v1999 = vpack.c.bf16 %v1575, %v1571
    %v2000 = vpack.c.bf16 %v1576, %v1572
    %v2001 = vpack.c.bf16 %v1577, %v1573
    %v2002 = vpack.c.bf16 %v1578, %v1574
    %v2003 = vpack.c.bf16 %v1583, %v1579
    %v2004 = vpack.c.bf16 %v1584, %v1580
    %v2005 = vpack.c.bf16 %v1585, %v1581
    %v2006 = vpack.c.bf16 %v1586, %v1582
    %v2007 = vpack.c.bf16 %v1591, %v1587
    %v2008 = vpack.c.bf16 %v1592, %v1588
    %v2009 = vpack.c.bf16 %v1593, %v1589
    %v2010 = vpack.c.bf16 %v1594, %v1590
    %v2011 = vpack.c.bf16 %v1599, %v1595
    %v2012 = vpack.c.bf16 %v1600, %v1596
    %v2013 = vpack.c.bf16 %v1601, %v1597
    %v2014 = vpack.c.bf16 %v1602, %v1598
    %v2015 = vpack.c.bf16 %v1607, %v1603
    %v2016 = vpack.c.bf16 %v1608, %v1604
    %v2017 = vpack.c.bf16 %v1609, %v1605
    %v2018 = vpack.c.bf16 %v1610, %v1606
    %v2019 = vpack.c.bf16 %v1615, %v1611
    %v2020 = vpack.c.bf16 %v1616, %v1612
    %v2021 = vpack.c.bf16 %v1617, %v1613
    %v2022 = vpack.c.bf16 %v1618, %v1614
    %v2023 = vpack.c.bf16 %v1623, %v1619
    %v2024 = vpack.c.bf16 %v1624, %v1620
    %v2025 = vpack.c.bf16 %v1625, %v1621
    %v2026 = vpack.c.bf16 %v1626, %v1622
    %v2027 = vpack.c.bf16 %v1631, %v1627
    %v2028 = vpack.c.bf16 %v1632, %v1628
    %v2029 = vpack.c.bf16 %v1633, %v1629
    %v2030 = vpack.c.bf16 %v1634, %v1630
    %v2031 = vpack.c.bf16 %v1639, %v1635
    %v2032 = vpack.c.bf16 %v1640, %v1636
    %v2033 = vpack.c.bf16 %v1641, %v1637
    %v2034 = vpack.c.bf16 %v1642, %v1638
    %v2035 = vpack.c.bf16 %v1647, %v1643
    %v2036 = vpack.c.bf16 %v1648, %v1644
    %v2037 = vpack.c.bf16 %v1649, %v1645
    %v2038 = vpack.c.bf16 %v1650, %v1646
    %v2039 = vpack.c.bf16 %v1655, %v1651
    %v2040 = vpack.c.bf16 %v1656, %v1652
    %v2041 = vpack.c.bf16 %v1657, %v1653
    %v2042 = vpack.c.bf16 %v1658, %v1654
    %v2043 = vpack.c.bf16 %v1663, %v1659
    %v2044 = vpack.c.bf16 %v1664, %v1660
    %v2045 = vpack.c.bf16 %v1665, %v1661
    %v2046 = vpack.c.bf16 %v1666, %v1662
    %v2047 = vpack.c.bf16 %v1671, %v1667
    %v2048 = vpack.c.bf16 %v1672, %v1668
    %v2049 = vpack.c.bf16 %v1673, %v1669
    %v2050 = vpack.c.bf16 %v1674, %v1670
    %v2051 = vpack.c.bf16 %v1679, %v1675
    %v2052 = vpack.c.bf16 %v1680, %v1676
    %v2053 = vpack.c.bf16 %v1681, %v1677
    %v2054 = vpack.c.bf16 %v1682, %v1678
    %v2055 = vpack.c.bf16 %v1687, %v1683
    %v2056 = vpack.c.bf16 %v1688, %v1684
    %v2057 = vpack.c.bf16 %v1689, %v1685
    %v2058 = vpack.c.bf16 %v1690, %v1686
    %v2059 = vpack.c.bf16 %v1695, %v1691
    %v2060 = vpack.c.bf16 %v1696, %v1692
    %v2061 = vpack.c.bf16 %v1697, %v1693
    %v2062 = vpack.c.bf16 %v1698, %v1694
    %v2063 = vpack.c.bf16 %v1703, %v1699
    %v2064 = vpack.c.bf16 %v1704, %v1700
    %v2065 = vpack.c.bf16 %v1705, %v1701
    %v2066 = vpack.c.bf16 %v1706, %v1702
    %v2067 = vpack.c.bf16 %v1711, %v1707
    %v2068 = vpack.c.bf16 %v1712, %v1708
    %v2069 = vpack.c.bf16 %v1713, %v1709
    %v2070 = vpack.c.bf16 %v1714, %v1710
    %v2071 = vpack.c.bf16 %v1719, %v1715
    %v2072 = vpack.c.bf16 %v1720, %v1716
    %v2073 = vpack.c.bf16 %v1721, %v1717
    %v2074 = vpack.c.bf16 %v1722, %v1718
    %v2075 = vpack.c.bf16 %v1727, %v1723
    %v2076 = vpack.c.bf16 %v1728, %v1724
    %v2077 = vpack.c.bf16 %v1729, %v1725
    %v2078 = vpack.c.bf16 %v1730, %v1726
    %v2079 = vpack.c.bf16 %v1735, %v1731
    %v2080 = vpack.c.bf16 %v1736, %v1732
    %v2081 = vpack.c.bf16 %v1737, %v1733
    %v2082 = vpack.c.bf16 %v1738, %v1734
    %v2083 = vpack.c.bf16 %v1743, %v1739
    %v2084 = vpack.c.bf16 %v1744, %v1740
    %v2085 = vpack.c.bf16 %v1745, %v1741
    %v2086 = vpack.c.bf16 %v1746, %v1742
    %v2087 = vpack.c.bf16 %v1751, %v1747
    %v2088 = vpack.c.bf16 %v1752, %v1748
    %v2089 = vpack.c.bf16 %v1753, %v1749
    %v2090 = vpack.c.bf16 %v1754, %v1750
    %v2091 = vpack.c.bf16 %v1759, %v1755
    %v2092 = vpack.c.bf16 %v1760, %v1756
    %v2093 = vpack.c.bf16 %v1761, %v1757
    %v2094 = vpack.c.bf16 %v1762, %v1758
    %v2095 = vpack.c.bf16 %v1767, %v1763
    %v2096 = vpack.c.bf16 %v1768, %v1764
    %v2097 = vpack.c.bf16 %v1769, %v1765
    %v2098 = vpack.c.bf16 %v1770, %v1766
    %v2099 = vpack.c.bf16 %v1775, %v1771
    %v2100 = vpack.c.bf16 %v1776, %v1772
    %v2101 = vpack.c.bf16 %v1777, %v1773
    %v2102 = vpack.c.bf16 %v1778, %v1774
    %v2103 = vpack.c.bf16 %v1783, %v1779
    %v2104 = vpack.c.bf16 %v1784, %v1780
    %v2105 = vpack.c.bf16 %v1785, %v1781
    %v2106 = vpack.c.bf16 %v1786, %v1782
    %2107 = vmatpush.bf16.msra.mxu0 %v1815
    %2108 = vmatpush.bf16.msra.mxu0 %v1811
    %2109 = vmatpush.bf16.msra.mxu0 %v1807
    %2110 = vmatpush.bf16.msra.mxu0 %v1803
    %2111 = vmatpush.bf16.msra.mxu0 %v1799
    %2112 = vmatpush.bf16.msra.mxu0 %v1795
    %2113 = vmatpush.bf16.msra.mxu0 %v1791
    %2114 = vmatpush.bf16.msra.mxu0 %v1787
    %2115 = vmatmul.bf16.gmra.mxu0 %v337
    %v2116 = vpop.f32.mrf.mxu0
    %v2117 = vadd.f32 0.0, %v2116
    %v2118 = vpop.f32.mrf.mxu0
    %2119 = vdwg.mxu0
    %2120 = vmatpush.bf16.msra.mxu0 %v1847
    %2121 = vmatpush.bf16.msra.mxu0 %v1843
    %2122 = vmatpush.bf16.msra.mxu0 %v1839
    %2123 = vmatpush.bf16.msra.mxu0 %v1835
    %2124 = vmatpush.bf16.msra.mxu0 %v1831
    %2125 = vmatpush.bf16.msra.mxu0 %v1827
    %2126 = vmatpush.bf16.msra.mxu0 %v1823
    %2127 = vmatpush.bf16.msra.mxu0 %v1819
    %2128 = vmatmul.bf16.gmra.mxu0 %v338
    %v2129 = vpop.f32.mrf.mxu0
    %v2130 = vadd.f32 %v2117, %v2129
    %v2131 = vpop.f32.mrf.mxu0
    %2132 = vdwg.mxu0
    %2133 = vmatpush.bf16.msra.mxu0 %v1879
    %2134 = vmatpush.bf16.msra.mxu0 %v1875
    %2135 = vmatpush.bf16.msra.mxu0 %v1871
    %2136 = vmatpush.bf16.msra.mxu0 %v1867
    %2137 = vmatpush.bf16.msra.mxu0 %v1863
    %2138 = vmatpush.bf16.msra.mxu0 %v1859
    %2139 = vmatpush.bf16.msra.mxu0 %v1855
    %2140 = vmatpush.bf16.msra.mxu0 %v1851
    %2141 = vmatmul.bf16.gmra.mxu0 %v339
    %v2142 = vpop.f32.mrf.mxu0
    %v2143 = vadd.f32 %v2130, %v2142
    %v2144 = vpop.f32.mrf.mxu0
    %2145 = vdwg.mxu0
    %2146 = vmatpush.bf16.msra.mxu0 %v1911
    %2147 = vmatpush.bf16.msra.mxu0 %v1907
    %2148 = vmatpush.bf16.msra.mxu0 %v1903
    %2149 = vmatpush.bf16.msra.mxu0 %v1899
    %2150 = vmatpush.bf16.msra.mxu0 %v1895
    %2151 = vmatpush.bf16.msra.mxu0 %v1891
    %2152 = vmatpush.bf16.msra.mxu0 %v1887
    %2153 = vmatpush.bf16.msra.mxu0 %v1883
    %2154 = vmatmul.bf16.gmra.mxu0 %v340
    %v2155 = vpop.f32.mrf.mxu0
    %v2156 = vadd.f32 %v2143, %v2155
    %v2157 = vpop.f32.mrf.mxu0
    %2158 = vdwg.mxu0
    %2159 = vmatpush.bf16.msra.mxu0 %v1943
    %2160 = vmatpush.bf16.msra.mxu0 %v1939
    %2161 = vmatpush.bf16.msra.mxu0 %v1935
    %2162 = vmatpush.bf16.msra.mxu0 %v1931
    %2163 = vmatpush.bf16.msra.mxu0 %v1927
    %2164 = vmatpush.bf16.msra.mxu0 %v1923
    %2165 = vmatpush.bf16.msra.mxu0 %v1919
    %2166 = vmatpush.bf16.msra.mxu0 %v1915
    %2167 = vmatmul.bf16.gmra.mxu0 %v341
    %v2168 = vpop.f32.mrf.mxu0
    %v2169 = vadd.f32 %v2156, %v2168
    %v2170 = vpop.f32.mrf.mxu0
    %2171 = vdwg.mxu0
    %2172 = vmatpush.bf16.msra.mxu0 %v1975
    %2173 = vmatpush.bf16.msra.mxu0 %v1971
    %2174 = vmatpush.bf16.msra.mxu0 %v1967
    %2175 = vmatpush.bf16.msra.mxu0 %v1963
    %2176 = vmatpush.bf16.msra.mxu0 %v1959
    %2177 = vmatpush.bf16.msra.mxu0 %v1955
    %2178 = vmatpush.bf16.msra.mxu0 %v1951
    %2179 = vmatpush.bf16.msra.mxu0 %v1947
    %2180 = vmatmul.bf16.gmra.mxu0 %v342
    %v2181 = vpop.f32.mrf.mxu0
    %v2182 = vadd.f32 %v2169, %v2181
    %v2183 = vpop.f32.mrf.mxu0
    %2184 = vdwg.mxu0
    %2185 = vmatpush.bf16.msra.mxu0 %v2007
    %2186 = vmatpush.bf16.msra.mxu0 %v2003
    %2187 = vmatpush.bf16.msra.mxu0 %v1999
    %2188 = vmatpush.bf16.msra.mxu0 %v1995
    %2189 = vmatpush.bf16.msra.mxu0 %v1991
    %2190 = vmatpush.bf16.msra.mxu0 %v1987
    %2191 = vmatpush.bf16.msra.mxu0 %v1983
    %2192 = vmatpush.bf16.msra.mxu0 %v1979
    %2193 = vmatmul.bf16.gmra.mxu0 %v343
    %v2194 = vpop.f32.mrf.mxu0
    %v2195 = vadd.f32 %v2182, %v2194
    %v2196 = vpop.f32.mrf.mxu0
    %2197 = vdwg.mxu0
    %2198 = vmatpush.bf16.msra.mxu0 %v2039
    %2199 = vmatpush.bf16.msra.mxu0 %v2035
    %2200 = vmatpush.bf16.msra.mxu0 %v2031
    %2201 = vmatpush.bf16.msra.mxu0 %v2027
    %2202 = vmatpush.bf16.msra.mxu0 %v2023
    %2203 = vmatpush.bf16.msra.mxu0 %v2019
    %2204 = vmatpush.bf16.msra.mxu0 %v2015
    %2205 = vmatpush.bf16.msra.mxu0 %v2011
    %2206 = vmatmul.bf16.gmra.mxu0 %v344
    %v2207 = vpop.f32.mrf.mxu0
    %v2208 = vadd.f32 %v2195, %v2207
    %v2209 = vpop.f32.mrf.mxu0
    %2210 = vdwg.mxu0
    %2211 = vmatpush.bf16.msra.mxu0 %v2071
    %2212 = vmatpush.bf16.msra.mxu0 %v2067
    %2213 = vmatpush.bf16.msra.mxu0 %v2063
    %2214 = vmatpush.bf16.msra.mxu0 %v2059
    %2215 = vmatpush.bf16.msra.mxu0 %v2055
    %2216 = vmatpush.bf16.msra.mxu0 %v2051
    %2217 = vmatpush.bf16.msra.mxu0 %v2047
    %2218 = vmatpush.bf16.msra.mxu0 %v2043
    %2219 = vmatmul.bf16.gmra.mxu0 %v345
    %v2220 = vpop.f32.mrf.mxu0
    %v2221 = vadd.f32 %v2208, %v2220
    %v2222 = vpop.f32.mrf.mxu0
    %2223 = vdwg.mxu0
    %2224 = vmatpush.bf16.msra.mxu0 %v2103
    %2225 = vmatpush.bf16.msra.mxu0 %v2099
    %2226 = vmatpush.bf16.msra.mxu0 %v2095
    %2227 = vmatpush.bf16.msra.mxu0 %v2091
    %2228 = vmatpush.bf16.msra.mxu0 %v2087
    %2229 = vmatpush.bf16.msra.mxu0 %v2083
    %2230 = vmatpush.bf16.msra.mxu0 %v2079
    %2231 = vmatpush.bf16.msra.mxu0 %v2075
    %2232 = vmatmul.bf16.gmra.mxu0 %v346
    %v2233 = vpop.f32.mrf.mxu0
    %v2234 = vadd.f32 %v2221, %v2233
    %v2235 = vpop.f32.mrf.mxu0
    %2236 = vdwg.mxu0
    %2237 = vmatpush.bf16.msra.mxu0 %v1816
    %2238 = vmatpush.bf16.msra.mxu0 %v1812
    %2239 = vmatpush.bf16.msra.mxu0 %v1808
    %2240 = vmatpush.bf16.msra.mxu0 %v1804
    %2241 = vmatpush.bf16.msra.mxu0 %v1800
    %2242 = vmatpush.bf16.msra.mxu0 %v1796
    %2243 = vmatpush.bf16.msra.mxu0 %v1792
    %2244 = vmatpush.bf16.msra.mxu0 %v1788
    %2245 = vmatmul.bf16.gmra.mxu0 %v337
    %v2246 = vpop.f32.mrf.mxu0
    %v2247 = vadd.f32 0.0, %v2246
    %v2248 = vpop.f32.mrf.mxu0
    %2249 = vdwg.mxu0
    %2250 = vmatpush.bf16.msra.mxu0 %v1848
    %2251 = vmatpush.bf16.msra.mxu0 %v1844
    %2252 = vmatpush.bf16.msra.mxu0 %v1840
    %2253 = vmatpush.bf16.msra.mxu0 %v1836
    %2254 = vmatpush.bf16.msra.mxu0 %v1832
    %2255 = vmatpush.bf16.msra.mxu0 %v1828
    %2256 = vmatpush.bf16.msra.mxu0 %v1824
    %2257 = vmatpush.bf16.msra.mxu0 %v1820
    %2258 = vmatmul.bf16.gmra.mxu0 %v338
    %v2259 = vpop.f32.mrf.mxu0
    %v2260 = vadd.f32 %v2247, %v2259
    %v2261 = vpop.f32.mrf.mxu0
    %2262 = vdwg.mxu0
    %2263 = vmatpush.bf16.msra.mxu0 %v1880
    %2264 = vmatpush.bf16.msra.mxu0 %v1876
    %2265 = vmatpush.bf16.msra.mxu0 %v1872
    %2266 = vmatpush.bf16.msra.mxu0 %v1868
    %2267 = vmatpush.bf16.msra.mxu0 %v1864
    %2268 = vmatpush.bf16.msra.mxu0 %v1860
    %2269 = vmatpush.bf16.msra.mxu0 %v1856
    %2270 = vmatpush.bf16.msra.mxu0 %v1852
    %2271 = vmatmul.bf16.gmra.mxu0 %v339
    %v2272 = vpop.f32.mrf.mxu0
    %v2273 = vadd.f32 %v2260, %v2272
    %v2274 = vpop.f32.mrf.mxu0
    %2275 = vdwg.mxu0
    %2276 = vmatpush.bf16.msra.mxu0 %v1912
    %2277 = vmatpush.bf16.msra.mxu0 %v1908
    %2278 = vmatpush.bf16.msra.mxu0 %v1904
    %2279 = vmatpush.bf16.msra.mxu0 %v1900
    %2280 = vmatpush.bf16.msra.mxu0 %v1896
    %2281 = vmatpush.bf16.msra.mxu0 %v1892
    %2282 = vmatpush.bf16.msra.mxu0 %v1888
    %2283 = vmatpush.bf16.msra.mxu0 %v1884
    %2284 = vmatmul.bf16.gmra.mxu0 %v340
    %v2285 = vpop.f32.mrf.mxu0
    %v2286 = vadd.f32 %v2273, %v2285
    %v2287 = vpop.f32.mrf.mxu0
    %2288 = vdwg.mxu0
    %2289 = vmatpush.bf16.msra.mxu0 %v1944
    %2290 = vmatpush.bf16.msra.mxu0 %v1940
    %2291 = vmatpush.bf16.msra.mxu0 %v1936
    %2292 = vmatpush.bf16.msra.mxu0 %v1932
    %2293 = vmatpush.bf16.msra.mxu0 %v1928
    %2294 = vmatpush.bf16.msra.mxu0 %v1924
    %2295 = vmatpush.bf16.msra.mxu0 %v1920
    %2296 = vmatpush.bf16.msra.mxu0 %v1916
    %2297 = vmatmul.bf16.gmra.mxu0 %v341
    %v2298 = vpop.f32.mrf.mxu0
    %v2299 = vadd.f32 %v2286, %v2298
    %v2300 = vpop.f32.mrf.mxu0
    %2301 = vdwg.mxu0
    %2302 = vmatpush.bf16.msra.mxu0 %v1976
    %2303 = vmatpush.bf16.msra.mxu0 %v1972
    %2304 = vmatpush.bf16.msra.mxu0 %v1968
    %2305 = vmatpush.bf16.msra.mxu0 %v1964
    %2306 = vmatpush.bf16.msra.mxu0 %v1960
    %2307 = vmatpush.bf16.msra.mxu0 %v1956
    %2308 = vmatpush.bf16.msra.mxu0 %v1952
    %2309 = vmatpush.bf16.msra.mxu0 %v1948
    %2310 = vmatmul.bf16.gmra.mxu0 %v342
    %v2311 = vpop.f32.mrf.mxu0
    %v2312 = vadd.f32 %v2299, %v2311
    %v2313 = vpop.f32.mrf.mxu0
    %2314 = vdwg.mxu0
    %2315 = vmatpush.bf16.msra.mxu0 %v2008
    %2316 = vmatpush.bf16.msra.mxu0 %v2004
    %2317 = vmatpush.bf16.msra.mxu0 %v2000
    %2318 = vmatpush.bf16.msra.mxu0 %v1996
    %2319 = vmatpush.bf16.msra.mxu0 %v1992
    %2320 = vmatpush.bf16.msra.mxu0 %v1988
    %2321 = vmatpush.bf16.msra.mxu0 %v1984
    %2322 = vmatpush.bf16.msra.mxu0 %v1980
    %2323 = vmatmul.bf16.gmra.mxu0 %v343
    %v2324 = vpop.f32.mrf.mxu0
    %v2325 = vadd.f32 %v2312, %v2324
    %v2326 = vpop.f32.mrf.mxu0
    %2327 = vdwg.mxu0
    %2328 = vmatpush.bf16.msra.mxu0 %v2040
    %2329 = vmatpush.bf16.msra.mxu0 %v2036
    %2330 = vmatpush.bf16.msra.mxu0 %v2032
    %2331 = vmatpush.bf16.msra.mxu0 %v2028
    %2332 = vmatpush.bf16.msra.mxu0 %v2024
    %2333 = vmatpush.bf16.msra.mxu0 %v2020
    %2334 = vmatpush.bf16.msra.mxu0 %v2016
    %2335 = vmatpush.bf16.msra.mxu0 %v2012
    %2336 = vmatmul.bf16.gmra.mxu0 %v344
    %v2337 = vpop.f32.mrf.mxu0
    %v2338 = vadd.f32 %v2325, %v2337
    %v2339 = vpop.f32.mrf.mxu0
    %2340 = vdwg.mxu0
    %2341 = vmatpush.bf16.msra.mxu0 %v2072
    %2342 = vmatpush.bf16.msra.mxu0 %v2068
    %2343 = vmatpush.bf16.msra.mxu0 %v2064
    %2344 = vmatpush.bf16.msra.mxu0 %v2060
    %2345 = vmatpush.bf16.msra.mxu0 %v2056
    %2346 = vmatpush.bf16.msra.mxu0 %v2052
    %2347 = vmatpush.bf16.msra.mxu0 %v2048
    %2348 = vmatpush.bf16.msra.mxu0 %v2044
    %2349 = vmatmul.bf16.gmra.mxu0 %v345
    %v2350 = vpop.f32.mrf.mxu0
    %v2351 = vadd.f32 %v2338, %v2350
    %v2352 = vpop.f32.mrf.mxu0
    %2353 = vdwg.mxu0
    %2354 = vmatpush.bf16.msra.mxu0 %v2104
    %2355 = vmatpush.bf16.msra.mxu0 %v2100
    %2356 = vmatpush.bf16.msra.mxu0 %v2096
    %2357 = vmatpush.bf16.msra.mxu0 %v2092
    %2358 = vmatpush.bf16.msra.mxu0 %v2088
    %2359 = vmatpush.bf16.msra.mxu0 %v2084
    %2360 = vmatpush.bf16.msra.mxu0 %v2080
    %2361 = vmatpush.bf16.msra.mxu0 %v2076
    %2362 = vmatmul.bf16.gmra.mxu0 %v346
    %v2363 = vpop.f32.mrf.mxu0
    %v2364 = vadd.f32 %v2351, %v2363
    %v2365 = vpop.f32.mrf.mxu0
    %2366 = vdwg.mxu0
    %2367 = vmatpush.bf16.msra.mxu0 %v1817
    %2368 = vmatpush.bf16.msra.mxu0 %v1813
    %2369 = vmatpush.bf16.msra.mxu0 %v1809
    %2370 = vmatpush.bf16.msra.mxu0 %v1805
    %2371 = vmatpush.bf16.msra.mxu0 %v1801
    %2372 = vmatpush.bf16.msra.mxu0 %v1797
    %2373 = vmatpush.bf16.msra.mxu0 %v1793
    %2374 = vmatpush.bf16.msra.mxu0 %v1789
    %2375 = vmatmul.bf16.gmra.mxu0 %v337
    %v2376 = vpop.f32.mrf.mxu0
    %v2377 = vadd.f32 0.0, %v2376
    %v2378 = vpop.f32.mrf.mxu0
    %2379 = vdwg.mxu0
    %2380 = vmatpush.bf16.msra.mxu0 %v1849
    %2381 = vmatpush.bf16.msra.mxu0 %v1845
    %2382 = vmatpush.bf16.msra.mxu0 %v1841
    %2383 = vmatpush.bf16.msra.mxu0 %v1837
    %2384 = vmatpush.bf16.msra.mxu0 %v1833
    %2385 = vmatpush.bf16.msra.mxu0 %v1829
    %2386 = vmatpush.bf16.msra.mxu0 %v1825
    %2387 = vmatpush.bf16.msra.mxu0 %v1821
    %2388 = vmatmul.bf16.gmra.mxu0 %v338
    %v2389 = vpop.f32.mrf.mxu0
    %v2390 = vadd.f32 %v2377, %v2389
    %v2391 = vpop.f32.mrf.mxu0
    %2392 = vdwg.mxu0
    %2393 = vmatpush.bf16.msra.mxu0 %v1881
    %2394 = vmatpush.bf16.msra.mxu0 %v1877
    %2395 = vmatpush.bf16.msra.mxu0 %v1873
    %2396 = vmatpush.bf16.msra.mxu0 %v1869
    %2397 = vmatpush.bf16.msra.mxu0 %v1865
    %2398 = vmatpush.bf16.msra.mxu0 %v1861
    %2399 = vmatpush.bf16.msra.mxu0 %v1857
    %2400 = vmatpush.bf16.msra.mxu0 %v1853
    %2401 = vmatmul.bf16.gmra.mxu0 %v339
    %v2402 = vpop.f32.mrf.mxu0
    %v2403 = vadd.f32 %v2390, %v2402
    %v2404 = vpop.f32.mrf.mxu0
    %2405 = vdwg.mxu0
    %2406 = vmatpush.bf16.msra.mxu0 %v1913
    %2407 = vmatpush.bf16.msra.mxu0 %v1909
    %2408 = vmatpush.bf16.msra.mxu0 %v1905
    %2409 = vmatpush.bf16.msra.mxu0 %v1901
    %2410 = vmatpush.bf16.msra.mxu0 %v1897
    %2411 = vmatpush.bf16.msra.mxu0 %v1893
    %2412 = vmatpush.bf16.msra.mxu0 %v1889
    %2413 = vmatpush.bf16.msra.mxu0 %v1885
    %2414 = vmatmul.bf16.gmra.mxu0 %v340
    %v2415 = vpop.f32.mrf.mxu0
    %v2416 = vadd.f32 %v2403, %v2415
    %v2417 = vpop.f32.mrf.mxu0
    %2418 = vdwg.mxu0
    %2419 = vmatpush.bf16.msra.mxu0 %v1945
    %2420 = vmatpush.bf16.msra.mxu0 %v1941
    %2421 = vmatpush.bf16.msra.mxu0 %v1937
    %2422 = vmatpush.bf16.msra.mxu0 %v1933
    %2423 = vmatpush.bf16.msra.mxu0 %v1929
    %2424 = vmatpush.bf16.msra.mxu0 %v1925
    %2425 = vmatpush.bf16.msra.mxu0 %v1921
    %2426 = vmatpush.bf16.msra.mxu0 %v1917
    %2427 = vmatmul.bf16.gmra.mxu0 %v341
    %v2428 = vpop.f32.mrf.mxu0
    %v2429 = vadd.f32 %v2416, %v2428
    %v2430 = vpop.f32.mrf.mxu0
    %2431 = vdwg.mxu0
    %2432 = vmatpush.bf16.msra.mxu0 %v1977
    %2433 = vmatpush.bf16.msra.mxu0 %v1973
    %2434 = vmatpush.bf16.msra.mxu0 %v1969
    %2435 = vmatpush.bf16.msra.mxu0 %v1965
    %2436 = vmatpush.bf16.msra.mxu0 %v1961
    %2437 = vmatpush.bf16.msra.mxu0 %v1957
    %2438 = vmatpush.bf16.msra.mxu0 %v1953
    %2439 = vmatpush.bf16.msra.mxu0 %v1949
    %2440 = vmatmul.bf16.gmra.mxu0 %v342
    %v2441 = vpop.f32.mrf.mxu0
    %v2442 = vadd.f32 %v2429, %v2441
    %v2443 = vpop.f32.mrf.mxu0
    %2444 = vdwg.mxu0
    %2445 = vmatpush.bf16.msra.mxu0 %v2009
    %2446 = vmatpush.bf16.msra.mxu0 %v2005
    %2447 = vmatpush.bf16.msra.mxu0 %v2001
    %2448 = vmatpush.bf16.msra.mxu0 %v1997
    %2449 = vmatpush.bf16.msra.mxu0 %v1993
    %2450 = vmatpush.bf16.msra.mxu0 %v1989
    %2451 = vmatpush.bf16.msra.mxu0 %v1985
    %2452 = vmatpush.bf16.msra.mxu0 %v1981
    %2453 = vmatmul.bf16.gmra.mxu0 %v343
    %v2454 = vpop.f32.mrf.mxu0
    %v2455 = vadd.f32 %v2442, %v2454
    %v2456 = vpop.f32.mrf.mxu0
    %2457 = vdwg.mxu0
    %2458 = vmatpush.bf16.msra.mxu0 %v2041
    %2459 = vmatpush.bf16.msra.mxu0 %v2037
    %2460 = vmatpush.bf16.msra.mxu0 %v2033
    %2461 = vmatpush.bf16.msra.mxu0 %v2029
    %2462 = vmatpush.bf16.msra.mxu0 %v2025
    %2463 = vmatpush.bf16.msra.mxu0 %v2021
    %2464 = vmatpush.bf16.msra.mxu0 %v2017
    %2465 = vmatpush.bf16.msra.mxu0 %v2013
    %2466 = vmatmul.bf16.gmra.mxu0 %v344
    %v2467 = vpop.f32.mrf.mxu0
    %v2468 = vadd.f32 %v2455, %v2467
    %v2469 = vpop.f32.mrf.mxu0
    %2470 = vdwg.mxu0
    %2471 = vmatpush.bf16.msra.mxu0 %v2073
    %2472 = vmatpush.bf16.msra.mxu0 %v2069
    %2473 = vmatpush.bf16.msra.mxu0 %v2065
    %2474 = vmatpush.bf16.msra.mxu0 %v2061
    %2475 = vmatpush.bf16.msra.mxu0 %v2057
    %2476 = vmatpush.bf16.msra.mxu0 %v2053
    %2477 = vmatpush.bf16.msra.mxu0 %v2049
    %2478 = vmatpush.bf16.msra.mxu0 %v2045
    %2479 = vmatmul.bf16.gmra.mxu0 %v345
    %v2480 = vpop.f32.mrf.mxu0
    %v2481 = vadd.f32 %v2468, %v2480
    %v2482 = vpop.f32.mrf.mxu0
    %2483 = vdwg.mxu0
    %2484 = vmatpush.bf16.msra.mxu0 %v2105
    %2485 = vmatpush.bf16.msra.mxu0 %v2101
    %2486 = vmatpush.bf16.msra.mxu0 %v2097
    %2487 = vmatpush.bf16.msra.mxu0 %v2093
    %2488 = vmatpush.bf16.msra.mxu0 %v2089
    %2489 = vmatpush.bf16.msra.mxu0 %v2085
    %2490 = vmatpush.bf16.msra.mxu0 %v2081
    %2491 = vmatpush.bf16.msra.mxu0 %v2077
    %2492 = vmatmul.bf16.gmra.mxu0 %v346
    %v2493 = vpop.f32.mrf.mxu0
    %v2494 = vadd.f32 %v2481, %v2493
    %v2495 = vpop.f32.mrf.mxu0
    %2496 = vdwg.mxu0
    %2497 = vmatpush.bf16.msra.mxu0 %v1818
    %2498 = vmatpush.bf16.msra.mxu0 %v1814
    %2499 = vmatpush.bf16.msra.mxu0 %v1810
    %2500 = vmatpush.bf16.msra.mxu0 %v1806
    %2501 = vmatpush.bf16.msra.mxu0 %v1802
    %2502 = vmatpush.bf16.msra.mxu0 %v1798
    %2503 = vmatpush.bf16.msra.mxu0 %v1794
    %2504 = vmatpush.bf16.msra.mxu0 %v1790
    %2505 = vmatmul.bf16.gmra.mxu0 %v337
    %v2506 = vpop.f32.mrf.mxu0
    %v2507 = vadd.f32 0.0, %v2506
    %v2508 = vpop.f32.mrf.mxu0
    %2509 = vdwg.mxu0
    %2510 = vmatpush.bf16.msra.mxu0 %v1850
    %2511 = vmatpush.bf16.msra.mxu0 %v1846
    %2512 = vmatpush.bf16.msra.mxu0 %v1842
    %2513 = vmatpush.bf16.msra.mxu0 %v1838
    %2514 = vmatpush.bf16.msra.mxu0 %v1834
    %2515 = vmatpush.bf16.msra.mxu0 %v1830
    %2516 = vmatpush.bf16.msra.mxu0 %v1826
    %2517 = vmatpush.bf16.msra.mxu0 %v1822
    %2518 = vmatmul.bf16.gmra.mxu0 %v338
    %v2519 = vpop.f32.mrf.mxu0
    %v2520 = vadd.f32 %v2507, %v2519
    %v2521 = vpop.f32.mrf.mxu0
    %2522 = vdwg.mxu0
    %2523 = vmatpush.bf16.msra.mxu0 %v1882
    %2524 = vmatpush.bf16.msra.mxu0 %v1878
    %2525 = vmatpush.bf16.msra.mxu0 %v1874
    %2526 = vmatpush.bf16.msra.mxu0 %v1870
    %2527 = vmatpush.bf16.msra.mxu0 %v1866
    %2528 = vmatpush.bf16.msra.mxu0 %v1862
    %2529 = vmatpush.bf16.msra.mxu0 %v1858
    %2530 = vmatpush.bf16.msra.mxu0 %v1854
    %2531 = vmatmul.bf16.gmra.mxu0 %v339
    %v2532 = vpop.f32.mrf.mxu0
    %v2533 = vadd.f32 %v2520, %v2532
    %v2534 = vpop.f32.mrf.mxu0
    %2535 = vdwg.mxu0
    %2536 = vmatpush.bf16.msra.mxu0 %v1914
    %2537 = vmatpush.bf16.msra.mxu0 %v1910
    %2538 = vmatpush.bf16.msra.mxu0 %v1906
    %2539 = vmatpush.bf16.msra.mxu0 %v1902
    %2540 = vmatpush.bf16.msra.mxu0 %v1898
    %2541 = vmatpush.bf16.msra.mxu0 %v1894
    %2542 = vmatpush.bf16.msra.mxu0 %v1890
    %2543 = vmatpush.bf16.msra.mxu0 %v1886
    %2544 = vmatmul.bf16.gmra.mxu0 %v340
    %v2545 = vpop.f32.mrf.mxu0
    %v2546 = vadd.f32 %v2533, %v2545
    %v2547 = vpop.f32.mrf.mxu0
    %2548 = vdwg.mxu0
    %2549 = vmatpush.bf16.msra.mxu0 %v1946
    %2550 = vmatpush.bf16.msra.mxu0 %v1942
    %2551 = vmatpush.bf16.msra.mxu0 %v1938
    %2552 = vmatpush.bf16.msra.mxu0 %v1934
    %2553 = vmatpush.bf16.msra.mxu0 %v1930
    %2554 = vmatpush.bf16.msra.mxu0 %v1926
    %2555 = vmatpush.bf16.msra.mxu0 %v1922
    %2556 = vmatpush.bf16.msra.mxu0 %v1918
    %2557 = vmatmul.bf16.gmra.mxu0 %v341
    %v2558 = vpop.f32.mrf.mxu0
    %v2559 = vadd.f32 %v2546, %v2558
    %v2560 = vpop.f32.mrf.mxu0
    %2561 = vdwg.mxu0
    %2562 = vmatpush.bf16.msra.mxu0 %v1978
    %2563 = vmatpush.bf16.msra.mxu0 %v1974
    %2564 = vmatpush.bf16.msra.mxu0 %v1970
    %2565 = vmatpush.bf16.msra.mxu0 %v1966
    %2566 = vmatpush.bf16.msra.mxu0 %v1962
    %2567 = vmatpush.bf16.msra.mxu0 %v1958
    %2568 = vmatpush.bf16.msra.mxu0 %v1954
    %2569 = vmatpush.bf16.msra.mxu0 %v1950
    %2570 = vmatmul.bf16.gmra.mxu0 %v342
    %v2571 = vpop.f32.mrf.mxu0
    %v2572 = vadd.f32 %v2559, %v2571
    %v2573 = vpop.f32.mrf.mxu0
    %2574 = vdwg.mxu0
    %2575 = vmatpush.bf16.msra.mxu0 %v2010
    %2576 = vmatpush.bf16.msra.mxu0 %v2006
    %2577 = vmatpush.bf16.msra.mxu0 %v2002
    %2578 = vmatpush.bf16.msra.mxu0 %v1998
    %2579 = vmatpush.bf16.msra.mxu0 %v1994
    %2580 = vmatpush.bf16.msra.mxu0 %v1990
    %2581 = vmatpush.bf16.msra.mxu0 %v1986
    %2582 = vmatpush.bf16.msra.mxu0 %v1982
    %2583 = vmatmul.bf16.gmra.mxu0 %v343
    %v2584 = vpop.f32.mrf.mxu0
    %v2585 = vadd.f32 %v2572, %v2584
    %v2586 = vpop.f32.mrf.mxu0
    %2587 = vdwg.mxu0
    %2588 = vmatpush.bf16.msra.mxu0 %v2042
    %2589 = vmatpush.bf16.msra.mxu0 %v2038
    %2590 = vmatpush.bf16.msra.mxu0 %v2034
    %2591 = vmatpush.bf16.msra.mxu0 %v2030
    %2592 = vmatpush.bf16.msra.mxu0 %v2026
    %2593 = vmatpush.bf16.msra.mxu0 %v2022
    %2594 = vmatpush.bf16.msra.mxu0 %v2018
    %2595 = vmatpush.bf16.msra.mxu0 %v2014
    %2596 = vmatmul.bf16.gmra.mxu0 %v344
    %v2597 = vpop.f32.mrf.mxu0
    %v2598 = vadd.f32 %v2585, %v2597
    %v2599 = vpop.f32.mrf.mxu0
    %2600 = vdwg.mxu0
    %2601 = vmatpush.bf16.msra.mxu0 %v2074
    %2602 = vmatpush.bf16.msra.mxu0 %v2070
    %2603 = vmatpush.bf16.msra.mxu0 %v2066
    %2604 = vmatpush.bf16.msra.mxu0 %v2062
    %2605 = vmatpush.bf16.msra.mxu0 %v2058
    %2606 = vmatpush.bf16.msra.mxu0 %v2054
    %2607 = vmatpush.bf16.msra.mxu0 %v2050
    %2608 = vmatpush.bf16.msra.mxu0 %v2046
    %2609 = vmatmul.bf16.gmra.mxu0 %v345
    %v2610 = vpop.f32.mrf.mxu0
    %v2611 = vadd.f32 %v2598, %v2610
    %v2612 = vpop.f32.mrf.mxu0
    %2613 = vdwg.mxu0
    %2614 = vmatpush.bf16.msra.mxu0 %v2106
    %2615 = vmatpush.bf16.msra.mxu0 %v2102
    %2616 = vmatpush.bf16.msra.mxu0 %v2098
    %2617 = vmatpush.bf16.msra.mxu0 %v2094
    %2618 = vmatpush.bf16.msra.mxu0 %v2090
    %2619 = vmatpush.bf16.msra.mxu0 %v2086
    %2620 = vmatpush.bf16.msra.mxu0 %v2082
    %2621 = vmatpush.bf16.msra.mxu0 %v2078
    %2622 = vmatmul.bf16.gmra.mxu0 %v346
    %v2623 = vpop.f32.mrf.mxu0
    %v2624 = vadd.f32 %v2611, %v2623
    %v2625 = vpop.f32.mrf.mxu0
    %2626 = vdwg.mxu0
    %v2627 = vld [vmem:[#allocation13] sm:$0xf]
    %v2629 = vperm.slane %v2627, 0
    %v2630 = vperm.slane %v2627, 1
    %v2631 = vperm.slane %v2627, 2
    %v2632 = vperm.slane %v2627, 3
    %v2637 = vmul.f32 %v2234, %v2629
    %v2638 = vmul.f32 %v2364, %v2630
    %v2639 = vmul.f32 %v2494, %v2631
    %v2640 = vmul.f32 %v2624, %v2632
    %v2641 = vld [vmem:[#allocation15] sm:$0xf]
    %v2643 = vperm.slane %v2641, 0
    %v2644 = vperm.slane %v2641, 1
    %v2645 = vperm.slane %v2641, 2
    %v2646 = vperm.slane %v2641, 3
    %v2651 = vadd.f32 %v2637, %v2643
    %v2652 = vadd.f32 %v2638, %v2644
    %v2653 = vadd.f32 %v2639, %v2645
    %v2654 = vadd.f32 %v2640, %v2646
    %v2655 = vmax.f32 %v2651, 0.0
    %v2656 = vmax.f32 %v2652, 0.0
    %v2657 = vmax.f32 %v2653, 0.0
    %v2658 = vmax.f32 %v2654, 0.0
    %v2660 = vrot.slane %v2658, 1
    %v2665 = vrot.slane %v2656, 7
    %v2666 = vrot.slane %v2657, 6
    %v2667 = vrot.slane %v2660, 5
    %v2668 = vsel %vm326, %v2655, %v2665
    %vm2669 = vcmask 1042434
    %v2670 = vsel %vm2669, %v2666, %v2667
    %vm2671 = vcmask 1041408
    %v2672 = vsel %vm2671, %v2668, %v2670
    %v2674 = vlaneseq
    %vm2675 = vcmp.ge.s32.totalorder %v2674, 0
    %vm2676 = vcmp.lt.s32.totalorder %v2674, 512
    %vm2677 = vmand %vm2675, %vm2676
    %2678 = vst.msk [vmem:[#allocation24] sm:$0xf] %vm2677, %v2672
    %v2679 = vld [vmem:[#allocation9] sm:$0xf]
    %v2681 = vperm.slane %v2679, 0
    %v2682 = vperm.slane %v2679, 1
    %v2683 = vperm.slane %v2679, 2
    %v2684 = vperm.slane %v2679, 3
    %v2689 = vpack.c.bf16 %v2655, %v2655
    %v2690 = vpack.c.bf16 %v2656, %v2656
    %v2691 = vpack.c.bf16 %v2657, %v2657
    %v2692 = vpack.c.bf16 %v2660, %v2660
    %v2693 = vpack.c.bf16 %v2681, %v2681
    %v2694 = vpack.c.bf16 %v2682, %v2682
    %v2695 = vpack.c.bf16 %v2683, %v2683
    %v2696 = vpack.c.bf16 %v2684, %v2684
    %v2697 = vld [vmem:[#allocation16] sm:$0xff]
    %v2698 = vld [vmem:[#allocation16 + $0x8] sm:$0xff]
    %v2699 = vld [vmem:[#allocation18] sm:$0xff]
    %v2700 = vld [vmem:[#allocation18 + $0x8] sm:$0xff]
    %s2701 = smul.u32 2, 128
    %s2702 = smul.u32 %s2701, 4
    %s2703 = sshll.u32 %s2702, 4
    %2704 = dma.done [#allocation3], %s2703
    %v2705 = vld [vmem:[#allocation2] sm:$0xff]
    %v2706 = vld [vmem:[#allocation2 + $0x8] sm:$0xff]
    %v2707 = vld [vmem:[#allocation2 + $0x10] sm:$0xff]
    %v2708 = vld [vmem:[#allocation2 + $0x18] sm:$0xff]
    %v2709 = vld [vmem:[#allocation2 + $0x20] sm:$0xff]
    %v2710 = vld [vmem:[#allocation2 + $0x28] sm:$0xff]
    %v2711 = vld [vmem:[#allocation2 + $0x30] sm:$0xff]
    %v2712 = vld [vmem:[#allocation2 + $0x38] sm:$0xff]
    %v2713 = vld [vmem:[#allocation2 + $0x40] sm:$0xff]
    %v2714 = vld [vmem:[#allocation2 + $0x48] sm:$0xff]
    %v2715 = vld [vmem:[#allocation2 + $0x50] sm:$0xff]
    %v2716 = vld [vmem:[#allocation2 + $0x58] sm:$0xff]
    %v2717 = vld [vmem:[#allocation2 + $0x60] sm:$0xff]
    %v2718 = vld [vmem:[#allocation2 + $0x68] sm:$0xff]
    %v2719 = vld [vmem:[#allocation2 + $0x70] sm:$0xff]
    %v2720 = vld [vmem:[#allocation2 + $0x78] sm:$0xff]
    %v2721 = vld [vmem:[#allocation2 + $0x80] sm:$0xff]
    %v2722 = vld [vmem:[#allocation2 + $0x88] sm:$0xff]
    %v2723 = vld [vmem:[#allocation2 + $0x90] sm:$0xff]
    %v2724 = vld [vmem:[#allocation2 + $0x98] sm:$0xff]
    %v2725 = vld [vmem:[#allocation2 + $0xa0] sm:$0xff]
    %v2726 = vld [vmem:[#allocation2 + $0xa8] sm:$0xff]
    %v2727 = vld [vmem:[#allocation2 + $0xb0] sm:$0xff]
    %v2728 = vld [vmem:[#allocation2 + $0xb8] sm:$0xff]
    %v2729 = vld [vmem:[#allocation2 + $0xc0] sm:$0xff]
    %v2730 = vld [vmem:[#allocation2 + $0xc8] sm:$0xff]
    %v2731 = vld [vmem:[#allocation2 + $0xd0] sm:$0xff]
    %v2732 = vld [vmem:[#allocation2 + $0xd8] sm:$0xff]
    %v2733 = vld [vmem:[#allocation2 + $0xe0] sm:$0xff]
    %v2734 = vld [vmem:[#allocation2 + $0xe8] sm:$0xff]
    %v2735 = vld [vmem:[#allocation2 + $0xf0] sm:$0xff]
    %v2736 = vld [vmem:[#allocation2 + $0xf8] sm:$0xff]
    %v2737 = vld [vmem:[#allocation2 + $0x100] sm:$0xff]
    %v2738 = vld [vmem:[#allocation2 + $0x108] sm:$0xff]
    %v2739 = vld [vmem:[#allocation2 + $0x110] sm:$0xff]
    %v2740 = vld [vmem:[#allocation2 + $0x118] sm:$0xff]
    %v2741 = vld [vmem:[#allocation2 + $0x120] sm:$0xff]
    %v2742 = vld [vmem:[#allocation2 + $0x128] sm:$0xff]
    %v2743 = vld [vmem:[#allocation2 + $0x130] sm:$0xff]
    %v2744 = vld [vmem:[#allocation2 + $0x138] sm:$0xff]
    %v2745 = vld [vmem:[#allocation2 + $0x140] sm:$0xff]
    %v2746 = vld [vmem:[#allocation2 + $0x148] sm:$0xff]
    %v2747 = vld [vmem:[#allocation2 + $0x150] sm:$0xff]
    %v2748 = vld [vmem:[#allocation2 + $0x158] sm:$0xff]
    %v2749 = vld [vmem:[#allocation2 + $0x160] sm:$0xff]
    %v2750 = vld [vmem:[#allocation2 + $0x168] sm:$0xff]
    %v2751 = vld [vmem:[#allocation2 + $0x170] sm:$0xff]
    %v2752 = vld [vmem:[#allocation2 + $0x178] sm:$0xff]
    %v2753 = vld [vmem:[#allocation2 + $0x180] sm:$0xff]
    %v2754 = vld [vmem:[#allocation2 + $0x188] sm:$0xff]
    %v2755 = vld [vmem:[#allocation2 + $0x190] sm:$0xff]
    %v2756 = vld [vmem:[#allocation2 + $0x198] sm:$0xff]
    %v2757 = vld [vmem:[#allocation2 + $0x1a0] sm:$0xff]
    %v2758 = vld [vmem:[#allocation2 + $0x1a8] sm:$0xff]
    %v2759 = vld [vmem:[#allocation2 + $0x1b0] sm:$0xff]
    %v2760 = vld [vmem:[#allocation2 + $0x1b8] sm:$0xff]
    %v2761 = vld [vmem:[#allocation2 + $0x1c0] sm:$0xff]
    %v2762 = vld [vmem:[#allocation2 + $0x1c8] sm:$0xff]
    %v2763 = vld [vmem:[#allocation2 + $0x1d0] sm:$0xff]
    %v2764 = vld [vmem:[#allocation2 + $0x1d8] sm:$0xff]
    %v2765 = vld [vmem:[#allocation2 + $0x1e0] sm:$0xff]
    %v2766 = vld [vmem:[#allocation2 + $0x1e8] sm:$0xff]
    %v2767 = vld [vmem:[#allocation2 + $0x1f0] sm:$0xff]
    %v2768 = vld [vmem:[#allocation2 + $0x1f8] sm:$0xff]
    %v2769 = vld [vmem:[#allocation2 + $0x200] sm:$0xff]
    %v2770 = vld [vmem:[#allocation2 + $0x208] sm:$0xff]
    %v2771 = vld [vmem:[#allocation2 + $0x210] sm:$0xff]
    %v2772 = vld [vmem:[#allocation2 + $0x218] sm:$0xff]
    %v2773 = vld [vmem:[#allocation2 + $0x220] sm:$0xff]
    %v2774 = vld [vmem:[#allocation2 + $0x228] sm:$0xff]
    %v2775 = vld [vmem:[#allocation2 + $0x230] sm:$0xff]
    %v2776 = vld [vmem:[#allocation2 + $0x238] sm:$0xff]
    %v2777 = vld [vmem:[#allocation2 + $0x240] sm:$0xff]
    %v2778 = vld [vmem:[#allocation2 + $0x248] sm:$0xff]
    %v2779 = vld [vmem:[#allocation2 + $0x250] sm:$0xff]
    %v2780 = vld [vmem:[#allocation2 + $0x258] sm:$0xff]
    %v2781 = vld [vmem:[#allocation2 + $0x260] sm:$0xff]
    %v2782 = vld [vmem:[#allocation2 + $0x268] sm:$0xff]
    %v2783 = vld [vmem:[#allocation2 + $0x270] sm:$0xff]
    %v2784 = vld [vmem:[#allocation2 + $0x278] sm:$0xff]
    %v2785 = vld [vmem:[#allocation2 + $0x280] sm:$0xff]
    %v2786 = vld [vmem:[#allocation2 + $0x288] sm:$0xff]
    %v2787 = vld [vmem:[#allocation2 + $0x290] sm:$0xff]
    %v2788 = vld [vmem:[#allocation2 + $0x298] sm:$0xff]
    %v2789 = vld [vmem:[#allocation2 + $0x2a0] sm:$0xff]
    %v2790 = vld [vmem:[#allocation2 + $0x2a8] sm:$0xff]
    %v2791 = vld [vmem:[#allocation2 + $0x2b0] sm:$0xff]
    %v2792 = vld [vmem:[#allocation2 + $0x2b8] sm:$0xff]
    %v2793 = vld [vmem:[#allocation2 + $0x2c0] sm:$0xff]
    %v2794 = vld [vmem:[#allocation2 + $0x2c8] sm:$0xff]
    %v2795 = vld [vmem:[#allocation2 + $0x2d0] sm:$0xff]
    %v2796 = vld [vmem:[#allocation2 + $0x2d8] sm:$0xff]
    %v2797 = vld [vmem:[#allocation2 + $0x2e0] sm:$0xff]
    %v2798 = vld [vmem:[#allocation2 + $0x2e8] sm:$0xff]
    %v2799 = vld [vmem:[#allocation2 + $0x2f0] sm:$0xff]
    %v2800 = vld [vmem:[#allocation2 + $0x2f8] sm:$0xff]
    %v2801 = vld [vmem:[#allocation2 + $0x300] sm:$0xff]
    %v2802 = vld [vmem:[#allocation2 + $0x308] sm:$0xff]
    %v2803 = vld [vmem:[#allocation2 + $0x310] sm:$0xff]
    %v2804 = vld [vmem:[#allocation2 + $0x318] sm:$0xff]
    %v2805 = vld [vmem:[#allocation2 + $0x320] sm:$0xff]
    %v2806 = vld [vmem:[#allocation2 + $0x328] sm:$0xff]
    %v2807 = vld [vmem:[#allocation2 + $0x330] sm:$0xff]
    %v2808 = vld [vmem:[#allocation2 + $0x338] sm:$0xff]
    %v2809 = vld [vmem:[#allocation2 + $0x340] sm:$0xff]
    %v2810 = vld [vmem:[#allocation2 + $0x348] sm:$0xff]
    %v2811 = vld [vmem:[#allocation2 + $0x350] sm:$0xff]
    %v2812 = vld [vmem:[#allocation2 + $0x358] sm:$0xff]
    %v2813 = vld [vmem:[#allocation2 + $0x360] sm:$0xff]
    %v2814 = vld [vmem:[#allocation2 + $0x368] sm:$0xff]
    %v2815 = vld [vmem:[#allocation2 + $0x370] sm:$0xff]
    %v2816 = vld [vmem:[#allocation2 + $0x378] sm:$0xff]
    %v2817 = vld [vmem:[#allocation2 + $0x380] sm:$0xff]
    %v2818 = vld [vmem:[#allocation2 + $0x388] sm:$0xff]
    %v2819 = vld [vmem:[#allocation2 + $0x390] sm:$0xff]
    %v2820 = vld [vmem:[#allocation2 + $0x398] sm:$0xff]
    %v2821 = vld [vmem:[#allocation2 + $0x3a0] sm:$0xff]
    %v2822 = vld [vmem:[#allocation2 + $0x3a8] sm:$0xff]
    %v2823 = vld [vmem:[#allocation2 + $0x3b0] sm:$0xff]
    %v2824 = vld [vmem:[#allocation2 + $0x3b8] sm:$0xff]
    %v2825 = vld [vmem:[#allocation2 + $0x3c0] sm:$0xff]
    %v2826 = vld [vmem:[#allocation2 + $0x3c8] sm:$0xff]
    %v2827 = vld [vmem:[#allocation2 + $0x3d0] sm:$0xff]
    %v2828 = vld [vmem:[#allocation2 + $0x3d8] sm:$0xff]
    %v2829 = vld [vmem:[#allocation2 + $0x3e0] sm:$0xff]
    %v2830 = vld [vmem:[#allocation2 + $0x3e8] sm:$0xff]
    %v2831 = vld [vmem:[#allocation2 + $0x3f0] sm:$0xff]
    %v2832 = vld [vmem:[#allocation2 + $0x3f8] sm:$0xff]
    %v2833 = vunpack.c.0.s8 %v2705
    %v2834 = vunpack.c.0.s8 %v2706
    %v2835 = vunpack.c.0.s8 %v2707
    %v2836 = vunpack.c.0.s8 %v2708
    %v2837 = vunpack.c.1.s8 %v2705
    %v2838 = vunpack.c.1.s8 %v2706
    %v2839 = vunpack.c.1.s8 %v2707
    %v2840 = vunpack.c.1.s8 %v2708
    %v2841 = vunpack.c.2.s8 %v2705
    %v2842 = vunpack.c.2.s8 %v2706
    %v2843 = vunpack.c.2.s8 %v2707
    %v2844 = vunpack.c.2.s8 %v2708
    %v2845 = vunpack.c.3.s8 %v2705
    %v2846 = vunpack.c.3.s8 %v2706
    %v2847 = vunpack.c.3.s8 %v2707
    %v2848 = vunpack.c.3.s8 %v2708
    %v2849 = vunpack.c.0.s8 %v2709
    %v2850 = vunpack.c.0.s8 %v2710
    %v2851 = vunpack.c.0.s8 %v2711
    %v2852 = vunpack.c.0.s8 %v2712
    %v2853 = vunpack.c.1.s8 %v2709
    %v2854 = vunpack.c.1.s8 %v2710
    %v2855 = vunpack.c.1.s8 %v2711
    %v2856 = vunpack.c.1.s8 %v2712
    %v2857 = vunpack.c.2.s8 %v2709
    %v2858 = vunpack.c.2.s8 %v2710
    %v2859 = vunpack.c.2.s8 %v2711
    %v2860 = vunpack.c.2.s8 %v2712
    %v2861 = vunpack.c.3.s8 %v2709
    %v2862 = vunpack.c.3.s8 %v2710
    %v2863 = vunpack.c.3.s8 %v2711
    %v2864 = vunpack.c.3.s8 %v2712
    %v2865 = vunpack.c.0.s8 %v2713
    %v2866 = vunpack.c.0.s8 %v2714
    %v2867 = vunpack.c.0.s8 %v2715
    %v2868 = vunpack.c.0.s8 %v2716
    %v2869 = vunpack.c.1.s8 %v2713
    %v2870 = vunpack.c.1.s8 %v2714
    %v2871 = vunpack.c.1.s8 %v2715
    %v2872 = vunpack.c.1.s8 %v2716
    %v2873 = vunpack.c.2.s8 %v2713
    %v2874 = vunpack.c.2.s8 %v2714
    %v2875 = vunpack.c.2.s8 %v2715
    %v2876 = vunpack.c.2.s8 %v2716
    %v2877 = vunpack.c.3.s8 %v2713
    %v2878 = vunpack.c.3.s8 %v2714
    %v2879 = vunpack.c.3.s8 %v2715
    %v2880 = vunpack.c.3.s8 %v2716
    %v2881 = vunpack.c.0.s8 %v2717
    %v2882 = vunpack.c.0.s8 %v2718
    %v2883 = vunpack.c.0.s8 %v2719
    %v2884 = vunpack.c.0.s8 %v2720
    %v2885 = vunpack.c.1.s8 %v2717
    %v2886 = vunpack.c.1.s8 %v2718
    %v2887 = vunpack.c.1.s8 %v2719
    %v2888 = vunpack.c.1.s8 %v2720
    %v2889 = vunpack.c.2.s8 %v2717
    %v2890 = vunpack.c.2.s8 %v2718
    %v2891 = vunpack.c.2.s8 %v2719
    %v2892 = vunpack.c.2.s8 %v2720
    %v2893 = vunpack.c.3.s8 %v2717
    %v2894 = vunpack.c.3.s8 %v2718
    %v2895 = vunpack.c.3.s8 %v2719
    %v2896 = vunpack.c.3.s8 %v2720
    %v2897 = vunpack.c.0.s8 %v2721
    %v2898 = vunpack.c.0.s8 %v2722
    %v2899 = vunpack.c.0.s8 %v2723
    %v2900 = vunpack.c.0.s8 %v2724
    %v2901 = vunpack.c.1.s8 %v2721
    %v2902 = vunpack.c.1.s8 %v2722
    %v2903 = vunpack.c.1.s8 %v2723
    %v2904 = vunpack.c.1.s8 %v2724
    %v2905 = vunpack.c.2.s8 %v2721
    %v2906 = vunpack.c.2.s8 %v2722
    %v2907 = vunpack.c.2.s8 %v2723
    %v2908 = vunpack.c.2.s8 %v2724
    %v2909 = vunpack.c.3.s8 %v2721
    %v2910 = vunpack.c.3.s8 %v2722
    %v2911 = vunpack.c.3.s8 %v2723
    %v2912 = vunpack.c.3.s8 %v2724
    %v2913 = vunpack.c.0.s8 %v2725
    %v2914 = vunpack.c.0.s8 %v2726
    %v2915 = vunpack.c.0.s8 %v2727
    %v2916 = vunpack.c.0.s8 %v2728
    %v2917 = vunpack.c.1.s8 %v2725
    %v2918 = vunpack.c.1.s8 %v2726
    %v2919 = vunpack.c.1.s8 %v2727
    %v2920 = vunpack.c.1.s8 %v2728
    %v2921 = vunpack.c.2.s8 %v2725
    %v2922 = vunpack.c.2.s8 %v2726
    %v2923 = vunpack.c.2.s8 %v2727
    %v2924 = vunpack.c.2.s8 %v2728
    %v2925 = vunpack.c.3.s8 %v2725
    %v2926 = vunpack.c.3.s8 %v2726
    %v2927 = vunpack.c.3.s8 %v2727
    %v2928 = vunpack.c.3.s8 %v2728
    %v2929 = vunpack.c.0.s8 %v2729
    %v2930 = vunpack.c.0.s8 %v2730
    %v2931 = vunpack.c.0.s8 %v2731
    %v2932 = vunpack.c.0.s8 %v2732
    %v2933 = vunpack.c.1.s8 %v2729
    %v2934 = vunpack.c.1.s8 %v2730
    %v2935 = vunpack.c.1.s8 %v2731
    %v2936 = vunpack.c.1.s8 %v2732
    %v2937 = vunpack.c.2.s8 %v2729
    %v2938 = vunpack.c.2.s8 %v2730
    %v2939 = vunpack.c.2.s8 %v2731
    %v2940 = vunpack.c.2.s8 %v2732
    %v2941 = vunpack.c.3.s8 %v2729
    %v2942 = vunpack.c.3.s8 %v2730
    %v2943 = vunpack.c.3.s8 %v2731
    %v2944 = vunpack.c.3.s8 %v2732
    %v2945 = vunpack.c.0.s8 %v2733
    %v2946 = vunpack.c.0.s8 %v2734
    %v2947 = vunpack.c.0.s8 %v2735
    %v2948 = vunpack.c.0.s8 %v2736
    %v2949 = vunpack.c.1.s8 %v2733
    %v2950 = vunpack.c.1.s8 %v2734
    %v2951 = vunpack.c.1.s8 %v2735
    %v2952 = vunpack.c.1.s8 %v2736
    %v2953 = vunpack.c.2.s8 %v2733
    %v2954 = vunpack.c.2.s8 %v2734
    %v2955 = vunpack.c.2.s8 %v2735
    %v2956 = vunpack.c.2.s8 %v2736
    %v2957 = vunpack.c.3.s8 %v2733
    %v2958 = vunpack.c.3.s8 %v2734
    %v2959 = vunpack.c.3.s8 %v2735
    %v2960 = vunpack.c.3.s8 %v2736
    %v2961 = vunpack.c.0.s8 %v2737
    %v2962 = vunpack.c.0.s8 %v2738
    %v2963 = vunpack.c.0.s8 %v2739
    %v2964 = vunpack.c.0.s8 %v2740
    %v2965 = vunpack.c.1.s8 %v2737
    %v2966 = vunpack.c.1.s8 %v2738
    %v2967 = vunpack.c.1.s8 %v2739
    %v2968 = vunpack.c.1.s8 %v2740
    %v2969 = vunpack.c.2.s8 %v2737
    %v2970 = vunpack.c.2.s8 %v2738
    %v2971 = vunpack.c.2.s8 %v2739
    %v2972 = vunpack.c.2.s8 %v2740
    %v2973 = vunpack.c.3.s8 %v2737
    %v2974 = vunpack.c.3.s8 %v2738
    %v2975 = vunpack.c.3.s8 %v2739
    %v2976 = vunpack.c.3.s8 %v2740
    %v2977 = vunpack.c.0.s8 %v2741
    %v2978 = vunpack.c.0.s8 %v2742
    %v2979 = vunpack.c.0.s8 %v2743
    %v2980 = vunpack.c.0.s8 %v2744
    %v2981 = vunpack.c.1.s8 %v2741
    %v2982 = vunpack.c.1.s8 %v2742
    %v2983 = vunpack.c.1.s8 %v2743
    %v2984 = vunpack.c.1.s8 %v2744
    %v2985 = vunpack.c.2.s8 %v2741
    %v2986 = vunpack.c.2.s8 %v2742
    %v2987 = vunpack.c.2.s8 %v2743
    %v2988 = vunpack.c.2.s8 %v2744
    %v2989 = vunpack.c.3.s8 %v2741
    %v2990 = vunpack.c.3.s8 %v2742
    %v2991 = vunpack.c.3.s8 %v2743
    %v2992 = vunpack.c.3.s8 %v2744
    %v2993 = vunpack.c.0.s8 %v2745
    %v2994 = vunpack.c.0.s8 %v2746
    %v2995 = vunpack.c.0.s8 %v2747
    %v2996 = vunpack.c.0.s8 %v2748
    %v2997 = vunpack.c.1.s8 %v2745
    %v2998 = vunpack.c.1.s8 %v2746
    %v2999 = vunpack.c.1.s8 %v2747
    %v3000 = vunpack.c.1.s8 %v2748
    %v3001 = vunpack.c.2.s8 %v2745
    %v3002 = vunpack.c.2.s8 %v2746
    %v3003 = vunpack.c.2.s8 %v2747
    %v3004 = vunpack.c.2.s8 %v2748
    %v3005 = vunpack.c.3.s8 %v2745
    %v3006 = vunpack.c.3.s8 %v2746
    %v3007 = vunpack.c.3.s8 %v2747
    %v3008 = vunpack.c.3.s8 %v2748
    %v3009 = vunpack.c.0.s8 %v2749
    %v3010 = vunpack.c.0.s8 %v2750
    %v3011 = vunpack.c.0.s8 %v2751
    %v3012 = vunpack.c.0.s8 %v2752
    %v3013 = vunpack.c.1.s8 %v2749
    %v3014 = vunpack.c.1.s8 %v2750
    %v3015 = vunpack.c.1.s8 %v2751
    %v3016 = vunpack.c.1.s8 %v2752
    %v3017 = vunpack.c.2.s8 %v2749
    %v3018 = vunpack.c.2.s8 %v2750
    %v3019 = vunpack.c.2.s8 %v2751
    %v3020 = vunpack.c.2.s8 %v2752
    %v3021 = vunpack.c.3.s8 %v2749
    %v3022 = vunpack.c.3.s8 %v2750
    %v3023 = vunpack.c.3.s8 %v2751
    %v3024 = vunpack.c.3.s8 %v2752
    %v3025 = vunpack.c.0.s8 %v2753
    %v3026 = vunpack.c.0.s8 %v2754
    %v3027 = vunpack.c.0.s8 %v2755
    %v3028 = vunpack.c.0.s8 %v2756
    %v3029 = vunpack.c.1.s8 %v2753
    %v3030 = vunpack.c.1.s8 %v2754
    %v3031 = vunpack.c.1.s8 %v2755
    %v3032 = vunpack.c.1.s8 %v2756
    %v3033 = vunpack.c.2.s8 %v2753
    %v3034 = vunpack.c.2.s8 %v2754
    %v3035 = vunpack.c.2.s8 %v2755
    %v3036 = vunpack.c.2.s8 %v2756
    %v3037 = vunpack.c.3.s8 %v2753
    %v3038 = vunpack.c.3.s8 %v2754
    %v3039 = vunpack.c.3.s8 %v2755
    %v3040 = vunpack.c.3.s8 %v2756
    %v3041 = vunpack.c.0.s8 %v2757
    %v3042 = vunpack.c.0.s8 %v2758
    %v3043 = vunpack.c.0.s8 %v2759
    %v3044 = vunpack.c.0.s8 %v2760
    %v3045 = vunpack.c.1.s8 %v2757
    %v3046 = vunpack.c.1.s8 %v2758
    %v3047 = vunpack.c.1.s8 %v2759
    %v3048 = vunpack.c.1.s8 %v2760
    %v3049 = vunpack.c.2.s8 %v2757
    %v3050 = vunpack.c.2.s8 %v2758
    %v3051 = vunpack.c.2.s8 %v2759
    %v3052 = vunpack.c.2.s8 %v2760
    %v3053 = vunpack.c.3.s8 %v2757
    %v3054 = vunpack.c.3.s8 %v2758
    %v3055 = vunpack.c.3.s8 %v2759
    %v3056 = vunpack.c.3.s8 %v2760
    %v3057 = vunpack.c.0.s8 %v2761
    %v3058 = vunpack.c.0.s8 %v2762
    %v3059 = vunpack.c.0.s8 %v2763
    %v3060 = vunpack.c.0.s8 %v2764
    %v3061 = vunpack.c.1.s8 %v2761
    %v3062 = vunpack.c.1.s8 %v2762
    %v3063 = vunpack.c.1.s8 %v2763
    %v3064 = vunpack.c.1.s8 %v2764
    %v3065 = vunpack.c.2.s8 %v2761
    %v3066 = vunpack.c.2.s8 %v2762
    %v3067 = vunpack.c.2.s8 %v2763
    %v3068 = vunpack.c.2.s8 %v2764
    %v3069 = vunpack.c.3.s8 %v2761
    %v3070 = vunpack.c.3.s8 %v2762
    %v3071 = vunpack.c.3.s8 %v2763
    %v3072 = vunpack.c.3.s8 %v2764
    %v3073 = vunpack.c.0.s8 %v2765
    %v3074 = vunpack.c.0.s8 %v2766
    %v3075 = vunpack.c.0.s8 %v2767
    %v3076 = vunpack.c.0.s8 %v2768
    %v3077 = vunpack.c.1.s8 %v2765
    %v3078 = vunpack.c.1.s8 %v2766
    %v3079 = vunpack.c.1.s8 %v2767
    %v3080 = vunpack.c.1.s8 %v2768
    %v3081 = vunpack.c.2.s8 %v2765
    %v3082 = vunpack.c.2.s8 %v2766
    %v3083 = vunpack.c.2.s8 %v2767
    %v3084 = vunpack.c.2.s8 %v2768
    %v3085 = vunpack.c.3.s8 %v2765
    %v3086 = vunpack.c.3.s8 %v2766
    %v3087 = vunpack.c.3.s8 %v2767
    %v3088 = vunpack.c.3.s8 %v2768
    %v3089 = vunpack.c.0.s8 %v2769
    %v3090 = vunpack.c.0.s8 %v2770
    %v3091 = vunpack.c.0.s8 %v2771
    %v3092 = vunpack.c.0.s8 %v2772
    %v3093 = vunpack.c.1.s8 %v2769
    %v3094 = vunpack.c.1.s8 %v2770
    %v3095 = vunpack.c.1.s8 %v2771
    %v3096 = vunpack.c.1.s8 %v2772
    %v3097 = vunpack.c.2.s8 %v2769
    %v3098 = vunpack.c.2.s8 %v2770
    %v3099 = vunpack.c.2.s8 %v2771
    %v3100 = vunpack.c.2.s8 %v2772
    %v3101 = vunpack.c.3.s8 %v2769
    %v3102 = vunpack.c.3.s8 %v2770
    %v3103 = vunpack.c.3.s8 %v2771
    %v3104 = vunpack.c.3.s8 %v2772
    %v3105 = vunpack.c.0.s8 %v2773
    %v3106 = vunpack.c.0.s8 %v2774
    %v3107 = vunpack.c.0.s8 %v2775
    %v3108 = vunpack.c.0.s8 %v2776
    %v3109 = vunpack.c.1.s8 %v2773
    %v3110 = vunpack.c.1.s8 %v2774
    %v3111 = vunpack.c.1.s8 %v2775
    %v3112 = vunpack.c.1.s8 %v2776
    %v3113 = vunpack.c.2.s8 %v2773
    %v3114 = vunpack.c.2.s8 %v2774
    %v3115 = vunpack.c.2.s8 %v2775
    %v3116 = vunpack.c.2.s8 %v2776
    %v3117 = vunpack.c.3.s8 %v2773
    %v3118 = vunpack.c.3.s8 %v2774
    %v3119 = vunpack.c.3.s8 %v2775
    %v3120 = vunpack.c.3.s8 %v2776
    %v3121 = vunpack.c.0.s8 %v2777
    %v3122 = vunpack.c.0.s8 %v2778
    %v3123 = vunpack.c.0.s8 %v2779
    %v3124 = vunpack.c.0.s8 %v2780
    %v3125 = vunpack.c.1.s8 %v2777
    %v3126 = vunpack.c.1.s8 %v2778
    %v3127 = vunpack.c.1.s8 %v2779
    %v3128 = vunpack.c.1.s8 %v2780
    %v3129 = vunpack.c.2.s8 %v2777
    %v3130 = vunpack.c.2.s8 %v2778
    %v3131 = vunpack.c.2.s8 %v2779
    %v3132 = vunpack.c.2.s8 %v2780
    %v3133 = vunpack.c.3.s8 %v2777
    %v3134 = vunpack.c.3.s8 %v2778
    %v3135 = vunpack.c.3.s8 %v2779
    %v3136 = vunpack.c.3.s8 %v2780
    %v3137 = vunpack.c.0.s8 %v2781
    %v3138 = vunpack.c.0.s8 %v2782
    %v3139 = vunpack.c.0.s8 %v2783
    %v3140 = vunpack.c.0.s8 %v2784
    %v3141 = vunpack.c.1.s8 %v2781
    %v3142 = vunpack.c.1.s8 %v2782
    %v3143 = vunpack.c.1.s8 %v2783
    %v3144 = vunpack.c.1.s8 %v2784
    %v3145 = vunpack.c.2.s8 %v2781
    %v3146 = vunpack.c.2.s8 %v2782
    %v3147 = vunpack.c.2.s8 %v2783
    %v3148 = vunpack.c.2.s8 %v2784
    %v3149 = vunpack.c.3.s8 %v2781
    %v3150 = vunpack.c.3.s8 %v2782
    %v3151 = vunpack.c.3.s8 %v2783
    %v3152 = vunpack.c.3.s8 %v2784
    %v3153 = vunpack.c.0.s8 %v2785
    %v3154 = vunpack.c.0.s8 %v2786
    %v3155 = vunpack.c.0.s8 %v2787
    %v3156 = vunpack.c.0.s8 %v2788
    %v3157 = vunpack.c.1.s8 %v2785
    %v3158 = vunpack.c.1.s8 %v2786
    %v3159 = vunpack.c.1.s8 %v2787
    %v3160 = vunpack.c.1.s8 %v2788
    %v3161 = vunpack.c.2.s8 %v2785
    %v3162 = vunpack.c.2.s8 %v2786
    %v3163 = vunpack.c.2.s8 %v2787
    %v3164 = vunpack.c.2.s8 %v2788
    %v3165 = vunpack.c.3.s8 %v2785
    %v3166 = vunpack.c.3.s8 %v2786
    %v3167 = vunpack.c.3.s8 %v2787
    %v3168 = vunpack.c.3.s8 %v2788
    %v3169 = vunpack.c.0.s8 %v2789
    %v3170 = vunpack.c.0.s8 %v2790
    %v3171 = vunpack.c.0.s8 %v2791
    %v3172 = vunpack.c.0.s8 %v2792
    %v3173 = vunpack.c.1.s8 %v2789
    %v3174 = vunpack.c.1.s8 %v2790
    %v3175 = vunpack.c.1.s8 %v2791
    %v3176 = vunpack.c.1.s8 %v2792
    %v3177 = vunpack.c.2.s8 %v2789
    %v3178 = vunpack.c.2.s8 %v2790
    %v3179 = vunpack.c.2.s8 %v2791
    %v3180 = vunpack.c.2.s8 %v2792
    %v3181 = vunpack.c.3.s8 %v2789
    %v3182 = vunpack.c.3.s8 %v2790
    %v3183 = vunpack.c.3.s8 %v2791
    %v3184 = vunpack.c.3.s8 %v2792
    %v3185 = vunpack.c.0.s8 %v2793
    %v3186 = vunpack.c.0.s8 %v2794
    %v3187 = vunpack.c.0.s8 %v2795
    %v3188 = vunpack.c.0.s8 %v2796
    %v3189 = vunpack.c.1.s8 %v2793
    %v3190 = vunpack.c.1.s8 %v2794
    %v3191 = vunpack.c.1.s8 %v2795
    %v3192 = vunpack.c.1.s8 %v2796
    %v3193 = vunpack.c.2.s8 %v2793
    %v3194 = vunpack.c.2.s8 %v2794
    %v3195 = vunpack.c.2.s8 %v2795
    %v3196 = vunpack.c.2.s8 %v2796
    %v3197 = vunpack.c.3.s8 %v2793
    %v3198 = vunpack.c.3.s8 %v2794
    %v3199 = vunpack.c.3.s8 %v2795
    %v3200 = vunpack.c.3.s8 %v2796
    %v3201 = vunpack.c.0.s8 %v2797
    %v3202 = vunpack.c.0.s8 %v2798
    %v3203 = vunpack.c.0.s8 %v2799
    %v3204 = vunpack.c.0.s8 %v2800
    %v3205 = vunpack.c.1.s8 %v2797
    %v3206 = vunpack.c.1.s8 %v2798
    %v3207 = vunpack.c.1.s8 %v2799
    %v3208 = vunpack.c.1.s8 %v2800
    %v3209 = vunpack.c.2.s8 %v2797
    %v3210 = vunpack.c.2.s8 %v2798
    %v3211 = vunpack.c.2.s8 %v2799
    %v3212 = vunpack.c.2.s8 %v2800
    %v3213 = vunpack.c.3.s8 %v2797
    %v3214 = vunpack.c.3.s8 %v2798
    %v3215 = vunpack.c.3.s8 %v2799
    %v3216 = vunpack.c.3.s8 %v2800
    %v3217 = vunpack.c.0.s8 %v2801
    %v3218 = vunpack.c.0.s8 %v2802
    %v3219 = vunpack.c.0.s8 %v2803
    %v3220 = vunpack.c.0.s8 %v2804
    %v3221 = vunpack.c.1.s8 %v2801
    %v3222 = vunpack.c.1.s8 %v2802
    %v3223 = vunpack.c.1.s8 %v2803
    %v3224 = vunpack.c.1.s8 %v2804
    %v3225 = vunpack.c.2.s8 %v2801
    %v3226 = vunpack.c.2.s8 %v2802
    %v3227 = vunpack.c.2.s8 %v2803
    %v3228 = vunpack.c.2.s8 %v2804
    %v3229 = vunpack.c.3.s8 %v2801
    %v3230 = vunpack.c.3.s8 %v2802
    %v3231 = vunpack.c.3.s8 %v2803
    %v3232 = vunpack.c.3.s8 %v2804
    %v3233 = vunpack.c.0.s8 %v2805
    %v3234 = vunpack.c.0.s8 %v2806
    %v3235 = vunpack.c.0.s8 %v2807
    %v3236 = vunpack.c.0.s8 %v2808
    %v3237 = vunpack.c.1.s8 %v2805
    %v3238 = vunpack.c.1.s8 %v2806
    %v3239 = vunpack.c.1.s8 %v2807
    %v3240 = vunpack.c.1.s8 %v2808
    %v3241 = vunpack.c.2.s8 %v2805
    %v3242 = vunpack.c.2.s8 %v2806
    %v3243 = vunpack.c.2.s8 %v2807
    %v3244 = vunpack.c.2.s8 %v2808
    %v3245 = vunpack.c.3.s8 %v2805
    %v3246 = vunpack.c.3.s8 %v2806
    %v3247 = vunpack.c.3.s8 %v2807
    %v3248 = vunpack.c.3.s8 %v2808
    %v3249 = vunpack.c.0.s8 %v2809
    %v3250 = vunpack.c.0.s8 %v2810
    %v3251 = vunpack.c.0.s8 %v2811
    %v3252 = vunpack.c.0.s8 %v2812
    %v3253 = vunpack.c.1.s8 %v2809
    %v3254 = vunpack.c.1.s8 %v2810
    %v3255 = vunpack.c.1.s8 %v2811
    %v3256 = vunpack.c.1.s8 %v2812
    %v3257 = vunpack.c.2.s8 %v2809
    %v3258 = vunpack.c.2.s8 %v2810
    %v3259 = vunpack.c.2.s8 %v2811
    %v3260 = vunpack.c.2.s8 %v2812
    %v3261 = vunpack.c.3.s8 %v2809
    %v3262 = vunpack.c.3.s8 %v2810
    %v3263 = vunpack.c.3.s8 %v2811
    %v3264 = vunpack.c.3.s8 %v2812
    %v3265 = vunpack.c.0.s8 %v2813
    %v3266 = vunpack.c.0.s8 %v2814
    %v3267 = vunpack.c.0.s8 %v2815
    %v3268 = vunpack.c.0.s8 %v2816
    %v3269 = vunpack.c.1.s8 %v2813
    %v3270 = vunpack.c.1.s8 %v2814
    %v3271 = vunpack.c.1.s8 %v2815
    %v3272 = vunpack.c.1.s8 %v2816
    %v3273 = vunpack.c.2.s8 %v2813
    %v3274 = vunpack.c.2.s8 %v2814
    %v3275 = vunpack.c.2.s8 %v2815
    %v3276 = vunpack.c.2.s8 %v2816
    %v3277 = vunpack.c.3.s8 %v2813
    %v3278 = vunpack.c.3.s8 %v2814
    %v3279 = vunpack.c.3.s8 %v2815
    %v3280 = vunpack.c.3.s8 %v2816
    %v3281 = vunpack.c.0.s8 %v2817
    %v3282 = vunpack.c.0.s8 %v2818
    %v3283 = vunpack.c.0.s8 %v2819
    %v3284 = vunpack.c.0.s8 %v2820
    %v3285 = vunpack.c.1.s8 %v2817
    %v3286 = vunpack.c.1.s8 %v2818
    %v3287 = vunpack.c.1.s8 %v2819
    %v3288 = vunpack.c.1.s8 %v2820
    %v3289 = vunpack.c.2.s8 %v2817
    %v3290 = vunpack.c.2.s8 %v2818
    %v3291 = vunpack.c.2.s8 %v2819
    %v3292 = vunpack.c.2.s8 %v2820
    %v3293 = vunpack.c.3.s8 %v2817
    %v3294 = vunpack.c.3.s8 %v2818
    %v3295 = vunpack.c.3.s8 %v2819
    %v3296 = vunpack.c.3.s8 %v2820
    %v3297 = vunpack.c.0.s8 %v2821
    %v3298 = vunpack.c.0.s8 %v2822
    %v3299 = vunpack.c.0.s8 %v2823
    %v3300 = vunpack.c.0.s8 %v2824
    %v3301 = vunpack.c.1.s8 %v2821
    %v3302 = vunpack.c.1.s8 %v2822
    %v3303 = vunpack.c.1.s8 %v2823
    %v3304 = vunpack.c.1.s8 %v2824
    %v3305 = vunpack.c.2.s8 %v2821
    %v3306 = vunpack.c.2.s8 %v2822
    %v3307 = vunpack.c.2.s8 %v2823
    %v3308 = vunpack.c.2.s8 %v2824
    %v3309 = vunpack.c.3.s8 %v2821
    %v3310 = vunpack.c.3.s8 %v2822
    %v3311 = vunpack.c.3.s8 %v2823
    %v3312 = vunpack.c.3.s8 %v2824
    %v3313 = vunpack.c.0.s8 %v2825
    %v3314 = vunpack.c.0.s8 %v2826
    %v3315 = vunpack.c.0.s8 %v2827
    %v3316 = vunpack.c.0.s8 %v2828
    %v3317 = vunpack.c.1.s8 %v2825
    %v3318 = vunpack.c.1.s8 %v2826
    %v3319 = vunpack.c.1.s8 %v2827
    %v3320 = vunpack.c.1.s8 %v2828
    %v3321 = vunpack.c.2.s8 %v2825
    %v3322 = vunpack.c.2.s8 %v2826
    %v3323 = vunpack.c.2.s8 %v2827
    %v3324 = vunpack.c.2.s8 %v2828
    %v3325 = vunpack.c.3.s8 %v2825
    %v3326 = vunpack.c.3.s8 %v2826
    %v3327 = vunpack.c.3.s8 %v2827
    %v3328 = vunpack.c.3.s8 %v2828
    %v3329 = vunpack.c.0.s8 %v2829
    %v3330 = vunpack.c.0.s8 %v2830
    %v3331 = vunpack.c.0.s8 %v2831
    %v3332 = vunpack.c.0.s8 %v2832
    %v3333 = vunpack.c.1.s8 %v2829
    %v3334 = vunpack.c.1.s8 %v2830
    %v3335 = vunpack.c.1.s8 %v2831
    %v3336 = vunpack.c.1.s8 %v2832
    %v3337 = vunpack.c.2.s8 %v2829
    %v3338 = vunpack.c.2.s8 %v2830
    %v3339 = vunpack.c.2.s8 %v2831
    %v3340 = vunpack.c.2.s8 %v2832
    %v3341 = vunpack.c.3.s8 %v2829
    %v3342 = vunpack.c.3.s8 %v2830
    %v3343 = vunpack.c.3.s8 %v2831
    %v3344 = vunpack.c.3.s8 %v2832
    %v3345 = vcvt.s32.f32 %v2833
    %v3346 = vcvt.s32.f32 %v2834
    %v3347 = vcvt.s32.f32 %v2835
    %v3348 = vcvt.s32.f32 %v2836
    %v3349 = vcvt.s32.f32 %v2837
    %v3350 = vcvt.s32.f32 %v2838
    %v3351 = vcvt.s32.f32 %v2839
    %v3352 = vcvt.s32.f32 %v2840
    %v3353 = vcvt.s32.f32 %v2841
    %v3354 = vcvt.s32.f32 %v2842
    %v3355 = vcvt.s32.f32 %v2843
    %v3356 = vcvt.s32.f32 %v2844
    %v3357 = vcvt.s32.f32 %v2845
    %v3358 = vcvt.s32.f32 %v2846
    %v3359 = vcvt.s32.f32 %v2847
    %v3360 = vcvt.s32.f32 %v2848
    %v3361 = vcvt.s32.f32 %v2849
    %v3362 = vcvt.s32.f32 %v2850
    %v3363 = vcvt.s32.f32 %v2851
    %v3364 = vcvt.s32.f32 %v2852
    %v3365 = vcvt.s32.f32 %v2853
    %v3366 = vcvt.s32.f32 %v2854
    %v3367 = vcvt.s32.f32 %v2855
    %v3368 = vcvt.s32.f32 %v2856
    %v3369 = vcvt.s32.f32 %v2857
    %v3370 = vcvt.s32.f32 %v2858
    %v3371 = vcvt.s32.f32 %v2859
    %v3372 = vcvt.s32.f32 %v2860
    %v3373 = vcvt.s32.f32 %v2861
    %v3374 = vcvt.s32.f32 %v2862
    %v3375 = vcvt.s32.f32 %v2863
    %v3376 = vcvt.s32.f32 %v2864
    %v3377 = vcvt.s32.f32 %v2865
    %v3378 = vcvt.s32.f32 %v2866
    %v3379 = vcvt.s32.f32 %v2867
    %v3380 = vcvt.s32.f32 %v2868
    %v3381 = vcvt.s32.f32 %v2869
    %v3382 = vcvt.s32.f32 %v2870
    %v3383 = vcvt.s32.f32 %v2871
    %v3384 = vcvt.s32.f32 %v2872
    %v3385 = vcvt.s32.f32 %v2873
    %v3386 = vcvt.s32.f32 %v2874
    %v3387 = vcvt.s32.f32 %v2875
    %v3388 = vcvt.s32.f32 %v2876
    %v3389 = vcvt.s32.f32 %v2877
    %v3390 = vcvt.s32.f32 %v2878
    %v3391 = vcvt.s32.f32 %v2879
    %v3392 = vcvt.s32.f32 %v2880
    %v3393 = vcvt.s32.f32 %v2881
    %v3394 = vcvt.s32.f32 %v2882
    %v3395 = vcvt.s32.f32 %v2883
    %v3396 = vcvt.s32.f32 %v2884
    %v3397 = vcvt.s32.f32 %v2885
    %v3398 = vcvt.s32.f32 %v2886
    %v3399 = vcvt.s32.f32 %v2887
    %v3400 = vcvt.s32.f32 %v2888
    %v3401 = vcvt.s32.f32 %v2889
    %v3402 = vcvt.s32.f32 %v2890
    %v3403 = vcvt.s32.f32 %v2891
    %v3404 = vcvt.s32.f32 %v2892
    %v3405 = vcvt.s32.f32 %v2893
    %v3406 = vcvt.s32.f32 %v2894
    %v3407 = vcvt.s32.f32 %v2895
    %v3408 = vcvt.s32.f32 %v2896
    %v3409 = vcvt.s32.f32 %v2897
    %v3410 = vcvt.s32.f32 %v2898
    %v3411 = vcvt.s32.f32 %v2899
    %v3412 = vcvt.s32.f32 %v2900
    %v3413 = vcvt.s32.f32 %v2901
    %v3414 = vcvt.s32.f32 %v2902
    %v3415 = vcvt.s32.f32 %v2903
    %v3416 = vcvt.s32.f32 %v2904
    %v3417 = vcvt.s32.f32 %v2905
    %v3418 = vcvt.s32.f32 %v2906
    %v3419 = vcvt.s32.f32 %v2907
    %v3420 = vcvt.s32.f32 %v2908
    %v3421 = vcvt.s32.f32 %v2909
    %v3422 = vcvt.s32.f32 %v2910
    %v3423 = vcvt.s32.f32 %v2911
    %v3424 = vcvt.s32.f32 %v2912
    %v3425 = vcvt.s32.f32 %v2913
    %v3426 = vcvt.s32.f32 %v2914
    %v3427 = vcvt.s32.f32 %v2915
    %v3428 = vcvt.s32.f32 %v2916
    %v3429 = vcvt.s32.f32 %v2917
    %v3430 = vcvt.s32.f32 %v2918
    %v3431 = vcvt.s32.f32 %v2919
    %v3432 = vcvt.s32.f32 %v2920
    %v3433 = vcvt.s32.f32 %v2921
    %v3434 = vcvt.s32.f32 %v2922
    %v3435 = vcvt.s32.f32 %v2923
    %v3436 = vcvt.s32.f32 %v2924
    %v3437 = vcvt.s32.f32 %v2925
    %v3438 = vcvt.s32.f32 %v2926
    %v3439 = vcvt.s32.f32 %v2927
    %v3440 = vcvt.s32.f32 %v2928
    %v3441 = vcvt.s32.f32 %v2929
    %v3442 = vcvt.s32.f32 %v2930
    %v3443 = vcvt.s32.f32 %v2931
    %v3444 = vcvt.s32.f32 %v2932
    %v3445 = vcvt.s32.f32 %v2933
    %v3446 = vcvt.s32.f32 %v2934
    %v3447 = vcvt.s32.f32 %v2935
    %v3448 = vcvt.s32.f32 %v2936
    %v3449 = vcvt.s32.f32 %v2937
    %v3450 = vcvt.s32.f32 %v2938
    %v3451 = vcvt.s32.f32 %v2939
    %v3452 = vcvt.s32.f32 %v2940
    %v3453 = vcvt.s32.f32 %v2941
    %v3454 = vcvt.s32.f32 %v2942
    %v3455 = vcvt.s32.f32 %v2943
    %v3456 = vcvt.s32.f32 %v2944
    %v3457 = vcvt.s32.f32 %v2945
    %v3458 = vcvt.s32.f32 %v2946
    %v3459 = vcvt.s32.f32 %v2947
    %v3460 = vcvt.s32.f32 %v2948
    %v3461 = vcvt.s32.f32 %v2949
    %v3462 = vcvt.s32.f32 %v2950
    %v3463 = vcvt.s32.f32 %v2951
    %v3464 = vcvt.s32.f32 %v2952
    %v3465 = vcvt.s32.f32 %v2953
    %v3466 = vcvt.s32.f32 %v2954
    %v3467 = vcvt.s32.f32 %v2955
    %v3468 = vcvt.s32.f32 %v2956
    %v3469 = vcvt.s32.f32 %v2957
    %v3470 = vcvt.s32.f32 %v2958
    %v3471 = vcvt.s32.f32 %v2959
    %v3472 = vcvt.s32.f32 %v2960
    %v3473 = vcvt.s32.f32 %v2961
    %v3474 = vcvt.s32.f32 %v2962
    %v3475 = vcvt.s32.f32 %v2963
    %v3476 = vcvt.s32.f32 %v2964
    %v3477 = vcvt.s32.f32 %v2965
    %v3478 = vcvt.s32.f32 %v2966
    %v3479 = vcvt.s32.f32 %v2967
    %v3480 = vcvt.s32.f32 %v2968
    %v3481 = vcvt.s32.f32 %v2969
    %v3482 = vcvt.s32.f32 %v2970
    %v3483 = vcvt.s32.f32 %v2971
    %v3484 = vcvt.s32.f32 %v2972
    %v3485 = vcvt.s32.f32 %v2973
    %v3486 = vcvt.s32.f32 %v2974
    %v3487 = vcvt.s32.f32 %v2975
    %v3488 = vcvt.s32.f32 %v2976
    %v3489 = vcvt.s32.f32 %v2977
    %v3490 = vcvt.s32.f32 %v2978
    %v3491 = vcvt.s32.f32 %v2979
    %v3492 = vcvt.s32.f32 %v2980
    %v3493 = vcvt.s32.f32 %v2981
    %v3494 = vcvt.s32.f32 %v2982
    %v3495 = vcvt.s32.f32 %v2983
    %v3496 = vcvt.s32.f32 %v2984
    %v3497 = vcvt.s32.f32 %v2985
    %v3498 = vcvt.s32.f32 %v2986
    %v3499 = vcvt.s32.f32 %v2987
    %v3500 = vcvt.s32.f32 %v2988
    %v3501 = vcvt.s32.f32 %v2989
    %v3502 = vcvt.s32.f32 %v2990
    %v3503 = vcvt.s32.f32 %v2991
    %v3504 = vcvt.s32.f32 %v2992
    %v3505 = vcvt.s32.f32 %v2993
    %v3506 = vcvt.s32.f32 %v2994
    %v3507 = vcvt.s32.f32 %v2995
    %v3508 = vcvt.s32.f32 %v2996
    %v3509 = vcvt.s32.f32 %v2997
    %v3510 = vcvt.s32.f32 %v2998
    %v3511 = vcvt.s32.f32 %v2999
    %v3512 = vcvt.s32.f32 %v3000
    %v3513 = vcvt.s32.f32 %v3001
    %v3514 = vcvt.s32.f32 %v3002
    %v3515 = vcvt.s32.f32 %v3003
    %v3516 = vcvt.s32.f32 %v3004
    %v3517 = vcvt.s32.f32 %v3005
    %v3518 = vcvt.s32.f32 %v3006
    %v3519 = vcvt.s32.f32 %v3007
    %v3520 = vcvt.s32.f32 %v3008
    %v3521 = vcvt.s32.f32 %v3009
    %v3522 = vcvt.s32.f32 %v3010
    %v3523 = vcvt.s32.f32 %v3011
    %v3524 = vcvt.s32.f32 %v3012
    %v3525 = vcvt.s32.f32 %v3013
    %v3526 = vcvt.s32.f32 %v3014
    %v3527 = vcvt.s32.f32 %v3015
    %v3528 = vcvt.s32.f32 %v3016
    %v3529 = vcvt.s32.f32 %v3017
    %v3530 = vcvt.s32.f32 %v3018
    %v3531 = vcvt.s32.f32 %v3019
    %v3532 = vcvt.s32.f32 %v3020
    %v3533 = vcvt.s32.f32 %v3021
    %v3534 = vcvt.s32.f32 %v3022
    %v3535 = vcvt.s32.f32 %v3023
    %v3536 = vcvt.s32.f32 %v3024
    %v3537 = vcvt.s32.f32 %v3025
    %v3538 = vcvt.s32.f32 %v3026
    %v3539 = vcvt.s32.f32 %v3027
    %v3540 = vcvt.s32.f32 %v3028
    %v3541 = vcvt.s32.f32 %v3029
    %v3542 = vcvt.s32.f32 %v3030
    %v3543 = vcvt.s32.f32 %v3031
    %v3544 = vcvt.s32.f32 %v3032
    %v3545 = vcvt.s32.f32 %v3033
    %v3546 = vcvt.s32.f32 %v3034
    %v3547 = vcvt.s32.f32 %v3035
    %v3548 = vcvt.s32.f32 %v3036
    %v3549 = vcvt.s32.f32 %v3037
    %v3550 = vcvt.s32.f32 %v3038
    %v3551 = vcvt.s32.f32 %v3039
    %v3552 = vcvt.s32.f32 %v3040
    %v3553 = vcvt.s32.f32 %v3041
    %v3554 = vcvt.s32.f32 %v3042
    %v3555 = vcvt.s32.f32 %v3043
    %v3556 = vcvt.s32.f32 %v3044
    %v3557 = vcvt.s32.f32 %v3045
    %v3558 = vcvt.s32.f32 %v3046
    %v3559 = vcvt.s32.f32 %v3047
    %v3560 = vcvt.s32.f32 %v3048
    %v3561 = vcvt.s32.f32 %v3049
    %v3562 = vcvt.s32.f32 %v3050
    %v3563 = vcvt.s32.f32 %v3051
    %v3564 = vcvt.s32.f32 %v3052
    %v3565 = vcvt.s32.f32 %v3053
    %v3566 = vcvt.s32.f32 %v3054
    %v3567 = vcvt.s32.f32 %v3055
    %v3568 = vcvt.s32.f32 %v3056
    %v3569 = vcvt.s32.f32 %v3057
    %v3570 = vcvt.s32.f32 %v3058
    %v3571 = vcvt.s32.f32 %v3059
    %v3572 = vcvt.s32.f32 %v3060
    %v3573 = vcvt.s32.f32 %v3061
    %v3574 = vcvt.s32.f32 %v3062
    %v3575 = vcvt.s32.f32 %v3063
    %v3576 = vcvt.s32.f32 %v3064
    %v3577 = vcvt.s32.f32 %v3065
    %v3578 = vcvt.s32.f32 %v3066
    %v3579 = vcvt.s32.f32 %v3067
    %v3580 = vcvt.s32.f32 %v3068
    %v3581 = vcvt.s32.f32 %v3069
    %v3582 = vcvt.s32.f32 %v3070
    %v3583 = vcvt.s32.f32 %v3071
    %v3584 = vcvt.s32.f32 %v3072
    %v3585 = vcvt.s32.f32 %v3073
    %v3586 = vcvt.s32.f32 %v3074
    %v3587 = vcvt.s32.f32 %v3075
    %v3588 = vcvt.s32.f32 %v3076
    %v3589 = vcvt.s32.f32 %v3077
    %v3590 = vcvt.s32.f32 %v3078
    %v3591 = vcvt.s32.f32 %v3079
    %v3592 = vcvt.s32.f32 %v3080
    %v3593 = vcvt.s32.f32 %v3081
    %v3594 = vcvt.s32.f32 %v3082
    %v3595 = vcvt.s32.f32 %v3083
    %v3596 = vcvt.s32.f32 %v3084
    %v3597 = vcvt.s32.f32 %v3085
    %v3598 = vcvt.s32.f32 %v3086
    %v3599 = vcvt.s32.f32 %v3087
    %v3600 = vcvt.s32.f32 %v3088
    %v3601 = vcvt.s32.f32 %v3089
    %v3602 = vcvt.s32.f32 %v3090
    %v3603 = vcvt.s32.f32 %v3091
    %v3604 = vcvt.s32.f32 %v3092
    %v3605 = vcvt.s32.f32 %v3093
    %v3606 = vcvt.s32.f32 %v3094
    %v3607 = vcvt.s32.f32 %v3095
    %v3608 = vcvt.s32.f32 %v3096
    %v3609 = vcvt.s32.f32 %v3097
    %v3610 = vcvt.s32.f32 %v3098
    %v3611 = vcvt.s32.f32 %v3099
    %v3612 = vcvt.s32.f32 %v3100
    %v3613 = vcvt.s32.f32 %v3101
    %v3614 = vcvt.s32.f32 %v3102
    %v3615 = vcvt.s32.f32 %v3103
    %v3616 = vcvt.s32.f32 %v3104
    %v3617 = vcvt.s32.f32 %v3105
    %v3618 = vcvt.s32.f32 %v3106
    %v3619 = vcvt.s32.f32 %v3107
    %v3620 = vcvt.s32.f32 %v3108
    %v3621 = vcvt.s32.f32 %v3109
    %v3622 = vcvt.s32.f32 %v3110
    %v3623 = vcvt.s32.f32 %v3111
    %v3624 = vcvt.s32.f32 %v3112
    %v3625 = vcvt.s32.f32 %v3113
    %v3626 = vcvt.s32.f32 %v3114
    %v3627 = vcvt.s32.f32 %v3115
    %v3628 = vcvt.s32.f32 %v3116
    %v3629 = vcvt.s32.f32 %v3117
    %v3630 = vcvt.s32.f32 %v3118
    %v3631 = vcvt.s32.f32 %v3119
    %v3632 = vcvt.s32.f32 %v3120
    %v3633 = vcvt.s32.f32 %v3121
    %v3634 = vcvt.s32.f32 %v3122
    %v3635 = vcvt.s32.f32 %v3123
    %v3636 = vcvt.s32.f32 %v3124
    %v3637 = vcvt.s32.f32 %v3125
    %v3638 = vcvt.s32.f32 %v3126
    %v3639 = vcvt.s32.f32 %v3127
    %v3640 = vcvt.s32.f32 %v3128
    %v3641 = vcvt.s32.f32 %v3129
    %v3642 = vcvt.s32.f32 %v3130
    %v3643 = vcvt.s32.f32 %v3131
    %v3644 = vcvt.s32.f32 %v3132
    %v3645 = vcvt.s32.f32 %v3133
    %v3646 = vcvt.s32.f32 %v3134
    %v3647 = vcvt.s32.f32 %v3135
    %v3648 = vcvt.s32.f32 %v3136
    %v3649 = vcvt.s32.f32 %v3137
    %v3650 = vcvt.s32.f32 %v3138
    %v3651 = vcvt.s32.f32 %v3139
    %v3652 = vcvt.s32.f32 %v3140
    %v3653 = vcvt.s32.f32 %v3141
    %v3654 = vcvt.s32.f32 %v3142
    %v3655 = vcvt.s32.f32 %v3143
    %v3656 = vcvt.s32.f32 %v3144
    %v3657 = vcvt.s32.f32 %v3145
    %v3658 = vcvt.s32.f32 %v3146
    %v3659 = vcvt.s32.f32 %v3147
    %v3660 = vcvt.s32.f32 %v3148
    %v3661 = vcvt.s32.f32 %v3149
    %v3662 = vcvt.s32.f32 %v3150
    %v3663 = vcvt.s32.f32 %v3151
    %v3664 = vcvt.s32.f32 %v3152
    %v3665 = vcvt.s32.f32 %v3153
    %v3666 = vcvt.s32.f32 %v3154
    %v3667 = vcvt.s32.f32 %v3155
    %v3668 = vcvt.s32.f32 %v3156
    %v3669 = vcvt.s32.f32 %v3157
    %v3670 = vcvt.s32.f32 %v3158
    %v3671 = vcvt.s32.f32 %v3159
    %v3672 = vcvt.s32.f32 %v3160
    %v3673 = vcvt.s32.f32 %v3161
    %v3674 = vcvt.s32.f32 %v3162
    %v3675 = vcvt.s32.f32 %v3163
    %v3676 = vcvt.s32.f32 %v3164
    %v3677 = vcvt.s32.f32 %v3165
    %v3678 = vcvt.s32.f32 %v3166
    %v3679 = vcvt.s32.f32 %v3167
    %v3680 = vcvt.s32.f32 %v3168
    %v3681 = vcvt.s32.f32 %v3169
    %v3682 = vcvt.s32.f32 %v3170
    %v3683 = vcvt.s32.f32 %v3171
    %v3684 = vcvt.s32.f32 %v3172
    %v3685 = vcvt.s32.f32 %v3173
    %v3686 = vcvt.s32.f32 %v3174
    %v3687 = vcvt.s32.f32 %v3175
    %v3688 = vcvt.s32.f32 %v3176
    %v3689 = vcvt.s32.f32 %v3177
    %v3690 = vcvt.s32.f32 %v3178
    %v3691 = vcvt.s32.f32 %v3179
    %v3692 = vcvt.s32.f32 %v3180
    %v3693 = vcvt.s32.f32 %v3181
    %v3694 = vcvt.s32.f32 %v3182
    %v3695 = vcvt.s32.f32 %v3183
    %v3696 = vcvt.s32.f32 %v3184
    %v3697 = vcvt.s32.f32 %v3185
    %v3698 = vcvt.s32.f32 %v3186
    %v3699 = vcvt.s32.f32 %v3187
    %v3700 = vcvt.s32.f32 %v3188
    %v3701 = vcvt.s32.f32 %v3189
    %v3702 = vcvt.s32.f32 %v3190
    %v3703 = vcvt.s32.f32 %v3191
    %v3704 = vcvt.s32.f32 %v3192
    %v3705 = vcvt.s32.f32 %v3193
    %v3706 = vcvt.s32.f32 %v3194
    %v3707 = vcvt.s32.f32 %v3195
    %v3708 = vcvt.s32.f32 %v3196
    %v3709 = vcvt.s32.f32 %v3197
    %v3710 = vcvt.s32.f32 %v3198
    %v3711 = vcvt.s32.f32 %v3199
    %v3712 = vcvt.s32.f32 %v3200
    %v3713 = vcvt.s32.f32 %v3201
    %v3714 = vcvt.s32.f32 %v3202
    %v3715 = vcvt.s32.f32 %v3203
    %v3716 = vcvt.s32.f32 %v3204
    %v3717 = vcvt.s32.f32 %v3205
    %v3718 = vcvt.s32.f32 %v3206
    %v3719 = vcvt.s32.f32 %v3207
    %v3720 = vcvt.s32.f32 %v3208
    %v3721 = vcvt.s32.f32 %v3209
    %v3722 = vcvt.s32.f32 %v3210
    %v3723 = vcvt.s32.f32 %v3211
    %v3724 = vcvt.s32.f32 %v3212
    %v3725 = vcvt.s32.f32 %v3213
    %v3726 = vcvt.s32.f32 %v3214
    %v3727 = vcvt.s32.f32 %v3215
    %v3728 = vcvt.s32.f32 %v3216
    %v3729 = vcvt.s32.f32 %v3217
    %v3730 = vcvt.s32.f32 %v3218
    %v3731 = vcvt.s32.f32 %v3219
    %v3732 = vcvt.s32.f32 %v3220
    %v3733 = vcvt.s32.f32 %v3221
    %v3734 = vcvt.s32.f32 %v3222
    %v3735 = vcvt.s32.f32 %v3223
    %v3736 = vcvt.s32.f32 %v3224
    %v3737 = vcvt.s32.f32 %v3225
    %v3738 = vcvt.s32.f32 %v3226
    %v3739 = vcvt.s32.f32 %v3227
    %v3740 = vcvt.s32.f32 %v3228
    %v3741 = vcvt.s32.f32 %v3229
    %v3742 = vcvt.s32.f32 %v3230
    %v3743 = vcvt.s32.f32 %v3231
    %v3744 = vcvt.s32.f32 %v3232
    %v3745 = vcvt.s32.f32 %v3233
    %v3746 = vcvt.s32.f32 %v3234
    %v3747 = vcvt.s32.f32 %v3235
    %v3748 = vcvt.s32.f32 %v3236
    %v3749 = vcvt.s32.f32 %v3237
    %v3750 = vcvt.s32.f32 %v3238
    %v3751 = vcvt.s32.f32 %v3239
    %v3752 = vcvt.s32.f32 %v3240
    %v3753 = vcvt.s32.f32 %v3241
    %v3754 = vcvt.s32.f32 %v3242
    %v3755 = vcvt.s32.f32 %v3243
    %v3756 = vcvt.s32.f32 %v3244
    %v3757 = vcvt.s32.f32 %v3245
    %v3758 = vcvt.s32.f32 %v3246
    %v3759 = vcvt.s32.f32 %v3247
    %v3760 = vcvt.s32.f32 %v3248
    %v3761 = vcvt.s32.f32 %v3249
    %v3762 = vcvt.s32.f32 %v3250
    %v3763 = vcvt.s32.f32 %v3251
    %v3764 = vcvt.s32.f32 %v3252
    %v3765 = vcvt.s32.f32 %v3253
    %v3766 = vcvt.s32.f32 %v3254
    %v3767 = vcvt.s32.f32 %v3255
    %v3768 = vcvt.s32.f32 %v3256
    %v3769 = vcvt.s32.f32 %v3257
    %v3770 = vcvt.s32.f32 %v3258
    %v3771 = vcvt.s32.f32 %v3259
    %v3772 = vcvt.s32.f32 %v3260
    %v3773 = vcvt.s32.f32 %v3261
    %v3774 = vcvt.s32.f32 %v3262
    %v3775 = vcvt.s32.f32 %v3263
    %v3776 = vcvt.s32.f32 %v3264
    %v3777 = vcvt.s32.f32 %v3265
    %v3778 = vcvt.s32.f32 %v3266
    %v3779 = vcvt.s32.f32 %v3267
    %v3780 = vcvt.s32.f32 %v3268
    %v3781 = vcvt.s32.f32 %v3269
    %v3782 = vcvt.s32.f32 %v3270
    %v3783 = vcvt.s32.f32 %v3271
    %v3784 = vcvt.s32.f32 %v3272
    %v3785 = vcvt.s32.f32 %v3273
    %v3786 = vcvt.s32.f32 %v3274
    %v3787 = vcvt.s32.f32 %v3275
    %v3788 = vcvt.s32.f32 %v3276
    %v3789 = vcvt.s32.f32 %v3277
    %v3790 = vcvt.s32.f32 %v3278
    %v3791 = vcvt.s32.f32 %v3279
    %v3792 = vcvt.s32.f32 %v3280
    %v3793 = vcvt.s32.f32 %v3281
    %v3794 = vcvt.s32.f32 %v3282
    %v3795 = vcvt.s32.f32 %v3283
    %v3796 = vcvt.s32.f32 %v3284
    %v3797 = vcvt.s32.f32 %v3285
    %v3798 = vcvt.s32.f32 %v3286
    %v3799 = vcvt.s32.f32 %v3287
    %v3800 = vcvt.s32.f32 %v3288
    %v3801 = vcvt.s32.f32 %v3289
    %v3802 = vcvt.s32.f32 %v3290
    %v3803 = vcvt.s32.f32 %v3291
    %v3804 = vcvt.s32.f32 %v3292
    %v3805 = vcvt.s32.f32 %v3293
    %v3806 = vcvt.s32.f32 %v3294
    %v3807 = vcvt.s32.f32 %v3295
    %v3808 = vcvt.s32.f32 %v3296
    %v3809 = vcvt.s32.f32 %v3297
    %v3810 = vcvt.s32.f32 %v3298
    %v3811 = vcvt.s32.f32 %v3299
    %v3812 = vcvt.s32.f32 %v3300
    %v3813 = vcvt.s32.f32 %v3301
    %v3814 = vcvt.s32.f32 %v3302
    %v3815 = vcvt.s32.f32 %v3303
    %v3816 = vcvt.s32.f32 %v3304
    %v3817 = vcvt.s32.f32 %v3305
    %v3818 = vcvt.s32.f32 %v3306
    %v3819 = vcvt.s32.f32 %v3307
    %v3820 = vcvt.s32.f32 %v3308
    %v3821 = vcvt.s32.f32 %v3309
    %v3822 = vcvt.s32.f32 %v3310
    %v3823 = vcvt.s32.f32 %v3311
    %v3824 = vcvt.s32.f32 %v3312
    %v3825 = vcvt.s32.f32 %v3313
    %v3826 = vcvt.s32.f32 %v3314
    %v3827 = vcvt.s32.f32 %v3315
    %v3828 = vcvt.s32.f32 %v3316
    %v3829 = vcvt.s32.f32 %v3317
    %v3830 = vcvt.s32.f32 %v3318
    %v3831 = vcvt.s32.f32 %v3319
    %v3832 = vcvt.s32.f32 %v3320
    %v3833 = vcvt.s32.f32 %v3321
    %v3834 = vcvt.s32.f32 %v3322
    %v3835 = vcvt.s32.f32 %v3323
    %v3836 = vcvt.s32.f32 %v3324
    %v3837 = vcvt.s32.f32 %v3325
    %v3838 = vcvt.s32.f32 %v3326
    %v3839 = vcvt.s32.f32 %v3327
    %v3840 = vcvt.s32.f32 %v3328
    %v3841 = vcvt.s32.f32 %v3329
    %v3842 = vcvt.s32.f32 %v3330
    %v3843 = vcvt.s32.f32 %v3331
    %v3844 = vcvt.s32.f32 %v3332
    %v3845 = vcvt.s32.f32 %v3333
    %v3846 = vcvt.s32.f32 %v3334
    %v3847 = vcvt.s32.f32 %v3335
    %v3848 = vcvt.s32.f32 %v3336
    %v3849 = vcvt.s32.f32 %v3337
    %v3850 = vcvt.s32.f32 %v3338
    %v3851 = vcvt.s32.f32 %v3339
    %v3852 = vcvt.s32.f32 %v3340
    %v3853 = vcvt.s32.f32 %v3341
    %v3854 = vcvt.s32.f32 %v3342
    %v3855 = vcvt.s32.f32 %v3343
    %v3856 = vcvt.s32.f32 %v3344
    %v3857 = vpack.c.bf16 %v3349, %v3345
    %v3858 = vpack.c.bf16 %v3350, %v3346
    %v3859 = vpack.c.bf16 %v3351, %v3347
    %v3860 = vpack.c.bf16 %v3352, %v3348
    %v3861 = vpack.c.bf16 %v3357, %v3353
    %v3862 = vpack.c.bf16 %v3358, %v3354
    %v3863 = vpack.c.bf16 %v3359, %v3355
    %v3864 = vpack.c.bf16 %v3360, %v3356
    %v3865 = vpack.c.bf16 %v3365, %v3361
    %v3866 = vpack.c.bf16 %v3366, %v3362
    %v3867 = vpack.c.bf16 %v3367, %v3363
    %v3868 = vpack.c.bf16 %v3368, %v3364
    %v3869 = vpack.c.bf16 %v3373, %v3369
    %v3870 = vpack.c.bf16 %v3374, %v3370
    %v3871 = vpack.c.bf16 %v3375, %v3371
    %v3872 = vpack.c.bf16 %v3376, %v3372
    %v3873 = vpack.c.bf16 %v3381, %v3377
    %v3874 = vpack.c.bf16 %v3382, %v3378
    %v3875 = vpack.c.bf16 %v3383, %v3379
    %v3876 = vpack.c.bf16 %v3384, %v3380
    %v3877 = vpack.c.bf16 %v3389, %v3385
    %v3878 = vpack.c.bf16 %v3390, %v3386
    %v3879 = vpack.c.bf16 %v3391, %v3387
    %v3880 = vpack.c.bf16 %v3392, %v3388
    %v3881 = vpack.c.bf16 %v3397, %v3393
    %v3882 = vpack.c.bf16 %v3398, %v3394
    %v3883 = vpack.c.bf16 %v3399, %v3395
    %v3884 = vpack.c.bf16 %v3400, %v3396
    %v3885 = vpack.c.bf16 %v3405, %v3401
    %v3886 = vpack.c.bf16 %v3406, %v3402
    %v3887 = vpack.c.bf16 %v3407, %v3403
    %v3888 = vpack.c.bf16 %v3408, %v3404
    %v3889 = vpack.c.bf16 %v3413, %v3409
    %v3890 = vpack.c.bf16 %v3414, %v3410
    %v3891 = vpack.c.bf16 %v3415, %v3411
    %v3892 = vpack.c.bf16 %v3416, %v3412
    %v3893 = vpack.c.bf16 %v3421, %v3417
    %v3894 = vpack.c.bf16 %v3422, %v3418
    %v3895 = vpack.c.bf16 %v3423, %v3419
    %v3896 = vpack.c.bf16 %v3424, %v3420
    %v3897 = vpack.c.bf16 %v3429, %v3425
    %v3898 = vpack.c.bf16 %v3430, %v3426
    %v3899 = vpack.c.bf16 %v3431, %v3427
    %v3900 = vpack.c.bf16 %v3432, %v3428
    %v3901 = vpack.c.bf16 %v3437, %v3433
    %v3902 = vpack.c.bf16 %v3438, %v3434
    %v3903 = vpack.c.bf16 %v3439, %v3435
    %v3904 = vpack.c.bf16 %v3440, %v3436
    %v3905 = vpack.c.bf16 %v3445, %v3441
    %v3906 = vpack.c.bf16 %v3446, %v3442
    %v3907 = vpack.c.bf16 %v3447, %v3443
    %v3908 = vpack.c.bf16 %v3448, %v3444
    %v3909 = vpack.c.bf16 %v3453, %v3449
    %v3910 = vpack.c.bf16 %v3454, %v3450
    %v3911 = vpack.c.bf16 %v3455, %v3451
    %v3912 = vpack.c.bf16 %v3456, %v3452
    %v3913 = vpack.c.bf16 %v3461, %v3457
    %v3914 = vpack.c.bf16 %v3462, %v3458
    %v3915 = vpack.c.bf16 %v3463, %v3459
    %v3916 = vpack.c.bf16 %v3464, %v3460
    %v3917 = vpack.c.bf16 %v3469, %v3465
    %v3918 = vpack.c.bf16 %v3470, %v3466
    %v3919 = vpack.c.bf16 %v3471, %v3467
    %v3920 = vpack.c.bf16 %v3472, %v3468
    %v3921 = vpack.c.bf16 %v3477, %v3473
    %v3922 = vpack.c.bf16 %v3478, %v3474
    %v3923 = vpack.c.bf16 %v3479, %v3475
    %v3924 = vpack.c.bf16 %v3480, %v3476
    %v3925 = vpack.c.bf16 %v3485, %v3481
    %v3926 = vpack.c.bf16 %v3486, %v3482
    %v3927 = vpack.c.bf16 %v3487, %v3483
    %v3928 = vpack.c.bf16 %v3488, %v3484
    %v3929 = vpack.c.bf16 %v3493, %v3489
    %v3930 = vpack.c.bf16 %v3494, %v3490
    %v3931 = vpack.c.bf16 %v3495, %v3491
    %v3932 = vpack.c.bf16 %v3496, %v3492
    %v3933 = vpack.c.bf16 %v3501, %v3497
    %v3934 = vpack.c.bf16 %v3502, %v3498
    %v3935 = vpack.c.bf16 %v3503, %v3499
    %v3936 = vpack.c.bf16 %v3504, %v3500
    %v3937 = vpack.c.bf16 %v3509, %v3505
    %v3938 = vpack.c.bf16 %v3510, %v3506
    %v3939 = vpack.c.bf16 %v3511, %v3507
    %v3940 = vpack.c.bf16 %v3512, %v3508
    %v3941 = vpack.c.bf16 %v3517, %v3513
    %v3942 = vpack.c.bf16 %v3518, %v3514
    %v3943 = vpack.c.bf16 %v3519, %v3515
    %v3944 = vpack.c.bf16 %v3520, %v3516
    %v3945 = vpack.c.bf16 %v3525, %v3521
    %v3946 = vpack.c.bf16 %v3526, %v3522
    %v3947 = vpack.c.bf16 %v3527, %v3523
    %v3948 = vpack.c.bf16 %v3528, %v3524
    %v3949 = vpack.c.bf16 %v3533, %v3529
    %v3950 = vpack.c.bf16 %v3534, %v3530
    %v3951 = vpack.c.bf16 %v3535, %v3531
    %v3952 = vpack.c.bf16 %v3536, %v3532
    %v3953 = vpack.c.bf16 %v3541, %v3537
    %v3954 = vpack.c.bf16 %v3542, %v3538
    %v3955 = vpack.c.bf16 %v3543, %v3539
    %v3956 = vpack.c.bf16 %v3544, %v3540
    %v3957 = vpack.c.bf16 %v3549, %v3545
    %v3958 = vpack.c.bf16 %v3550, %v3546
    %v3959 = vpack.c.bf16 %v3551, %v3547
    %v3960 = vpack.c.bf16 %v3552, %v3548
    %v3961 = vpack.c.bf16 %v3557, %v3553
    %v3962 = vpack.c.bf16 %v3558, %v3554
    %v3963 = vpack.c.bf16 %v3559, %v3555
    %v3964 = vpack.c.bf16 %v3560, %v3556
    %v3965 = vpack.c.bf16 %v3565, %v3561
    %v3966 = vpack.c.bf16 %v3566, %v3562
    %v3967 = vpack.c.bf16 %v3567, %v3563
    %v3968 = vpack.c.bf16 %v3568, %v3564
    %v3969 = vpack.c.bf16 %v3573, %v3569
    %v3970 = vpack.c.bf16 %v3574, %v3570
    %v3971 = vpack.c.bf16 %v3575, %v3571
    %v3972 = vpack.c.bf16 %v3576, %v3572
    %v3973 = vpack.c.bf16 %v3581, %v3577
    %v3974 = vpack.c.bf16 %v3582, %v3578
    %v3975 = vpack.c.bf16 %v3583, %v3579
    %v3976 = vpack.c.bf16 %v3584, %v3580
    %v3977 = vpack.c.bf16 %v3589, %v3585
    %v3978 = vpack.c.bf16 %v3590, %v3586
    %v3979 = vpack.c.bf16 %v3591, %v3587
    %v3980 = vpack.c.bf16 %v3592, %v3588
    %v3981 = vpack.c.bf16 %v3597, %v3593
    %v3982 = vpack.c.bf16 %v3598, %v3594
    %v3983 = vpack.c.bf16 %v3599, %v3595
    %v3984 = vpack.c.bf16 %v3600, %v3596
    %v3985 = vpack.c.bf16 %v3605, %v3601
    %v3986 = vpack.c.bf16 %v3606, %v3602
    %v3987 = vpack.c.bf16 %v3607, %v3603
    %v3988 = vpack.c.bf16 %v3608, %v3604
    %v3989 = vpack.c.bf16 %v3613, %v3609
    %v3990 = vpack.c.bf16 %v3614, %v3610
    %v3991 = vpack.c.bf16 %v3615, %v3611
    %v3992 = vpack.c.bf16 %v3616, %v3612
    %v3993 = vpack.c.bf16 %v3621, %v3617
    %v3994 = vpack.c.bf16 %v3622, %v3618
    %v3995 = vpack.c.bf16 %v3623, %v3619
    %v3996 = vpack.c.bf16 %v3624, %v3620
    %v3997 = vpack.c.bf16 %v3629, %v3625
    %v3998 = vpack.c.bf16 %v3630, %v3626
    %v3999 = vpack.c.bf16 %v3631, %v3627
    %v4000 = vpack.c.bf16 %v3632, %v3628
    %v4001 = vpack.c.bf16 %v3637, %v3633
    %v4002 = vpack.c.bf16 %v3638, %v3634
    %v4003 = vpack.c.bf16 %v3639, %v3635
    %v4004 = vpack.c.bf16 %v3640, %v3636
    %v4005 = vpack.c.bf16 %v3645, %v3641
    %v4006 = vpack.c.bf16 %v3646, %v3642
    %v4007 = vpack.c.bf16 %v3647, %v3643
    %v4008 = vpack.c.bf16 %v3648, %v3644
    %v4009 = vpack.c.bf16 %v3653, %v3649
    %v4010 = vpack.c.bf16 %v3654, %v3650
    %v4011 = vpack.c.bf16 %v3655, %v3651
    %v4012 = vpack.c.bf16 %v3656, %v3652
    %v4013 = vpack.c.bf16 %v3661, %v3657
    %v4014 = vpack.c.bf16 %v3662, %v3658
    %v4015 = vpack.c.bf16 %v3663, %v3659
    %v4016 = vpack.c.bf16 %v3664, %v3660
    %v4017 = vpack.c.bf16 %v3669, %v3665
    %v4018 = vpack.c.bf16 %v3670, %v3666
    %v4019 = vpack.c.bf16 %v3671, %v3667
    %v4020 = vpack.c.bf16 %v3672, %v3668
    %v4021 = vpack.c.bf16 %v3677, %v3673
    %v4022 = vpack.c.bf16 %v3678, %v3674
    %v4023 = vpack.c.bf16 %v3679, %v3675
    %v4024 = vpack.c.bf16 %v3680, %v3676
    %v4025 = vpack.c.bf16 %v3685, %v3681
    %v4026 = vpack.c.bf16 %v3686, %v3682
    %v4027 = vpack.c.bf16 %v3687, %v3683
    %v4028 = vpack.c.bf16 %v3688, %v3684
    %v4029 = vpack.c.bf16 %v3693, %v3689
    %v4030 = vpack.c.bf16 %v3694, %v3690
    %v4031 = vpack.c.bf16 %v3695, %v3691
    %v4032 = vpack.c.bf16 %v3696, %v3692
    %v4033 = vpack.c.bf16 %v3701, %v3697
    %v4034 = vpack.c.bf16 %v3702, %v3698
    %v4035 = vpack.c.bf16 %v3703, %v3699
    %v4036 = vpack.c.bf16 %v3704, %v3700
    %v4037 = vpack.c.bf16 %v3709, %v3705
    %v4038 = vpack.c.bf16 %v3710, %v3706
    %v4039 = vpack.c.bf16 %v3711, %v3707
    %v4040 = vpack.c.bf16 %v3712, %v3708
    %v4041 = vpack.c.bf16 %v3717, %v3713
    %v4042 = vpack.c.bf16 %v3718, %v3714
    %v4043 = vpack.c.bf16 %v3719, %v3715
    %v4044 = vpack.c.bf16 %v3720, %v3716
    %v4045 = vpack.c.bf16 %v3725, %v3721
    %v4046 = vpack.c.bf16 %v3726, %v3722
    %v4047 = vpack.c.bf16 %v3727, %v3723
    %v4048 = vpack.c.bf16 %v3728, %v3724
    %v4049 = vpack.c.bf16 %v3733, %v3729
    %v4050 = vpack.c.bf16 %v3734, %v3730
    %v4051 = vpack.c.bf16 %v3735, %v3731
    %v4052 = vpack.c.bf16 %v3736, %v3732
    %v4053 = vpack.c.bf16 %v3741, %v3737
    %v4054 = vpack.c.bf16 %v3742, %v3738
    %v4055 = vpack.c.bf16 %v3743, %v3739
    %v4056 = vpack.c.bf16 %v3744, %v3740
    %v4057 = vpack.c.bf16 %v3749, %v3745
    %v4058 = vpack.c.bf16 %v3750, %v3746
    %v4059 = vpack.c.bf16 %v3751, %v3747
    %v4060 = vpack.c.bf16 %v3752, %v3748
    %v4061 = vpack.c.bf16 %v3757, %v3753
    %v4062 = vpack.c.bf16 %v3758, %v3754
    %v4063 = vpack.c.bf16 %v3759, %v3755
    %v4064 = vpack.c.bf16 %v3760, %v3756
    %v4065 = vpack.c.bf16 %v3765, %v3761
    %v4066 = vpack.c.bf16 %v3766, %v3762
    %v4067 = vpack.c.bf16 %v3767, %v3763
    %v4068 = vpack.c.bf16 %v3768, %v3764
    %v4069 = vpack.c.bf16 %v3773, %v3769
    %v4070 = vpack.c.bf16 %v3774, %v3770
    %v4071 = vpack.c.bf16 %v3775, %v3771
    %v4072 = vpack.c.bf16 %v3776, %v3772
    %v4073 = vpack.c.bf16 %v3781, %v3777
    %v4074 = vpack.c.bf16 %v3782, %v3778
    %v4075 = vpack.c.bf16 %v3783, %v3779
    %v4076 = vpack.c.bf16 %v3784, %v3780
    %v4077 = vpack.c.bf16 %v3789, %v3785
    %v4078 = vpack.c.bf16 %v3790, %v3786
    %v4079 = vpack.c.bf16 %v3791, %v3787
    %v4080 = vpack.c.bf16 %v3792, %v3788
    %v4081 = vpack.c.bf16 %v3797, %v3793
    %v4082 = vpack.c.bf16 %v3798, %v3794
    %v4083 = vpack.c.bf16 %v3799, %v3795
    %v4084 = vpack.c.bf16 %v3800, %v3796
    %v4085 = vpack.c.bf16 %v3805, %v3801
    %v4086 = vpack.c.bf16 %v3806, %v3802
    %v4087 = vpack.c.bf16 %v3807, %v3803
    %v4088 = vpack.c.bf16 %v3808, %v3804
    %v4089 = vpack.c.bf16 %v3813, %v3809
    %v4090 = vpack.c.bf16 %v3814, %v3810
    %v4091 = vpack.c.bf16 %v3815, %v3811
    %v4092 = vpack.c.bf16 %v3816, %v3812
    %v4093 = vpack.c.bf16 %v3821, %v3817
    %v4094 = vpack.c.bf16 %v3822, %v3818
    %v4095 = vpack.c.bf16 %v3823, %v3819
    %v4096 = vpack.c.bf16 %v3824, %v3820
    %v4097 = vpack.c.bf16 %v3829, %v3825
    %v4098 = vpack.c.bf16 %v3830, %v3826
    %v4099 = vpack.c.bf16 %v3831, %v3827
    %v4100 = vpack.c.bf16 %v3832, %v3828
    %v4101 = vpack.c.bf16 %v3837, %v3833
    %v4102 = vpack.c.bf16 %v3838, %v3834
    %v4103 = vpack.c.bf16 %v3839, %v3835
    %v4104 = vpack.c.bf16 %v3840, %v3836
    %v4105 = vpack.c.bf16 %v3845, %v3841
    %v4106 = vpack.c.bf16 %v3846, %v3842
    %v4107 = vpack.c.bf16 %v3847, %v3843
    %v4108 = vpack.c.bf16 %v3848, %v3844
    %v4109 = vpack.c.bf16 %v3853, %v3849
    %v4110 = vpack.c.bf16 %v3854, %v3850
    %v4111 = vpack.c.bf16 %v3855, %v3851
    %v4112 = vpack.c.bf16 %v3856, %v3852
    %4113 = vmatpush.bf16.msra.mxu0 %v3885
    %4114 = vmatpush.bf16.msra.mxu0 %v3881
    %4115 = vmatpush.bf16.msra.mxu0 %v3877
    %4116 = vmatpush.bf16.msra.mxu0 %v3873
    %4117 = vmatpush.bf16.msra.mxu0 %v3869
    %4118 = vmatpush.bf16.msra.mxu0 %v3865
    %4119 = vmatpush.bf16.msra.mxu0 %v3861
    %4120 = vmatpush.bf16.msra.mxu0 %v3857
    %4121 = vmatmul.bf16.gmra.mxu0 %v2689
    %v4122 = vpop.f32.mrf.mxu0
    %v4123 = vadd.f32 0.0, %v4122
    %v4124 = vpop.f32.mrf.mxu0
    %4125 = vdwg.mxu0
    %4126 = vmatpush.bf16.msra.mxu0 %v3917
    %4127 = vmatpush.bf16.msra.mxu0 %v3913
    %4128 = vmatpush.bf16.msra.mxu0 %v3909
    %4129 = vmatpush.bf16.msra.mxu0 %v3905
    %4130 = vmatpush.bf16.msra.mxu0 %v3901
    %4131 = vmatpush.bf16.msra.mxu0 %v3897
    %4132 = vmatpush.bf16.msra.mxu0 %v3893
    %4133 = vmatpush.bf16.msra.mxu0 %v3889
    %4134 = vmatmul.bf16.gmra.mxu0 %v2690
    %v4135 = vpop.f32.mrf.mxu0
    %v4136 = vadd.f32 %v4123, %v4135
    %v4137 = vpop.f32.mrf.mxu0
    %4138 = vdwg.mxu0
    %4139 = vmatpush.bf16.msra.mxu0 %v3949
    %4140 = vmatpush.bf16.msra.mxu0 %v3945
    %4141 = vmatpush.bf16.msra.mxu0 %v3941
    %4142 = vmatpush.bf16.msra.mxu0 %v3937
    %4143 = vmatpush.bf16.msra.mxu0 %v3933
    %4144 = vmatpush.bf16.msra.mxu0 %v3929
    %4145 = vmatpush.bf16.msra.mxu0 %v3925
    %4146 = vmatpush.bf16.msra.mxu0 %v3921
    %4147 = vmatmul.bf16.gmra.mxu0 %v2691
    %v4148 = vpop.f32.mrf.mxu0
    %v4149 = vadd.f32 %v4136, %v4148
    %v4150 = vpop.f32.mrf.mxu0
    %4151 = vdwg.mxu0
    %4152 = vmatpush.bf16.msra.mxu0 %v3981
    %4153 = vmatpush.bf16.msra.mxu0 %v3977
    %4154 = vmatpush.bf16.msra.mxu0 %v3973
    %4155 = vmatpush.bf16.msra.mxu0 %v3969
    %4156 = vmatpush.bf16.msra.mxu0 %v3965
    %4157 = vmatpush.bf16.msra.mxu0 %v3961
    %4158 = vmatpush.bf16.msra.mxu0 %v3957
    %4159 = vmatpush.bf16.msra.mxu0 %v3953
    %4160 = vmatmul.bf16.gmra.mxu0 %v2692
    %v4161 = vpop.f32.mrf.mxu0
    %v4162 = vadd.f32 %v4149, %v4161
    %v4163 = vpop.f32.mrf.mxu0
    %4164 = vdwg.mxu0
    %4165 = vmatpush.bf16.msra.mxu0 %v4013
    %4166 = vmatpush.bf16.msra.mxu0 %v4009
    %4167 = vmatpush.bf16.msra.mxu0 %v4005
    %4168 = vmatpush.bf16.msra.mxu0 %v4001
    %4169 = vmatpush.bf16.msra.mxu0 %v3997
    %4170 = vmatpush.bf16.msra.mxu0 %v3993
    %4171 = vmatpush.bf16.msra.mxu0 %v3989
    %4172 = vmatpush.bf16.msra.mxu0 %v3985
    %4173 = vmatmul.bf16.gmra.mxu0 %v2693
    %v4174 = vpop.f32.mrf.mxu0
    %v4175 = vadd.f32 %v4162, %v4174
    %v4176 = vpop.f32.mrf.mxu0
    %4177 = vdwg.mxu0
    %4178 = vmatpush.bf16.msra.mxu0 %v4045
    %4179 = vmatpush.bf16.msra.mxu0 %v4041
    %4180 = vmatpush.bf16.msra.mxu0 %v4037
    %4181 = vmatpush.bf16.msra.mxu0 %v4033
    %4182 = vmatpush.bf16.msra.mxu0 %v4029
    %4183 = vmatpush.bf16.msra.mxu0 %v4025
    %4184 = vmatpush.bf16.msra.mxu0 %v4021
    %4185 = vmatpush.bf16.msra.mxu0 %v4017
    %4186 = vmatmul.bf16.gmra.mxu0 %v2694
    %v4187 = vpop.f32.mrf.mxu0
    %v4188 = vadd.f32 %v4175, %v4187
    %v4189 = vpop.f32.mrf.mxu0
    %4190 = vdwg.mxu0
    %4191 = vmatpush.bf16.msra.mxu0 %v4077
    %4192 = vmatpush.bf16.msra.mxu0 %v4073
    %4193 = vmatpush.bf16.msra.mxu0 %v4069
    %4194 = vmatpush.bf16.msra.mxu0 %v4065
    %4195 = vmatpush.bf16.msra.mxu0 %v4061
    %4196 = vmatpush.bf16.msra.mxu0 %v4057
    %4197 = vmatpush.bf16.msra.mxu0 %v4053
    %4198 = vmatpush.bf16.msra.mxu0 %v4049
    %4199 = vmatmul.bf16.gmra.mxu0 %v2695
    %v4200 = vpop.f32.mrf.mxu0
    %v4201 = vadd.f32 %v4188, %v4200
    %v4202 = vpop.f32.mrf.mxu0
    %4203 = vdwg.mxu0
    %4204 = vmatpush.bf16.msra.mxu0 %v4109
    %4205 = vmatpush.bf16.msra.mxu0 %v4105
    %4206 = vmatpush.bf16.msra.mxu0 %v4101
    %4207 = vmatpush.bf16.msra.mxu0 %v4097
    %4208 = vmatpush.bf16.msra.mxu0 %v4093
    %4209 = vmatpush.bf16.msra.mxu0 %v4089
    %4210 = vmatpush.bf16.msra.mxu0 %v4085
    %4211 = vmatpush.bf16.msra.mxu0 %v4081
    %4212 = vmatmul.bf16.gmra.mxu0 %v2696
    %v4213 = vpop.f32.mrf.mxu0
    %v4214 = vadd.f32 %v4201, %v4213
    %v4215 = vpop.f32.mrf.mxu0
    %4216 = vdwg.mxu0
    %4217 = vmatpush.bf16.msra.mxu0 %v3886
    %4218 = vmatpush.bf16.msra.mxu0 %v3882
    %4219 = vmatpush.bf16.msra.mxu0 %v3878
    %4220 = vmatpush.bf16.msra.mxu0 %v3874
    %4221 = vmatpush.bf16.msra.mxu0 %v3870
    %4222 = vmatpush.bf16.msra.mxu0 %v3866
    %4223 = vmatpush.bf16.msra.mxu0 %v3862
    %4224 = vmatpush.bf16.msra.mxu0 %v3858
    %4225 = vmatmul.bf16.gmra.mxu0 %v2689
    %v4226 = vpop.f32.mrf.mxu0
    %v4227 = vadd.f32 0.0, %v4226
    %v4228 = vpop.f32.mrf.mxu0
    %4229 = vdwg.mxu0
    %4230 = vmatpush.bf16.msra.mxu0 %v3918
    %4231 = vmatpush.bf16.msra.mxu0 %v3914
    %4232 = vmatpush.bf16.msra.mxu0 %v3910
    %4233 = vmatpush.bf16.msra.mxu0 %v3906
    %4234 = vmatpush.bf16.msra.mxu0 %v3902
    %4235 = vmatpush.bf16.msra.mxu0 %v3898
    %4236 = vmatpush.bf16.msra.mxu0 %v3894
    %4237 = vmatpush.bf16.msra.mxu0 %v3890
    %4238 = vmatmul.bf16.gmra.mxu0 %v2690
    %v4239 = vpop.f32.mrf.mxu0
    %v4240 = vadd.f32 %v4227, %v4239
    %v4241 = vpop.f32.mrf.mxu0
    %4242 = vdwg.mxu0
    %4243 = vmatpush.bf16.msra.mxu0 %v3950
    %4244 = vmatpush.bf16.msra.mxu0 %v3946
    %4245 = vmatpush.bf16.msra.mxu0 %v3942
    %4246 = vmatpush.bf16.msra.mxu0 %v3938
    %4247 = vmatpush.bf16.msra.mxu0 %v3934
    %4248 = vmatpush.bf16.msra.mxu0 %v3930
    %4249 = vmatpush.bf16.msra.mxu0 %v3926
    %4250 = vmatpush.bf16.msra.mxu0 %v3922
    %4251 = vmatmul.bf16.gmra.mxu0 %v2691
    %v4252 = vpop.f32.mrf.mxu0
    %v4253 = vadd.f32 %v4240, %v4252
    %v4254 = vpop.f32.mrf.mxu0
    %4255 = vdwg.mxu0
    %4256 = vmatpush.bf16.msra.mxu0 %v3982
    %4257 = vmatpush.bf16.msra.mxu0 %v3978
    %4258 = vmatpush.bf16.msra.mxu0 %v3974
    %4259 = vmatpush.bf16.msra.mxu0 %v3970
    %4260 = vmatpush.bf16.msra.mxu0 %v3966
    %4261 = vmatpush.bf16.msra.mxu0 %v3962
    %4262 = vmatpush.bf16.msra.mxu0 %v3958
    %4263 = vmatpush.bf16.msra.mxu0 %v3954
    %4264 = vmatmul.bf16.gmra.mxu0 %v2692
    %v4265 = vpop.f32.mrf.mxu0
    %v4266 = vadd.f32 %v4253, %v4265
    %v4267 = vpop.f32.mrf.mxu0
    %4268 = vdwg.mxu0
    %4269 = vmatpush.bf16.msra.mxu0 %v4014
    %4270 = vmatpush.bf16.msra.mxu0 %v4010
    %4271 = vmatpush.bf16.msra.mxu0 %v4006
    %4272 = vmatpush.bf16.msra.mxu0 %v4002
    %4273 = vmatpush.bf16.msra.mxu0 %v3998
    %4274 = vmatpush.bf16.msra.mxu0 %v3994
    %4275 = vmatpush.bf16.msra.mxu0 %v3990
    %4276 = vmatpush.bf16.msra.mxu0 %v3986
    %4277 = vmatmul.bf16.gmra.mxu0 %v2693
    %v4278 = vpop.f32.mrf.mxu0
    %v4279 = vadd.f32 %v4266, %v4278
    %v4280 = vpop.f32.mrf.mxu0
    %4281 = vdwg.mxu0
    %4282 = vmatpush.bf16.msra.mxu0 %v4046
    %4283 = vmatpush.bf16.msra.mxu0 %v4042
    %4284 = vmatpush.bf16.msra.mxu0 %v4038
    %4285 = vmatpush.bf16.msra.mxu0 %v4034
    %4286 = vmatpush.bf16.msra.mxu0 %v4030
    %4287 = vmatpush.bf16.msra.mxu0 %v4026
    %4288 = vmatpush.bf16.msra.mxu0 %v4022
    %4289 = vmatpush.bf16.msra.mxu0 %v4018
    %4290 = vmatmul.bf16.gmra.mxu0 %v2694
    %v4291 = vpop.f32.mrf.mxu0
    %v4292 = vadd.f32 %v4279, %v4291
    %v4293 = vpop.f32.mrf.mxu0
    %4294 = vdwg.mxu0
    %4295 = vmatpush.bf16.msra.mxu0 %v4078
    %4296 = vmatpush.bf16.msra.mxu0 %v4074
    %4297 = vmatpush.bf16.msra.mxu0 %v4070
    %4298 = vmatpush.bf16.msra.mxu0 %v4066
    %4299 = vmatpush.bf16.msra.mxu0 %v4062
    %4300 = vmatpush.bf16.msra.mxu0 %v4058
    %4301 = vmatpush.bf16.msra.mxu0 %v4054
    %4302 = vmatpush.bf16.msra.mxu0 %v4050
    %4303 = vmatmul.bf16.gmra.mxu0 %v2695
    %v4304 = vpop.f32.mrf.mxu0
    %v4305 = vadd.f32 %v4292, %v4304
    %v4306 = vpop.f32.mrf.mxu0
    %4307 = vdwg.mxu0
    %4308 = vmatpush.bf16.msra.mxu0 %v4110
    %4309 = vmatpush.bf16.msra.mxu0 %v4106
    %4310 = vmatpush.bf16.msra.mxu0 %v4102
    %4311 = vmatpush.bf16.msra.mxu0 %v4098
    %4312 = vmatpush.bf16.msra.mxu0 %v4094
    %4313 = vmatpush.bf16.msra.mxu0 %v4090
    %4314 = vmatpush.bf16.msra.mxu0 %v4086
    %4315 = vmatpush.bf16.msra.mxu0 %v4082
    %4316 = vmatmul.bf16.gmra.mxu0 %v2696
    %v4317 = vpop.f32.mrf.mxu0
    %v4318 = vadd.f32 %v4305, %v4317
    %v4319 = vpop.f32.mrf.mxu0
    %4320 = vdwg.mxu0
    %4321 = vmatpush.bf16.msra.mxu0 %v3887
    %4322 = vmatpush.bf16.msra.mxu0 %v3883
    %4323 = vmatpush.bf16.msra.mxu0 %v3879
    %4324 = vmatpush.bf16.msra.mxu0 %v3875
    %4325 = vmatpush.bf16.msra.mxu0 %v3871
    %4326 = vmatpush.bf16.msra.mxu0 %v3867
    %4327 = vmatpush.bf16.msra.mxu0 %v3863
    %4328 = vmatpush.bf16.msra.mxu0 %v3859
    %4329 = vmatmul.bf16.gmra.mxu0 %v2689
    %v4330 = vpop.f32.mrf.mxu0
    %v4331 = vadd.f32 0.0, %v4330
    %v4332 = vpop.f32.mrf.mxu0
    %4333 = vdwg.mxu0
    %4334 = vmatpush.bf16.msra.mxu0 %v3919
    %4335 = vmatpush.bf16.msra.mxu0 %v3915
    %4336 = vmatpush.bf16.msra.mxu0 %v3911
    %4337 = vmatpush.bf16.msra.mxu0 %v3907
    %4338 = vmatpush.bf16.msra.mxu0 %v3903
    %4339 = vmatpush.bf16.msra.mxu0 %v3899
    %4340 = vmatpush.bf16.msra.mxu0 %v3895
    %4341 = vmatpush.bf16.msra.mxu0 %v3891
    %4342 = vmatmul.bf16.gmra.mxu0 %v2690
    %v4343 = vpop.f32.mrf.mxu0
    %v4344 = vadd.f32 %v4331, %v4343
    %v4345 = vpop.f32.mrf.mxu0
    %4346 = vdwg.mxu0
    %4347 = vmatpush.bf16.msra.mxu0 %v3951
    %4348 = vmatpush.bf16.msra.mxu0 %v3947
    %4349 = vmatpush.bf16.msra.mxu0 %v3943
    %4350 = vmatpush.bf16.msra.mxu0 %v3939
    %4351 = vmatpush.bf16.msra.mxu0 %v3935
    %4352 = vmatpush.bf16.msra.mxu0 %v3931
    %4353 = vmatpush.bf16.msra.mxu0 %v3927
    %4354 = vmatpush.bf16.msra.mxu0 %v3923
    %4355 = vmatmul.bf16.gmra.mxu0 %v2691
    %v4356 = vpop.f32.mrf.mxu0
    %v4357 = vadd.f32 %v4344, %v4356
    %v4358 = vpop.f32.mrf.mxu0
    %4359 = vdwg.mxu0
    %4360 = vmatpush.bf16.msra.mxu0 %v3983
    %4361 = vmatpush.bf16.msra.mxu0 %v3979
    %4362 = vmatpush.bf16.msra.mxu0 %v3975
    %4363 = vmatpush.bf16.msra.mxu0 %v3971
    %4364 = vmatpush.bf16.msra.mxu0 %v3967
    %4365 = vmatpush.bf16.msra.mxu0 %v3963
    %4366 = vmatpush.bf16.msra.mxu0 %v3959
    %4367 = vmatpush.bf16.msra.mxu0 %v3955
    %4368 = vmatmul.bf16.gmra.mxu0 %v2692
    %v4369 = vpop.f32.mrf.mxu0
    %v4370 = vadd.f32 %v4357, %v4369
    %v4371 = vpop.f32.mrf.mxu0
    %4372 = vdwg.mxu0
    %4373 = vmatpush.bf16.msra.mxu0 %v4015
    %4374 = vmatpush.bf16.msra.mxu0 %v4011
    %4375 = vmatpush.bf16.msra.mxu0 %v4007
    %4376 = vmatpush.bf16.msra.mxu0 %v4003
    %4377 = vmatpush.bf16.msra.mxu0 %v3999
    %4378 = vmatpush.bf16.msra.mxu0 %v3995
    %4379 = vmatpush.bf16.msra.mxu0 %v3991
    %4380 = vmatpush.bf16.msra.mxu0 %v3987
    %4381 = vmatmul.bf16.gmra.mxu0 %v2693
    %v4382 = vpop.f32.mrf.mxu0
    %v4383 = vadd.f32 %v4370, %v4382
    %v4384 = vpop.f32.mrf.mxu0
    %4385 = vdwg.mxu0
    %4386 = vmatpush.bf16.msra.mxu0 %v4047
    %4387 = vmatpush.bf16.msra.mxu0 %v4043
    %4388 = vmatpush.bf16.msra.mxu0 %v4039
    %4389 = vmatpush.bf16.msra.mxu0 %v4035
    %4390 = vmatpush.bf16.msra.mxu0 %v4031
    %4391 = vmatpush.bf16.msra.mxu0 %v4027
    %4392 = vmatpush.bf16.msra.mxu0 %v4023
    %4393 = vmatpush.bf16.msra.mxu0 %v4019
    %4394 = vmatmul.bf16.gmra.mxu0 %v2694
    %v4395 = vpop.f32.mrf.mxu0
    %v4396 = vadd.f32 %v4383, %v4395
    %v4397 = vpop.f32.mrf.mxu0
    %4398 = vdwg.mxu0
    %4399 = vmatpush.bf16.msra.mxu0 %v4079
    %4400 = vmatpush.bf16.msra.mxu0 %v4075
    %4401 = vmatpush.bf16.msra.mxu0 %v4071
    %4402 = vmatpush.bf16.msra.mxu0 %v4067
    %4403 = vmatpush.bf16.msra.mxu0 %v4063
    %4404 = vmatpush.bf16.msra.mxu0 %v4059
    %4405 = vmatpush.bf16.msra.mxu0 %v4055
    %4406 = vmatpush.bf16.msra.mxu0 %v4051
    %4407 = vmatmul.bf16.gmra.mxu0 %v2695
    %v4408 = vpop.f32.mrf.mxu0
    %v4409 = vadd.f32 %v4396, %v4408
    %v4410 = vpop.f32.mrf.mxu0
    %4411 = vdwg.mxu0
    %4412 = vmatpush.bf16.msra.mxu0 %v4111
    %4413 = vmatpush.bf16.msra.mxu0 %v4107
    %4414 = vmatpush.bf16.msra.mxu0 %v4103
    %4415 = vmatpush.bf16.msra.mxu0 %v4099
    %4416 = vmatpush.bf16.msra.mxu0 %v4095
    %4417 = vmatpush.bf16.msra.mxu0 %v4091
    %4418 = vmatpush.bf16.msra.mxu0 %v4087
    %4419 = vmatpush.bf16.msra.mxu0 %v4083
    %4420 = vmatmul.bf16.gmra.mxu0 %v2696
    %v4421 = vpop.f32.mrf.mxu0
    %v4422 = vadd.f32 %v4409, %v4421
    %v4423 = vpop.f32.mrf.mxu0
    %4424 = vdwg.mxu0
    %4425 = vmatpush.bf16.msra.mxu0 %v3888
    %4426 = vmatpush.bf16.msra.mxu0 %v3884
    %4427 = vmatpush.bf16.msra.mxu0 %v3880
    %4428 = vmatpush.bf16.msra.mxu0 %v3876
    %4429 = vmatpush.bf16.msra.mxu0 %v3872
    %4430 = vmatpush.bf16.msra.mxu0 %v3868
    %4431 = vmatpush.bf16.msra.mxu0 %v3864
    %4432 = vmatpush.bf16.msra.mxu0 %v3860
    %4433 = vmatmul.bf16.gmra.mxu0 %v2689
    %v4434 = vpop.f32.mrf.mxu0
    %v4435 = vadd.f32 0.0, %v4434
    %v4436 = vpop.f32.mrf.mxu0
    %4437 = vdwg.mxu0
    %4438 = vmatpush.bf16.msra.mxu0 %v3920
    %4439 = vmatpush.bf16.msra.mxu0 %v3916
    %4440 = vmatpush.bf16.msra.mxu0 %v3912
    %4441 = vmatpush.bf16.msra.mxu0 %v3908
    %4442 = vmatpush.bf16.msra.mxu0 %v3904
    %4443 = vmatpush.bf16.msra.mxu0 %v3900
    %4444 = vmatpush.bf16.msra.mxu0 %v3896
    %4445 = vmatpush.bf16.msra.mxu0 %v3892
    %4446 = vmatmul.bf16.gmra.mxu0 %v2690
    %v4447 = vpop.f32.mrf.mxu0
    %v4448 = vadd.f32 %v4435, %v4447
    %v4449 = vpop.f32.mrf.mxu0
    %4450 = vdwg.mxu0
    %4451 = vmatpush.bf16.msra.mxu0 %v3952
    %4452 = vmatpush.bf16.msra.mxu0 %v3948
    %4453 = vmatpush.bf16.msra.mxu0 %v3944
    %4454 = vmatpush.bf16.msra.mxu0 %v3940
    %4455 = vmatpush.bf16.msra.mxu0 %v3936
    %4456 = vmatpush.bf16.msra.mxu0 %v3932
    %4457 = vmatpush.bf16.msra.mxu0 %v3928
    %4458 = vmatpush.bf16.msra.mxu0 %v3924
    %4459 = vmatmul.bf16.gmra.mxu0 %v2691
    %v4460 = vpop.f32.mrf.mxu0
    %v4461 = vadd.f32 %v4448, %v4460
    %v4462 = vpop.f32.mrf.mxu0
    %4463 = vdwg.mxu0
    %4464 = vmatpush.bf16.msra.mxu0 %v3984
    %4465 = vmatpush.bf16.msra.mxu0 %v3980
    %4466 = vmatpush.bf16.msra.mxu0 %v3976
    %4467 = vmatpush.bf16.msra.mxu0 %v3972
    %4468 = vmatpush.bf16.msra.mxu0 %v3968
    %4469 = vmatpush.bf16.msra.mxu0 %v3964
    %4470 = vmatpush.bf16.msra.mxu0 %v3960
    %4471 = vmatpush.bf16.msra.mxu0 %v3956
    %4472 = vmatmul.bf16.gmra.mxu0 %v2692
    %v4473 = vpop.f32.mrf.mxu0
    %v4474 = vadd.f32 %v4461, %v4473
    %v4475 = vpop.f32.mrf.mxu0
    %4476 = vdwg.mxu0
    %4477 = vmatpush.bf16.msra.mxu0 %v4016
    %4478 = vmatpush.bf16.msra.mxu0 %v4012
    %4479 = vmatpush.bf16.msra.mxu0 %v4008
    %4480 = vmatpush.bf16.msra.mxu0 %v4004
    %4481 = vmatpush.bf16.msra.mxu0 %v4000
    %4482 = vmatpush.bf16.msra.mxu0 %v3996
    %4483 = vmatpush.bf16.msra.mxu0 %v3992
    %4484 = vmatpush.bf16.msra.mxu0 %v3988
    %4485 = vmatmul.bf16.gmra.mxu0 %v2693
    %v4486 = vpop.f32.mrf.mxu0
    %v4487 = vadd.f32 %v4474, %v4486
    %v4488 = vpop.f32.mrf.mxu0
    %4489 = vdwg.mxu0
    %4490 = vmatpush.bf16.msra.mxu0 %v4048
    %4491 = vmatpush.bf16.msra.mxu0 %v4044
    %4492 = vmatpush.bf16.msra.mxu0 %v4040
    %4493 = vmatpush.bf16.msra.mxu0 %v4036
    %4494 = vmatpush.bf16.msra.mxu0 %v4032
    %4495 = vmatpush.bf16.msra.mxu0 %v4028
    %4496 = vmatpush.bf16.msra.mxu0 %v4024
    %4497 = vmatpush.bf16.msra.mxu0 %v4020
    %4498 = vmatmul.bf16.gmra.mxu0 %v2694
    %v4499 = vpop.f32.mrf.mxu0
    %v4500 = vadd.f32 %v4487, %v4499
    %v4501 = vpop.f32.mrf.mxu0
    %4502 = vdwg.mxu0
    %4503 = vmatpush.bf16.msra.mxu0 %v4080
    %4504 = vmatpush.bf16.msra.mxu0 %v4076
    %4505 = vmatpush.bf16.msra.mxu0 %v4072
    %4506 = vmatpush.bf16.msra.mxu0 %v4068
    %4507 = vmatpush.bf16.msra.mxu0 %v4064
    %4508 = vmatpush.bf16.msra.mxu0 %v4060
    %4509 = vmatpush.bf16.msra.mxu0 %v4056
    %4510 = vmatpush.bf16.msra.mxu0 %v4052
    %4511 = vmatmul.bf16.gmra.mxu0 %v2695
    %v4512 = vpop.f32.mrf.mxu0
    %v4513 = vadd.f32 %v4500, %v4512
    %v4514 = vpop.f32.mrf.mxu0
    %4515 = vdwg.mxu0
    %4516 = vmatpush.bf16.msra.mxu0 %v4112
    %4517 = vmatpush.bf16.msra.mxu0 %v4108
    %4518 = vmatpush.bf16.msra.mxu0 %v4104
    %4519 = vmatpush.bf16.msra.mxu0 %v4100
    %4520 = vmatpush.bf16.msra.mxu0 %v4096
    %4521 = vmatpush.bf16.msra.mxu0 %v4092
    %4522 = vmatpush.bf16.msra.mxu0 %v4088
    %4523 = vmatpush.bf16.msra.mxu0 %v4084
    %4524 = vmatmul.bf16.gmra.mxu0 %v2696
    %v4525 = vpop.f32.mrf.mxu0
    %v4526 = vadd.f32 %v4513, %v4525
    %v4527 = vpop.f32.mrf.mxu0
    %4528 = vdwg.mxu0
    %v4530 = vperm.slane %v2697, 0
    %v4531 = vperm.slane %v2697, 1
    %v4532 = vperm.slane %v2697, 2
    %v4533 = vperm.slane %v2697, 3
    %v4538 = vmul.f32 %v4214, %v4530
    %v4539 = vmul.f32 %v4318, %v4531
    %v4540 = vmul.f32 %v4422, %v4532
    %v4541 = vmul.f32 %v4526, %v4533
    %v4543 = vperm.slane %v2699, 0
    %v4544 = vperm.slane %v2699, 1
    %v4545 = vperm.slane %v2699, 2
    %v4546 = vperm.slane %v2699, 3
    %v4551 = vadd.f32 %v4538, %v4543
    %v4552 = vadd.f32 %v4539, %v4544
    %v4553 = vadd.f32 %v4540, %v4545
    %v4554 = vadd.f32 %v4541, %v4546
    %v4555 = vxor.u32 %v4551, 2147483648
    %v4556 = vxor.u32 %v4552, 2147483648
    %v4557 = vxor.u32 %v4553, 2147483648
    %v4558 = vxor.u32 %v4554, 2147483648
    %v4559 = vmul.f32 %v4555, 1.442695
    %v4560 = vpow.pop %v4559
    %v4561 = vmul.f32 %v4556, 1.442695
    %v4562 = vpow.pop %v4561
    %v4563 = vmul.f32 %v4557, 1.442695
    %v4564 = vpow.pop %v4563
    %v4565 = vmul.f32 %v4558, 1.442695
    %v4566 = vpow.pop %v4565
    %v4567 = vadd.f32 %v4560, 1.0
    %v4568 = vadd.f32 %v4562, 1.0
    %v4569 = vadd.f32 %v4564, 1.0
    %v4570 = vadd.f32 %v4566, 1.0
    %v4571 = vrcp.pop %v4567
    %v4572 = vmul.f32 %v4567, %v4571
    %v4573 = vsub.f32 1.0, %v4572
    %v4574 = vmul.f32 %v4571, %v4573
    %v4575 = vadd.f32 %v4571, %v4574
    %vm4576 = vweird.f32 %v4567
    %vm4577 = vweird.f32 %v4571
    %vm4578 = vmor %vm4576, %vm4577
    %v4579 = vsel %vm4578, %v4571, %v4575
    %v4580 = vand.u32 2147483647, %v4567
    %vm4581 = vcmp.eq.f32.partialorder %v4580, 8.507059e+37
    %v4582 = vand.u32 %v4567, 2147483648
    %v4583 = vor.u32 1.1754944e-38, %v4582
    %v4584 = vsel %vm4581, %v4583, %v4579
    %v4585 = vmul.f32 1.0, %v4584
    %v4586 = vrcp.pop %v4568
    %v4587 = vmul.f32 %v4568, %v4586
    %v4588 = vsub.f32 1.0, %v4587
    %v4589 = vmul.f32 %v4586, %v4588
    %v4590 = vadd.f32 %v4586, %v4589
    %vm4591 = vweird.f32 %v4568
    %vm4592 = vweird.f32 %v4586
    %vm4593 = vmor %vm4591, %vm4592
    %v4594 = vsel %vm4593, %v4586, %v4590
    %v4595 = vand.u32 2147483647, %v4568
    %vm4596 = vcmp.eq.f32.partialorder %v4595, 8.507059e+37
    %v4597 = vand.u32 %v4568, 2147483648
    %v4598 = vor.u32 1.1754944e-38, %v4597
    %v4599 = vsel %vm4596, %v4598, %v4594
    %v4600 = vmul.f32 1.0, %v4599
    %v4601 = vrcp.pop %v4569
    %v4602 = vmul.f32 %v4569, %v4601
    %v4603 = vsub.f32 1.0, %v4602
    %v4604 = vmul.f32 %v4601, %v4603
    %v4605 = vadd.f32 %v4601, %v4604
    %vm4606 = vweird.f32 %v4569
    %vm4607 = vweird.f32 %v4601
    %vm4608 = vmor %vm4606, %vm4607
    %v4609 = vsel %vm4608, %v4601, %v4605
    %v4610 = vand.u32 2147483647, %v4569
    %vm4611 = vcmp.eq.f32.partialorder %v4610, 8.507059e+37
    %v4612 = vand.u32 %v4569, 2147483648
    %v4613 = vor.u32 1.1754944e-38, %v4612
    %v4614 = vsel %vm4611, %v4613, %v4609
    %v4615 = vmul.f32 1.0, %v4614
    %v4616 = vrcp.pop %v4570
    %v4617 = vmul.f32 %v4570, %v4616
    %v4618 = vsub.f32 1.0, %v4617
    %v4619 = vmul.f32 %v4616, %v4618
    %v4620 = vadd.f32 %v4616, %v4619
    %vm4621 = vweird.f32 %v4570
    %vm4622 = vweird.f32 %v4616
    %vm4623 = vmor %vm4621, %vm4622
    %v4624 = vsel %vm4623, %v4616, %v4620
    %v4625 = vand.u32 2147483647, %v4570
    %vm4626 = vcmp.eq.f32.partialorder %v4625, 8.507059e+37
    %v4627 = vand.u32 %v4570, 2147483648
    %v4628 = vor.u32 1.1754944e-38, %v4627
    %v4629 = vsel %vm4626, %v4628, %v4624
    %v4630 = vmul.f32 1.0, %v4629
    %s4631 = sshll.u32 %s2702, 4
    %4632 = dma.done %s232, %s4631
    %v4633 = vld [vmem:[%s231] sm:$0xff]
    %v4634 = vld [vmem:[%s231 + $0x8] sm:$0xff]
    %v4635 = vld [vmem:[%s231 + $0x10] sm:$0xff]
    %v4636 = vld [vmem:[%s231 + $0x18] sm:$0xff]
    %v4637 = vld [vmem:[%s231 + $0x20] sm:$0xff]
    %v4638 = vld [vmem:[%s231 + $0x28] sm:$0xff]
    %v4639 = vld [vmem:[%s231 + $0x30] sm:$0xff]
    %v4640 = vld [vmem:[%s231 + $0x38] sm:$0xff]
    %v4641 = vld [vmem:[%s231 + $0x40] sm:$0xff]
    %v4642 = vld [vmem:[%s231 + $0x48] sm:$0xff]
    %v4643 = vld [vmem:[%s231 + $0x50] sm:$0xff]
    %v4644 = vld [vmem:[%s231 + $0x58] sm:$0xff]
    %v4645 = vld [vmem:[%s231 + $0x60] sm:$0xff]
    %v4646 = vld [vmem:[%s231 + $0x68] sm:$0xff]
    %v4647 = vld [vmem:[%s231 + $0x70] sm:$0xff]
    %v4648 = vld [vmem:[%s231 + $0x78] sm:$0xff]
    %v4649 = vld [vmem:[%s231 + $0x80] sm:$0xff]
    %v4650 = vld [vmem:[%s231 + $0x88] sm:$0xff]
    %v4651 = vld [vmem:[%s231 + $0x90] sm:$0xff]
    %v4652 = vld [vmem:[%s231 + $0x98] sm:$0xff]
    %v4653 = vld [vmem:[%s231 + $0xa0] sm:$0xff]
    %v4654 = vld [vmem:[%s231 + $0xa8] sm:$0xff]
    %v4655 = vld [vmem:[%s231 + $0xb0] sm:$0xff]
    %v4656 = vld [vmem:[%s231 + $0xb8] sm:$0xff]
    %v4657 = vld [vmem:[%s231 + $0xc0] sm:$0xff]
    %v4658 = vld [vmem:[%s231 + $0xc8] sm:$0xff]
    %v4659 = vld [vmem:[%s231 + $0xd0] sm:$0xff]
    %v4660 = vld [vmem:[%s231 + $0xd8] sm:$0xff]
    %v4661 = vld [vmem:[%s231 + $0xe0] sm:$0xff]
    %v4662 = vld [vmem:[%s231 + $0xe8] sm:$0xff]
    %v4663 = vld [vmem:[%s231 + $0xf0] sm:$0xff]
    %v4664 = vld [vmem:[%s231 + $0xf8] sm:$0xff]
    %v4665 = vld [vmem:[%s231 + $0x100] sm:$0xff]
    %v4666 = vld [vmem:[%s231 + $0x108] sm:$0xff]
    %v4667 = vld [vmem:[%s231 + $0x110] sm:$0xff]
    %v4668 = vld [vmem:[%s231 + $0x118] sm:$0xff]
    %v4669 = vld [vmem:[%s231 + $0x120] sm:$0xff]
    %v4670 = vld [vmem:[%s231 + $0x128] sm:$0xff]
    %v4671 = vld [vmem:[%s231 + $0x130] sm:$0xff]
    %v4672 = vld [vmem:[%s231 + $0x138] sm:$0xff]
    %v4673 = vld [vmem:[%s231 + $0x140] sm:$0xff]
    %v4674 = vld [vmem:[%s231 + $0x148] sm:$0xff]
    %v4675 = vld [vmem:[%s231 + $0x150] sm:$0xff]
    %v4676 = vld [vmem:[%s231 + $0x158] sm:$0xff]
    %v4677 = vld [vmem:[%s231 + $0x160] sm:$0xff]
    %v4678 = vld [vmem:[%s231 + $0x168] sm:$0xff]
    %v4679 = vld [vmem:[%s231 + $0x170] sm:$0xff]
    %v4680 = vld [vmem:[%s231 + $0x178] sm:$0xff]
    %v4681 = vld [vmem:[%s231 + $0x180] sm:$0xff]
    %v4682 = vld [vmem:[%s231 + $0x188] sm:$0xff]
    %v4683 = vld [vmem:[%s231 + $0x190] sm:$0xff]
    %v4684 = vld [vmem:[%s231 + $0x198] sm:$0xff]
    %v4685 = vld [vmem:[%s231 + $0x1a0] sm:$0xff]
    %v4686 = vld [vmem:[%s231 + $0x1a8] sm:$0xff]
    %v4687 = vld [vmem:[%s231 + $0x1b0] sm:$0xff]
    %v4688 = vld [vmem:[%s231 + $0x1b8] sm:$0xff]
    %v4689 = vld [vmem:[%s231 + $0x1c0] sm:$0xff]
    %v4690 = vld [vmem:[%s231 + $0x1c8] sm:$0xff]
    %v4691 = vld [vmem:[%s231 + $0x1d0] sm:$0xff]
    %v4692 = vld [vmem:[%s231 + $0x1d8] sm:$0xff]
    %v4693 = vld [vmem:[%s231 + $0x1e0] sm:$0xff]
    %v4694 = vld [vmem:[%s231 + $0x1e8] sm:$0xff]
    %v4695 = vld [vmem:[%s231 + $0x1f0] sm:$0xff]
    %v4696 = vld [vmem:[%s231 + $0x1f8] sm:$0xff]
    %v4697 = vld [vmem:[%s231 + $0x200] sm:$0xff]
    %v4698 = vld [vmem:[%s231 + $0x208] sm:$0xff]
    %v4699 = vld [vmem:[%s231 + $0x210] sm:$0xff]
    %v4700 = vld [vmem:[%s231 + $0x218] sm:$0xff]
    %v4701 = vld [vmem:[%s231 + $0x220] sm:$0xff]
    %v4702 = vld [vmem:[%s231 + $0x228] sm:$0xff]
    %v4703 = vld [vmem:[%s231 + $0x230] sm:$0xff]
    %v4704 = vld [vmem:[%s231 + $0x238] sm:$0xff]
    %v4705 = vld [vmem:[%s231 + $0x240] sm:$0xff]
    %v4706 = vld [vmem:[%s231 + $0x248] sm:$0xff]
    %v4707 = vld [vmem:[%s231 + $0x250] sm:$0xff]
    %v4708 = vld [vmem:[%s231 + $0x258] sm:$0xff]
    %v4709 = vld [vmem:[%s231 + $0x260] sm:$0xff]
    %v4710 = vld [vmem:[%s231 + $0x268] sm:$0xff]
    %v4711 = vld [vmem:[%s231 + $0x270] sm:$0xff]
    %v4712 = vld [vmem:[%s231 + $0x278] sm:$0xff]
    %v4713 = vld [vmem:[%s231 + $0x280] sm:$0xff]
    %v4714 = vld [vmem:[%s231 + $0x288] sm:$0xff]
    %v4715 = vld [vmem:[%s231 + $0x290] sm:$0xff]
    %v4716 = vld [vmem:[%s231 + $0x298] sm:$0xff]
    %v4717 = vld [vmem:[%s231 + $0x2a0] sm:$0xff]
    %v4718 = vld [vmem:[%s231 + $0x2a8] sm:$0xff]
    %v4719 = vld [vmem:[%s231 + $0x2b0] sm:$0xff]
    %v4720 = vld [vmem:[%s231 + $0x2b8] sm:$0xff]
    %v4721 = vld [vmem:[%s231 + $0x2c0] sm:$0xff]
    %v4722 = vld [vmem:[%s231 + $0x2c8] sm:$0xff]
    %v4723 = vld [vmem:[%s231 + $0x2d0] sm:$0xff]
    %v4724 = vld [vmem:[%s231 + $0x2d8] sm:$0xff]
    %v4725 = vld [vmem:[%s231 + $0x2e0] sm:$0xff]
    %v4726 = vld [vmem:[%s231 + $0x2e8] sm:$0xff]
    %v4727 = vld [vmem:[%s231 + $0x2f0] sm:$0xff]
    %v4728 = vld [vmem:[%s231 + $0x2f8] sm:$0xff]
    %v4729 = vld [vmem:[%s231 + $0x300] sm:$0xff]
    %v4730 = vld [vmem:[%s231 + $0x308] sm:$0xff]
    %v4731 = vld [vmem:[%s231 + $0x310] sm:$0xff]
    %v4732 = vld [vmem:[%s231 + $0x318] sm:$0xff]
    %v4733 = vld [vmem:[%s231 + $0x320] sm:$0xff]
    %v4734 = vld [vmem:[%s231 + $0x328] sm:$0xff]
    %v4735 = vld [vmem:[%s231 + $0x330] sm:$0xff]
    %v4736 = vld [vmem:[%s231 + $0x338] sm:$0xff]
    %v4737 = vld [vmem:[%s231 + $0x340] sm:$0xff]
    %v4738 = vld [vmem:[%s231 + $0x348] sm:$0xff]
    %v4739 = vld [vmem:[%s231 + $0x350] sm:$0xff]
    %v4740 = vld [vmem:[%s231 + $0x358] sm:$0xff]
    %v4741 = vld [vmem:[%s231 + $0x360] sm:$0xff]
    %v4742 = vld [vmem:[%s231 + $0x368] sm:$0xff]
    %v4743 = vld [vmem:[%s231 + $0x370] sm:$0xff]
    %v4744 = vld [vmem:[%s231 + $0x378] sm:$0xff]
    %v4745 = vld [vmem:[%s231 + $0x380] sm:$0xff]
    %v4746 = vld [vmem:[%s231 + $0x388] sm:$0xff]
    %v4747 = vld [vmem:[%s231 + $0x390] sm:$0xff]
    %v4748 = vld [vmem:[%s231 + $0x398] sm:$0xff]
    %v4749 = vld [vmem:[%s231 + $0x3a0] sm:$0xff]
    %v4750 = vld [vmem:[%s231 + $0x3a8] sm:$0xff]
    %v4751 = vld [vmem:[%s231 + $0x3b0] sm:$0xff]
    %v4752 = vld [vmem:[%s231 + $0x3b8] sm:$0xff]
    %v4753 = vld [vmem:[%s231 + $0x3c0] sm:$0xff]
    %v4754 = vld [vmem:[%s231 + $0x3c8] sm:$0xff]
    %v4755 = vld [vmem:[%s231 + $0x3d0] sm:$0xff]
    %v4756 = vld [vmem:[%s231 + $0x3d8] sm:$0xff]
    %v4757 = vld [vmem:[%s231 + $0x3e0] sm:$0xff]
    %v4758 = vld [vmem:[%s231 + $0x3e8] sm:$0xff]
    %v4759 = vld [vmem:[%s231 + $0x3f0] sm:$0xff]
    %v4760 = vld [vmem:[%s231 + $0x3f8] sm:$0xff]
    %v4761 = vunpack.c.0.s8 %v4633
    %v4762 = vunpack.c.0.s8 %v4634
    %v4763 = vunpack.c.0.s8 %v4635
    %v4764 = vunpack.c.0.s8 %v4636
    %v4765 = vunpack.c.1.s8 %v4633
    %v4766 = vunpack.c.1.s8 %v4634
    %v4767 = vunpack.c.1.s8 %v4635
    %v4768 = vunpack.c.1.s8 %v4636
    %v4769 = vunpack.c.2.s8 %v4633
    %v4770 = vunpack.c.2.s8 %v4634
    %v4771 = vunpack.c.2.s8 %v4635
    %v4772 = vunpack.c.2.s8 %v4636
    %v4773 = vunpack.c.3.s8 %v4633
    %v4774 = vunpack.c.3.s8 %v4634
    %v4775 = vunpack.c.3.s8 %v4635
    %v4776 = vunpack.c.3.s8 %v4636
    %v4777 = vunpack.c.0.s8 %v4637
    %v4778 = vunpack.c.0.s8 %v4638
    %v4779 = vunpack.c.0.s8 %v4639
    %v4780 = vunpack.c.0.s8 %v4640
    %v4781 = vunpack.c.1.s8 %v4637
    %v4782 = vunpack.c.1.s8 %v4638
    %v4783 = vunpack.c.1.s8 %v4639
    %v4784 = vunpack.c.1.s8 %v4640
    %v4785 = vunpack.c.2.s8 %v4637
    %v4786 = vunpack.c.2.s8 %v4638
    %v4787 = vunpack.c.2.s8 %v4639
    %v4788 = vunpack.c.2.s8 %v4640
    %v4789 = vunpack.c.3.s8 %v4637
    %v4790 = vunpack.c.3.s8 %v4638
    %v4791 = vunpack.c.3.s8 %v4639
    %v4792 = vunpack.c.3.s8 %v4640
    %v4793 = vunpack.c.0.s8 %v4641
    %v4794 = vunpack.c.0.s8 %v4642
    %v4795 = vunpack.c.0.s8 %v4643
    %v4796 = vunpack.c.0.s8 %v4644
    %v4797 = vunpack.c.1.s8 %v4641
    %v4798 = vunpack.c.1.s8 %v4642
    %v4799 = vunpack.c.1.s8 %v4643
    %v4800 = vunpack.c.1.s8 %v4644
    %v4801 = vunpack.c.2.s8 %v4641
    %v4802 = vunpack.c.2.s8 %v4642
    %v4803 = vunpack.c.2.s8 %v4643
    %v4804 = vunpack.c.2.s8 %v4644
    %v4805 = vunpack.c.3.s8 %v4641
    %v4806 = vunpack.c.3.s8 %v4642
    %v4807 = vunpack.c.3.s8 %v4643
    %v4808 = vunpack.c.3.s8 %v4644
    %v4809 = vunpack.c.0.s8 %v4645
    %v4810 = vunpack.c.0.s8 %v4646
    %v4811 = vunpack.c.0.s8 %v4647
    %v4812 = vunpack.c.0.s8 %v4648
    %v4813 = vunpack.c.1.s8 %v4645
    %v4814 = vunpack.c.1.s8 %v4646
    %v4815 = vunpack.c.1.s8 %v4647
    %v4816 = vunpack.c.1.s8 %v4648
    %v4817 = vunpack.c.2.s8 %v4645
    %v4818 = vunpack.c.2.s8 %v4646
    %v4819 = vunpack.c.2.s8 %v4647
    %v4820 = vunpack.c.2.s8 %v4648
    %v4821 = vunpack.c.3.s8 %v4645
    %v4822 = vunpack.c.3.s8 %v4646
    %v4823 = vunpack.c.3.s8 %v4647
    %v4824 = vunpack.c.3.s8 %v4648
    %v4825 = vunpack.c.0.s8 %v4649
    %v4826 = vunpack.c.0.s8 %v4650
    %v4827 = vunpack.c.0.s8 %v4651
    %v4828 = vunpack.c.0.s8 %v4652
    %v4829 = vunpack.c.1.s8 %v4649
    %v4830 = vunpack.c.1.s8 %v4650
    %v4831 = vunpack.c.1.s8 %v4651
    %v4832 = vunpack.c.1.s8 %v4652
    %v4833 = vunpack.c.2.s8 %v4649
    %v4834 = vunpack.c.2.s8 %v4650
    %v4835 = vunpack.c.2.s8 %v4651
    %v4836 = vunpack.c.2.s8 %v4652
    %v4837 = vunpack.c.3.s8 %v4649
    %v4838 = vunpack.c.3.s8 %v4650
    %v4839 = vunpack.c.3.s8 %v4651
    %v4840 = vunpack.c.3.s8 %v4652
    %v4841 = vunpack.c.0.s8 %v4653
    %v4842 = vunpack.c.0.s8 %v4654
    %v4843 = vunpack.c.0.s8 %v4655
    %v4844 = vunpack.c.0.s8 %v4656
    %v4845 = vunpack.c.1.s8 %v4653
    %v4846 = vunpack.c.1.s8 %v4654
    %v4847 = vunpack.c.1.s8 %v4655
    %v4848 = vunpack.c.1.s8 %v4656
    %v4849 = vunpack.c.2.s8 %v4653
    %v4850 = vunpack.c.2.s8 %v4654
    %v4851 = vunpack.c.2.s8 %v4655
    %v4852 = vunpack.c.2.s8 %v4656
    %v4853 = vunpack.c.3.s8 %v4653
    %v4854 = vunpack.c.3.s8 %v4654
    %v4855 = vunpack.c.3.s8 %v4655
    %v4856 = vunpack.c.3.s8 %v4656
    %v4857 = vunpack.c.0.s8 %v4657
    %v4858 = vunpack.c.0.s8 %v4658
    %v4859 = vunpack.c.0.s8 %v4659
    %v4860 = vunpack.c.0.s8 %v4660
    %v4861 = vunpack.c.1.s8 %v4657
    %v4862 = vunpack.c.1.s8 %v4658
    %v4863 = vunpack.c.1.s8 %v4659
    %v4864 = vunpack.c.1.s8 %v4660
    %v4865 = vunpack.c.2.s8 %v4657
    %v4866 = vunpack.c.2.s8 %v4658
    %v4867 = vunpack.c.2.s8 %v4659
    %v4868 = vunpack.c.2.s8 %v4660
    %v4869 = vunpack.c.3.s8 %v4657
    %v4870 = vunpack.c.3.s8 %v4658
    %v4871 = vunpack.c.3.s8 %v4659
    %v4872 = vunpack.c.3.s8 %v4660
    %v4873 = vunpack.c.0.s8 %v4661
    %v4874 = vunpack.c.0.s8 %v4662
    %v4875 = vunpack.c.0.s8 %v4663
    %v4876 = vunpack.c.0.s8 %v4664
    %v4877 = vunpack.c.1.s8 %v4661
    %v4878 = vunpack.c.1.s8 %v4662
    %v4879 = vunpack.c.1.s8 %v4663
    %v4880 = vunpack.c.1.s8 %v4664
    %v4881 = vunpack.c.2.s8 %v4661
    %v4882 = vunpack.c.2.s8 %v4662
    %v4883 = vunpack.c.2.s8 %v4663
    %v4884 = vunpack.c.2.s8 %v4664
    %v4885 = vunpack.c.3.s8 %v4661
    %v4886 = vunpack.c.3.s8 %v4662
    %v4887 = vunpack.c.3.s8 %v4663
    %v4888 = vunpack.c.3.s8 %v4664
    %v4889 = vunpack.c.0.s8 %v4665
    %v4890 = vunpack.c.0.s8 %v4666
    %v4891 = vunpack.c.0.s8 %v4667
    %v4892 = vunpack.c.0.s8 %v4668
    %v4893 = vunpack.c.1.s8 %v4665
    %v4894 = vunpack.c.1.s8 %v4666
    %v4895 = vunpack.c.1.s8 %v4667
    %v4896 = vunpack.c.1.s8 %v4668
    %v4897 = vunpack.c.2.s8 %v4665
    %v4898 = vunpack.c.2.s8 %v4666
    %v4899 = vunpack.c.2.s8 %v4667
    %v4900 = vunpack.c.2.s8 %v4668
    %v4901 = vunpack.c.3.s8 %v4665
    %v4902 = vunpack.c.3.s8 %v4666
    %v4903 = vunpack.c.3.s8 %v4667
    %v4904 = vunpack.c.3.s8 %v4668
    %v4905 = vunpack.c.0.s8 %v4669
    %v4906 = vunpack.c.0.s8 %v4670
    %v4907 = vunpack.c.0.s8 %v4671
    %v4908 = vunpack.c.0.s8 %v4672
    %v4909 = vunpack.c.1.s8 %v4669
    %v4910 = vunpack.c.1.s8 %v4670
    %v4911 = vunpack.c.1.s8 %v4671
    %v4912 = vunpack.c.1.s8 %v4672
    %v4913 = vunpack.c.2.s8 %v4669
    %v4914 = vunpack.c.2.s8 %v4670
    %v4915 = vunpack.c.2.s8 %v4671
    %v4916 = vunpack.c.2.s8 %v4672
    %v4917 = vunpack.c.3.s8 %v4669
    %v4918 = vunpack.c.3.s8 %v4670
    %v4919 = vunpack.c.3.s8 %v4671
    %v4920 = vunpack.c.3.s8 %v4672
    %v4921 = vunpack.c.0.s8 %v4673
    %v4922 = vunpack.c.0.s8 %v4674
    %v4923 = vunpack.c.0.s8 %v4675
    %v4924 = vunpack.c.0.s8 %v4676
    %v4925 = vunpack.c.1.s8 %v4673
    %v4926 = vunpack.c.1.s8 %v4674
    %v4927 = vunpack.c.1.s8 %v4675
    %v4928 = vunpack.c.1.s8 %v4676
    %v4929 = vunpack.c.2.s8 %v4673
    %v4930 = vunpack.c.2.s8 %v4674
    %v4931 = vunpack.c.2.s8 %v4675
    %v4932 = vunpack.c.2.s8 %v4676
    %v4933 = vunpack.c.3.s8 %v4673
    %v4934 = vunpack.c.3.s8 %v4674
    %v4935 = vunpack.c.3.s8 %v4675
    %v4936 = vunpack.c.3.s8 %v4676
    %v4937 = vunpack.c.0.s8 %v4677
    %v4938 = vunpack.c.0.s8 %v4678
    %v4939 = vunpack.c.0.s8 %v4679
    %v4940 = vunpack.c.0.s8 %v4680
    %v4941 = vunpack.c.1.s8 %v4677
    %v4942 = vunpack.c.1.s8 %v4678
    %v4943 = vunpack.c.1.s8 %v4679
    %v4944 = vunpack.c.1.s8 %v4680
    %v4945 = vunpack.c.2.s8 %v4677
    %v4946 = vunpack.c.2.s8 %v4678
    %v4947 = vunpack.c.2.s8 %v4679
    %v4948 = vunpack.c.2.s8 %v4680
    %v4949 = vunpack.c.3.s8 %v4677
    %v4950 = vunpack.c.3.s8 %v4678
    %v4951 = vunpack.c.3.s8 %v4679
    %v4952 = vunpack.c.3.s8 %v4680
    %v4953 = vunpack.c.0.s8 %v4681
    %v4954 = vunpack.c.0.s8 %v4682
    %v4955 = vunpack.c.0.s8 %v4683
    %v4956 = vunpack.c.0.s8 %v4684
    %v4957 = vunpack.c.1.s8 %v4681
    %v4958 = vunpack.c.1.s8 %v4682
    %v4959 = vunpack.c.1.s8 %v4683
    %v4960 = vunpack.c.1.s8 %v4684
    %v4961 = vunpack.c.2.s8 %v4681
    %v4962 = vunpack.c.2.s8 %v4682
    %v4963 = vunpack.c.2.s8 %v4683
    %v4964 = vunpack.c.2.s8 %v4684
    %v4965 = vunpack.c.3.s8 %v4681
    %v4966 = vunpack.c.3.s8 %v4682
    %v4967 = vunpack.c.3.s8 %v4683
    %v4968 = vunpack.c.3.s8 %v4684
    %v4969 = vunpack.c.0.s8 %v4685
    %v4970 = vunpack.c.0.s8 %v4686
    %v4971 = vunpack.c.0.s8 %v4687
    %v4972 = vunpack.c.0.s8 %v4688
    %v4973 = vunpack.c.1.s8 %v4685
    %v4974 = vunpack.c.1.s8 %v4686
    %v4975 = vunpack.c.1.s8 %v4687
    %v4976 = vunpack.c.1.s8 %v4688
    %v4977 = vunpack.c.2.s8 %v4685
    %v4978 = vunpack.c.2.s8 %v4686
    %v4979 = vunpack.c.2.s8 %v4687
    %v4980 = vunpack.c.2.s8 %v4688
    %v4981 = vunpack.c.3.s8 %v4685
    %v4982 = vunpack.c.3.s8 %v4686
    %v4983 = vunpack.c.3.s8 %v4687
    %v4984 = vunpack.c.3.s8 %v4688
    %v4985 = vunpack.c.0.s8 %v4689
    %v4986 = vunpack.c.0.s8 %v4690
    %v4987 = vunpack.c.0.s8 %v4691
    %v4988 = vunpack.c.0.s8 %v4692
    %v4989 = vunpack.c.1.s8 %v4689
    %v4990 = vunpack.c.1.s8 %v4690
    %v4991 = vunpack.c.1.s8 %v4691
    %v4992 = vunpack.c.1.s8 %v4692
    %v4993 = vunpack.c.2.s8 %v4689
    %v4994 = vunpack.c.2.s8 %v4690
    %v4995 = vunpack.c.2.s8 %v4691
    %v4996 = vunpack.c.2.s8 %v4692
    %v4997 = vunpack.c.3.s8 %v4689
    %v4998 = vunpack.c.3.s8 %v4690
    %v4999 = vunpack.c.3.s8 %v4691
    %v5000 = vunpack.c.3.s8 %v4692
    %v5001 = vunpack.c.0.s8 %v4693
    %v5002 = vunpack.c.0.s8 %v4694
    %v5003 = vunpack.c.0.s8 %v4695
    %v5004 = vunpack.c.0.s8 %v4696
    %v5005 = vunpack.c.1.s8 %v4693
    %v5006 = vunpack.c.1.s8 %v4694
    %v5007 = vunpack.c.1.s8 %v4695
    %v5008 = vunpack.c.1.s8 %v4696
    %v5009 = vunpack.c.2.s8 %v4693
    %v5010 = vunpack.c.2.s8 %v4694
    %v5011 = vunpack.c.2.s8 %v4695
    %v5012 = vunpack.c.2.s8 %v4696
    %v5013 = vunpack.c.3.s8 %v4693
    %v5014 = vunpack.c.3.s8 %v4694
    %v5015 = vunpack.c.3.s8 %v4695
    %v5016 = vunpack.c.3.s8 %v4696
    %v5017 = vunpack.c.0.s8 %v4697
    %v5018 = vunpack.c.0.s8 %v4698
    %v5019 = vunpack.c.0.s8 %v4699
    %v5020 = vunpack.c.0.s8 %v4700
    %v5021 = vunpack.c.1.s8 %v4697
    %v5022 = vunpack.c.1.s8 %v4698
    %v5023 = vunpack.c.1.s8 %v4699
    %v5024 = vunpack.c.1.s8 %v4700
    %v5025 = vunpack.c.2.s8 %v4697
    %v5026 = vunpack.c.2.s8 %v4698
    %v5027 = vunpack.c.2.s8 %v4699
    %v5028 = vunpack.c.2.s8 %v4700
    %v5029 = vunpack.c.3.s8 %v4697
    %v5030 = vunpack.c.3.s8 %v4698
    %v5031 = vunpack.c.3.s8 %v4699
    %v5032 = vunpack.c.3.s8 %v4700
    %v5033 = vunpack.c.0.s8 %v4701
    %v5034 = vunpack.c.0.s8 %v4702
    %v5035 = vunpack.c.0.s8 %v4703
    %v5036 = vunpack.c.0.s8 %v4704
    %v5037 = vunpack.c.1.s8 %v4701
    %v5038 = vunpack.c.1.s8 %v4702
    %v5039 = vunpack.c.1.s8 %v4703
    %v5040 = vunpack.c.1.s8 %v4704
    %v5041 = vunpack.c.2.s8 %v4701
    %v5042 = vunpack.c.2.s8 %v4702
    %v5043 = vunpack.c.2.s8 %v4703
    %v5044 = vunpack.c.2.s8 %v4704
    %v5045 = vunpack.c.3.s8 %v4701
    %v5046 = vunpack.c.3.s8 %v4702
    %v5047 = vunpack.c.3.s8 %v4703
    %v5048 = vunpack.c.3.s8 %v4704
    %v5049 = vunpack.c.0.s8 %v4705
    %v5050 = vunpack.c.0.s8 %v4706
    %v5051 = vunpack.c.0.s8 %v4707
    %v5052 = vunpack.c.0.s8 %v4708
    %v5053 = vunpack.c.1.s8 %v4705
    %v5054 = vunpack.c.1.s8 %v4706
    %v5055 = vunpack.c.1.s8 %v4707
    %v5056 = vunpack.c.1.s8 %v4708
    %v5057 = vunpack.c.2.s8 %v4705
    %v5058 = vunpack.c.2.s8 %v4706
    %v5059 = vunpack.c.2.s8 %v4707
    %v5060 = vunpack.c.2.s8 %v4708
    %v5061 = vunpack.c.3.s8 %v4705
    %v5062 = vunpack.c.3.s8 %v4706
    %v5063 = vunpack.c.3.s8 %v4707
    %v5064 = vunpack.c.3.s8 %v4708
    %v5065 = vunpack.c.0.s8 %v4709
    %v5066 = vunpack.c.0.s8 %v4710
    %v5067 = vunpack.c.0.s8 %v4711
    %v5068 = vunpack.c.0.s8 %v4712
    %v5069 = vunpack.c.1.s8 %v4709
    %v5070 = vunpack.c.1.s8 %v4710
    %v5071 = vunpack.c.1.s8 %v4711
    %v5072 = vunpack.c.1.s8 %v4712
    %v5073 = vunpack.c.2.s8 %v4709
    %v5074 = vunpack.c.2.s8 %v4710
    %v5075 = vunpack.c.2.s8 %v4711
    %v5076 = vunpack.c.2.s8 %v4712
    %v5077 = vunpack.c.3.s8 %v4709
    %v5078 = vunpack.c.3.s8 %v4710
    %v5079 = vunpack.c.3.s8 %v4711
    %v5080 = vunpack.c.3.s8 %v4712
    %v5081 = vunpack.c.0.s8 %v4713
    %v5082 = vunpack.c.0.s8 %v4714
    %v5083 = vunpack.c.0.s8 %v4715
    %v5084 = vunpack.c.0.s8 %v4716
    %v5085 = vunpack.c.1.s8 %v4713
    %v5086 = vunpack.c.1.s8 %v4714
    %v5087 = vunpack.c.1.s8 %v4715
    %v5088 = vunpack.c.1.s8 %v4716
    %v5089 = vunpack.c.2.s8 %v4713
    %v5090 = vunpack.c.2.s8 %v4714
    %v5091 = vunpack.c.2.s8 %v4715
    %v5092 = vunpack.c.2.s8 %v4716
    %v5093 = vunpack.c.3.s8 %v4713
    %v5094 = vunpack.c.3.s8 %v4714
    %v5095 = vunpack.c.3.s8 %v4715
    %v5096 = vunpack.c.3.s8 %v4716
    %v5097 = vunpack.c.0.s8 %v4717
    %v5098 = vunpack.c.0.s8 %v4718
    %v5099 = vunpack.c.0.s8 %v4719
    %v5100 = vunpack.c.0.s8 %v4720
    %v5101 = vunpack.c.1.s8 %v4717
    %v5102 = vunpack.c.1.s8 %v4718
    %v5103 = vunpack.c.1.s8 %v4719
    %v5104 = vunpack.c.1.s8 %v4720
    %v5105 = vunpack.c.2.s8 %v4717
    %v5106 = vunpack.c.2.s8 %v4718
    %v5107 = vunpack.c.2.s8 %v4719
    %v5108 = vunpack.c.2.s8 %v4720
    %v5109 = vunpack.c.3.s8 %v4717
    %v5110 = vunpack.c.3.s8 %v4718
    %v5111 = vunpack.c.3.s8 %v4719
    %v5112 = vunpack.c.3.s8 %v4720
    %v5113 = vunpack.c.0.s8 %v4721
    %v5114 = vunpack.c.0.s8 %v4722
    %v5115 = vunpack.c.0.s8 %v4723
    %v5116 = vunpack.c.0.s8 %v4724
    %v5117 = vunpack.c.1.s8 %v4721
    %v5118 = vunpack.c.1.s8 %v4722
    %v5119 = vunpack.c.1.s8 %v4723
    %v5120 = vunpack.c.1.s8 %v4724
    %v5121 = vunpack.c.2.s8 %v4721
    %v5122 = vunpack.c.2.s8 %v4722
    %v5123 = vunpack.c.2.s8 %v4723
    %v5124 = vunpack.c.2.s8 %v4724
    %v5125 = vunpack.c.3.s8 %v4721
    %v5126 = vunpack.c.3.s8 %v4722
    %v5127 = vunpack.c.3.s8 %v4723
    %v5128 = vunpack.c.3.s8 %v4724
    %v5129 = vunpack.c.0.s8 %v4725
    %v5130 = vunpack.c.0.s8 %v4726
    %v5131 = vunpack.c.0.s8 %v4727
    %v5132 = vunpack.c.0.s8 %v4728
    %v5133 = vunpack.c.1.s8 %v4725
    %v5134 = vunpack.c.1.s8 %v4726
    %v5135 = vunpack.c.1.s8 %v4727
    %v5136 = vunpack.c.1.s8 %v4728
    %v5137 = vunpack.c.2.s8 %v4725
    %v5138 = vunpack.c.2.s8 %v4726
    %v5139 = vunpack.c.2.s8 %v4727
    %v5140 = vunpack.c.2.s8 %v4728
    %v5141 = vunpack.c.3.s8 %v4725
    %v5142 = vunpack.c.3.s8 %v4726
    %v5143 = vunpack.c.3.s8 %v4727
    %v5144 = vunpack.c.3.s8 %v4728
    %v5145 = vunpack.c.0.s8 %v4729
    %v5146 = vunpack.c.0.s8 %v4730
    %v5147 = vunpack.c.0.s8 %v4731
    %v5148 = vunpack.c.0.s8 %v4732
    %v5149 = vunpack.c.1.s8 %v4729
    %v5150 = vunpack.c.1.s8 %v4730
    %v5151 = vunpack.c.1.s8 %v4731
    %v5152 = vunpack.c.1.s8 %v4732
    %v5153 = vunpack.c.2.s8 %v4729
    %v5154 = vunpack.c.2.s8 %v4730
    %v5155 = vunpack.c.2.s8 %v4731
    %v5156 = vunpack.c.2.s8 %v4732
    %v5157 = vunpack.c.3.s8 %v4729
    %v5158 = vunpack.c.3.s8 %v4730
    %v5159 = vunpack.c.3.s8 %v4731
    %v5160 = vunpack.c.3.s8 %v4732
    %v5161 = vunpack.c.0.s8 %v4733
    %v5162 = vunpack.c.0.s8 %v4734
    %v5163 = vunpack.c.0.s8 %v4735
    %v5164 = vunpack.c.0.s8 %v4736
    %v5165 = vunpack.c.1.s8 %v4733
    %v5166 = vunpack.c.1.s8 %v4734
    %v5167 = vunpack.c.1.s8 %v4735
    %v5168 = vunpack.c.1.s8 %v4736
    %v5169 = vunpack.c.2.s8 %v4733
    %v5170 = vunpack.c.2.s8 %v4734
    %v5171 = vunpack.c.2.s8 %v4735
    %v5172 = vunpack.c.2.s8 %v4736
    %v5173 = vunpack.c.3.s8 %v4733
    %v5174 = vunpack.c.3.s8 %v4734
    %v5175 = vunpack.c.3.s8 %v4735
    %v5176 = vunpack.c.3.s8 %v4736
    %v5177 = vunpack.c.0.s8 %v4737
    %v5178 = vunpack.c.0.s8 %v4738
    %v5179 = vunpack.c.0.s8 %v4739
    %v5180 = vunpack.c.0.s8 %v4740
    %v5181 = vunpack.c.1.s8 %v4737
    %v5182 = vunpack.c.1.s8 %v4738
    %v5183 = vunpack.c.1.s8 %v4739
    %v5184 = vunpack.c.1.s8 %v4740
    %v5185 = vunpack.c.2.s8 %v4737
    %v5186 = vunpack.c.2.s8 %v4738
    %v5187 = vunpack.c.2.s8 %v4739
    %v5188 = vunpack.c.2.s8 %v4740
    %v5189 = vunpack.c.3.s8 %v4737
    %v5190 = vunpack.c.3.s8 %v4738
    %v5191 = vunpack.c.3.s8 %v4739
    %v5192 = vunpack.c.3.s8 %v4740
    %v5193 = vunpack.c.0.s8 %v4741
    %v5194 = vunpack.c.0.s8 %v4742
    %v5195 = vunpack.c.0.s8 %v4743
    %v5196 = vunpack.c.0.s8 %v4744
    %v5197 = vunpack.c.1.s8 %v4741
    %v5198 = vunpack.c.1.s8 %v4742
    %v5199 = vunpack.c.1.s8 %v4743
    %v5200 = vunpack.c.1.s8 %v4744
    %v5201 = vunpack.c.2.s8 %v4741
    %v5202 = vunpack.c.2.s8 %v4742
    %v5203 = vunpack.c.2.s8 %v4743
    %v5204 = vunpack.c.2.s8 %v4744
    %v5205 = vunpack.c.3.s8 %v4741
    %v5206 = vunpack.c.3.s8 %v4742
    %v5207 = vunpack.c.3.s8 %v4743
    %v5208 = vunpack.c.3.s8 %v4744
    %v5209 = vunpack.c.0.s8 %v4745
    %v5210 = vunpack.c.0.s8 %v4746
    %v5211 = vunpack.c.0.s8 %v4747
    %v5212 = vunpack.c.0.s8 %v4748
    %v5213 = vunpack.c.1.s8 %v4745
    %v5214 = vunpack.c.1.s8 %v4746
    %v5215 = vunpack.c.1.s8 %v4747
    %v5216 = vunpack.c.1.s8 %v4748
    %v5217 = vunpack.c.2.s8 %v4745
    %v5218 = vunpack.c.2.s8 %v4746
    %v5219 = vunpack.c.2.s8 %v4747
    %v5220 = vunpack.c.2.s8 %v4748
    %v5221 = vunpack.c.3.s8 %v4745
    %v5222 = vunpack.c.3.s8 %v4746
    %v5223 = vunpack.c.3.s8 %v4747
    %v5224 = vunpack.c.3.s8 %v4748
    %v5225 = vunpack.c.0.s8 %v4749
    %v5226 = vunpack.c.0.s8 %v4750
    %v5227 = vunpack.c.0.s8 %v4751
    %v5228 = vunpack.c.0.s8 %v4752
    %v5229 = vunpack.c.1.s8 %v4749
    %v5230 = vunpack.c.1.s8 %v4750
    %v5231 = vunpack.c.1.s8 %v4751
    %v5232 = vunpack.c.1.s8 %v4752
    %v5233 = vunpack.c.2.s8 %v4749
    %v5234 = vunpack.c.2.s8 %v4750
    %v5235 = vunpack.c.2.s8 %v4751
    %v5236 = vunpack.c.2.s8 %v4752
    %v5237 = vunpack.c.3.s8 %v4749
    %v5238 = vunpack.c.3.s8 %v4750
    %v5239 = vunpack.c.3.s8 %v4751
    %v5240 = vunpack.c.3.s8 %v4752
    %v5241 = vunpack.c.0.s8 %v4753
    %v5242 = vunpack.c.0.s8 %v4754
    %v5243 = vunpack.c.0.s8 %v4755
    %v5244 = vunpack.c.0.s8 %v4756
    %v5245 = vunpack.c.1.s8 %v4753
    %v5246 = vunpack.c.1.s8 %v4754
    %v5247 = vunpack.c.1.s8 %v4755
    %v5248 = vunpack.c.1.s8 %v4756
    %v5249 = vunpack.c.2.s8 %v4753
    %v5250 = vunpack.c.2.s8 %v4754
    %v5251 = vunpack.c.2.s8 %v4755
    %v5252 = vunpack.c.2.s8 %v4756
    %v5253 = vunpack.c.3.s8 %v4753
    %v5254 = vunpack.c.3.s8 %v4754
    %v5255 = vunpack.c.3.s8 %v4755
    %v5256 = vunpack.c.3.s8 %v4756
    %v5257 = vunpack.c.0.s8 %v4757
    %v5258 = vunpack.c.0.s8 %v4758
    %v5259 = vunpack.c.0.s8 %v4759
    %v5260 = vunpack.c.0.s8 %v4760
    %v5261 = vunpack.c.1.s8 %v4757
    %v5262 = vunpack.c.1.s8 %v4758
    %v5263 = vunpack.c.1.s8 %v4759
    %v5264 = vunpack.c.1.s8 %v4760
    %v5265 = vunpack.c.2.s8 %v4757
    %v5266 = vunpack.c.2.s8 %v4758
    %v5267 = vunpack.c.2.s8 %v4759
    %v5268 = vunpack.c.2.s8 %v4760
    %v5269 = vunpack.c.3.s8 %v4757
    %v5270 = vunpack.c.3.s8 %v4758
    %v5271 = vunpack.c.3.s8 %v4759
    %v5272 = vunpack.c.3.s8 %v4760
    %v5273 = vcvt.s32.f32 %v4761
    %v5274 = vcvt.s32.f32 %v4762
    %v5275 = vcvt.s32.f32 %v4763
    %v5276 = vcvt.s32.f32 %v4764
    %v5277 = vcvt.s32.f32 %v4765
    %v5278 = vcvt.s32.f32 %v4766
    %v5279 = vcvt.s32.f32 %v4767
    %v5280 = vcvt.s32.f32 %v4768
    %v5281 = vcvt.s32.f32 %v4769
    %v5282 = vcvt.s32.f32 %v4770
    %v5283 = vcvt.s32.f32 %v4771
    %v5284 = vcvt.s32.f32 %v4772
    %v5285 = vcvt.s32.f32 %v4773
    %v5286 = vcvt.s32.f32 %v4774
    %v5287 = vcvt.s32.f32 %v4775
    %v5288 = vcvt.s32.f32 %v4776
    %v5289 = vcvt.s32.f32 %v4777
    %v5290 = vcvt.s32.f32 %v4778
    %v5291 = vcvt.s32.f32 %v4779
    %v5292 = vcvt.s32.f32 %v4780
    %v5293 = vcvt.s32.f32 %v4781
    %v5294 = vcvt.s32.f32 %v4782
    %v5295 = vcvt.s32.f32 %v4783
    %v5296 = vcvt.s32.f32 %v4784
    %v5297 = vcvt.s32.f32 %v4785
    %v5298 = vcvt.s32.f32 %v4786
    %v5299 = vcvt.s32.f32 %v4787
    %v5300 = vcvt.s32.f32 %v4788
    %v5301 = vcvt.s32.f32 %v4789
    %v5302 = vcvt.s32.f32 %v4790
    %v5303 = vcvt.s32.f32 %v4791
    %v5304 = vcvt.s32.f32 %v4792
    %v5305 = vcvt.s32.f32 %v4793
    %v5306 = vcvt.s32.f32 %v4794
    %v5307 = vcvt.s32.f32 %v4795
    %v5308 = vcvt.s32.f32 %v4796
    %v5309 = vcvt.s32.f32 %v4797
    %v5310 = vcvt.s32.f32 %v4798
    %v5311 = vcvt.s32.f32 %v4799
    %v5312 = vcvt.s32.f32 %v4800
    %v5313 = vcvt.s32.f32 %v4801
    %v5314 = vcvt.s32.f32 %v4802
    %v5315 = vcvt.s32.f32 %v4803
    %v5316 = vcvt.s32.f32 %v4804
    %v5317 = vcvt.s32.f32 %v4805
    %v5318 = vcvt.s32.f32 %v4806
    %v5319 = vcvt.s32.f32 %v4807
    %v5320 = vcvt.s32.f32 %v4808
    %v5321 = vcvt.s32.f32 %v4809
    %v5322 = vcvt.s32.f32 %v4810
    %v5323 = vcvt.s32.f32 %v4811
    %v5324 = vcvt.s32.f32 %v4812
    %v5325 = vcvt.s32.f32 %v4813
    %v5326 = vcvt.s32.f32 %v4814
    %v5327 = vcvt.s32.f32 %v4815
    %v5328 = vcvt.s32.f32 %v4816
    %v5329 = vcvt.s32.f32 %v4817
    %v5330 = vcvt.s32.f32 %v4818
    %v5331 = vcvt.s32.f32 %v4819
    %v5332 = vcvt.s32.f32 %v4820
    %v5333 = vcvt.s32.f32 %v4821
    %v5334 = vcvt.s32.f32 %v4822
    %v5335 = vcvt.s32.f32 %v4823
    %v5336 = vcvt.s32.f32 %v4824
    %v5337 = vcvt.s32.f32 %v4825
    %v5338 = vcvt.s32.f32 %v4826
    %v5339 = vcvt.s32.f32 %v4827
    %v5340 = vcvt.s32.f32 %v4828
    %v5341 = vcvt.s32.f32 %v4829
    %v5342 = vcvt.s32.f32 %v4830
    %v5343 = vcvt.s32.f32 %v4831
    %v5344 = vcvt.s32.f32 %v4832
    %v5345 = vcvt.s32.f32 %v4833
    %v5346 = vcvt.s32.f32 %v4834
    %v5347 = vcvt.s32.f32 %v4835
    %v5348 = vcvt.s32.f32 %v4836
    %v5349 = vcvt.s32.f32 %v4837
    %v5350 = vcvt.s32.f32 %v4838
    %v5351 = vcvt.s32.f32 %v4839
    %v5352 = vcvt.s32.f32 %v4840
    %v5353 = vcvt.s32.f32 %v4841
    %v5354 = vcvt.s32.f32 %v4842
    %v5355 = vcvt.s32.f32 %v4843
    %v5356 = vcvt.s32.f32 %v4844
    %v5357 = vcvt.s32.f32 %v4845
    %v5358 = vcvt.s32.f32 %v4846
    %v5359 = vcvt.s32.f32 %v4847
    %v5360 = vcvt.s32.f32 %v4848
    %v5361 = vcvt.s32.f32 %v4849
    %v5362 = vcvt.s32.f32 %v4850
    %v5363 = vcvt.s32.f32 %v4851
    %v5364 = vcvt.s32.f32 %v4852
    %v5365 = vcvt.s32.f32 %v4853
    %v5366 = vcvt.s32.f32 %v4854
    %v5367 = vcvt.s32.f32 %v4855
    %v5368 = vcvt.s32.f32 %v4856
    %v5369 = vcvt.s32.f32 %v4857
    %v5370 = vcvt.s32.f32 %v4858
    %v5371 = vcvt.s32.f32 %v4859
    %v5372 = vcvt.s32.f32 %v4860
    %v5373 = vcvt.s32.f32 %v4861
    %v5374 = vcvt.s32.f32 %v4862
    %v5375 = vcvt.s32.f32 %v4863
    %v5376 = vcvt.s32.f32 %v4864
    %v5377 = vcvt.s32.f32 %v4865
    %v5378 = vcvt.s32.f32 %v4866
    %v5379 = vcvt.s32.f32 %v4867
    %v5380 = vcvt.s32.f32 %v4868
    %v5381 = vcvt.s32.f32 %v4869
    %v5382 = vcvt.s32.f32 %v4870
    %v5383 = vcvt.s32.f32 %v4871
    %v5384 = vcvt.s32.f32 %v4872
    %v5385 = vcvt.s32.f32 %v4873
    %v5386 = vcvt.s32.f32 %v4874
    %v5387 = vcvt.s32.f32 %v4875
    %v5388 = vcvt.s32.f32 %v4876
    %v5389 = vcvt.s32.f32 %v4877
    %v5390 = vcvt.s32.f32 %v4878
    %v5391 = vcvt.s32.f32 %v4879
    %v5392 = vcvt.s32.f32 %v4880
    %v5393 = vcvt.s32.f32 %v4881
    %v5394 = vcvt.s32.f32 %v4882
    %v5395 = vcvt.s32.f32 %v4883
    %v5396 = vcvt.s32.f32 %v4884
    %v5397 = vcvt.s32.f32 %v4885
    %v5398 = vcvt.s32.f32 %v4886
    %v5399 = vcvt.s32.f32 %v4887
    %v5400 = vcvt.s32.f32 %v4888
    %v5401 = vcvt.s32.f32 %v4889
    %v5402 = vcvt.s32.f32 %v4890
    %v5403 = vcvt.s32.f32 %v4891
    %v5404 = vcvt.s32.f32 %v4892
    %v5405 = vcvt.s32.f32 %v4893
    %v5406 = vcvt.s32.f32 %v4894
    %v5407 = vcvt.s32.f32 %v4895
    %v5408 = vcvt.s32.f32 %v4896
    %v5409 = vcvt.s32.f32 %v4897
    %v5410 = vcvt.s32.f32 %v4898
    %v5411 = vcvt.s32.f32 %v4899
    %v5412 = vcvt.s32.f32 %v4900
    %v5413 = vcvt.s32.f32 %v4901
    %v5414 = vcvt.s32.f32 %v4902
    %v5415 = vcvt.s32.f32 %v4903
    %v5416 = vcvt.s32.f32 %v4904
    %v5417 = vcvt.s32.f32 %v4905
    %v5418 = vcvt.s32.f32 %v4906
    %v5419 = vcvt.s32.f32 %v4907
    %v5420 = vcvt.s32.f32 %v4908
    %v5421 = vcvt.s32.f32 %v4909
    %v5422 = vcvt.s32.f32 %v4910
    %v5423 = vcvt.s32.f32 %v4911
    %v5424 = vcvt.s32.f32 %v4912
    %v5425 = vcvt.s32.f32 %v4913
    %v5426 = vcvt.s32.f32 %v4914
    %v5427 = vcvt.s32.f32 %v4915
    %v5428 = vcvt.s32.f32 %v4916
    %v5429 = vcvt.s32.f32 %v4917
    %v5430 = vcvt.s32.f32 %v4918
    %v5431 = vcvt.s32.f32 %v4919
    %v5432 = vcvt.s32.f32 %v4920
    %v5433 = vcvt.s32.f32 %v4921
    %v5434 = vcvt.s32.f32 %v4922
    %v5435 = vcvt.s32.f32 %v4923
    %v5436 = vcvt.s32.f32 %v4924
    %v5437 = vcvt.s32.f32 %v4925
    %v5438 = vcvt.s32.f32 %v4926
    %v5439 = vcvt.s32.f32 %v4927
    %v5440 = vcvt.s32.f32 %v4928
    %v5441 = vcvt.s32.f32 %v4929
    %v5442 = vcvt.s32.f32 %v4930
    %v5443 = vcvt.s32.f32 %v4931
    %v5444 = vcvt.s32.f32 %v4932
    %v5445 = vcvt.s32.f32 %v4933
    %v5446 = vcvt.s32.f32 %v4934
    %v5447 = vcvt.s32.f32 %v4935
    %v5448 = vcvt.s32.f32 %v4936
    %v5449 = vcvt.s32.f32 %v4937
    %v5450 = vcvt.s32.f32 %v4938
    %v5451 = vcvt.s32.f32 %v4939
    %v5452 = vcvt.s32.f32 %v4940
    %v5453 = vcvt.s32.f32 %v4941
    %v5454 = vcvt.s32.f32 %v4942
    %v5455 = vcvt.s32.f32 %v4943
    %v5456 = vcvt.s32.f32 %v4944
    %v5457 = vcvt.s32.f32 %v4945
    %v5458 = vcvt.s32.f32 %v4946
    %v5459 = vcvt.s32.f32 %v4947
    %v5460 = vcvt.s32.f32 %v4948
    %v5461 = vcvt.s32.f32 %v4949
    %v5462 = vcvt.s32.f32 %v4950
    %v5463 = vcvt.s32.f32 %v4951
    %v5464 = vcvt.s32.f32 %v4952
    %v5465 = vcvt.s32.f32 %v4953
    %v5466 = vcvt.s32.f32 %v4954
    %v5467 = vcvt.s32.f32 %v4955
    %v5468 = vcvt.s32.f32 %v4956
    %v5469 = vcvt.s32.f32 %v4957
    %v5470 = vcvt.s32.f32 %v4958
    %v5471 = vcvt.s32.f32 %v4959
    %v5472 = vcvt.s32.f32 %v4960
    %v5473 = vcvt.s32.f32 %v4961
    %v5474 = vcvt.s32.f32 %v4962
    %v5475 = vcvt.s32.f32 %v4963
    %v5476 = vcvt.s32.f32 %v4964
    %v5477 = vcvt.s32.f32 %v4965
    %v5478 = vcvt.s32.f32 %v4966
    %v5479 = vcvt.s32.f32 %v4967
    %v5480 = vcvt.s32.f32 %v4968
    %v5481 = vcvt.s32.f32 %v4969
    %v5482 = vcvt.s32.f32 %v4970
    %v5483 = vcvt.s32.f32 %v4971
    %v5484 = vcvt.s32.f32 %v4972
    %v5485 = vcvt.s32.f32 %v4973
    %v5486 = vcvt.s32.f32 %v4974
    %v5487 = vcvt.s32.f32 %v4975
    %v5488 = vcvt.s32.f32 %v4976
    %v5489 = vcvt.s32.f32 %v4977
    %v5490 = vcvt.s32.f32 %v4978
    %v5491 = vcvt.s32.f32 %v4979
    %v5492 = vcvt.s32.f32 %v4980
    %v5493 = vcvt.s32.f32 %v4981
    %v5494 = vcvt.s32.f32 %v4982
    %v5495 = vcvt.s32.f32 %v4983
    %v5496 = vcvt.s32.f32 %v4984
    %v5497 = vcvt.s32.f32 %v4985
    %v5498 = vcvt.s32.f32 %v4986
    %v5499 = vcvt.s32.f32 %v4987
    %v5500 = vcvt.s32.f32 %v4988
    %v5501 = vcvt.s32.f32 %v4989
    %v5502 = vcvt.s32.f32 %v4990
    %v5503 = vcvt.s32.f32 %v4991
    %v5504 = vcvt.s32.f32 %v4992
    %v5505 = vcvt.s32.f32 %v4993
    %v5506 = vcvt.s32.f32 %v4994
    %v5507 = vcvt.s32.f32 %v4995
    %v5508 = vcvt.s32.f32 %v4996
    %v5509 = vcvt.s32.f32 %v4997
    %v5510 = vcvt.s32.f32 %v4998
    %v5511 = vcvt.s32.f32 %v4999
    %v5512 = vcvt.s32.f32 %v5000
    %v5513 = vcvt.s32.f32 %v5001
    %v5514 = vcvt.s32.f32 %v5002
    %v5515 = vcvt.s32.f32 %v5003
    %v5516 = vcvt.s32.f32 %v5004
    %v5517 = vcvt.s32.f32 %v5005
    %v5518 = vcvt.s32.f32 %v5006
    %v5519 = vcvt.s32.f32 %v5007
    %v5520 = vcvt.s32.f32 %v5008
    %v5521 = vcvt.s32.f32 %v5009
    %v5522 = vcvt.s32.f32 %v5010
    %v5523 = vcvt.s32.f32 %v5011
    %v5524 = vcvt.s32.f32 %v5012
    %v5525 = vcvt.s32.f32 %v5013
    %v5526 = vcvt.s32.f32 %v5014
    %v5527 = vcvt.s32.f32 %v5015
    %v5528 = vcvt.s32.f32 %v5016
    %v5529 = vcvt.s32.f32 %v5017
    %v5530 = vcvt.s32.f32 %v5018
    %v5531 = vcvt.s32.f32 %v5019
    %v5532 = vcvt.s32.f32 %v5020
    %v5533 = vcvt.s32.f32 %v5021
    %v5534 = vcvt.s32.f32 %v5022
    %v5535 = vcvt.s32.f32 %v5023
    %v5536 = vcvt.s32.f32 %v5024
    %v5537 = vcvt.s32.f32 %v5025
    %v5538 = vcvt.s32.f32 %v5026
    %v5539 = vcvt.s32.f32 %v5027
    %v5540 = vcvt.s32.f32 %v5028
    %v5541 = vcvt.s32.f32 %v5029
    %v5542 = vcvt.s32.f32 %v5030
    %v5543 = vcvt.s32.f32 %v5031
    %v5544 = vcvt.s32.f32 %v5032
    %v5545 = vcvt.s32.f32 %v5033
    %v5546 = vcvt.s32.f32 %v5034
    %v5547 = vcvt.s32.f32 %v5035
    %v5548 = vcvt.s32.f32 %v5036
    %v5549 = vcvt.s32.f32 %v5037
    %v5550 = vcvt.s32.f32 %v5038
    %v5551 = vcvt.s32.f32 %v5039
    %v5552 = vcvt.s32.f32 %v5040
    %v5553 = vcvt.s32.f32 %v5041
    %v5554 = vcvt.s32.f32 %v5042
    %v5555 = vcvt.s32.f32 %v5043
    %v5556 = vcvt.s32.f32 %v5044
    %v5557 = vcvt.s32.f32 %v5045
    %v5558 = vcvt.s32.f32 %v5046
    %v5559 = vcvt.s32.f32 %v5047
    %v5560 = vcvt.s32.f32 %v5048
    %v5561 = vcvt.s32.f32 %v5049
    %v5562 = vcvt.s32.f32 %v5050
    %v5563 = vcvt.s32.f32 %v5051
    %v5564 = vcvt.s32.f32 %v5052
    %v5565 = vcvt.s32.f32 %v5053
    %v5566 = vcvt.s32.f32 %v5054
    %v5567 = vcvt.s32.f32 %v5055
    %v5568 = vcvt.s32.f32 %v5056
    %v5569 = vcvt.s32.f32 %v5057
    %v5570 = vcvt.s32.f32 %v5058
    %v5571 = vcvt.s32.f32 %v5059
    %v5572 = vcvt.s32.f32 %v5060
    %v5573 = vcvt.s32.f32 %v5061
    %v5574 = vcvt.s32.f32 %v5062
    %v5575 = vcvt.s32.f32 %v5063
    %v5576 = vcvt.s32.f32 %v5064
    %v5577 = vcvt.s32.f32 %v5065
    %v5578 = vcvt.s32.f32 %v5066
    %v5579 = vcvt.s32.f32 %v5067
    %v5580 = vcvt.s32.f32 %v5068
    %v5581 = vcvt.s32.f32 %v5069
    %v5582 = vcvt.s32.f32 %v5070
    %v5583 = vcvt.s32.f32 %v5071
    %v5584 = vcvt.s32.f32 %v5072
    %v5585 = vcvt.s32.f32 %v5073
    %v5586 = vcvt.s32.f32 %v5074
    %v5587 = vcvt.s32.f32 %v5075
    %v5588 = vcvt.s32.f32 %v5076
    %v5589 = vcvt.s32.f32 %v5077
    %v5590 = vcvt.s32.f32 %v5078
    %v5591 = vcvt.s32.f32 %v5079
    %v5592 = vcvt.s32.f32 %v5080
    %v5593 = vcvt.s32.f32 %v5081
    %v5594 = vcvt.s32.f32 %v5082
    %v5595 = vcvt.s32.f32 %v5083
    %v5596 = vcvt.s32.f32 %v5084
    %v5597 = vcvt.s32.f32 %v5085
    %v5598 = vcvt.s32.f32 %v5086
    %v5599 = vcvt.s32.f32 %v5087
    %v5600 = vcvt.s32.f32 %v5088
    %v5601 = vcvt.s32.f32 %v5089
    %v5602 = vcvt.s32.f32 %v5090
    %v5603 = vcvt.s32.f32 %v5091
    %v5604 = vcvt.s32.f32 %v5092
    %v5605 = vcvt.s32.f32 %v5093
    %v5606 = vcvt.s32.f32 %v5094
    %v5607 = vcvt.s32.f32 %v5095
    %v5608 = vcvt.s32.f32 %v5096
    %v5609 = vcvt.s32.f32 %v5097
    %v5610 = vcvt.s32.f32 %v5098
    %v5611 = vcvt.s32.f32 %v5099
    %v5612 = vcvt.s32.f32 %v5100
    %v5613 = vcvt.s32.f32 %v5101
    %v5614 = vcvt.s32.f32 %v5102
    %v5615 = vcvt.s32.f32 %v5103
    %v5616 = vcvt.s32.f32 %v5104
    %v5617 = vcvt.s32.f32 %v5105
    %v5618 = vcvt.s32.f32 %v5106
    %v5619 = vcvt.s32.f32 %v5107
    %v5620 = vcvt.s32.f32 %v5108
    %v5621 = vcvt.s32.f32 %v5109
    %v5622 = vcvt.s32.f32 %v5110
    %v5623 = vcvt.s32.f32 %v5111
    %v5624 = vcvt.s32.f32 %v5112
    %v5625 = vcvt.s32.f32 %v5113
    %v5626 = vcvt.s32.f32 %v5114
    %v5627 = vcvt.s32.f32 %v5115
    %v5628 = vcvt.s32.f32 %v5116
    %v5629 = vcvt.s32.f32 %v5117
    %v5630 = vcvt.s32.f32 %v5118
    %v5631 = vcvt.s32.f32 %v5119
    %v5632 = vcvt.s32.f32 %v5120
    %v5633 = vcvt.s32.f32 %v5121
    %v5634 = vcvt.s32.f32 %v5122
    %v5635 = vcvt.s32.f32 %v5123
    %v5636 = vcvt.s32.f32 %v5124
    %v5637 = vcvt.s32.f32 %v5125
    %v5638 = vcvt.s32.f32 %v5126
    %v5639 = vcvt.s32.f32 %v5127
    %v5640 = vcvt.s32.f32 %v5128
    %v5641 = vcvt.s32.f32 %v5129
    %v5642 = vcvt.s32.f32 %v5130
    %v5643 = vcvt.s32.f32 %v5131
    %v5644 = vcvt.s32.f32 %v5132
    %v5645 = vcvt.s32.f32 %v5133
    %v5646 = vcvt.s32.f32 %v5134
    %v5647 = vcvt.s32.f32 %v5135
    %v5648 = vcvt.s32.f32 %v5136
    %v5649 = vcvt.s32.f32 %v5137
    %v5650 = vcvt.s32.f32 %v5138
    %v5651 = vcvt.s32.f32 %v5139
    %v5652 = vcvt.s32.f32 %v5140
    %v5653 = vcvt.s32.f32 %v5141
    %v5654 = vcvt.s32.f32 %v5142
    %v5655 = vcvt.s32.f32 %v5143
    %v5656 = vcvt.s32.f32 %v5144
    %v5657 = vcvt.s32.f32 %v5145
    %v5658 = vcvt.s32.f32 %v5146
    %v5659 = vcvt.s32.f32 %v5147
    %v5660 = vcvt.s32.f32 %v5148
    %v5661 = vcvt.s32.f32 %v5149
    %v5662 = vcvt.s32.f32 %v5150
    %v5663 = vcvt.s32.f32 %v5151
    %v5664 = vcvt.s32.f32 %v5152
    %v5665 = vcvt.s32.f32 %v5153
    %v5666 = vcvt.s32.f32 %v5154
    %v5667 = vcvt.s32.f32 %v5155
    %v5668 = vcvt.s32.f32 %v5156
    %v5669 = vcvt.s32.f32 %v5157
    %v5670 = vcvt.s32.f32 %v5158
    %v5671 = vcvt.s32.f32 %v5159
    %v5672 = vcvt.s32.f32 %v5160
    %v5673 = vcvt.s32.f32 %v5161
    %v5674 = vcvt.s32.f32 %v5162
    %v5675 = vcvt.s32.f32 %v5163
    %v5676 = vcvt.s32.f32 %v5164
    %v5677 = vcvt.s32.f32 %v5165
    %v5678 = vcvt.s32.f32 %v5166
    %v5679 = vcvt.s32.f32 %v5167
    %v5680 = vcvt.s32.f32 %v5168
    %v5681 = vcvt.s32.f32 %v5169
    %v5682 = vcvt.s32.f32 %v5170
    %v5683 = vcvt.s32.f32 %v5171
    %v5684 = vcvt.s32.f32 %v5172
    %v5685 = vcvt.s32.f32 %v5173
    %v5686 = vcvt.s32.f32 %v5174
    %v5687 = vcvt.s32.f32 %v5175
    %v5688 = vcvt.s32.f32 %v5176
    %v5689 = vcvt.s32.f32 %v5177
    %v5690 = vcvt.s32.f32 %v5178
    %v5691 = vcvt.s32.f32 %v5179
    %v5692 = vcvt.s32.f32 %v5180
    %v5693 = vcvt.s32.f32 %v5181
    %v5694 = vcvt.s32.f32 %v5182
    %v5695 = vcvt.s32.f32 %v5183
    %v5696 = vcvt.s32.f32 %v5184
    %v5697 = vcvt.s32.f32 %v5185
    %v5698 = vcvt.s32.f32 %v5186
    %v5699 = vcvt.s32.f32 %v5187
    %v5700 = vcvt.s32.f32 %v5188
    %v5701 = vcvt.s32.f32 %v5189
    %v5702 = vcvt.s32.f32 %v5190
    %v5703 = vcvt.s32.f32 %v5191
    %v5704 = vcvt.s32.f32 %v5192
    %v5705 = vcvt.s32.f32 %v5193
    %v5706 = vcvt.s32.f32 %v5194
    %v5707 = vcvt.s32.f32 %v5195
    %v5708 = vcvt.s32.f32 %v5196
    %v5709 = vcvt.s32.f32 %v5197
    %v5710 = vcvt.s32.f32 %v5198
    %v5711 = vcvt.s32.f32 %v5199
    %v5712 = vcvt.s32.f32 %v5200
    %v5713 = vcvt.s32.f32 %v5201
    %v5714 = vcvt.s32.f32 %v5202
    %v5715 = vcvt.s32.f32 %v5203
    %v5716 = vcvt.s32.f32 %v5204
    %v5717 = vcvt.s32.f32 %v5205
    %v5718 = vcvt.s32.f32 %v5206
    %v5719 = vcvt.s32.f32 %v5207
    %v5720 = vcvt.s32.f32 %v5208
    %v5721 = vcvt.s32.f32 %v5209
    %v5722 = vcvt.s32.f32 %v5210
    %v5723 = vcvt.s32.f32 %v5211
    %v5724 = vcvt.s32.f32 %v5212
    %v5725 = vcvt.s32.f32 %v5213
    %v5726 = vcvt.s32.f32 %v5214
    %v5727 = vcvt.s32.f32 %v5215
    %v5728 = vcvt.s32.f32 %v5216
    %v5729 = vcvt.s32.f32 %v5217
    %v5730 = vcvt.s32.f32 %v5218
    %v5731 = vcvt.s32.f32 %v5219
    %v5732 = vcvt.s32.f32 %v5220
    %v5733 = vcvt.s32.f32 %v5221
    %v5734 = vcvt.s32.f32 %v5222
    %v5735 = vcvt.s32.f32 %v5223
    %v5736 = vcvt.s32.f32 %v5224
    %v5737 = vcvt.s32.f32 %v5225
    %v5738 = vcvt.s32.f32 %v5226
    %v5739 = vcvt.s32.f32 %v5227
    %v5740 = vcvt.s32.f32 %v5228
    %v5741 = vcvt.s32.f32 %v5229
    %v5742 = vcvt.s32.f32 %v5230
    %v5743 = vcvt.s32.f32 %v5231
    %v5744 = vcvt.s32.f32 %v5232
    %v5745 = vcvt.s32.f32 %v5233
    %v5746 = vcvt.s32.f32 %v5234
    %v5747 = vcvt.s32.f32 %v5235
    %v5748 = vcvt.s32.f32 %v5236
    %v5749 = vcvt.s32.f32 %v5237
    %v5750 = vcvt.s32.f32 %v5238
    %v5751 = vcvt.s32.f32 %v5239
    %v5752 = vcvt.s32.f32 %v5240
    %v5753 = vcvt.s32.f32 %v5241
    %v5754 = vcvt.s32.f32 %v5242
    %v5755 = vcvt.s32.f32 %v5243
    %v5756 = vcvt.s32.f32 %v5244
    %v5757 = vcvt.s32.f32 %v5245
    %v5758 = vcvt.s32.f32 %v5246
    %v5759 = vcvt.s32.f32 %v5247
    %v5760 = vcvt.s32.f32 %v5248
    %v5761 = vcvt.s32.f32 %v5249
    %v5762 = vcvt.s32.f32 %v5250
    %v5763 = vcvt.s32.f32 %v5251
    %v5764 = vcvt.s32.f32 %v5252
    %v5765 = vcvt.s32.f32 %v5253
    %v5766 = vcvt.s32.f32 %v5254
    %v5767 = vcvt.s32.f32 %v5255
    %v5768 = vcvt.s32.f32 %v5256
    %v5769 = vcvt.s32.f32 %v5257
    %v5770 = vcvt.s32.f32 %v5258
    %v5771 = vcvt.s32.f32 %v5259
    %v5772 = vcvt.s32.f32 %v5260
    %v5773 = vcvt.s32.f32 %v5261
    %v5774 = vcvt.s32.f32 %v5262
    %v5775 = vcvt.s32.f32 %v5263
    %v5776 = vcvt.s32.f32 %v5264
    %v5777 = vcvt.s32.f32 %v5265
    %v5778 = vcvt.s32.f32 %v5266
    %v5779 = vcvt.s32.f32 %v5267
    %v5780 = vcvt.s32.f32 %v5268
    %v5781 = vcvt.s32.f32 %v5269
    %v5782 = vcvt.s32.f32 %v5270
    %v5783 = vcvt.s32.f32 %v5271
    %v5784 = vcvt.s32.f32 %v5272
    %v5785 = vpack.c.bf16 %v5277, %v5273
    %v5786 = vpack.c.bf16 %v5278, %v5274
    %v5787 = vpack.c.bf16 %v5279, %v5275
    %v5788 = vpack.c.bf16 %v5280, %v5276
    %v5789 = vpack.c.bf16 %v5285, %v5281
    %v5790 = vpack.c.bf16 %v5286, %v5282
    %v5791 = vpack.c.bf16 %v5287, %v5283
    %v5792 = vpack.c.bf16 %v5288, %v5284
    %v5793 = vpack.c.bf16 %v5293, %v5289
    %v5794 = vpack.c.bf16 %v5294, %v5290
    %v5795 = vpack.c.bf16 %v5295, %v5291
    %v5796 = vpack.c.bf16 %v5296, %v5292
    %v5797 = vpack.c.bf16 %v5301, %v5297
    %v5798 = vpack.c.bf16 %v5302, %v5298
    %v5799 = vpack.c.bf16 %v5303, %v5299
    %v5800 = vpack.c.bf16 %v5304, %v5300
    %v5801 = vpack.c.bf16 %v5309, %v5305
    %v5802 = vpack.c.bf16 %v5310, %v5306
    %v5803 = vpack.c.bf16 %v5311, %v5307
    %v5804 = vpack.c.bf16 %v5312, %v5308
    %v5805 = vpack.c.bf16 %v5317, %v5313
    %v5806 = vpack.c.bf16 %v5318, %v5314
    %v5807 = vpack.c.bf16 %v5319, %v5315
    %v5808 = vpack.c.bf16 %v5320, %v5316
    %v5809 = vpack.c.bf16 %v5325, %v5321
    %v5810 = vpack.c.bf16 %v5326, %v5322
    %v5811 = vpack.c.bf16 %v5327, %v5323
    %v5812 = vpack.c.bf16 %v5328, %v5324
    %v5813 = vpack.c.bf16 %v5333, %v5329
    %v5814 = vpack.c.bf16 %v5334, %v5330
    %v5815 = vpack.c.bf16 %v5335, %v5331
    %v5816 = vpack.c.bf16 %v5336, %v5332
    %v5817 = vpack.c.bf16 %v5341, %v5337
    %v5818 = vpack.c.bf16 %v5342, %v5338
    %v5819 = vpack.c.bf16 %v5343, %v5339
    %v5820 = vpack.c.bf16 %v5344, %v5340
    %v5821 = vpack.c.bf16 %v5349, %v5345
    %v5822 = vpack.c.bf16 %v5350, %v5346
    %v5823 = vpack.c.bf16 %v5351, %v5347
    %v5824 = vpack.c.bf16 %v5352, %v5348
    %v5825 = vpack.c.bf16 %v5357, %v5353
    %v5826 = vpack.c.bf16 %v5358, %v5354
    %v5827 = vpack.c.bf16 %v5359, %v5355
    %v5828 = vpack.c.bf16 %v5360, %v5356
    %v5829 = vpack.c.bf16 %v5365, %v5361
    %v5830 = vpack.c.bf16 %v5366, %v5362
    %v5831 = vpack.c.bf16 %v5367, %v5363
    %v5832 = vpack.c.bf16 %v5368, %v5364
    %v5833 = vpack.c.bf16 %v5373, %v5369
    %v5834 = vpack.c.bf16 %v5374, %v5370
    %v5835 = vpack.c.bf16 %v5375, %v5371
    %v5836 = vpack.c.bf16 %v5376, %v5372
    %v5837 = vpack.c.bf16 %v5381, %v5377
    %v5838 = vpack.c.bf16 %v5382, %v5378
    %v5839 = vpack.c.bf16 %v5383, %v5379
    %v5840 = vpack.c.bf16 %v5384, %v5380
    %v5841 = vpack.c.bf16 %v5389, %v5385
    %v5842 = vpack.c.bf16 %v5390, %v5386
    %v5843 = vpack.c.bf16 %v5391, %v5387
    %v5844 = vpack.c.bf16 %v5392, %v5388
    %v5845 = vpack.c.bf16 %v5397, %v5393
    %v5846 = vpack.c.bf16 %v5398, %v5394
    %v5847 = vpack.c.bf16 %v5399, %v5395
    %v5848 = vpack.c.bf16 %v5400, %v5396
    %v5849 = vpack.c.bf16 %v5405, %v5401
    %v5850 = vpack.c.bf16 %v5406, %v5402
    %v5851 = vpack.c.bf16 %v5407, %v5403
    %v5852 = vpack.c.bf16 %v5408, %v5404
    %v5853 = vpack.c.bf16 %v5413, %v5409
    %v5854 = vpack.c.bf16 %v5414, %v5410
    %v5855 = vpack.c.bf16 %v5415, %v5411
    %v5856 = vpack.c.bf16 %v5416, %v5412
    %v5857 = vpack.c.bf16 %v5421, %v5417
    %v5858 = vpack.c.bf16 %v5422, %v5418
    %v5859 = vpack.c.bf16 %v5423, %v5419
    %v5860 = vpack.c.bf16 %v5424, %v5420
    %v5861 = vpack.c.bf16 %v5429, %v5425
    %v5862 = vpack.c.bf16 %v5430, %v5426
    %v5863 = vpack.c.bf16 %v5431, %v5427
    %v5864 = vpack.c.bf16 %v5432, %v5428
    %v5865 = vpack.c.bf16 %v5437, %v5433
    %v5866 = vpack.c.bf16 %v5438, %v5434
    %v5867 = vpack.c.bf16 %v5439, %v5435
    %v5868 = vpack.c.bf16 %v5440, %v5436
    %v5869 = vpack.c.bf16 %v5445, %v5441
    %v5870 = vpack.c.bf16 %v5446, %v5442
    %v5871 = vpack.c.bf16 %v5447, %v5443
    %v5872 = vpack.c.bf16 %v5448, %v5444
    %v5873 = vpack.c.bf16 %v5453, %v5449
    %v5874 = vpack.c.bf16 %v5454, %v5450
    %v5875 = vpack.c.bf16 %v5455, %v5451
    %v5876 = vpack.c.bf16 %v5456, %v5452
    %v5877 = vpack.c.bf16 %v5461, %v5457
    %v5878 = vpack.c.bf16 %v5462, %v5458
    %v5879 = vpack.c.bf16 %v5463, %v5459
    %v5880 = vpack.c.bf16 %v5464, %v5460
    %v5881 = vpack.c.bf16 %v5469, %v5465
    %v5882 = vpack.c.bf16 %v5470, %v5466
    %v5883 = vpack.c.bf16 %v5471, %v5467
    %v5884 = vpack.c.bf16 %v5472, %v5468
    %v5885 = vpack.c.bf16 %v5477, %v5473
    %v5886 = vpack.c.bf16 %v5478, %v5474
    %v5887 = vpack.c.bf16 %v5479, %v5475
    %v5888 = vpack.c.bf16 %v5480, %v5476
    %v5889 = vpack.c.bf16 %v5485, %v5481
    %v5890 = vpack.c.bf16 %v5486, %v5482
    %v5891 = vpack.c.bf16 %v5487, %v5483
    %v5892 = vpack.c.bf16 %v5488, %v5484
    %v5893 = vpack.c.bf16 %v5493, %v5489
    %v5894 = vpack.c.bf16 %v5494, %v5490
    %v5895 = vpack.c.bf16 %v5495, %v5491
    %v5896 = vpack.c.bf16 %v5496, %v5492
    %v5897 = vpack.c.bf16 %v5501, %v5497
    %v5898 = vpack.c.bf16 %v5502, %v5498
    %v5899 = vpack.c.bf16 %v5503, %v5499
    %v5900 = vpack.c.bf16 %v5504, %v5500
    %v5901 = vpack.c.bf16 %v5509, %v5505
    %v5902 = vpack.c.bf16 %v5510, %v5506
    %v5903 = vpack.c.bf16 %v5511, %v5507
    %v5904 = vpack.c.bf16 %v5512, %v5508
    %v5905 = vpack.c.bf16 %v5517, %v5513
    %v5906 = vpack.c.bf16 %v5518, %v5514
    %v5907 = vpack.c.bf16 %v5519, %v5515
    %v5908 = vpack.c.bf16 %v5520, %v5516
    %v5909 = vpack.c.bf16 %v5525, %v5521
    %v5910 = vpack.c.bf16 %v5526, %v5522
    %v5911 = vpack.c.bf16 %v5527, %v5523
    %v5912 = vpack.c.bf16 %v5528, %v5524
    %v5913 = vpack.c.bf16 %v5533, %v5529
    %v5914 = vpack.c.bf16 %v5534, %v5530
    %v5915 = vpack.c.bf16 %v5535, %v5531
    %v5916 = vpack.c.bf16 %v5536, %v5532
    %v5917 = vpack.c.bf16 %v5541, %v5537
    %v5918 = vpack.c.bf16 %v5542, %v5538
    %v5919 = vpack.c.bf16 %v5543, %v5539
    %v5920 = vpack.c.bf16 %v5544, %v5540
    %v5921 = vpack.c.bf16 %v5549, %v5545
    %v5922 = vpack.c.bf16 %v5550, %v5546
    %v5923 = vpack.c.bf16 %v5551, %v5547
    %v5924 = vpack.c.bf16 %v5552, %v5548
    %v5925 = vpack.c.bf16 %v5557, %v5553
    %v5926 = vpack.c.bf16 %v5558, %v5554
    %v5927 = vpack.c.bf16 %v5559, %v5555
    %v5928 = vpack.c.bf16 %v5560, %v5556
    %v5929 = vpack.c.bf16 %v5565, %v5561
    %v5930 = vpack.c.bf16 %v5566, %v5562
    %v5931 = vpack.c.bf16 %v5567, %v5563
    %v5932 = vpack.c.bf16 %v5568, %v5564
    %v5933 = vpack.c.bf16 %v5573, %v5569
    %v5934 = vpack.c.bf16 %v5574, %v5570
    %v5935 = vpack.c.bf16 %v5575, %v5571
    %v5936 = vpack.c.bf16 %v5576, %v5572
    %v5937 = vpack.c.bf16 %v5581, %v5577
    %v5938 = vpack.c.bf16 %v5582, %v5578
    %v5939 = vpack.c.bf16 %v5583, %v5579
    %v5940 = vpack.c.bf16 %v5584, %v5580
    %v5941 = vpack.c.bf16 %v5589, %v5585
    %v5942 = vpack.c.bf16 %v5590, %v5586
    %v5943 = vpack.c.bf16 %v5591, %v5587
    %v5944 = vpack.c.bf16 %v5592, %v5588
    %v5945 = vpack.c.bf16 %v5597, %v5593
    %v5946 = vpack.c.bf16 %v5598, %v5594
    %v5947 = vpack.c.bf16 %v5599, %v5595
    %v5948 = vpack.c.bf16 %v5600, %v5596
    %v5949 = vpack.c.bf16 %v5605, %v5601
    %v5950 = vpack.c.bf16 %v5606, %v5602
    %v5951 = vpack.c.bf16 %v5607, %v5603
    %v5952 = vpack.c.bf16 %v5608, %v5604
    %v5953 = vpack.c.bf16 %v5613, %v5609
    %v5954 = vpack.c.bf16 %v5614, %v5610
    %v5955 = vpack.c.bf16 %v5615, %v5611
    %v5956 = vpack.c.bf16 %v5616, %v5612
    %v5957 = vpack.c.bf16 %v5621, %v5617
    %v5958 = vpack.c.bf16 %v5622, %v5618
    %v5959 = vpack.c.bf16 %v5623, %v5619
    %v5960 = vpack.c.bf16 %v5624, %v5620
    %v5961 = vpack.c.bf16 %v5629, %v5625
    %v5962 = vpack.c.bf16 %v5630, %v5626
    %v5963 = vpack.c.bf16 %v5631, %v5627
    %v5964 = vpack.c.bf16 %v5632, %v5628
    %v5965 = vpack.c.bf16 %v5637, %v5633
    %v5966 = vpack.c.bf16 %v5638, %v5634
    %v5967 = vpack.c.bf16 %v5639, %v5635
    %v5968 = vpack.c.bf16 %v5640, %v5636
    %v5969 = vpack.c.bf16 %v5645, %v5641
    %v5970 = vpack.c.bf16 %v5646, %v5642
    %v5971 = vpack.c.bf16 %v5647, %v5643
    %v5972 = vpack.c.bf16 %v5648, %v5644
    %v5973 = vpack.c.bf16 %v5653, %v5649
    %v5974 = vpack.c.bf16 %v5654, %v5650
    %v5975 = vpack.c.bf16 %v5655, %v5651
    %v5976 = vpack.c.bf16 %v5656, %v5652
    %v5977 = vpack.c.bf16 %v5661, %v5657
    %v5978 = vpack.c.bf16 %v5662, %v5658
    %v5979 = vpack.c.bf16 %v5663, %v5659
    %v5980 = vpack.c.bf16 %v5664, %v5660
    %v5981 = vpack.c.bf16 %v5669, %v5665
    %v5982 = vpack.c.bf16 %v5670, %v5666
    %v5983 = vpack.c.bf16 %v5671, %v5667
    %v5984 = vpack.c.bf16 %v5672, %v5668
    %v5985 = vpack.c.bf16 %v5677, %v5673
    %v5986 = vpack.c.bf16 %v5678, %v5674
    %v5987 = vpack.c.bf16 %v5679, %v5675
    %v5988 = vpack.c.bf16 %v5680, %v5676
    %v5989 = vpack.c.bf16 %v5685, %v5681
    %v5990 = vpack.c.bf16 %v5686, %v5682
    %v5991 = vpack.c.bf16 %v5687, %v5683
    %v5992 = vpack.c.bf16 %v5688, %v5684
    %v5993 = vpack.c.bf16 %v5693, %v5689
    %v5994 = vpack.c.bf16 %v5694, %v5690
    %v5995 = vpack.c.bf16 %v5695, %v5691
    %v5996 = vpack.c.bf16 %v5696, %v5692
    %v5997 = vpack.c.bf16 %v5701, %v5697
    %v5998 = vpack.c.bf16 %v5702, %v5698
    %v5999 = vpack.c.bf16 %v5703, %v5699
    %v6000 = vpack.c.bf16 %v5704, %v5700
    %v6001 = vpack.c.bf16 %v5709, %v5705
    %v6002 = vpack.c.bf16 %v5710, %v5706
    %v6003 = vpack.c.bf16 %v5711, %v5707
    %v6004 = vpack.c.bf16 %v5712, %v5708
    %v6005 = vpack.c.bf16 %v5717, %v5713
    %v6006 = vpack.c.bf16 %v5718, %v5714
    %v6007 = vpack.c.bf16 %v5719, %v5715
    %v6008 = vpack.c.bf16 %v5720, %v5716
    %v6009 = vpack.c.bf16 %v5725, %v5721
    %v6010 = vpack.c.bf16 %v5726, %v5722
    %v6011 = vpack.c.bf16 %v5727, %v5723
    %v6012 = vpack.c.bf16 %v5728, %v5724
    %v6013 = vpack.c.bf16 %v5733, %v5729
    %v6014 = vpack.c.bf16 %v5734, %v5730
    %v6015 = vpack.c.bf16 %v5735, %v5731
    %v6016 = vpack.c.bf16 %v5736, %v5732
    %v6017 = vpack.c.bf16 %v5741, %v5737
    %v6018 = vpack.c.bf16 %v5742, %v5738
    %v6019 = vpack.c.bf16 %v5743, %v5739
    %v6020 = vpack.c.bf16 %v5744, %v5740
    %v6021 = vpack.c.bf16 %v5749, %v5745
    %v6022 = vpack.c.bf16 %v5750, %v5746
    %v6023 = vpack.c.bf16 %v5751, %v5747
    %v6024 = vpack.c.bf16 %v5752, %v5748
    %v6025 = vpack.c.bf16 %v5757, %v5753
    %v6026 = vpack.c.bf16 %v5758, %v5754
    %v6027 = vpack.c.bf16 %v5759, %v5755
    %v6028 = vpack.c.bf16 %v5760, %v5756
    %v6029 = vpack.c.bf16 %v5765, %v5761
    %v6030 = vpack.c.bf16 %v5766, %v5762
    %v6031 = vpack.c.bf16 %v5767, %v5763
    %v6032 = vpack.c.bf16 %v5768, %v5764
    %v6033 = vpack.c.bf16 %v5773, %v5769
    %v6034 = vpack.c.bf16 %v5774, %v5770
    %v6035 = vpack.c.bf16 %v5775, %v5771
    %v6036 = vpack.c.bf16 %v5776, %v5772
    %v6037 = vpack.c.bf16 %v5781, %v5777
    %v6038 = vpack.c.bf16 %v5782, %v5778
    %v6039 = vpack.c.bf16 %v5783, %v5779
    %v6040 = vpack.c.bf16 %v5784, %v5780
    %6041 = vmatpush.bf16.msra.mxu0 %v5813
    %6042 = vmatpush.bf16.msra.mxu0 %v5809
    %6043 = vmatpush.bf16.msra.mxu0 %v5805
    %6044 = vmatpush.bf16.msra.mxu0 %v5801
    %6045 = vmatpush.bf16.msra.mxu0 %v5797
    %6046 = vmatpush.bf16.msra.mxu0 %v5793
    %6047 = vmatpush.bf16.msra.mxu0 %v5789
    %6048 = vmatpush.bf16.msra.mxu0 %v5785
    %6049 = vmatmul.bf16.gmra.mxu0 %v2689
    %v6050 = vpop.f32.mrf.mxu0
    %v6051 = vadd.f32 0.0, %v6050
    %v6052 = vpop.f32.mrf.mxu0
    %6053 = vdwg.mxu0
    %6054 = vmatpush.bf16.msra.mxu0 %v5845
    %6055 = vmatpush.bf16.msra.mxu0 %v5841
    %6056 = vmatpush.bf16.msra.mxu0 %v5837
    %6057 = vmatpush.bf16.msra.mxu0 %v5833
    %6058 = vmatpush.bf16.msra.mxu0 %v5829
    %6059 = vmatpush.bf16.msra.mxu0 %v5825
    %6060 = vmatpush.bf16.msra.mxu0 %v5821
    %6061 = vmatpush.bf16.msra.mxu0 %v5817
    %6062 = vmatmul.bf16.gmra.mxu0 %v2690
    %v6063 = vpop.f32.mrf.mxu0
    %v6064 = vadd.f32 %v6051, %v6063
    %v6065 = vpop.f32.mrf.mxu0
    %6066 = vdwg.mxu0
    %6067 = vmatpush.bf16.msra.mxu0 %v5877
    %6068 = vmatpush.bf16.msra.mxu0 %v5873
    %6069 = vmatpush.bf16.msra.mxu0 %v5869
    %6070 = vmatpush.bf16.msra.mxu0 %v5865
    %6071 = vmatpush.bf16.msra.mxu0 %v5861
    %6072 = vmatpush.bf16.msra.mxu0 %v5857
    %6073 = vmatpush.bf16.msra.mxu0 %v5853
    %6074 = vmatpush.bf16.msra.mxu0 %v5849
    %6075 = vmatmul.bf16.gmra.mxu0 %v2691
    %v6076 = vpop.f32.mrf.mxu0
    %v6077 = vadd.f32 %v6064, %v6076
    %v6078 = vpop.f32.mrf.mxu0
    %6079 = vdwg.mxu0
    %6080 = vmatpush.bf16.msra.mxu0 %v5909
    %6081 = vmatpush.bf16.msra.mxu0 %v5905
    %6082 = vmatpush.bf16.msra.mxu0 %v5901
    %6083 = vmatpush.bf16.msra.mxu0 %v5897
    %6084 = vmatpush.bf16.msra.mxu0 %v5893
    %6085 = vmatpush.bf16.msra.mxu0 %v5889
    %6086 = vmatpush.bf16.msra.mxu0 %v5885
    %6087 = vmatpush.bf16.msra.mxu0 %v5881
    %6088 = vmatmul.bf16.gmra.mxu0 %v2692
    %v6089 = vpop.f32.mrf.mxu0
    %v6090 = vadd.f32 %v6077, %v6089
    %v6091 = vpop.f32.mrf.mxu0
    %6092 = vdwg.mxu0
    %6093 = vmatpush.bf16.msra.mxu0 %v5941
    %6094 = vmatpush.bf16.msra.mxu0 %v5937
    %6095 = vmatpush.bf16.msra.mxu0 %v5933
    %6096 = vmatpush.bf16.msra.mxu0 %v5929
    %6097 = vmatpush.bf16.msra.mxu0 %v5925
    %6098 = vmatpush.bf16.msra.mxu0 %v5921
    %6099 = vmatpush.bf16.msra.mxu0 %v5917
    %6100 = vmatpush.bf16.msra.mxu0 %v5913
    %6101 = vmatmul.bf16.gmra.mxu0 %v2693
    %v6102 = vpop.f32.mrf.mxu0
    %v6103 = vadd.f32 %v6090, %v6102
    %v6104 = vpop.f32.mrf.mxu0
    %6105 = vdwg.mxu0
    %6106 = vmatpush.bf16.msra.mxu0 %v5973
    %6107 = vmatpush.bf16.msra.mxu0 %v5969
    %6108 = vmatpush.bf16.msra.mxu0 %v5965
    %6109 = vmatpush.bf16.msra.mxu0 %v5961
    %6110 = vmatpush.bf16.msra.mxu0 %v5957
    %6111 = vmatpush.bf16.msra.mxu0 %v5953
    %6112 = vmatpush.bf16.msra.mxu0 %v5949
    %6113 = vmatpush.bf16.msra.mxu0 %v5945
    %6114 = vmatmul.bf16.gmra.mxu0 %v2694
    %v6115 = vpop.f32.mrf.mxu0
    %v6116 = vadd.f32 %v6103, %v6115
    %v6117 = vpop.f32.mrf.mxu0
    %6118 = vdwg.mxu0
    %6119 = vmatpush.bf16.msra.mxu0 %v6005
    %6120 = vmatpush.bf16.msra.mxu0 %v6001
    %6121 = vmatpush.bf16.msra.mxu0 %v5997
    %6122 = vmatpush.bf16.msra.mxu0 %v5993
    %6123 = vmatpush.bf16.msra.mxu0 %v5989
    %6124 = vmatpush.bf16.msra.mxu0 %v5985
    %6125 = vmatpush.bf16.msra.mxu0 %v5981
    %6126 = vmatpush.bf16.msra.mxu0 %v5977
    %6127 = vmatmul.bf16.gmra.mxu0 %v2695
    %v6128 = vpop.f32.mrf.mxu0
    %v6129 = vadd.f32 %v6116, %v6128
    %v6130 = vpop.f32.mrf.mxu0
    %6131 = vdwg.mxu0
    %6132 = vmatpush.bf16.msra.mxu0 %v6037
    %6133 = vmatpush.bf16.msra.mxu0 %v6033
    %6134 = vmatpush.bf16.msra.mxu0 %v6029
    %6135 = vmatpush.bf16.msra.mxu0 %v6025
    %6136 = vmatpush.bf16.msra.mxu0 %v6021
    %6137 = vmatpush.bf16.msra.mxu0 %v6017
    %6138 = vmatpush.bf16.msra.mxu0 %v6013
    %6139 = vmatpush.bf16.msra.mxu0 %v6009
    %6140 = vmatmul.bf16.gmra.mxu0 %v2696
    %v6141 = vpop.f32.mrf.mxu0
    %v6142 = vadd.f32 %v6129, %v6141
    %v6143 = vpop.f32.mrf.mxu0
    %6144 = vdwg.mxu0
    %6145 = vmatpush.bf16.msra.mxu0 %v5814
    %6146 = vmatpush.bf16.msra.mxu0 %v5810
    %6147 = vmatpush.bf16.msra.mxu0 %v5806
    %6148 = vmatpush.bf16.msra.mxu0 %v5802
    %6149 = vmatpush.bf16.msra.mxu0 %v5798
    %6150 = vmatpush.bf16.msra.mxu0 %v5794
    %6151 = vmatpush.bf16.msra.mxu0 %v5790
    %6152 = vmatpush.bf16.msra.mxu0 %v5786
    %6153 = vmatmul.bf16.gmra.mxu0 %v2689
    %v6154 = vpop.f32.mrf.mxu0
    %v6155 = vadd.f32 0.0, %v6154
    %v6156 = vpop.f32.mrf.mxu0
    %6157 = vdwg.mxu0
    %6158 = vmatpush.bf16.msra.mxu0 %v5846
    %6159 = vmatpush.bf16.msra.mxu0 %v5842
    %6160 = vmatpush.bf16.msra.mxu0 %v5838
    %6161 = vmatpush.bf16.msra.mxu0 %v5834
    %6162 = vmatpush.bf16.msra.mxu0 %v5830
    %6163 = vmatpush.bf16.msra.mxu0 %v5826
    %6164 = vmatpush.bf16.msra.mxu0 %v5822
    %6165 = vmatpush.bf16.msra.mxu0 %v5818
    %6166 = vmatmul.bf16.gmra.mxu0 %v2690
    %v6167 = vpop.f32.mrf.mxu0
    %v6168 = vadd.f32 %v6155, %v6167
    %v6169 = vpop.f32.mrf.mxu0
    %6170 = vdwg.mxu0
    %6171 = vmatpush.bf16.msra.mxu0 %v5878
    %6172 = vmatpush.bf16.msra.mxu0 %v5874
    %6173 = vmatpush.bf16.msra.mxu0 %v5870
    %6174 = vmatpush.bf16.msra.mxu0 %v5866
    %6175 = vmatpush.bf16.msra.mxu0 %v5862
    %6176 = vmatpush.bf16.msra.mxu0 %v5858
    %6177 = vmatpush.bf16.msra.mxu0 %v5854
    %6178 = vmatpush.bf16.msra.mxu0 %v5850
    %6179 = vmatmul.bf16.gmra.mxu0 %v2691
    %v6180 = vpop.f32.mrf.mxu0
    %v6181 = vadd.f32 %v6168, %v6180
    %v6182 = vpop.f32.mrf.mxu0
    %6183 = vdwg.mxu0
    %6184 = vmatpush.bf16.msra.mxu0 %v5910
    %6185 = vmatpush.bf16.msra.mxu0 %v5906
    %6186 = vmatpush.bf16.msra.mxu0 %v5902
    %6187 = vmatpush.bf16.msra.mxu0 %v5898
    %6188 = vmatpush.bf16.msra.mxu0 %v5894
    %6189 = vmatpush.bf16.msra.mxu0 %v5890
    %6190 = vmatpush.bf16.msra.mxu0 %v5886
    %6191 = vmatpush.bf16.msra.mxu0 %v5882
    %6192 = vmatmul.bf16.gmra.mxu0 %v2692
    %v6193 = vpop.f32.mrf.mxu0
    %v6194 = vadd.f32 %v6181, %v6193
    %v6195 = vpop.f32.mrf.mxu0
    %6196 = vdwg.mxu0
    %6197 = vmatpush.bf16.msra.mxu0 %v5942
    %6198 = vmatpush.bf16.msra.mxu0 %v5938
    %6199 = vmatpush.bf16.msra.mxu0 %v5934
    %6200 = vmatpush.bf16.msra.mxu0 %v5930
    %6201 = vmatpush.bf16.msra.mxu0 %v5926
    %6202 = vmatpush.bf16.msra.mxu0 %v5922
    %6203 = vmatpush.bf16.msra.mxu0 %v5918
    %6204 = vmatpush.bf16.msra.mxu0 %v5914
    %6205 = vmatmul.bf16.gmra.mxu0 %v2693
    %v6206 = vpop.f32.mrf.mxu0
    %v6207 = vadd.f32 %v6194, %v6206
    %v6208 = vpop.f32.mrf.mxu0
    %6209 = vdwg.mxu0
    %6210 = vmatpush.bf16.msra.mxu0 %v5974
    %6211 = vmatpush.bf16.msra.mxu0 %v5970
    %6212 = vmatpush.bf16.msra.mxu0 %v5966
    %6213 = vmatpush.bf16.msra.mxu0 %v5962
    %6214 = vmatpush.bf16.msra.mxu0 %v5958
    %6215 = vmatpush.bf16.msra.mxu0 %v5954
    %6216 = vmatpush.bf16.msra.mxu0 %v5950
    %6217 = vmatpush.bf16.msra.mxu0 %v5946
    %6218 = vmatmul.bf16.gmra.mxu0 %v2694
    %v6219 = vpop.f32.mrf.mxu0
    %v6220 = vadd.f32 %v6207, %v6219
    %v6221 = vpop.f32.mrf.mxu0
    %6222 = vdwg.mxu0
    %6223 = vmatpush.bf16.msra.mxu0 %v6006
    %6224 = vmatpush.bf16.msra.mxu0 %v6002
    %6225 = vmatpush.bf16.msra.mxu0 %v5998
    %6226 = vmatpush.bf16.msra.mxu0 %v5994
    %6227 = vmatpush.bf16.msra.mxu0 %v5990
    %6228 = vmatpush.bf16.msra.mxu0 %v5986
    %6229 = vmatpush.bf16.msra.mxu0 %v5982
    %6230 = vmatpush.bf16.msra.mxu0 %v5978
    %6231 = vmatmul.bf16.gmra.mxu0 %v2695
    %v6232 = vpop.f32.mrf.mxu0
    %v6233 = vadd.f32 %v6220, %v6232
    %v6234 = vpop.f32.mrf.mxu0
    %6235 = vdwg.mxu0
    %6236 = vmatpush.bf16.msra.mxu0 %v6038
    %6237 = vmatpush.bf16.msra.mxu0 %v6034
    %6238 = vmatpush.bf16.msra.mxu0 %v6030
    %6239 = vmatpush.bf16.msra.mxu0 %v6026
    %6240 = vmatpush.bf16.msra.mxu0 %v6022
    %6241 = vmatpush.bf16.msra.mxu0 %v6018
    %6242 = vmatpush.bf16.msra.mxu0 %v6014
    %6243 = vmatpush.bf16.msra.mxu0 %v6010
    %6244 = vmatmul.bf16.gmra.mxu0 %v2696
    %v6245 = vpop.f32.mrf.mxu0
    %v6246 = vadd.f32 %v6233, %v6245
    %v6247 = vpop.f32.mrf.mxu0
    %6248 = vdwg.mxu0
    %6249 = vmatpush.bf16.msra.mxu0 %v5815
    %6250 = vmatpush.bf16.msra.mxu0 %v5811
    %6251 = vmatpush.bf16.msra.mxu0 %v5807
    %6252 = vmatpush.bf16.msra.mxu0 %v5803
    %6253 = vmatpush.bf16.msra.mxu0 %v5799
    %6254 = vmatpush.bf16.msra.mxu0 %v5795
    %6255 = vmatpush.bf16.msra.mxu0 %v5791
    %6256 = vmatpush.bf16.msra.mxu0 %v5787
    %6257 = vmatmul.bf16.gmra.mxu0 %v2689
    %v6258 = vpop.f32.mrf.mxu0
    %v6259 = vadd.f32 0.0, %v6258
    %v6260 = vpop.f32.mrf.mxu0
    %6261 = vdwg.mxu0
    %6262 = vmatpush.bf16.msra.mxu0 %v5847
    %6263 = vmatpush.bf16.msra.mxu0 %v5843
    %6264 = vmatpush.bf16.msra.mxu0 %v5839
    %6265 = vmatpush.bf16.msra.mxu0 %v5835
    %6266 = vmatpush.bf16.msra.mxu0 %v5831
    %6267 = vmatpush.bf16.msra.mxu0 %v5827
    %6268 = vmatpush.bf16.msra.mxu0 %v5823
    %6269 = vmatpush.bf16.msra.mxu0 %v5819
    %6270 = vmatmul.bf16.gmra.mxu0 %v2690
    %v6271 = vpop.f32.mrf.mxu0
    %v6272 = vadd.f32 %v6259, %v6271
    %v6273 = vpop.f32.mrf.mxu0
    %6274 = vdwg.mxu0
    %6275 = vmatpush.bf16.msra.mxu0 %v5879
    %6276 = vmatpush.bf16.msra.mxu0 %v5875
    %6277 = vmatpush.bf16.msra.mxu0 %v5871
    %6278 = vmatpush.bf16.msra.mxu0 %v5867
    %6279 = vmatpush.bf16.msra.mxu0 %v5863
    %6280 = vmatpush.bf16.msra.mxu0 %v5859
    %6281 = vmatpush.bf16.msra.mxu0 %v5855
    %6282 = vmatpush.bf16.msra.mxu0 %v5851
    %6283 = vmatmul.bf16.gmra.mxu0 %v2691
    %v6284 = vpop.f32.mrf.mxu0
    %v6285 = vadd.f32 %v6272, %v6284
    %v6286 = vpop.f32.mrf.mxu0
    %6287 = vdwg.mxu0
    %6288 = vmatpush.bf16.msra.mxu0 %v5911
    %6289 = vmatpush.bf16.msra.mxu0 %v5907
    %6290 = vmatpush.bf16.msra.mxu0 %v5903
    %6291 = vmatpush.bf16.msra.mxu0 %v5899
    %6292 = vmatpush.bf16.msra.mxu0 %v5895
    %6293 = vmatpush.bf16.msra.mxu0 %v5891
    %6294 = vmatpush.bf16.msra.mxu0 %v5887
    %6295 = vmatpush.bf16.msra.mxu0 %v5883
    %6296 = vmatmul.bf16.gmra.mxu0 %v2692
    %v6297 = vpop.f32.mrf.mxu0
    %v6298 = vadd.f32 %v6285, %v6297
    %v6299 = vpop.f32.mrf.mxu0
    %6300 = vdwg.mxu0
    %6301 = vmatpush.bf16.msra.mxu0 %v5943
    %6302 = vmatpush.bf16.msra.mxu0 %v5939
    %6303 = vmatpush.bf16.msra.mxu0 %v5935
    %6304 = vmatpush.bf16.msra.mxu0 %v5931
    %6305 = vmatpush.bf16.msra.mxu0 %v5927
    %6306 = vmatpush.bf16.msra.mxu0 %v5923
    %6307 = vmatpush.bf16.msra.mxu0 %v5919
    %6308 = vmatpush.bf16.msra.mxu0 %v5915
    %6309 = vmatmul.bf16.gmra.mxu0 %v2693
    %v6310 = vpop.f32.mrf.mxu0
    %v6311 = vadd.f32 %v6298, %v6310
    %v6312 = vpop.f32.mrf.mxu0
    %6313 = vdwg.mxu0
    %6314 = vmatpush.bf16.msra.mxu0 %v5975
    %6315 = vmatpush.bf16.msra.mxu0 %v5971
    %6316 = vmatpush.bf16.msra.mxu0 %v5967
    %6317 = vmatpush.bf16.msra.mxu0 %v5963
    %6318 = vmatpush.bf16.msra.mxu0 %v5959
    %6319 = vmatpush.bf16.msra.mxu0 %v5955
    %6320 = vmatpush.bf16.msra.mxu0 %v5951
    %6321 = vmatpush.bf16.msra.mxu0 %v5947
    %6322 = vmatmul.bf16.gmra.mxu0 %v2694
    %v6323 = vpop.f32.mrf.mxu0
    %v6324 = vadd.f32 %v6311, %v6323
    %v6325 = vpop.f32.mrf.mxu0
    %6326 = vdwg.mxu0
    %6327 = vmatpush.bf16.msra.mxu0 %v6007
    %6328 = vmatpush.bf16.msra.mxu0 %v6003
    %6329 = vmatpush.bf16.msra.mxu0 %v5999
    %6330 = vmatpush.bf16.msra.mxu0 %v5995
    %6331 = vmatpush.bf16.msra.mxu0 %v5991
    %6332 = vmatpush.bf16.msra.mxu0 %v5987
    %6333 = vmatpush.bf16.msra.mxu0 %v5983
    %6334 = vmatpush.bf16.msra.mxu0 %v5979
    %6335 = vmatmul.bf16.gmra.mxu0 %v2695
    %v6336 = vpop.f32.mrf.mxu0
    %v6337 = vadd.f32 %v6324, %v6336
    %v6338 = vpop.f32.mrf.mxu0
    %6339 = vdwg.mxu0
    %6340 = vmatpush.bf16.msra.mxu0 %v6039
    %6341 = vmatpush.bf16.msra.mxu0 %v6035
    %6342 = vmatpush.bf16.msra.mxu0 %v6031
    %6343 = vmatpush.bf16.msra.mxu0 %v6027
    %6344 = vmatpush.bf16.msra.mxu0 %v6023
    %6345 = vmatpush.bf16.msra.mxu0 %v6019
    %6346 = vmatpush.bf16.msra.mxu0 %v6015
    %6347 = vmatpush.bf16.msra.mxu0 %v6011
    %6348 = vmatmul.bf16.gmra.mxu0 %v2696
    %v6349 = vpop.f32.mrf.mxu0
    %v6350 = vadd.f32 %v6337, %v6349
    %v6351 = vpop.f32.mrf.mxu0
    %6352 = vdwg.mxu0
    %6353 = vmatpush.bf16.msra.mxu0 %v5816
    %6354 = vmatpush.bf16.msra.mxu0 %v5812
    %6355 = vmatpush.bf16.msra.mxu0 %v5808
    %6356 = vmatpush.bf16.msra.mxu0 %v5804
    %6357 = vmatpush.bf16.msra.mxu0 %v5800
    %6358 = vmatpush.bf16.msra.mxu0 %v5796
    %6359 = vmatpush.bf16.msra.mxu0 %v5792
    %6360 = vmatpush.bf16.msra.mxu0 %v5788
    %6361 = vmatmul.bf16.gmra.mxu0 %v2689
    %v6362 = vpop.f32.mrf.mxu0
    %v6363 = vadd.f32 0.0, %v6362
    %v6364 = vpop.f32.mrf.mxu0
    %6365 = vdwg.mxu0
    %6366 = vmatpush.bf16.msra.mxu0 %v5848
    %6367 = vmatpush.bf16.msra.mxu0 %v5844
    %6368 = vmatpush.bf16.msra.mxu0 %v5840
    %6369 = vmatpush.bf16.msra.mxu0 %v5836
    %6370 = vmatpush.bf16.msra.mxu0 %v5832
    %6371 = vmatpush.bf16.msra.mxu0 %v5828
    %6372 = vmatpush.bf16.msra.mxu0 %v5824
    %6373 = vmatpush.bf16.msra.mxu0 %v5820
    %6374 = vmatmul.bf16.gmra.mxu0 %v2690
    %v6375 = vpop.f32.mrf.mxu0
    %v6376 = vadd.f32 %v6363, %v6375
    %v6377 = vpop.f32.mrf.mxu0
    %6378 = vdwg.mxu0
    %6379 = vmatpush.bf16.msra.mxu0 %v5880
    %6380 = vmatpush.bf16.msra.mxu0 %v5876
    %6381 = vmatpush.bf16.msra.mxu0 %v5872
    %6382 = vmatpush.bf16.msra.mxu0 %v5868
    %6383 = vmatpush.bf16.msra.mxu0 %v5864
    %6384 = vmatpush.bf16.msra.mxu0 %v5860
    %6385 = vmatpush.bf16.msra.mxu0 %v5856
    %6386 = vmatpush.bf16.msra.mxu0 %v5852
    %6387 = vmatmul.bf16.gmra.mxu0 %v2691
    %v6388 = vpop.f32.mrf.mxu0
    %v6389 = vadd.f32 %v6376, %v6388
    %v6390 = vpop.f32.mrf.mxu0
    %6391 = vdwg.mxu0
    %6392 = vmatpush.bf16.msra.mxu0 %v5912
    %6393 = vmatpush.bf16.msra.mxu0 %v5908
    %6394 = vmatpush.bf16.msra.mxu0 %v5904
    %6395 = vmatpush.bf16.msra.mxu0 %v5900
    %6396 = vmatpush.bf16.msra.mxu0 %v5896
    %6397 = vmatpush.bf16.msra.mxu0 %v5892
    %6398 = vmatpush.bf16.msra.mxu0 %v5888
    %6399 = vmatpush.bf16.msra.mxu0 %v5884
    %6400 = vmatmul.bf16.gmra.mxu0 %v2692
    %v6401 = vpop.f32.mrf.mxu0
    %v6402 = vadd.f32 %v6389, %v6401
    %v6403 = vpop.f32.mrf.mxu0
    %6404 = vdwg.mxu0
    %6405 = vmatpush.bf16.msra.mxu0 %v5944
    %6406 = vmatpush.bf16.msra.mxu0 %v5940
    %6407 = vmatpush.bf16.msra.mxu0 %v5936
    %6408 = vmatpush.bf16.msra.mxu0 %v5932
    %6409 = vmatpush.bf16.msra.mxu0 %v5928
    %6410 = vmatpush.bf16.msra.mxu0 %v5924
    %6411 = vmatpush.bf16.msra.mxu0 %v5920
    %6412 = vmatpush.bf16.msra.mxu0 %v5916
    %6413 = vmatmul.bf16.gmra.mxu0 %v2693
    %v6414 = vpop.f32.mrf.mxu0
    %v6415 = vadd.f32 %v6402, %v6414
    %v6416 = vpop.f32.mrf.mxu0
    %6417 = vdwg.mxu0
    %6418 = vmatpush.bf16.msra.mxu0 %v5976
    %6419 = vmatpush.bf16.msra.mxu0 %v5972
    %6420 = vmatpush.bf16.msra.mxu0 %v5968
    %6421 = vmatpush.bf16.msra.mxu0 %v5964
    %6422 = vmatpush.bf16.msra.mxu0 %v5960
    %6423 = vmatpush.bf16.msra.mxu0 %v5956
    %6424 = vmatpush.bf16.msra.mxu0 %v5952
    %6425 = vmatpush.bf16.msra.mxu0 %v5948
    %6426 = vmatmul.bf16.gmra.mxu0 %v2694
    %v6427 = vpop.f32.mrf.mxu0
    %v6428 = vadd.f32 %v6415, %v6427
    %v6429 = vpop.f32.mrf.mxu0
    %6430 = vdwg.mxu0
    %6431 = vmatpush.bf16.msra.mxu0 %v6008
    %6432 = vmatpush.bf16.msra.mxu0 %v6004
    %6433 = vmatpush.bf16.msra.mxu0 %v6000
    %6434 = vmatpush.bf16.msra.mxu0 %v5996
    %6435 = vmatpush.bf16.msra.mxu0 %v5992
    %6436 = vmatpush.bf16.msra.mxu0 %v5988
    %6437 = vmatpush.bf16.msra.mxu0 %v5984
    %6438 = vmatpush.bf16.msra.mxu0 %v5980
    %6439 = vmatmul.bf16.gmra.mxu0 %v2695
    %v6440 = vpop.f32.mrf.mxu0
    %v6441 = vadd.f32 %v6428, %v6440
    %v6442 = vpop.f32.mrf.mxu0
    %6443 = vdwg.mxu0
    %6444 = vmatpush.bf16.msra.mxu0 %v6040
    %6445 = vmatpush.bf16.msra.mxu0 %v6036
    %6446 = vmatpush.bf16.msra.mxu0 %v6032
    %6447 = vmatpush.bf16.msra.mxu0 %v6028
    %6448 = vmatpush.bf16.msra.mxu0 %v6024
    %6449 = vmatpush.bf16.msra.mxu0 %v6020
    %6450 = vmatpush.bf16.msra.mxu0 %v6016
    %6451 = vmatpush.bf16.msra.mxu0 %v6012
    %6452 = vmatmul.bf16.gmra.mxu0 %v2696
    %v6453 = vpop.f32.mrf.mxu0
    %v6454 = vadd.f32 %v6441, %v6453
    %v6455 = vpop.f32.mrf.mxu0
    %6456 = vdwg.mxu0
    %v6457 = vperm.slane %v2697, 4
    %v6458 = vperm.slane %v2697, 5
    %v6459 = vperm.slane %v2697, 6
    %v6460 = vperm.slane %v2697, 7
    %v6465 = vmul.f32 %v6142, %v6457
    %v6466 = vmul.f32 %v6246, %v6458
    %v6467 = vmul.f32 %v6350, %v6459
    %v6468 = vmul.f32 %v6454, %v6460
    %v6469 = vperm.slane %v2699, 4
    %v6470 = vperm.slane %v2699, 5
    %v6471 = vperm.slane %v2699, 6
    %v6472 = vperm.slane %v2699, 7
    %v6477 = vadd.f32 %v6465, %v6469
    %v6478 = vadd.f32 %v6466, %v6470
    %v6479 = vadd.f32 %v6467, %v6471
    %v6480 = vadd.f32 %v6468, %v6472
    %v6481 = vxor.u32 %v6477, 2147483648
    %v6482 = vxor.u32 %v6478, 2147483648
    %v6483 = vxor.u32 %v6479, 2147483648
    %v6484 = vxor.u32 %v6480, 2147483648
    %v6485 = vmul.f32 %v6481, 1.442695
    %v6486 = vpow.pop %v6485
    %v6487 = vmul.f32 %v6482, 1.442695
    %v6488 = vpow.pop %v6487
    %v6489 = vmul.f32 %v6483, 1.442695
    %v6490 = vpow.pop %v6489
    %v6491 = vmul.f32 %v6484, 1.442695
    %v6492 = vpow.pop %v6491
    %v6493 = vadd.f32 %v6486, 1.0
    %v6494 = vadd.f32 %v6488, 1.0
    %v6495 = vadd.f32 %v6490, 1.0
    %v6496 = vadd.f32 %v6492, 1.0
    %v6497 = vrcp.pop %v6493
    %v6498 = vmul.f32 %v6493, %v6497
    %v6499 = vsub.f32 1.0, %v6498
    %v6500 = vmul.f32 %v6497, %v6499
    %v6501 = vadd.f32 %v6497, %v6500
    %vm6502 = vweird.f32 %v6493
    %vm6503 = vweird.f32 %v6497
    %vm6504 = vmor %vm6502, %vm6503
    %v6505 = vsel %vm6504, %v6497, %v6501
    %v6506 = vand.u32 2147483647, %v6493
    %vm6507 = vcmp.eq.f32.partialorder %v6506, 8.507059e+37
    %v6508 = vand.u32 %v6493, 2147483648
    %v6509 = vor.u32 1.1754944e-38, %v6508
    %v6510 = vsel %vm6507, %v6509, %v6505
    %v6511 = vmul.f32 1.0, %v6510
    %v6512 = vrcp.pop %v6494
    %v6513 = vmul.f32 %v6494, %v6512
    %v6514 = vsub.f32 1.0, %v6513
    %v6515 = vmul.f32 %v6512, %v6514
    %v6516 = vadd.f32 %v6512, %v6515
    %vm6517 = vweird.f32 %v6494
    %vm6518 = vweird.f32 %v6512
    %vm6519 = vmor %vm6517, %vm6518
    %v6520 = vsel %vm6519, %v6512, %v6516
    %v6521 = vand.u32 2147483647, %v6494
    %vm6522 = vcmp.eq.f32.partialorder %v6521, 8.507059e+37
    %v6523 = vand.u32 %v6494, 2147483648
    %v6524 = vor.u32 1.1754944e-38, %v6523
    %v6525 = vsel %vm6522, %v6524, %v6520
    %v6526 = vmul.f32 1.0, %v6525
    %v6527 = vrcp.pop %v6495
    %v6528 = vmul.f32 %v6495, %v6527
    %v6529 = vsub.f32 1.0, %v6528
    %v6530 = vmul.f32 %v6527, %v6529
    %v6531 = vadd.f32 %v6527, %v6530
    %vm6532 = vweird.f32 %v6495
    %vm6533 = vweird.f32 %v6527
    %vm6534 = vmor %vm6532, %vm6533
    %v6535 = vsel %vm6534, %v6527, %v6531
    %v6536 = vand.u32 2147483647, %v6495
    %vm6537 = vcmp.eq.f32.partialorder %v6536, 8.507059e+37
    %v6538 = vand.u32 %v6495, 2147483648
    %v6539 = vor.u32 1.1754944e-38, %v6538
    %v6540 = vsel %vm6537, %v6539, %v6535
    %v6541 = vmul.f32 1.0, %v6540
    %v6542 = vrcp.pop %v6496
    %v6543 = vmul.f32 %v6496, %v6542
    %v6544 = vsub.f32 1.0, %v6543
    %v6545 = vmul.f32 %v6542, %v6544
    %v6546 = vadd.f32 %v6542, %v6545
    %vm6547 = vweird.f32 %v6496
    %vm6548 = vweird.f32 %v6542
    %vm6549 = vmor %vm6547, %vm6548
    %v6550 = vsel %vm6549, %v6542, %v6546
    %v6551 = vand.u32 2147483647, %v6496
    %vm6552 = vcmp.eq.f32.partialorder %v6551, 8.507059e+37
    %v6553 = vand.u32 %v6496, 2147483648
    %v6554 = vor.u32 1.1754944e-38, %v6553
    %v6555 = vsel %vm6552, %v6554, %v6550
    %v6556 = vmul.f32 1.0, %v6555
    %s6557 = sshll.u32 %s2702, 4
    %6558 = dma.done %s248, %s6557
    %v6559 = vld [vmem:[%s247] sm:$0xff]
    %v6560 = vld [vmem:[%s247 + $0x8] sm:$0xff]
    %v6561 = vld [vmem:[%s247 + $0x10] sm:$0xff]
    %v6562 = vld [vmem:[%s247 + $0x18] sm:$0xff]
    %v6563 = vld [vmem:[%s247 + $0x20] sm:$0xff]
    %v6564 = vld [vmem:[%s247 + $0x28] sm:$0xff]
    %v6565 = vld [vmem:[%s247 + $0x30] sm:$0xff]
    %v6566 = vld [vmem:[%s247 + $0x38] sm:$0xff]
    %v6567 = vld [vmem:[%s247 + $0x40] sm:$0xff]
    %v6568 = vld [vmem:[%s247 + $0x48] sm:$0xff]
    %v6569 = vld [vmem:[%s247 + $0x50] sm:$0xff]
    %v6570 = vld [vmem:[%s247 + $0x58] sm:$0xff]
    %v6571 = vld [vmem:[%s247 + $0x60] sm:$0xff]
    %v6572 = vld [vmem:[%s247 + $0x68] sm:$0xff]
    %v6573 = vld [vmem:[%s247 + $0x70] sm:$0xff]
    %v6574 = vld [vmem:[%s247 + $0x78] sm:$0xff]
    %v6575 = vld [vmem:[%s247 + $0x80] sm:$0xff]
    %v6576 = vld [vmem:[%s247 + $0x88] sm:$0xff]
    %v6577 = vld [vmem:[%s247 + $0x90] sm:$0xff]
    %v6578 = vld [vmem:[%s247 + $0x98] sm:$0xff]
    %v6579 = vld [vmem:[%s247 + $0xa0] sm:$0xff]
    %v6580 = vld [vmem:[%s247 + $0xa8] sm:$0xff]
    %v6581 = vld [vmem:[%s247 + $0xb0] sm:$0xff]
    %v6582 = vld [vmem:[%s247 + $0xb8] sm:$0xff]
    %v6583 = vld [vmem:[%s247 + $0xc0] sm:$0xff]
    %v6584 = vld [vmem:[%s247 + $0xc8] sm:$0xff]
    %v6585 = vld [vmem:[%s247 + $0xd0] sm:$0xff]
    %v6586 = vld [vmem:[%s247 + $0xd8] sm:$0xff]
    %v6587 = vld [vmem:[%s247 + $0xe0] sm:$0xff]
    %v6588 = vld [vmem:[%s247 + $0xe8] sm:$0xff]
    %v6589 = vld [vmem:[%s247 + $0xf0] sm:$0xff]
    %v6590 = vld [vmem:[%s247 + $0xf8] sm:$0xff]
    %v6591 = vld [vmem:[%s247 + $0x100] sm:$0xff]
    %v6592 = vld [vmem:[%s247 + $0x108] sm:$0xff]
    %v6593 = vld [vmem:[%s247 + $0x110] sm:$0xff]
    %v6594 = vld [vmem:[%s247 + $0x118] sm:$0xff]
    %v6595 = vld [vmem:[%s247 + $0x120] sm:$0xff]
    %v6596 = vld [vmem:[%s247 + $0x128] sm:$0xff]
    %v6597 = vld [vmem:[%s247 + $0x130] sm:$0xff]
    %v6598 = vld [vmem:[%s247 + $0x138] sm:$0xff]
    %v6599 = vld [vmem:[%s247 + $0x140] sm:$0xff]
    %v6600 = vld [vmem:[%s247 + $0x148] sm:$0xff]
    %v6601 = vld [vmem:[%s247 + $0x150] sm:$0xff]
    %v6602 = vld [vmem:[%s247 + $0x158] sm:$0xff]
    %v6603 = vld [vmem:[%s247 + $0x160] sm:$0xff]
    %v6604 = vld [vmem:[%s247 + $0x168] sm:$0xff]
    %v6605 = vld [vmem:[%s247 + $0x170] sm:$0xff]
    %v6606 = vld [vmem:[%s247 + $0x178] sm:$0xff]
    %v6607 = vld [vmem:[%s247 + $0x180] sm:$0xff]
    %v6608 = vld [vmem:[%s247 + $0x188] sm:$0xff]
    %v6609 = vld [vmem:[%s247 + $0x190] sm:$0xff]
    %v6610 = vld [vmem:[%s247 + $0x198] sm:$0xff]
    %v6611 = vld [vmem:[%s247 + $0x1a0] sm:$0xff]
    %v6612 = vld [vmem:[%s247 + $0x1a8] sm:$0xff]
    %v6613 = vld [vmem:[%s247 + $0x1b0] sm:$0xff]
    %v6614 = vld [vmem:[%s247 + $0x1b8] sm:$0xff]
    %v6615 = vld [vmem:[%s247 + $0x1c0] sm:$0xff]
    %v6616 = vld [vmem:[%s247 + $0x1c8] sm:$0xff]
    %v6617 = vld [vmem:[%s247 + $0x1d0] sm:$0xff]
    %v6618 = vld [vmem:[%s247 + $0x1d8] sm:$0xff]
    %v6619 = vld [vmem:[%s247 + $0x1e0] sm:$0xff]
    %v6620 = vld [vmem:[%s247 + $0x1e8] sm:$0xff]
    %v6621 = vld [vmem:[%s247 + $0x1f0] sm:$0xff]
    %v6622 = vld [vmem:[%s247 + $0x1f8] sm:$0xff]
    %v6623 = vld [vmem:[%s247 + $0x200] sm:$0xff]
    %v6624 = vld [vmem:[%s247 + $0x208] sm:$0xff]
    %v6625 = vld [vmem:[%s247 + $0x210] sm:$0xff]
    %v6626 = vld [vmem:[%s247 + $0x218] sm:$0xff]
    %v6627 = vld [vmem:[%s247 + $0x220] sm:$0xff]
    %v6628 = vld [vmem:[%s247 + $0x228] sm:$0xff]
    %v6629 = vld [vmem:[%s247 + $0x230] sm:$0xff]
    %v6630 = vld [vmem:[%s247 + $0x238] sm:$0xff]
    %v6631 = vld [vmem:[%s247 + $0x240] sm:$0xff]
    %v6632 = vld [vmem:[%s247 + $0x248] sm:$0xff]
    %v6633 = vld [vmem:[%s247 + $0x250] sm:$0xff]
    %v6634 = vld [vmem:[%s247 + $0x258] sm:$0xff]
    %v6635 = vld [vmem:[%s247 + $0x260] sm:$0xff]
    %v6636 = vld [vmem:[%s247 + $0x268] sm:$0xff]
    %v6637 = vld [vmem:[%s247 + $0x270] sm:$0xff]
    %v6638 = vld [vmem:[%s247 + $0x278] sm:$0xff]
    %v6639 = vld [vmem:[%s247 + $0x280] sm:$0xff]
    %v6640 = vld [vmem:[%s247 + $0x288] sm:$0xff]
    %v6641 = vld [vmem:[%s247 + $0x290] sm:$0xff]
    %v6642 = vld [vmem:[%s247 + $0x298] sm:$0xff]
    %v6643 = vld [vmem:[%s247 + $0x2a0] sm:$0xff]
    %v6644 = vld [vmem:[%s247 + $0x2a8] sm:$0xff]
    %v6645 = vld [vmem:[%s247 + $0x2b0] sm:$0xff]
    %v6646 = vld [vmem:[%s247 + $0x2b8] sm:$0xff]
    %v6647 = vld [vmem:[%s247 + $0x2c0] sm:$0xff]
    %v6648 = vld [vmem:[%s247 + $0x2c8] sm:$0xff]
    %v6649 = vld [vmem:[%s247 + $0x2d0] sm:$0xff]
    %v6650 = vld [vmem:[%s247 + $0x2d8] sm:$0xff]
    %v6651 = vld [vmem:[%s247 + $0x2e0] sm:$0xff]
    %v6652 = vld [vmem:[%s247 + $0x2e8] sm:$0xff]
    %v6653 = vld [vmem:[%s247 + $0x2f0] sm:$0xff]
    %v6654 = vld [vmem:[%s247 + $0x2f8] sm:$0xff]
    %v6655 = vld [vmem:[%s247 + $0x300] sm:$0xff]
    %v6656 = vld [vmem:[%s247 + $0x308] sm:$0xff]
    %v6657 = vld [vmem:[%s247 + $0x310] sm:$0xff]
    %v6658 = vld [vmem:[%s247 + $0x318] sm:$0xff]
    %v6659 = vld [vmem:[%s247 + $0x320] sm:$0xff]
    %v6660 = vld [vmem:[%s247 + $0x328] sm:$0xff]
    %v6661 = vld [vmem:[%s247 + $0x330] sm:$0xff]
    %v6662 = vld [vmem:[%s247 + $0x338] sm:$0xff]
    %v6663 = vld [vmem:[%s247 + $0x340] sm:$0xff]
    %v6664 = vld [vmem:[%s247 + $0x348] sm:$0xff]
    %v6665 = vld [vmem:[%s247 + $0x350] sm:$0xff]
    %v6666 = vld [vmem:[%s247 + $0x358] sm:$0xff]
    %v6667 = vld [vmem:[%s247 + $0x360] sm:$0xff]
    %v6668 = vld [vmem:[%s247 + $0x368] sm:$0xff]
    %v6669 = vld [vmem:[%s247 + $0x370] sm:$0xff]
    %v6670 = vld [vmem:[%s247 + $0x378] sm:$0xff]
    %v6671 = vld [vmem:[%s247 + $0x380] sm:$0xff]
    %v6672 = vld [vmem:[%s247 + $0x388] sm:$0xff]
    %v6673 = vld [vmem:[%s247 + $0x390] sm:$0xff]
    %v6674 = vld [vmem:[%s247 + $0x398] sm:$0xff]
    %v6675 = vld [vmem:[%s247 + $0x3a0] sm:$0xff]
    %v6676 = vld [vmem:[%s247 + $0x3a8] sm:$0xff]
    %v6677 = vld [vmem:[%s247 + $0x3b0] sm:$0xff]
    %v6678 = vld [vmem:[%s247 + $0x3b8] sm:$0xff]
    %v6679 = vld [vmem:[%s247 + $0x3c0] sm:$0xff]
    %v6680 = vld [vmem:[%s247 + $0x3c8] sm:$0xff]
    %v6681 = vld [vmem:[%s247 + $0x3d0] sm:$0xff]
    %v6682 = vld [vmem:[%s247 + $0x3d8] sm:$0xff]
    %v6683 = vld [vmem:[%s247 + $0x3e0] sm:$0xff]
    %v6684 = vld [vmem:[%s247 + $0x3e8] sm:$0xff]
    %v6685 = vld [vmem:[%s247 + $0x3f0] sm:$0xff]
    %v6686 = vld [vmem:[%s247 + $0x3f8] sm:$0xff]
    %v6687 = vunpack.c.0.s8 %v6559
    %v6688 = vunpack.c.0.s8 %v6560
    %v6689 = vunpack.c.0.s8 %v6561
    %v6690 = vunpack.c.0.s8 %v6562
    %v6691 = vunpack.c.1.s8 %v6559
    %v6692 = vunpack.c.1.s8 %v6560
    %v6693 = vunpack.c.1.s8 %v6561
    %v6694 = vunpack.c.1.s8 %v6562
    %v6695 = vunpack.c.2.s8 %v6559
    %v6696 = vunpack.c.2.s8 %v6560
    %v6697 = vunpack.c.2.s8 %v6561
    %v6698 = vunpack.c.2.s8 %v6562
    %v6699 = vunpack.c.3.s8 %v6559
    %v6700 = vunpack.c.3.s8 %v6560
    %v6701 = vunpack.c.3.s8 %v6561
    %v6702 = vunpack.c.3.s8 %v6562
    %v6703 = vunpack.c.0.s8 %v6563
    %v6704 = vunpack.c.0.s8 %v6564
    %v6705 = vunpack.c.0.s8 %v6565
    %v6706 = vunpack.c.0.s8 %v6566
    %v6707 = vunpack.c.1.s8 %v6563
    %v6708 = vunpack.c.1.s8 %v6564
    %v6709 = vunpack.c.1.s8 %v6565
    %v6710 = vunpack.c.1.s8 %v6566
    %v6711 = vunpack.c.2.s8 %v6563
    %v6712 = vunpack.c.2.s8 %v6564
    %v6713 = vunpack.c.2.s8 %v6565
    %v6714 = vunpack.c.2.s8 %v6566
    %v6715 = vunpack.c.3.s8 %v6563
    %v6716 = vunpack.c.3.s8 %v6564
    %v6717 = vunpack.c.3.s8 %v6565
    %v6718 = vunpack.c.3.s8 %v6566
    %v6719 = vunpack.c.0.s8 %v6567
    %v6720 = vunpack.c.0.s8 %v6568
    %v6721 = vunpack.c.0.s8 %v6569
    %v6722 = vunpack.c.0.s8 %v6570
    %v6723 = vunpack.c.1.s8 %v6567
    %v6724 = vunpack.c.1.s8 %v6568
    %v6725 = vunpack.c.1.s8 %v6569
    %v6726 = vunpack.c.1.s8 %v6570
    %v6727 = vunpack.c.2.s8 %v6567
    %v6728 = vunpack.c.2.s8 %v6568
    %v6729 = vunpack.c.2.s8 %v6569
    %v6730 = vunpack.c.2.s8 %v6570
    %v6731 = vunpack.c.3.s8 %v6567
    %v6732 = vunpack.c.3.s8 %v6568
    %v6733 = vunpack.c.3.s8 %v6569
    %v6734 = vunpack.c.3.s8 %v6570
    %v6735 = vunpack.c.0.s8 %v6571
    %v6736 = vunpack.c.0.s8 %v6572
    %v6737 = vunpack.c.0.s8 %v6573
    %v6738 = vunpack.c.0.s8 %v6574
    %v6739 = vunpack.c.1.s8 %v6571
    %v6740 = vunpack.c.1.s8 %v6572
    %v6741 = vunpack.c.1.s8 %v6573
    %v6742 = vunpack.c.1.s8 %v6574
    %v6743 = vunpack.c.2.s8 %v6571
    %v6744 = vunpack.c.2.s8 %v6572
    %v6745 = vunpack.c.2.s8 %v6573
    %v6746 = vunpack.c.2.s8 %v6574
    %v6747 = vunpack.c.3.s8 %v6571
    %v6748 = vunpack.c.3.s8 %v6572
    %v6749 = vunpack.c.3.s8 %v6573
    %v6750 = vunpack.c.3.s8 %v6574
    %v6751 = vunpack.c.0.s8 %v6575
    %v6752 = vunpack.c.0.s8 %v6576
    %v6753 = vunpack.c.0.s8 %v6577
    %v6754 = vunpack.c.0.s8 %v6578
    %v6755 = vunpack.c.1.s8 %v6575
    %v6756 = vunpack.c.1.s8 %v6576
    %v6757 = vunpack.c.1.s8 %v6577
    %v6758 = vunpack.c.1.s8 %v6578
    %v6759 = vunpack.c.2.s8 %v6575
    %v6760 = vunpack.c.2.s8 %v6576
    %v6761 = vunpack.c.2.s8 %v6577
    %v6762 = vunpack.c.2.s8 %v6578
    %v6763 = vunpack.c.3.s8 %v6575
    %v6764 = vunpack.c.3.s8 %v6576
    %v6765 = vunpack.c.3.s8 %v6577
    %v6766 = vunpack.c.3.s8 %v6578
    %v6767 = vunpack.c.0.s8 %v6579
    %v6768 = vunpack.c.0.s8 %v6580
    %v6769 = vunpack.c.0.s8 %v6581
    %v6770 = vunpack.c.0.s8 %v6582
    %v6771 = vunpack.c.1.s8 %v6579
    %v6772 = vunpack.c.1.s8 %v6580
    %v6773 = vunpack.c.1.s8 %v6581
    %v6774 = vunpack.c.1.s8 %v6582
    %v6775 = vunpack.c.2.s8 %v6579
    %v6776 = vunpack.c.2.s8 %v6580
    %v6777 = vunpack.c.2.s8 %v6581
    %v6778 = vunpack.c.2.s8 %v6582
    %v6779 = vunpack.c.3.s8 %v6579
    %v6780 = vunpack.c.3.s8 %v6580
    %v6781 = vunpack.c.3.s8 %v6581
    %v6782 = vunpack.c.3.s8 %v6582
    %v6783 = vunpack.c.0.s8 %v6583
    %v6784 = vunpack.c.0.s8 %v6584
    %v6785 = vunpack.c.0.s8 %v6585
    %v6786 = vunpack.c.0.s8 %v6586
    %v6787 = vunpack.c.1.s8 %v6583
    %v6788 = vunpack.c.1.s8 %v6584
    %v6789 = vunpack.c.1.s8 %v6585
    %v6790 = vunpack.c.1.s8 %v6586
    %v6791 = vunpack.c.2.s8 %v6583
    %v6792 = vunpack.c.2.s8 %v6584
    %v6793 = vunpack.c.2.s8 %v6585
    %v6794 = vunpack.c.2.s8 %v6586
    %v6795 = vunpack.c.3.s8 %v6583
    %v6796 = vunpack.c.3.s8 %v6584
    %v6797 = vunpack.c.3.s8 %v6585
    %v6798 = vunpack.c.3.s8 %v6586
    %v6799 = vunpack.c.0.s8 %v6587
    %v6800 = vunpack.c.0.s8 %v6588
    %v6801 = vunpack.c.0.s8 %v6589
    %v6802 = vunpack.c.0.s8 %v6590
    %v6803 = vunpack.c.1.s8 %v6587
    %v6804 = vunpack.c.1.s8 %v6588
    %v6805 = vunpack.c.1.s8 %v6589
    %v6806 = vunpack.c.1.s8 %v6590
    %v6807 = vunpack.c.2.s8 %v6587
    %v6808 = vunpack.c.2.s8 %v6588
    %v6809 = vunpack.c.2.s8 %v6589
    %v6810 = vunpack.c.2.s8 %v6590
    %v6811 = vunpack.c.3.s8 %v6587
    %v6812 = vunpack.c.3.s8 %v6588
    %v6813 = vunpack.c.3.s8 %v6589
    %v6814 = vunpack.c.3.s8 %v6590
    %v6815 = vunpack.c.0.s8 %v6591
    %v6816 = vunpack.c.0.s8 %v6592
    %v6817 = vunpack.c.0.s8 %v6593
    %v6818 = vunpack.c.0.s8 %v6594
    %v6819 = vunpack.c.1.s8 %v6591
    %v6820 = vunpack.c.1.s8 %v6592
    %v6821 = vunpack.c.1.s8 %v6593
    %v6822 = vunpack.c.1.s8 %v6594
    %v6823 = vunpack.c.2.s8 %v6591
    %v6824 = vunpack.c.2.s8 %v6592
    %v6825 = vunpack.c.2.s8 %v6593
    %v6826 = vunpack.c.2.s8 %v6594
    %v6827 = vunpack.c.3.s8 %v6591
    %v6828 = vunpack.c.3.s8 %v6592
    %v6829 = vunpack.c.3.s8 %v6593
    %v6830 = vunpack.c.3.s8 %v6594
    %v6831 = vunpack.c.0.s8 %v6595
    %v6832 = vunpack.c.0.s8 %v6596
    %v6833 = vunpack.c.0.s8 %v6597
    %v6834 = vunpack.c.0.s8 %v6598
    %v6835 = vunpack.c.1.s8 %v6595
    %v6836 = vunpack.c.1.s8 %v6596
    %v6837 = vunpack.c.1.s8 %v6597
    %v6838 = vunpack.c.1.s8 %v6598
    %v6839 = vunpack.c.2.s8 %v6595
    %v6840 = vunpack.c.2.s8 %v6596
    %v6841 = vunpack.c.2.s8 %v6597
    %v6842 = vunpack.c.2.s8 %v6598
    %v6843 = vunpack.c.3.s8 %v6595
    %v6844 = vunpack.c.3.s8 %v6596
    %v6845 = vunpack.c.3.s8 %v6597
    %v6846 = vunpack.c.3.s8 %v6598
    %v6847 = vunpack.c.0.s8 %v6599
    %v6848 = vunpack.c.0.s8 %v6600
    %v6849 = vunpack.c.0.s8 %v6601
    %v6850 = vunpack.c.0.s8 %v6602
    %v6851 = vunpack.c.1.s8 %v6599
    %v6852 = vunpack.c.1.s8 %v6600
    %v6853 = vunpack.c.1.s8 %v6601
    %v6854 = vunpack.c.1.s8 %v6602
    %v6855 = vunpack.c.2.s8 %v6599
    %v6856 = vunpack.c.2.s8 %v6600
    %v6857 = vunpack.c.2.s8 %v6601
    %v6858 = vunpack.c.2.s8 %v6602
    %v6859 = vunpack.c.3.s8 %v6599
    %v6860 = vunpack.c.3.s8 %v6600
    %v6861 = vunpack.c.3.s8 %v6601
    %v6862 = vunpack.c.3.s8 %v6602
    %v6863 = vunpack.c.0.s8 %v6603
    %v6864 = vunpack.c.0.s8 %v6604
    %v6865 = vunpack.c.0.s8 %v6605
    %v6866 = vunpack.c.0.s8 %v6606
    %v6867 = vunpack.c.1.s8 %v6603
    %v6868 = vunpack.c.1.s8 %v6604
    %v6869 = vunpack.c.1.s8 %v6605
    %v6870 = vunpack.c.1.s8 %v6606
    %v6871 = vunpack.c.2.s8 %v6603
    %v6872 = vunpack.c.2.s8 %v6604
    %v6873 = vunpack.c.2.s8 %v6605
    %v6874 = vunpack.c.2.s8 %v6606
    %v6875 = vunpack.c.3.s8 %v6603
    %v6876 = vunpack.c.3.s8 %v6604
    %v6877 = vunpack.c.3.s8 %v6605
    %v6878 = vunpack.c.3.s8 %v6606
    %v6879 = vunpack.c.0.s8 %v6607
    %v6880 = vunpack.c.0.s8 %v6608
    %v6881 = vunpack.c.0.s8 %v6609
    %v6882 = vunpack.c.0.s8 %v6610
    %v6883 = vunpack.c.1.s8 %v6607
    %v6884 = vunpack.c.1.s8 %v6608
    %v6885 = vunpack.c.1.s8 %v6609
    %v6886 = vunpack.c.1.s8 %v6610
    %v6887 = vunpack.c.2.s8 %v6607
    %v6888 = vunpack.c.2.s8 %v6608
    %v6889 = vunpack.c.2.s8 %v6609
    %v6890 = vunpack.c.2.s8 %v6610
    %v6891 = vunpack.c.3.s8 %v6607
    %v6892 = vunpack.c.3.s8 %v6608
    %v6893 = vunpack.c.3.s8 %v6609
    %v6894 = vunpack.c.3.s8 %v6610
    %v6895 = vunpack.c.0.s8 %v6611
    %v6896 = vunpack.c.0.s8 %v6612
    %v6897 = vunpack.c.0.s8 %v6613
    %v6898 = vunpack.c.0.s8 %v6614
    %v6899 = vunpack.c.1.s8 %v6611
    %v6900 = vunpack.c.1.s8 %v6612
    %v6901 = vunpack.c.1.s8 %v6613
    %v6902 = vunpack.c.1.s8 %v6614
    %v6903 = vunpack.c.2.s8 %v6611
    %v6904 = vunpack.c.2.s8 %v6612
    %v6905 = vunpack.c.2.s8 %v6613
    %v6906 = vunpack.c.2.s8 %v6614
    %v6907 = vunpack.c.3.s8 %v6611
    %v6908 = vunpack.c.3.s8 %v6612
    %v6909 = vunpack.c.3.s8 %v6613
    %v6910 = vunpack.c.3.s8 %v6614
    %v6911 = vunpack.c.0.s8 %v6615
    %v6912 = vunpack.c.0.s8 %v6616
    %v6913 = vunpack.c.0.s8 %v6617
    %v6914 = vunpack.c.0.s8 %v6618
    %v6915 = vunpack.c.1.s8 %v6615
    %v6916 = vunpack.c.1.s8 %v6616
    %v6917 = vunpack.c.1.s8 %v6617
    %v6918 = vunpack.c.1.s8 %v6618
    %v6919 = vunpack.c.2.s8 %v6615
    %v6920 = vunpack.c.2.s8 %v6616
    %v6921 = vunpack.c.2.s8 %v6617
    %v6922 = vunpack.c.2.s8 %v6618
    %v6923 = vunpack.c.3.s8 %v6615
    %v6924 = vunpack.c.3.s8 %v6616
    %v6925 = vunpack.c.3.s8 %v6617
    %v6926 = vunpack.c.3.s8 %v6618
    %v6927 = vunpack.c.0.s8 %v6619
    %v6928 = vunpack.c.0.s8 %v6620
    %v6929 = vunpack.c.0.s8 %v6621
    %v6930 = vunpack.c.0.s8 %v6622
    %v6931 = vunpack.c.1.s8 %v6619
    %v6932 = vunpack.c.1.s8 %v6620
    %v6933 = vunpack.c.1.s8 %v6621
    %v6934 = vunpack.c.1.s8 %v6622
    %v6935 = vunpack.c.2.s8 %v6619
    %v6936 = vunpack.c.2.s8 %v6620
    %v6937 = vunpack.c.2.s8 %v6621
    %v6938 = vunpack.c.2.s8 %v6622
    %v6939 = vunpack.c.3.s8 %v6619
    %v6940 = vunpack.c.3.s8 %v6620
    %v6941 = vunpack.c.3.s8 %v6621
    %v6942 = vunpack.c.3.s8 %v6622
    %v6943 = vunpack.c.0.s8 %v6623
    %v6944 = vunpack.c.0.s8 %v6624
    %v6945 = vunpack.c.0.s8 %v6625
    %v6946 = vunpack.c.0.s8 %v6626
    %v6947 = vunpack.c.1.s8 %v6623
    %v6948 = vunpack.c.1.s8 %v6624
    %v6949 = vunpack.c.1.s8 %v6625
    %v6950 = vunpack.c.1.s8 %v6626
    %v6951 = vunpack.c.2.s8 %v6623
    %v6952 = vunpack.c.2.s8 %v6624
    %v6953 = vunpack.c.2.s8 %v6625
    %v6954 = vunpack.c.2.s8 %v6626
    %v6955 = vunpack.c.3.s8 %v6623
    %v6956 = vunpack.c.3.s8 %v6624
    %v6957 = vunpack.c.3.s8 %v6625
    %v6958 = vunpack.c.3.s8 %v6626
    %v6959 = vunpack.c.0.s8 %v6627
    %v6960 = vunpack.c.0.s8 %v6628
    %v6961 = vunpack.c.0.s8 %v6629
    %v6962 = vunpack.c.0.s8 %v6630
    %v6963 = vunpack.c.1.s8 %v6627
    %v6964 = vunpack.c.1.s8 %v6628
    %v6965 = vunpack.c.1.s8 %v6629
    %v6966 = vunpack.c.1.s8 %v6630
    %v6967 = vunpack.c.2.s8 %v6627
    %v6968 = vunpack.c.2.s8 %v6628
    %v6969 = vunpack.c.2.s8 %v6629
    %v6970 = vunpack.c.2.s8 %v6630
    %v6971 = vunpack.c.3.s8 %v6627
    %v6972 = vunpack.c.3.s8 %v6628
    %v6973 = vunpack.c.3.s8 %v6629
    %v6974 = vunpack.c.3.s8 %v6630
    %v6975 = vunpack.c.0.s8 %v6631
    %v6976 = vunpack.c.0.s8 %v6632
    %v6977 = vunpack.c.0.s8 %v6633
    %v6978 = vunpack.c.0.s8 %v6634
    %v6979 = vunpack.c.1.s8 %v6631
    %v6980 = vunpack.c.1.s8 %v6632
    %v6981 = vunpack.c.1.s8 %v6633
    %v6982 = vunpack.c.1.s8 %v6634
    %v6983 = vunpack.c.2.s8 %v6631
    %v6984 = vunpack.c.2.s8 %v6632
    %v6985 = vunpack.c.2.s8 %v6633
    %v6986 = vunpack.c.2.s8 %v6634
    %v6987 = vunpack.c.3.s8 %v6631
    %v6988 = vunpack.c.3.s8 %v6632
    %v6989 = vunpack.c.3.s8 %v6633
    %v6990 = vunpack.c.3.s8 %v6634
    %v6991 = vunpack.c.0.s8 %v6635
    %v6992 = vunpack.c.0.s8 %v6636
    %v6993 = vunpack.c.0.s8 %v6637
    %v6994 = vunpack.c.0.s8 %v6638
    %v6995 = vunpack.c.1.s8 %v6635
    %v6996 = vunpack.c.1.s8 %v6636
    %v6997 = vunpack.c.1.s8 %v6637
    %v6998 = vunpack.c.1.s8 %v6638
    %v6999 = vunpack.c.2.s8 %v6635
    %v7000 = vunpack.c.2.s8 %v6636
    %v7001 = vunpack.c.2.s8 %v6637
    %v7002 = vunpack.c.2.s8 %v6638
    %v7003 = vunpack.c.3.s8 %v6635
    %v7004 = vunpack.c.3.s8 %v6636
    %v7005 = vunpack.c.3.s8 %v6637
    %v7006 = vunpack.c.3.s8 %v6638
    %v7007 = vunpack.c.0.s8 %v6639
    %v7008 = vunpack.c.0.s8 %v6640
    %v7009 = vunpack.c.0.s8 %v6641
    %v7010 = vunpack.c.0.s8 %v6642
    %v7011 = vunpack.c.1.s8 %v6639
    %v7012 = vunpack.c.1.s8 %v6640
    %v7013 = vunpack.c.1.s8 %v6641
    %v7014 = vunpack.c.1.s8 %v6642
    %v7015 = vunpack.c.2.s8 %v6639
    %v7016 = vunpack.c.2.s8 %v6640
    %v7017 = vunpack.c.2.s8 %v6641
    %v7018 = vunpack.c.2.s8 %v6642
    %v7019 = vunpack.c.3.s8 %v6639
    %v7020 = vunpack.c.3.s8 %v6640
    %v7021 = vunpack.c.3.s8 %v6641
    %v7022 = vunpack.c.3.s8 %v6642
    %v7023 = vunpack.c.0.s8 %v6643
    %v7024 = vunpack.c.0.s8 %v6644
    %v7025 = vunpack.c.0.s8 %v6645
    %v7026 = vunpack.c.0.s8 %v6646
    %v7027 = vunpack.c.1.s8 %v6643
    %v7028 = vunpack.c.1.s8 %v6644
    %v7029 = vunpack.c.1.s8 %v6645
    %v7030 = vunpack.c.1.s8 %v6646
    %v7031 = vunpack.c.2.s8 %v6643
    %v7032 = vunpack.c.2.s8 %v6644
    %v7033 = vunpack.c.2.s8 %v6645
    %v7034 = vunpack.c.2.s8 %v6646
    %v7035 = vunpack.c.3.s8 %v6643
    %v7036 = vunpack.c.3.s8 %v6644
    %v7037 = vunpack.c.3.s8 %v6645
    %v7038 = vunpack.c.3.s8 %v6646
    %v7039 = vunpack.c.0.s8 %v6647
    %v7040 = vunpack.c.0.s8 %v6648
    %v7041 = vunpack.c.0.s8 %v6649
    %v7042 = vunpack.c.0.s8 %v6650
    %v7043 = vunpack.c.1.s8 %v6647
    %v7044 = vunpack.c.1.s8 %v6648
    %v7045 = vunpack.c.1.s8 %v6649
    %v7046 = vunpack.c.1.s8 %v6650
    %v7047 = vunpack.c.2.s8 %v6647
    %v7048 = vunpack.c.2.s8 %v6648
    %v7049 = vunpack.c.2.s8 %v6649
    %v7050 = vunpack.c.2.s8 %v6650
    %v7051 = vunpack.c.3.s8 %v6647
    %v7052 = vunpack.c.3.s8 %v6648
    %v7053 = vunpack.c.3.s8 %v6649
    %v7054 = vunpack.c.3.s8 %v6650
    %v7055 = vunpack.c.0.s8 %v6651
    %v7056 = vunpack.c.0.s8 %v6652
    %v7057 = vunpack.c.0.s8 %v6653
    %v7058 = vunpack.c.0.s8 %v6654
    %v7059 = vunpack.c.1.s8 %v6651
    %v7060 = vunpack.c.1.s8 %v6652
    %v7061 = vunpack.c.1.s8 %v6653
    %v7062 = vunpack.c.1.s8 %v6654
    %v7063 = vunpack.c.2.s8 %v6651
    %v7064 = vunpack.c.2.s8 %v6652
    %v7065 = vunpack.c.2.s8 %v6653
    %v7066 = vunpack.c.2.s8 %v6654
    %v7067 = vunpack.c.3.s8 %v6651
    %v7068 = vunpack.c.3.s8 %v6652
    %v7069 = vunpack.c.3.s8 %v6653
    %v7070 = vunpack.c.3.s8 %v6654
    %v7071 = vunpack.c.0.s8 %v6655
    %v7072 = vunpack.c.0.s8 %v6656
    %v7073 = vunpack.c.0.s8 %v6657
    %v7074 = vunpack.c.0.s8 %v6658
    %v7075 = vunpack.c.1.s8 %v6655
    %v7076 = vunpack.c.1.s8 %v6656
    %v7077 = vunpack.c.1.s8 %v6657
    %v7078 = vunpack.c.1.s8 %v6658
    %v7079 = vunpack.c.2.s8 %v6655
    %v7080 = vunpack.c.2.s8 %v6656
    %v7081 = vunpack.c.2.s8 %v6657
    %v7082 = vunpack.c.2.s8 %v6658
    %v7083 = vunpack.c.3.s8 %v6655
    %v7084 = vunpack.c.3.s8 %v6656
    %v7085 = vunpack.c.3.s8 %v6657
    %v7086 = vunpack.c.3.s8 %v6658
    %v7087 = vunpack.c.0.s8 %v6659
    %v7088 = vunpack.c.0.s8 %v6660
    %v7089 = vunpack.c.0.s8 %v6661
    %v7090 = vunpack.c.0.s8 %v6662
    %v7091 = vunpack.c.1.s8 %v6659
    %v7092 = vunpack.c.1.s8 %v6660
    %v7093 = vunpack.c.1.s8 %v6661
    %v7094 = vunpack.c.1.s8 %v6662
    %v7095 = vunpack.c.2.s8 %v6659
    %v7096 = vunpack.c.2.s8 %v6660
    %v7097 = vunpack.c.2.s8 %v6661
    %v7098 = vunpack.c.2.s8 %v6662
    %v7099 = vunpack.c.3.s8 %v6659
    %v7100 = vunpack.c.3.s8 %v6660
    %v7101 = vunpack.c.3.s8 %v6661
    %v7102 = vunpack.c.3.s8 %v6662
    %v7103 = vunpack.c.0.s8 %v6663
    %v7104 = vunpack.c.0.s8 %v6664
    %v7105 = vunpack.c.0.s8 %v6665
    %v7106 = vunpack.c.0.s8 %v6666
    %v7107 = vunpack.c.1.s8 %v6663
    %v7108 = vunpack.c.1.s8 %v6664
    %v7109 = vunpack.c.1.s8 %v6665
    %v7110 = vunpack.c.1.s8 %v6666
    %v7111 = vunpack.c.2.s8 %v6663
    %v7112 = vunpack.c.2.s8 %v6664
    %v7113 = vunpack.c.2.s8 %v6665
    %v7114 = vunpack.c.2.s8 %v6666
    %v7115 = vunpack.c.3.s8 %v6663
    %v7116 = vunpack.c.3.s8 %v6664
    %v7117 = vunpack.c.3.s8 %v6665
    %v7118 = vunpack.c.3.s8 %v6666
    %v7119 = vunpack.c.0.s8 %v6667
    %v7120 = vunpack.c.0.s8 %v6668
    %v7121 = vunpack.c.0.s8 %v6669
    %v7122 = vunpack.c.0.s8 %v6670
    %v7123 = vunpack.c.1.s8 %v6667
    %v7124 = vunpack.c.1.s8 %v6668
    %v7125 = vunpack.c.1.s8 %v6669
    %v7126 = vunpack.c.1.s8 %v6670
    %v7127 = vunpack.c.2.s8 %v6667
    %v7128 = vunpack.c.2.s8 %v6668
    %v7129 = vunpack.c.2.s8 %v6669
    %v7130 = vunpack.c.2.s8 %v6670
    %v7131 = vunpack.c.3.s8 %v6667
    %v7132 = vunpack.c.3.s8 %v6668
    %v7133 = vunpack.c.3.s8 %v6669
    %v7134 = vunpack.c.3.s8 %v6670
    %v7135 = vunpack.c.0.s8 %v6671
    %v7136 = vunpack.c.0.s8 %v6672
    %v7137 = vunpack.c.0.s8 %v6673
    %v7138 = vunpack.c.0.s8 %v6674
    %v7139 = vunpack.c.1.s8 %v6671
    %v7140 = vunpack.c.1.s8 %v6672
    %v7141 = vunpack.c.1.s8 %v6673
    %v7142 = vunpack.c.1.s8 %v6674
    %v7143 = vunpack.c.2.s8 %v6671
    %v7144 = vunpack.c.2.s8 %v6672
    %v7145 = vunpack.c.2.s8 %v6673
    %v7146 = vunpack.c.2.s8 %v6674
    %v7147 = vunpack.c.3.s8 %v6671
    %v7148 = vunpack.c.3.s8 %v6672
    %v7149 = vunpack.c.3.s8 %v6673
    %v7150 = vunpack.c.3.s8 %v6674
    %v7151 = vunpack.c.0.s8 %v6675
    %v7152 = vunpack.c.0.s8 %v6676
    %v7153 = vunpack.c.0.s8 %v6677
    %v7154 = vunpack.c.0.s8 %v6678
    %v7155 = vunpack.c.1.s8 %v6675
    %v7156 = vunpack.c.1.s8 %v6676
    %v7157 = vunpack.c.1.s8 %v6677
    %v7158 = vunpack.c.1.s8 %v6678
    %v7159 = vunpack.c.2.s8 %v6675
    %v7160 = vunpack.c.2.s8 %v6676
    %v7161 = vunpack.c.2.s8 %v6677
    %v7162 = vunpack.c.2.s8 %v6678
    %v7163 = vunpack.c.3.s8 %v6675
    %v7164 = vunpack.c.3.s8 %v6676
    %v7165 = vunpack.c.3.s8 %v6677
    %v7166 = vunpack.c.3.s8 %v6678
    %v7167 = vunpack.c.0.s8 %v6679
    %v7168 = vunpack.c.0.s8 %v6680
    %v7169 = vunpack.c.0.s8 %v6681
    %v7170 = vunpack.c.0.s8 %v6682
    %v7171 = vunpack.c.1.s8 %v6679
    %v7172 = vunpack.c.1.s8 %v6680
    %v7173 = vunpack.c.1.s8 %v6681
    %v7174 = vunpack.c.1.s8 %v6682
    %v7175 = vunpack.c.2.s8 %v6679
    %v7176 = vunpack.c.2.s8 %v6680
    %v7177 = vunpack.c.2.s8 %v6681
    %v7178 = vunpack.c.2.s8 %v6682
    %v7179 = vunpack.c.3.s8 %v6679
    %v7180 = vunpack.c.3.s8 %v6680
    %v7181 = vunpack.c.3.s8 %v6681
    %v7182 = vunpack.c.3.s8 %v6682
    %v7183 = vunpack.c.0.s8 %v6683
    %v7184 = vunpack.c.0.s8 %v6684
    %v7185 = vunpack.c.0.s8 %v6685
    %v7186 = vunpack.c.0.s8 %v6686
    %v7187 = vunpack.c.1.s8 %v6683
    %v7188 = vunpack.c.1.s8 %v6684
    %v7189 = vunpack.c.1.s8 %v6685
    %v7190 = vunpack.c.1.s8 %v6686
    %v7191 = vunpack.c.2.s8 %v6683
    %v7192 = vunpack.c.2.s8 %v6684
    %v7193 = vunpack.c.2.s8 %v6685
    %v7194 = vunpack.c.2.s8 %v6686
    %v7195 = vunpack.c.3.s8 %v6683
    %v7196 = vunpack.c.3.s8 %v6684
    %v7197 = vunpack.c.3.s8 %v6685
    %v7198 = vunpack.c.3.s8 %v6686
    %v7199 = vcvt.s32.f32 %v6687
    %v7200 = vcvt.s32.f32 %v6688
    %v7201 = vcvt.s32.f32 %v6689
    %v7202 = vcvt.s32.f32 %v6690
    %v7203 = vcvt.s32.f32 %v6691
    %v7204 = vcvt.s32.f32 %v6692
    %v7205 = vcvt.s32.f32 %v6693
    %v7206 = vcvt.s32.f32 %v6694
    %v7207 = vcvt.s32.f32 %v6695
    %v7208 = vcvt.s32.f32 %v6696
    %v7209 = vcvt.s32.f32 %v6697
    %v7210 = vcvt.s32.f32 %v6698
    %v7211 = vcvt.s32.f32 %v6699
    %v7212 = vcvt.s32.f32 %v6700
    %v7213 = vcvt.s32.f32 %v6701
    %v7214 = vcvt.s32.f32 %v6702
    %v7215 = vcvt.s32.f32 %v6703
    %v7216 = vcvt.s32.f32 %v6704
    %v7217 = vcvt.s32.f32 %v6705
    %v7218 = vcvt.s32.f32 %v6706
    %v7219 = vcvt.s32.f32 %v6707
    %v7220 = vcvt.s32.f32 %v6708
    %v7221 = vcvt.s32.f32 %v6709
    %v7222 = vcvt.s32.f32 %v6710
    %v7223 = vcvt.s32.f32 %v6711
    %v7224 = vcvt.s32.f32 %v6712
    %v7225 = vcvt.s32.f32 %v6713
    %v7226 = vcvt.s32.f32 %v6714
    %v7227 = vcvt.s32.f32 %v6715
    %v7228 = vcvt.s32.f32 %v6716
    %v7229 = vcvt.s32.f32 %v6717
    %v7230 = vcvt.s32.f32 %v6718
    %v7231 = vcvt.s32.f32 %v6719
    %v7232 = vcvt.s32.f32 %v6720
    %v7233 = vcvt.s32.f32 %v6721
    %v7234 = vcvt.s32.f32 %v6722
    %v7235 = vcvt.s32.f32 %v6723
    %v7236 = vcvt.s32.f32 %v6724
    %v7237 = vcvt.s32.f32 %v6725
    %v7238 = vcvt.s32.f32 %v6726
    %v7239 = vcvt.s32.f32 %v6727
    %v7240 = vcvt.s32.f32 %v6728
    %v7241 = vcvt.s32.f32 %v6729
    %v7242 = vcvt.s32.f32 %v6730
    %v7243 = vcvt.s32.f32 %v6731
    %v7244 = vcvt.s32.f32 %v6732
    %v7245 = vcvt.s32.f32 %v6733
    %v7246 = vcvt.s32.f32 %v6734
    %v7247 = vcvt.s32.f32 %v6735
    %v7248 = vcvt.s32.f32 %v6736
    %v7249 = vcvt.s32.f32 %v6737
    %v7250 = vcvt.s32.f32 %v6738
    %v7251 = vcvt.s32.f32 %v6739
    %v7252 = vcvt.s32.f32 %v6740
    %v7253 = vcvt.s32.f32 %v6741
    %v7254 = vcvt.s32.f32 %v6742
    %v7255 = vcvt.s32.f32 %v6743
    %v7256 = vcvt.s32.f32 %v6744
    %v7257 = vcvt.s32.f32 %v6745
    %v7258 = vcvt.s32.f32 %v6746
    %v7259 = vcvt.s32.f32 %v6747
    %v7260 = vcvt.s32.f32 %v6748
    %v7261 = vcvt.s32.f32 %v6749
    %v7262 = vcvt.s32.f32 %v6750
    %v7263 = vcvt.s32.f32 %v6751
    %v7264 = vcvt.s32.f32 %v6752
    %v7265 = vcvt.s32.f32 %v6753
    %v7266 = vcvt.s32.f32 %v6754
    %v7267 = vcvt.s32.f32 %v6755
    %v7268 = vcvt.s32.f32 %v6756
    %v7269 = vcvt.s32.f32 %v6757
    %v7270 = vcvt.s32.f32 %v6758
    %v7271 = vcvt.s32.f32 %v6759
    %v7272 = vcvt.s32.f32 %v6760
    %v7273 = vcvt.s32.f32 %v6761
    %v7274 = vcvt.s32.f32 %v6762
    %v7275 = vcvt.s32.f32 %v6763
    %v7276 = vcvt.s32.f32 %v6764
    %v7277 = vcvt.s32.f32 %v6765
    %v7278 = vcvt.s32.f32 %v6766
    %v7279 = vcvt.s32.f32 %v6767
    %v7280 = vcvt.s32.f32 %v6768
    %v7281 = vcvt.s32.f32 %v6769
    %v7282 = vcvt.s32.f32 %v6770
    %v7283 = vcvt.s32.f32 %v6771
    %v7284 = vcvt.s32.f32 %v6772
    %v7285 = vcvt.s32.f32 %v6773
    %v7286 = vcvt.s32.f32 %v6774
    %v7287 = vcvt.s32.f32 %v6775
    %v7288 = vcvt.s32.f32 %v6776
    %v7289 = vcvt.s32.f32 %v6777
    %v7290 = vcvt.s32.f32 %v6778
    %v7291 = vcvt.s32.f32 %v6779
    %v7292 = vcvt.s32.f32 %v6780
    %v7293 = vcvt.s32.f32 %v6781
    %v7294 = vcvt.s32.f32 %v6782
    %v7295 = vcvt.s32.f32 %v6783
    %v7296 = vcvt.s32.f32 %v6784
    %v7297 = vcvt.s32.f32 %v6785
    %v7298 = vcvt.s32.f32 %v6786
    %v7299 = vcvt.s32.f32 %v6787
    %v7300 = vcvt.s32.f32 %v6788
    %v7301 = vcvt.s32.f32 %v6789
    %v7302 = vcvt.s32.f32 %v6790
    %v7303 = vcvt.s32.f32 %v6791
    %v7304 = vcvt.s32.f32 %v6792
    %v7305 = vcvt.s32.f32 %v6793
    %v7306 = vcvt.s32.f32 %v6794
    %v7307 = vcvt.s32.f32 %v6795
    %v7308 = vcvt.s32.f32 %v6796
    %v7309 = vcvt.s32.f32 %v6797
    %v7310 = vcvt.s32.f32 %v6798
    %v7311 = vcvt.s32.f32 %v6799
    %v7312 = vcvt.s32.f32 %v6800
    %v7313 = vcvt.s32.f32 %v6801
    %v7314 = vcvt.s32.f32 %v6802
    %v7315 = vcvt.s32.f32 %v6803
    %v7316 = vcvt.s32.f32 %v6804
    %v7317 = vcvt.s32.f32 %v6805
    %v7318 = vcvt.s32.f32 %v6806
    %v7319 = vcvt.s32.f32 %v6807
    %v7320 = vcvt.s32.f32 %v6808
    %v7321 = vcvt.s32.f32 %v6809
    %v7322 = vcvt.s32.f32 %v6810
    %v7323 = vcvt.s32.f32 %v6811
    %v7324 = vcvt.s32.f32 %v6812
    %v7325 = vcvt.s32.f32 %v6813
    %v7326 = vcvt.s32.f32 %v6814
    %v7327 = vcvt.s32.f32 %v6815
    %v7328 = vcvt.s32.f32 %v6816
    %v7329 = vcvt.s32.f32 %v6817
    %v7330 = vcvt.s32.f32 %v6818
    %v7331 = vcvt.s32.f32 %v6819
    %v7332 = vcvt.s32.f32 %v6820
    %v7333 = vcvt.s32.f32 %v6821
    %v7334 = vcvt.s32.f32 %v6822
    %v7335 = vcvt.s32.f32 %v6823
    %v7336 = vcvt.s32.f32 %v6824
    %v7337 = vcvt.s32.f32 %v6825
    %v7338 = vcvt.s32.f32 %v6826
    %v7339 = vcvt.s32.f32 %v6827
    %v7340 = vcvt.s32.f32 %v6828
    %v7341 = vcvt.s32.f32 %v6829
    %v7342 = vcvt.s32.f32 %v6830
    %v7343 = vcvt.s32.f32 %v6831
    %v7344 = vcvt.s32.f32 %v6832
    %v7345 = vcvt.s32.f32 %v6833
    %v7346 = vcvt.s32.f32 %v6834
    %v7347 = vcvt.s32.f32 %v6835
    %v7348 = vcvt.s32.f32 %v6836
    %v7349 = vcvt.s32.f32 %v6837
    %v7350 = vcvt.s32.f32 %v6838
    %v7351 = vcvt.s32.f32 %v6839
    %v7352 = vcvt.s32.f32 %v6840
    %v7353 = vcvt.s32.f32 %v6841
    %v7354 = vcvt.s32.f32 %v6842
    %v7355 = vcvt.s32.f32 %v6843
    %v7356 = vcvt.s32.f32 %v6844
    %v7357 = vcvt.s32.f32 %v6845
    %v7358 = vcvt.s32.f32 %v6846
    %v7359 = vcvt.s32.f32 %v6847
    %v7360 = vcvt.s32.f32 %v6848
    %v7361 = vcvt.s32.f32 %v6849
    %v7362 = vcvt.s32.f32 %v6850
    %v7363 = vcvt.s32.f32 %v6851
    %v7364 = vcvt.s32.f32 %v6852
    %v7365 = vcvt.s32.f32 %v6853
    %v7366 = vcvt.s32.f32 %v6854
    %v7367 = vcvt.s32.f32 %v6855
    %v7368 = vcvt.s32.f32 %v6856
    %v7369 = vcvt.s32.f32 %v6857
    %v7370 = vcvt.s32.f32 %v6858
    %v7371 = vcvt.s32.f32 %v6859
    %v7372 = vcvt.s32.f32 %v6860
    %v7373 = vcvt.s32.f32 %v6861
    %v7374 = vcvt.s32.f32 %v6862
    %v7375 = vcvt.s32.f32 %v6863
    %v7376 = vcvt.s32.f32 %v6864
    %v7377 = vcvt.s32.f32 %v6865
    %v7378 = vcvt.s32.f32 %v6866
    %v7379 = vcvt.s32.f32 %v6867
    %v7380 = vcvt.s32.f32 %v6868
    %v7381 = vcvt.s32.f32 %v6869
    %v7382 = vcvt.s32.f32 %v6870
    %v7383 = vcvt.s32.f32 %v6871
    %v7384 = vcvt.s32.f32 %v6872
    %v7385 = vcvt.s32.f32 %v6873
    %v7386 = vcvt.s32.f32 %v6874
    %v7387 = vcvt.s32.f32 %v6875
    %v7388 = vcvt.s32.f32 %v6876
    %v7389 = vcvt.s32.f32 %v6877
    %v7390 = vcvt.s32.f32 %v6878
    %v7391 = vcvt.s32.f32 %v6879
    %v7392 = vcvt.s32.f32 %v6880
    %v7393 = vcvt.s32.f32 %v6881
    %v7394 = vcvt.s32.f32 %v6882
    %v7395 = vcvt.s32.f32 %v6883
    %v7396 = vcvt.s32.f32 %v6884
    %v7397 = vcvt.s32.f32 %v6885
    %v7398 = vcvt.s32.f32 %v6886
    %v7399 = vcvt.s32.f32 %v6887
    %v7400 = vcvt.s32.f32 %v6888
    %v7401 = vcvt.s32.f32 %v6889
    %v7402 = vcvt.s32.f32 %v6890
    %v7403 = vcvt.s32.f32 %v6891
    %v7404 = vcvt.s32.f32 %v6892
    %v7405 = vcvt.s32.f32 %v6893
    %v7406 = vcvt.s32.f32 %v6894
    %v7407 = vcvt.s32.f32 %v6895
    %v7408 = vcvt.s32.f32 %v6896
    %v7409 = vcvt.s32.f32 %v6897
    %v7410 = vcvt.s32.f32 %v6898
    %v7411 = vcvt.s32.f32 %v6899
    %v7412 = vcvt.s32.f32 %v6900
    %v7413 = vcvt.s32.f32 %v6901
    %v7414 = vcvt.s32.f32 %v6902
    %v7415 = vcvt.s32.f32 %v6903
    %v7416 = vcvt.s32.f32 %v6904
    %v7417 = vcvt.s32.f32 %v6905
    %v7418 = vcvt.s32.f32 %v6906
    %v7419 = vcvt.s32.f32 %v6907
    %v7420 = vcvt.s32.f32 %v6908
    %v7421 = vcvt.s32.f32 %v6909
    %v7422 = vcvt.s32.f32 %v6910
    %v7423 = vcvt.s32.f32 %v6911
    %v7424 = vcvt.s32.f32 %v6912
    %v7425 = vcvt.s32.f32 %v6913
    %v7426 = vcvt.s32.f32 %v6914
    %v7427 = vcvt.s32.f32 %v6915
    %v7428 = vcvt.s32.f32 %v6916
    %v7429 = vcvt.s32.f32 %v6917
    %v7430 = vcvt.s32.f32 %v6918
    %v7431 = vcvt.s32.f32 %v6919
    %v7432 = vcvt.s32.f32 %v6920
    %v7433 = vcvt.s32.f32 %v6921
    %v7434 = vcvt.s32.f32 %v6922
    %v7435 = vcvt.s32.f32 %v6923
    %v7436 = vcvt.s32.f32 %v6924
    %v7437 = vcvt.s32.f32 %v6925
    %v7438 = vcvt.s32.f32 %v6926
    %v7439 = vcvt.s32.f32 %v6927
    %v7440 = vcvt.s32.f32 %v6928
    %v7441 = vcvt.s32.f32 %v6929
    %v7442 = vcvt.s32.f32 %v6930
    %v7443 = vcvt.s32.f32 %v6931
    %v7444 = vcvt.s32.f32 %v6932
    %v7445 = vcvt.s32.f32 %v6933
    %v7446 = vcvt.s32.f32 %v6934
    %v7447 = vcvt.s32.f32 %v6935
    %v7448 = vcvt.s32.f32 %v6936
    %v7449 = vcvt.s32.f32 %v6937
    %v7450 = vcvt.s32.f32 %v6938
    %v7451 = vcvt.s32.f32 %v6939
    %v7452 = vcvt.s32.f32 %v6940
    %v7453 = vcvt.s32.f32 %v6941
    %v7454 = vcvt.s32.f32 %v6942
    %v7455 = vcvt.s32.f32 %v6943
    %v7456 = vcvt.s32.f32 %v6944
    %v7457 = vcvt.s32.f32 %v6945
    %v7458 = vcvt.s32.f32 %v6946
    %v7459 = vcvt.s32.f32 %v6947
    %v7460 = vcvt.s32.f32 %v6948
    %v7461 = vcvt.s32.f32 %v6949
    %v7462 = vcvt.s32.f32 %v6950
    %v7463 = vcvt.s32.f32 %v6951
    %v7464 = vcvt.s32.f32 %v6952
    %v7465 = vcvt.s32.f32 %v6953
    %v7466 = vcvt.s32.f32 %v6954
    %v7467 = vcvt.s32.f32 %v6955
    %v7468 = vcvt.s32.f32 %v6956
    %v7469 = vcvt.s32.f32 %v6957
    %v7470 = vcvt.s32.f32 %v6958
    %v7471 = vcvt.s32.f32 %v6959
    %v7472 = vcvt.s32.f32 %v6960
    %v7473 = vcvt.s32.f32 %v6961
    %v7474 = vcvt.s32.f32 %v6962
    %v7475 = vcvt.s32.f32 %v6963
    %v7476 = vcvt.s32.f32 %v6964
    %v7477 = vcvt.s32.f32 %v6965
    %v7478 = vcvt.s32.f32 %v6966
    %v7479 = vcvt.s32.f32 %v6967
    %v7480 = vcvt.s32.f32 %v6968
    %v7481 = vcvt.s32.f32 %v6969
    %v7482 = vcvt.s32.f32 %v6970
    %v7483 = vcvt.s32.f32 %v6971
    %v7484 = vcvt.s32.f32 %v6972
    %v7485 = vcvt.s32.f32 %v6973
    %v7486 = vcvt.s32.f32 %v6974
    %v7487 = vcvt.s32.f32 %v6975
    %v7488 = vcvt.s32.f32 %v6976
    %v7489 = vcvt.s32.f32 %v6977
    %v7490 = vcvt.s32.f32 %v6978
    %v7491 = vcvt.s32.f32 %v6979
    %v7492 = vcvt.s32.f32 %v6980
    %v7493 = vcvt.s32.f32 %v6981
    %v7494 = vcvt.s32.f32 %v6982
    %v7495 = vcvt.s32.f32 %v6983
    %v7496 = vcvt.s32.f32 %v6984
    %v7497 = vcvt.s32.f32 %v6985
    %v7498 = vcvt.s32.f32 %v6986
    %v7499 = vcvt.s32.f32 %v6987
    %v7500 = vcvt.s32.f32 %v6988
    %v7501 = vcvt.s32.f32 %v6989
    %v7502 = vcvt.s32.f32 %v6990
    %v7503 = vcvt.s32.f32 %v6991
    %v7504 = vcvt.s32.f32 %v6992
    %v7505 = vcvt.s32.f32 %v6993
    %v7506 = vcvt.s32.f32 %v6994
    %v7507 = vcvt.s32.f32 %v6995
    %v7508 = vcvt.s32.f32 %v6996
    %v7509 = vcvt.s32.f32 %v6997
    %v7510 = vcvt.s32.f32 %v6998
    %v7511 = vcvt.s32.f32 %v6999
    %v7512 = vcvt.s32.f32 %v7000
    %v7513 = vcvt.s32.f32 %v7001
    %v7514 = vcvt.s32.f32 %v7002
    %v7515 = vcvt.s32.f32 %v7003
    %v7516 = vcvt.s32.f32 %v7004
    %v7517 = vcvt.s32.f32 %v7005
    %v7518 = vcvt.s32.f32 %v7006
    %v7519 = vcvt.s32.f32 %v7007
    %v7520 = vcvt.s32.f32 %v7008
    %v7521 = vcvt.s32.f32 %v7009
    %v7522 = vcvt.s32.f32 %v7010
    %v7523 = vcvt.s32.f32 %v7011
    %v7524 = vcvt.s32.f32 %v7012
    %v7525 = vcvt.s32.f32 %v7013
    %v7526 = vcvt.s32.f32 %v7014
    %v7527 = vcvt.s32.f32 %v7015
    %v7528 = vcvt.s32.f32 %v7016
    %v7529 = vcvt.s32.f32 %v7017
    %v7530 = vcvt.s32.f32 %v7018
    %v7531 = vcvt.s32.f32 %v7019
    %v7532 = vcvt.s32.f32 %v7020
    %v7533 = vcvt.s32.f32 %v7021
    %v7534 = vcvt.s32.f32 %v7022
    %v7535 = vcvt.s32.f32 %v7023
    %v7536 = vcvt.s32.f32 %v7024
    %v7537 = vcvt.s32.f32 %v7025
    %v7538 = vcvt.s32.f32 %v7026
    %v7539 = vcvt.s32.f32 %v7027
    %v7540 = vcvt.s32.f32 %v7028
    %v7541 = vcvt.s32.f32 %v7029
    %v7542 = vcvt.s32.f32 %v7030
    %v7543 = vcvt.s32.f32 %v7031
    %v7544 = vcvt.s32.f32 %v7032
    %v7545 = vcvt.s32.f32 %v7033
    %v7546 = vcvt.s32.f32 %v7034
    %v7547 = vcvt.s32.f32 %v7035
    %v7548 = vcvt.s32.f32 %v7036
    %v7549 = vcvt.s32.f32 %v7037
    %v7550 = vcvt.s32.f32 %v7038
    %v7551 = vcvt.s32.f32 %v7039
    %v7552 = vcvt.s32.f32 %v7040
    %v7553 = vcvt.s32.f32 %v7041
    %v7554 = vcvt.s32.f32 %v7042
    %v7555 = vcvt.s32.f32 %v7043
    %v7556 = vcvt.s32.f32 %v7044
    %v7557 = vcvt.s32.f32 %v7045
    %v7558 = vcvt.s32.f32 %v7046
    %v7559 = vcvt.s32.f32 %v7047
    %v7560 = vcvt.s32.f32 %v7048
    %v7561 = vcvt.s32.f32 %v7049
    %v7562 = vcvt.s32.f32 %v7050
    %v7563 = vcvt.s32.f32 %v7051
    %v7564 = vcvt.s32.f32 %v7052
    %v7565 = vcvt.s32.f32 %v7053
    %v7566 = vcvt.s32.f32 %v7054
    %v7567 = vcvt.s32.f32 %v7055
    %v7568 = vcvt.s32.f32 %v7056
    %v7569 = vcvt.s32.f32 %v7057
    %v7570 = vcvt.s32.f32 %v7058
    %v7571 = vcvt.s32.f32 %v7059
    %v7572 = vcvt.s32.f32 %v7060
    %v7573 = vcvt.s32.f32 %v7061
    %v7574 = vcvt.s32.f32 %v7062
    %v7575 = vcvt.s32.f32 %v7063
    %v7576 = vcvt.s32.f32 %v7064
    %v7577 = vcvt.s32.f32 %v7065
    %v7578 = vcvt.s32.f32 %v7066
    %v7579 = vcvt.s32.f32 %v7067
    %v7580 = vcvt.s32.f32 %v7068
    %v7581 = vcvt.s32.f32 %v7069
    %v7582 = vcvt.s32.f32 %v7070
    %v7583 = vcvt.s32.f32 %v7071
    %v7584 = vcvt.s32.f32 %v7072
    %v7585 = vcvt.s32.f32 %v7073
    %v7586 = vcvt.s32.f32 %v7074
    %v7587 = vcvt.s32.f32 %v7075
    %v7588 = vcvt.s32.f32 %v7076
    %v7589 = vcvt.s32.f32 %v7077
    %v7590 = vcvt.s32.f32 %v7078
    %v7591 = vcvt.s32.f32 %v7079
    %v7592 = vcvt.s32.f32 %v7080
    %v7593 = vcvt.s32.f32 %v7081
    %v7594 = vcvt.s32.f32 %v7082
    %v7595 = vcvt.s32.f32 %v7083
    %v7596 = vcvt.s32.f32 %v7084
    %v7597 = vcvt.s32.f32 %v7085
    %v7598 = vcvt.s32.f32 %v7086
    %v7599 = vcvt.s32.f32 %v7087
    %v7600 = vcvt.s32.f32 %v7088
    %v7601 = vcvt.s32.f32 %v7089
    %v7602 = vcvt.s32.f32 %v7090
    %v7603 = vcvt.s32.f32 %v7091
    %v7604 = vcvt.s32.f32 %v7092
    %v7605 = vcvt.s32.f32 %v7093
    %v7606 = vcvt.s32.f32 %v7094
    %v7607 = vcvt.s32.f32 %v7095
    %v7608 = vcvt.s32.f32 %v7096
    %v7609 = vcvt.s32.f32 %v7097
    %v7610 = vcvt.s32.f32 %v7098
    %v7611 = vcvt.s32.f32 %v7099
    %v7612 = vcvt.s32.f32 %v7100
    %v7613 = vcvt.s32.f32 %v7101
    %v7614 = vcvt.s32.f32 %v7102
    %v7615 = vcvt.s32.f32 %v7103
    %v7616 = vcvt.s32.f32 %v7104
    %v7617 = vcvt.s32.f32 %v7105
    %v7618 = vcvt.s32.f32 %v7106
    %v7619 = vcvt.s32.f32 %v7107
    %v7620 = vcvt.s32.f32 %v7108
    %v7621 = vcvt.s32.f32 %v7109
    %v7622 = vcvt.s32.f32 %v7110
    %v7623 = vcvt.s32.f32 %v7111
    %v7624 = vcvt.s32.f32 %v7112
    %v7625 = vcvt.s32.f32 %v7113
    %v7626 = vcvt.s32.f32 %v7114
    %v7627 = vcvt.s32.f32 %v7115
    %v7628 = vcvt.s32.f32 %v7116
    %v7629 = vcvt.s32.f32 %v7117
    %v7630 = vcvt.s32.f32 %v7118
    %v7631 = vcvt.s32.f32 %v7119
    %v7632 = vcvt.s32.f32 %v7120
    %v7633 = vcvt.s32.f32 %v7121
    %v7634 = vcvt.s32.f32 %v7122
    %v7635 = vcvt.s32.f32 %v7123
    %v7636 = vcvt.s32.f32 %v7124
    %v7637 = vcvt.s32.f32 %v7125
    %v7638 = vcvt.s32.f32 %v7126
    %v7639 = vcvt.s32.f32 %v7127
    %v7640 = vcvt.s32.f32 %v7128
    %v7641 = vcvt.s32.f32 %v7129
    %v7642 = vcvt.s32.f32 %v7130
    %v7643 = vcvt.s32.f32 %v7131
    %v7644 = vcvt.s32.f32 %v7132
    %v7645 = vcvt.s32.f32 %v7133
    %v7646 = vcvt.s32.f32 %v7134
    %v7647 = vcvt.s32.f32 %v7135
    %v7648 = vcvt.s32.f32 %v7136
    %v7649 = vcvt.s32.f32 %v7137
    %v7650 = vcvt.s32.f32 %v7138
    %v7651 = vcvt.s32.f32 %v7139
    %v7652 = vcvt.s32.f32 %v7140
    %v7653 = vcvt.s32.f32 %v7141
    %v7654 = vcvt.s32.f32 %v7142
    %v7655 = vcvt.s32.f32 %v7143
    %v7656 = vcvt.s32.f32 %v7144
    %v7657 = vcvt.s32.f32 %v7145
    %v7658 = vcvt.s32.f32 %v7146
    %v7659 = vcvt.s32.f32 %v7147
    %v7660 = vcvt.s32.f32 %v7148
    %v7661 = vcvt.s32.f32 %v7149
    %v7662 = vcvt.s32.f32 %v7150
    %v7663 = vcvt.s32.f32 %v7151
    %v7664 = vcvt.s32.f32 %v7152
    %v7665 = vcvt.s32.f32 %v7153
    %v7666 = vcvt.s32.f32 %v7154
    %v7667 = vcvt.s32.f32 %v7155
    %v7668 = vcvt.s32.f32 %v7156
    %v7669 = vcvt.s32.f32 %v7157
    %v7670 = vcvt.s32.f32 %v7158
    %v7671 = vcvt.s32.f32 %v7159
    %v7672 = vcvt.s32.f32 %v7160
    %v7673 = vcvt.s32.f32 %v7161
    %v7674 = vcvt.s32.f32 %v7162
    %v7675 = vcvt.s32.f32 %v7163
    %v7676 = vcvt.s32.f32 %v7164
    %v7677 = vcvt.s32.f32 %v7165
    %v7678 = vcvt.s32.f32 %v7166
    %v7679 = vcvt.s32.f32 %v7167
    %v7680 = vcvt.s32.f32 %v7168
    %v7681 = vcvt.s32.f32 %v7169
    %v7682 = vcvt.s32.f32 %v7170
    %v7683 = vcvt.s32.f32 %v7171
    %v7684 = vcvt.s32.f32 %v7172
    %v7685 = vcvt.s32.f32 %v7173
    %v7686 = vcvt.s32.f32 %v7174
    %v7687 = vcvt.s32.f32 %v7175
    %v7688 = vcvt.s32.f32 %v7176
    %v7689 = vcvt.s32.f32 %v7177
    %v7690 = vcvt.s32.f32 %v7178
    %v7691 = vcvt.s32.f32 %v7179
    %v7692 = vcvt.s32.f32 %v7180
    %v7693 = vcvt.s32.f32 %v7181
    %v7694 = vcvt.s32.f32 %v7182
    %v7695 = vcvt.s32.f32 %v7183
    %v7696 = vcvt.s32.f32 %v7184
    %v7697 = vcvt.s32.f32 %v7185
    %v7698 = vcvt.s32.f32 %v7186
    %v7699 = vcvt.s32.f32 %v7187
    %v7700 = vcvt.s32.f32 %v7188
    %v7701 = vcvt.s32.f32 %v7189
    %v7702 = vcvt.s32.f32 %v7190
    %v7703 = vcvt.s32.f32 %v7191
    %v7704 = vcvt.s32.f32 %v7192
    %v7705 = vcvt.s32.f32 %v7193
    %v7706 = vcvt.s32.f32 %v7194
    %v7707 = vcvt.s32.f32 %v7195
    %v7708 = vcvt.s32.f32 %v7196
    %v7709 = vcvt.s32.f32 %v7197
    %v7710 = vcvt.s32.f32 %v7198
    %v7711 = vpack.c.bf16 %v7203, %v7199
    %v7712 = vpack.c.bf16 %v7204, %v7200
    %v7713 = vpack.c.bf16 %v7205, %v7201
    %v7714 = vpack.c.bf16 %v7206, %v7202
    %v7715 = vpack.c.bf16 %v7211, %v7207
    %v7716 = vpack.c.bf16 %v7212, %v7208
    %v7717 = vpack.c.bf16 %v7213, %v7209
    %v7718 = vpack.c.bf16 %v7214, %v7210
    %v7719 = vpack.c.bf16 %v7219, %v7215
    %v7720 = vpack.c.bf16 %v7220, %v7216
    %v7721 = vpack.c.bf16 %v7221, %v7217
    %v7722 = vpack.c.bf16 %v7222, %v7218
    %v7723 = vpack.c.bf16 %v7227, %v7223
    %v7724 = vpack.c.bf16 %v7228, %v7224
    %v7725 = vpack.c.bf16 %v7229, %v7225
    %v7726 = vpack.c.bf16 %v7230, %v7226
    %v7727 = vpack.c.bf16 %v7235, %v7231
    %v7728 = vpack.c.bf16 %v7236, %v7232
    %v7729 = vpack.c.bf16 %v7237, %v7233
    %v7730 = vpack.c.bf16 %v7238, %v7234
    %v7731 = vpack.c.bf16 %v7243, %v7239
    %v7732 = vpack.c.bf16 %v7244, %v7240
    %v7733 = vpack.c.bf16 %v7245, %v7241
    %v7734 = vpack.c.bf16 %v7246, %v7242
    %v7735 = vpack.c.bf16 %v7251, %v7247
    %v7736 = vpack.c.bf16 %v7252, %v7248
    %v7737 = vpack.c.bf16 %v7253, %v7249
    %v7738 = vpack.c.bf16 %v7254, %v7250
    %v7739 = vpack.c.bf16 %v7259, %v7255
    %v7740 = vpack.c.bf16 %v7260, %v7256
    %v7741 = vpack.c.bf16 %v7261, %v7257
    %v7742 = vpack.c.bf16 %v7262, %v7258
    %v7743 = vpack.c.bf16 %v7267, %v7263
    %v7744 = vpack.c.bf16 %v7268, %v7264
    %v7745 = vpack.c.bf16 %v7269, %v7265
    %v7746 = vpack.c.bf16 %v7270, %v7266
    %v7747 = vpack.c.bf16 %v7275, %v7271
    %v7748 = vpack.c.bf16 %v7276, %v7272
    %v7749 = vpack.c.bf16 %v7277, %v7273
    %v7750 = vpack.c.bf16 %v7278, %v7274
    %v7751 = vpack.c.bf16 %v7283, %v7279
    %v7752 = vpack.c.bf16 %v7284, %v7280
    %v7753 = vpack.c.bf16 %v7285, %v7281
    %v7754 = vpack.c.bf16 %v7286, %v7282
    %v7755 = vpack.c.bf16 %v7291, %v7287
    %v7756 = vpack.c.bf16 %v7292, %v7288
    %v7757 = vpack.c.bf16 %v7293, %v7289
    %v7758 = vpack.c.bf16 %v7294, %v7290
    %v7759 = vpack.c.bf16 %v7299, %v7295
    %v7760 = vpack.c.bf16 %v7300, %v7296
    %v7761 = vpack.c.bf16 %v7301, %v7297
    %v7762 = vpack.c.bf16 %v7302, %v7298
    %v7763 = vpack.c.bf16 %v7307, %v7303
    %v7764 = vpack.c.bf16 %v7308, %v7304
    %v7765 = vpack.c.bf16 %v7309, %v7305
    %v7766 = vpack.c.bf16 %v7310, %v7306
    %v7767 = vpack.c.bf16 %v7315, %v7311
    %v7768 = vpack.c.bf16 %v7316, %v7312
    %v7769 = vpack.c.bf16 %v7317, %v7313
    %v7770 = vpack.c.bf16 %v7318, %v7314
    %v7771 = vpack.c.bf16 %v7323, %v7319
    %v7772 = vpack.c.bf16 %v7324, %v7320
    %v7773 = vpack.c.bf16 %v7325, %v7321
    %v7774 = vpack.c.bf16 %v7326, %v7322
    %v7775 = vpack.c.bf16 %v7331, %v7327
    %v7776 = vpack.c.bf16 %v7332, %v7328
    %v7777 = vpack.c.bf16 %v7333, %v7329
    %v7778 = vpack.c.bf16 %v7334, %v7330
    %v7779 = vpack.c.bf16 %v7339, %v7335
    %v7780 = vpack.c.bf16 %v7340, %v7336
    %v7781 = vpack.c.bf16 %v7341, %v7337
    %v7782 = vpack.c.bf16 %v7342, %v7338
    %v7783 = vpack.c.bf16 %v7347, %v7343
    %v7784 = vpack.c.bf16 %v7348, %v7344
    %v7785 = vpack.c.bf16 %v7349, %v7345
    %v7786 = vpack.c.bf16 %v7350, %v7346
    %v7787 = vpack.c.bf16 %v7355, %v7351
    %v7788 = vpack.c.bf16 %v7356, %v7352
    %v7789 = vpack.c.bf16 %v7357, %v7353
    %v7790 = vpack.c.bf16 %v7358, %v7354
    %v7791 = vpack.c.bf16 %v7363, %v7359
    %v7792 = vpack.c.bf16 %v7364, %v7360
    %v7793 = vpack.c.bf16 %v7365, %v7361
    %v7794 = vpack.c.bf16 %v7366, %v7362
    %v7795 = vpack.c.bf16 %v7371, %v7367
    %v7796 = vpack.c.bf16 %v7372, %v7368
    %v7797 = vpack.c.bf16 %v7373, %v7369
    %v7798 = vpack.c.bf16 %v7374, %v7370
    %v7799 = vpack.c.bf16 %v7379, %v7375
    %v7800 = vpack.c.bf16 %v7380, %v7376
    %v7801 = vpack.c.bf16 %v7381, %v7377
    %v7802 = vpack.c.bf16 %v7382, %v7378
    %v7803 = vpack.c.bf16 %v7387, %v7383
    %v7804 = vpack.c.bf16 %v7388, %v7384
    %v7805 = vpack.c.bf16 %v7389, %v7385
    %v7806 = vpack.c.bf16 %v7390, %v7386
    %v7807 = vpack.c.bf16 %v7395, %v7391
    %v7808 = vpack.c.bf16 %v7396, %v7392
    %v7809 = vpack.c.bf16 %v7397, %v7393
    %v7810 = vpack.c.bf16 %v7398, %v7394
    %v7811 = vpack.c.bf16 %v7403, %v7399
    %v7812 = vpack.c.bf16 %v7404, %v7400
    %v7813 = vpack.c.bf16 %v7405, %v7401
    %v7814 = vpack.c.bf16 %v7406, %v7402
    %v7815 = vpack.c.bf16 %v7411, %v7407
    %v7816 = vpack.c.bf16 %v7412, %v7408
    %v7817 = vpack.c.bf16 %v7413, %v7409
    %v7818 = vpack.c.bf16 %v7414, %v7410
    %v7819 = vpack.c.bf16 %v7419, %v7415
    %v7820 = vpack.c.bf16 %v7420, %v7416
    %v7821 = vpack.c.bf16 %v7421, %v7417
    %v7822 = vpack.c.bf16 %v7422, %v7418
    %v7823 = vpack.c.bf16 %v7427, %v7423
    %v7824 = vpack.c.bf16 %v7428, %v7424
    %v7825 = vpack.c.bf16 %v7429, %v7425
    %v7826 = vpack.c.bf16 %v7430, %v7426
    %v7827 = vpack.c.bf16 %v7435, %v7431
    %v7828 = vpack.c.bf16 %v7436, %v7432
    %v7829 = vpack.c.bf16 %v7437, %v7433
    %v7830 = vpack.c.bf16 %v7438, %v7434
    %v7831 = vpack.c.bf16 %v7443, %v7439
    %v7832 = vpack.c.bf16 %v7444, %v7440
    %v7833 = vpack.c.bf16 %v7445, %v7441
    %v7834 = vpack.c.bf16 %v7446, %v7442
    %v7835 = vpack.c.bf16 %v7451, %v7447
    %v7836 = vpack.c.bf16 %v7452, %v7448
    %v7837 = vpack.c.bf16 %v7453, %v7449
    %v7838 = vpack.c.bf16 %v7454, %v7450
    %v7839 = vpack.c.bf16 %v7459, %v7455
    %v7840 = vpack.c.bf16 %v7460, %v7456
    %v7841 = vpack.c.bf16 %v7461, %v7457
    %v7842 = vpack.c.bf16 %v7462, %v7458
    %v7843 = vpack.c.bf16 %v7467, %v7463
    %v7844 = vpack.c.bf16 %v7468, %v7464
    %v7845 = vpack.c.bf16 %v7469, %v7465
    %v7846 = vpack.c.bf16 %v7470, %v7466
    %v7847 = vpack.c.bf16 %v7475, %v7471
    %v7848 = vpack.c.bf16 %v7476, %v7472
    %v7849 = vpack.c.bf16 %v7477, %v7473
    %v7850 = vpack.c.bf16 %v7478, %v7474
    %v7851 = vpack.c.bf16 %v7483, %v7479
    %v7852 = vpack.c.bf16 %v7484, %v7480
    %v7853 = vpack.c.bf16 %v7485, %v7481
    %v7854 = vpack.c.bf16 %v7486, %v7482
    %v7855 = vpack.c.bf16 %v7491, %v7487
    %v7856 = vpack.c.bf16 %v7492, %v7488
    %v7857 = vpack.c.bf16 %v7493, %v7489
    %v7858 = vpack.c.bf16 %v7494, %v7490
    %v7859 = vpack.c.bf16 %v7499, %v7495
    %v7860 = vpack.c.bf16 %v7500, %v7496
    %v7861 = vpack.c.bf16 %v7501, %v7497
    %v7862 = vpack.c.bf16 %v7502, %v7498
    %v7863 = vpack.c.bf16 %v7507, %v7503
    %v7864 = vpack.c.bf16 %v7508, %v7504
    %v7865 = vpack.c.bf16 %v7509, %v7505
    %v7866 = vpack.c.bf16 %v7510, %v7506
    %v7867 = vpack.c.bf16 %v7515, %v7511
    %v7868 = vpack.c.bf16 %v7516, %v7512
    %v7869 = vpack.c.bf16 %v7517, %v7513
    %v7870 = vpack.c.bf16 %v7518, %v7514
    %v7871 = vpack.c.bf16 %v7523, %v7519
    %v7872 = vpack.c.bf16 %v7524, %v7520
    %v7873 = vpack.c.bf16 %v7525, %v7521
    %v7874 = vpack.c.bf16 %v7526, %v7522
    %v7875 = vpack.c.bf16 %v7531, %v7527
    %v7876 = vpack.c.bf16 %v7532, %v7528
    %v7877 = vpack.c.bf16 %v7533, %v7529
    %v7878 = vpack.c.bf16 %v7534, %v7530
    %v7879 = vpack.c.bf16 %v7539, %v7535
    %v7880 = vpack.c.bf16 %v7540, %v7536
    %v7881 = vpack.c.bf16 %v7541, %v7537
    %v7882 = vpack.c.bf16 %v7542, %v7538
    %v7883 = vpack.c.bf16 %v7547, %v7543
    %v7884 = vpack.c.bf16 %v7548, %v7544
    %v7885 = vpack.c.bf16 %v7549, %v7545
    %v7886 = vpack.c.bf16 %v7550, %v7546
    %v7887 = vpack.c.bf16 %v7555, %v7551
    %v7888 = vpack.c.bf16 %v7556, %v7552
    %v7889 = vpack.c.bf16 %v7557, %v7553
    %v7890 = vpack.c.bf16 %v7558, %v7554
    %v7891 = vpack.c.bf16 %v7563, %v7559
    %v7892 = vpack.c.bf16 %v7564, %v7560
    %v7893 = vpack.c.bf16 %v7565, %v7561
    %v7894 = vpack.c.bf16 %v7566, %v7562
    %v7895 = vpack.c.bf16 %v7571, %v7567
    %v7896 = vpack.c.bf16 %v7572, %v7568
    %v7897 = vpack.c.bf16 %v7573, %v7569
    %v7898 = vpack.c.bf16 %v7574, %v7570
    %v7899 = vpack.c.bf16 %v7579, %v7575
    %v7900 = vpack.c.bf16 %v7580, %v7576
    %v7901 = vpack.c.bf16 %v7581, %v7577
    %v7902 = vpack.c.bf16 %v7582, %v7578
    %v7903 = vpack.c.bf16 %v7587, %v7583
    %v7904 = vpack.c.bf16 %v7588, %v7584
    %v7905 = vpack.c.bf16 %v7589, %v7585
    %v7906 = vpack.c.bf16 %v7590, %v7586
    %v7907 = vpack.c.bf16 %v7595, %v7591
    %v7908 = vpack.c.bf16 %v7596, %v7592
    %v7909 = vpack.c.bf16 %v7597, %v7593
    %v7910 = vpack.c.bf16 %v7598, %v7594
    %v7911 = vpack.c.bf16 %v7603, %v7599
    %v7912 = vpack.c.bf16 %v7604, %v7600
    %v7913 = vpack.c.bf16 %v7605, %v7601
    %v7914 = vpack.c.bf16 %v7606, %v7602
    %v7915 = vpack.c.bf16 %v7611, %v7607
    %v7916 = vpack.c.bf16 %v7612, %v7608
    %v7917 = vpack.c.bf16 %v7613, %v7609
    %v7918 = vpack.c.bf16 %v7614, %v7610
    %v7919 = vpack.c.bf16 %v7619, %v7615
    %v7920 = vpack.c.bf16 %v7620, %v7616
    %v7921 = vpack.c.bf16 %v7621, %v7617
    %v7922 = vpack.c.bf16 %v7622, %v7618
    %v7923 = vpack.c.bf16 %v7627, %v7623
    %v7924 = vpack.c.bf16 %v7628, %v7624
    %v7925 = vpack.c.bf16 %v7629, %v7625
    %v7926 = vpack.c.bf16 %v7630, %v7626
    %v7927 = vpack.c.bf16 %v7635, %v7631
    %v7928 = vpack.c.bf16 %v7636, %v7632
    %v7929 = vpack.c.bf16 %v7637, %v7633
    %v7930 = vpack.c.bf16 %v7638, %v7634
    %v7931 = vpack.c.bf16 %v7643, %v7639
    %v7932 = vpack.c.bf16 %v7644, %v7640
    %v7933 = vpack.c.bf16 %v7645, %v7641
    %v7934 = vpack.c.bf16 %v7646, %v7642
    %v7935 = vpack.c.bf16 %v7651, %v7647
    %v7936 = vpack.c.bf16 %v7652, %v7648
    %v7937 = vpack.c.bf16 %v7653, %v7649
    %v7938 = vpack.c.bf16 %v7654, %v7650
    %v7939 = vpack.c.bf16 %v7659, %v7655
    %v7940 = vpack.c.bf16 %v7660, %v7656
    %v7941 = vpack.c.bf16 %v7661, %v7657
    %v7942 = vpack.c.bf16 %v7662, %v7658
    %v7943 = vpack.c.bf16 %v7667, %v7663
    %v7944 = vpack.c.bf16 %v7668, %v7664
    %v7945 = vpack.c.bf16 %v7669, %v7665
    %v7946 = vpack.c.bf16 %v7670, %v7666
    %v7947 = vpack.c.bf16 %v7675, %v7671
    %v7948 = vpack.c.bf16 %v7676, %v7672
    %v7949 = vpack.c.bf16 %v7677, %v7673
    %v7950 = vpack.c.bf16 %v7678, %v7674
    %v7951 = vpack.c.bf16 %v7683, %v7679
    %v7952 = vpack.c.bf16 %v7684, %v7680
    %v7953 = vpack.c.bf16 %v7685, %v7681
    %v7954 = vpack.c.bf16 %v7686, %v7682
    %v7955 = vpack.c.bf16 %v7691, %v7687
    %v7956 = vpack.c.bf16 %v7692, %v7688
    %v7957 = vpack.c.bf16 %v7693, %v7689
    %v7958 = vpack.c.bf16 %v7694, %v7690
    %v7959 = vpack.c.bf16 %v7699, %v7695
    %v7960 = vpack.c.bf16 %v7700, %v7696
    %v7961 = vpack.c.bf16 %v7701, %v7697
    %v7962 = vpack.c.bf16 %v7702, %v7698
    %v7963 = vpack.c.bf16 %v7707, %v7703
    %v7964 = vpack.c.bf16 %v7708, %v7704
    %v7965 = vpack.c.bf16 %v7709, %v7705
    %v7966 = vpack.c.bf16 %v7710, %v7706
    %7967 = vmatpush.bf16.msra.mxu0 %v7739
    %7968 = vmatpush.bf16.msra.mxu0 %v7735
    %7969 = vmatpush.bf16.msra.mxu0 %v7731
    %7970 = vmatpush.bf16.msra.mxu0 %v7727
    %7971 = vmatpush.bf16.msra.mxu0 %v7723
    %7972 = vmatpush.bf16.msra.mxu0 %v7719
    %7973 = vmatpush.bf16.msra.mxu0 %v7715
    %7974 = vmatpush.bf16.msra.mxu0 %v7711
    %7975 = vmatmul.bf16.gmra.mxu0 %v2689
    %v7976 = vpop.f32.mrf.mxu0
    %v7977 = vadd.f32 0.0, %v7976
    %v7978 = vpop.f32.mrf.mxu0
    %7979 = vdwg.mxu0
    %7980 = vmatpush.bf16.msra.mxu0 %v7771
    %7981 = vmatpush.bf16.msra.mxu0 %v7767
    %7982 = vmatpush.bf16.msra.mxu0 %v7763
    %7983 = vmatpush.bf16.msra.mxu0 %v7759
    %7984 = vmatpush.bf16.msra.mxu0 %v7755
    %7985 = vmatpush.bf16.msra.mxu0 %v7751
    %7986 = vmatpush.bf16.msra.mxu0 %v7747
    %7987 = vmatpush.bf16.msra.mxu0 %v7743
    %7988 = vmatmul.bf16.gmra.mxu0 %v2690
    %v7989 = vpop.f32.mrf.mxu0
    %v7990 = vadd.f32 %v7977, %v7989
    %v7991 = vpop.f32.mrf.mxu0
    %7992 = vdwg.mxu0
    %7993 = vmatpush.bf16.msra.mxu0 %v7803
    %7994 = vmatpush.bf16.msra.mxu0 %v7799
    %7995 = vmatpush.bf16.msra.mxu0 %v7795
    %7996 = vmatpush.bf16.msra.mxu0 %v7791
    %7997 = vmatpush.bf16.msra.mxu0 %v7787
    %7998 = vmatpush.bf16.msra.mxu0 %v7783
    %7999 = vmatpush.bf16.msra.mxu0 %v7779
    %8000 = vmatpush.bf16.msra.mxu0 %v7775
    %8001 = vmatmul.bf16.gmra.mxu0 %v2691
    %v8002 = vpop.f32.mrf.mxu0
    %v8003 = vadd.f32 %v7990, %v8002
    %v8004 = vpop.f32.mrf.mxu0
    %8005 = vdwg.mxu0
    %8006 = vmatpush.bf16.msra.mxu0 %v7835
    %8007 = vmatpush.bf16.msra.mxu0 %v7831
    %8008 = vmatpush.bf16.msra.mxu0 %v7827
    %8009 = vmatpush.bf16.msra.mxu0 %v7823
    %8010 = vmatpush.bf16.msra.mxu0 %v7819
    %8011 = vmatpush.bf16.msra.mxu0 %v7815
    %8012 = vmatpush.bf16.msra.mxu0 %v7811
    %8013 = vmatpush.bf16.msra.mxu0 %v7807
    %8014 = vmatmul.bf16.gmra.mxu0 %v2692
    %v8015 = vpop.f32.mrf.mxu0
    %v8016 = vadd.f32 %v8003, %v8015
    %v8017 = vpop.f32.mrf.mxu0
    %8018 = vdwg.mxu0
    %8019 = vmatpush.bf16.msra.mxu0 %v7867
    %8020 = vmatpush.bf16.msra.mxu0 %v7863
    %8021 = vmatpush.bf16.msra.mxu0 %v7859
    %8022 = vmatpush.bf16.msra.mxu0 %v7855
    %8023 = vmatpush.bf16.msra.mxu0 %v7851
    %8024 = vmatpush.bf16.msra.mxu0 %v7847
    %8025 = vmatpush.bf16.msra.mxu0 %v7843
    %8026 = vmatpush.bf16.msra.mxu0 %v7839
    %8027 = vmatmul.bf16.gmra.mxu0 %v2693
    %v8028 = vpop.f32.mrf.mxu0
    %v8029 = vadd.f32 %v8016, %v8028
    %v8030 = vpop.f32.mrf.mxu0
    %8031 = vdwg.mxu0
    %8032 = vmatpush.bf16.msra.mxu0 %v7899
    %8033 = vmatpush.bf16.msra.mxu0 %v7895
    %8034 = vmatpush.bf16.msra.mxu0 %v7891
    %8035 = vmatpush.bf16.msra.mxu0 %v7887
    %8036 = vmatpush.bf16.msra.mxu0 %v7883
    %8037 = vmatpush.bf16.msra.mxu0 %v7879
    %8038 = vmatpush.bf16.msra.mxu0 %v7875
    %8039 = vmatpush.bf16.msra.mxu0 %v7871
    %8040 = vmatmul.bf16.gmra.mxu0 %v2694
    %v8041 = vpop.f32.mrf.mxu0
    %v8042 = vadd.f32 %v8029, %v8041
    %v8043 = vpop.f32.mrf.mxu0
    %8044 = vdwg.mxu0
    %8045 = vmatpush.bf16.msra.mxu0 %v7931
    %8046 = vmatpush.bf16.msra.mxu0 %v7927
    %8047 = vmatpush.bf16.msra.mxu0 %v7923
    %8048 = vmatpush.bf16.msra.mxu0 %v7919
    %8049 = vmatpush.bf16.msra.mxu0 %v7915
    %8050 = vmatpush.bf16.msra.mxu0 %v7911
    %8051 = vmatpush.bf16.msra.mxu0 %v7907
    %8052 = vmatpush.bf16.msra.mxu0 %v7903
    %8053 = vmatmul.bf16.gmra.mxu0 %v2695
    %v8054 = vpop.f32.mrf.mxu0
    %v8055 = vadd.f32 %v8042, %v8054
    %v8056 = vpop.f32.mrf.mxu0
    %8057 = vdwg.mxu0
    %8058 = vmatpush.bf16.msra.mxu0 %v7963
    %8059 = vmatpush.bf16.msra.mxu0 %v7959
    %8060 = vmatpush.bf16.msra.mxu0 %v7955
    %8061 = vmatpush.bf16.msra.mxu0 %v7951
    %8062 = vmatpush.bf16.msra.mxu0 %v7947
    %8063 = vmatpush.bf16.msra.mxu0 %v7943
    %8064 = vmatpush.bf16.msra.mxu0 %v7939
    %8065 = vmatpush.bf16.msra.mxu0 %v7935
    %8066 = vmatmul.bf16.gmra.mxu0 %v2696
    %v8067 = vpop.f32.mrf.mxu0
    %v8068 = vadd.f32 %v8055, %v8067
    %v8069 = vpop.f32.mrf.mxu0
    %8070 = vdwg.mxu0
    %8071 = vmatpush.bf16.msra.mxu0 %v7740
    %8072 = vmatpush.bf16.msra.mxu0 %v7736
    %8073 = vmatpush.bf16.msra.mxu0 %v7732
    %8074 = vmatpush.bf16.msra.mxu0 %v7728
    %8075 = vmatpush.bf16.msra.mxu0 %v7724
    %8076 = vmatpush.bf16.msra.mxu0 %v7720
    %8077 = vmatpush.bf16.msra.mxu0 %v7716
    %8078 = vmatpush.bf16.msra.mxu0 %v7712
    %8079 = vmatmul.bf16.gmra.mxu0 %v2689
    %v8080 = vpop.f32.mrf.mxu0
    %v8081 = vadd.f32 0.0, %v8080
    %v8082 = vpop.f32.mrf.mxu0
    %8083 = vdwg.mxu0
    %8084 = vmatpush.bf16.msra.mxu0 %v7772
    %8085 = vmatpush.bf16.msra.mxu0 %v7768
    %8086 = vmatpush.bf16.msra.mxu0 %v7764
    %8087 = vmatpush.bf16.msra.mxu0 %v7760
    %8088 = vmatpush.bf16.msra.mxu0 %v7756
    %8089 = vmatpush.bf16.msra.mxu0 %v7752
    %8090 = vmatpush.bf16.msra.mxu0 %v7748
    %8091 = vmatpush.bf16.msra.mxu0 %v7744
    %8092 = vmatmul.bf16.gmra.mxu0 %v2690
    %v8093 = vpop.f32.mrf.mxu0
    %v8094 = vadd.f32 %v8081, %v8093
    %v8095 = vpop.f32.mrf.mxu0
    %8096 = vdwg.mxu0
    %8097 = vmatpush.bf16.msra.mxu0 %v7804
    %8098 = vmatpush.bf16.msra.mxu0 %v7800
    %8099 = vmatpush.bf16.msra.mxu0 %v7796
    %8100 = vmatpush.bf16.msra.mxu0 %v7792
    %8101 = vmatpush.bf16.msra.mxu0 %v7788
    %8102 = vmatpush.bf16.msra.mxu0 %v7784
    %8103 = vmatpush.bf16.msra.mxu0 %v7780
    %8104 = vmatpush.bf16.msra.mxu0 %v7776
    %8105 = vmatmul.bf16.gmra.mxu0 %v2691
    %v8106 = vpop.f32.mrf.mxu0
    %v8107 = vadd.f32 %v8094, %v8106
    %v8108 = vpop.f32.mrf.mxu0
    %8109 = vdwg.mxu0
    %8110 = vmatpush.bf16.msra.mxu0 %v7836
    %8111 = vmatpush.bf16.msra.mxu0 %v7832
    %8112 = vmatpush.bf16.msra.mxu0 %v7828
    %8113 = vmatpush.bf16.msra.mxu0 %v7824
    %8114 = vmatpush.bf16.msra.mxu0 %v7820
    %8115 = vmatpush.bf16.msra.mxu0 %v7816
    %8116 = vmatpush.bf16.msra.mxu0 %v7812
    %8117 = vmatpush.bf16.msra.mxu0 %v7808
    %8118 = vmatmul.bf16.gmra.mxu0 %v2692
    %v8119 = vpop.f32.mrf.mxu0
    %v8120 = vadd.f32 %v8107, %v8119
    %v8121 = vpop.f32.mrf.mxu0
    %8122 = vdwg.mxu0
    %8123 = vmatpush.bf16.msra.mxu0 %v7868
    %8124 = vmatpush.bf16.msra.mxu0 %v7864
    %8125 = vmatpush.bf16.msra.mxu0 %v7860
    %8126 = vmatpush.bf16.msra.mxu0 %v7856
    %8127 = vmatpush.bf16.msra.mxu0 %v7852
    %8128 = vmatpush.bf16.msra.mxu0 %v7848
    %8129 = vmatpush.bf16.msra.mxu0 %v7844
    %8130 = vmatpush.bf16.msra.mxu0 %v7840
    %8131 = vmatmul.bf16.gmra.mxu0 %v2693
    %v8132 = vpop.f32.mrf.mxu0
    %v8133 = vadd.f32 %v8120, %v8132
    %v8134 = vpop.f32.mrf.mxu0
    %8135 = vdwg.mxu0
    %8136 = vmatpush.bf16.msra.mxu0 %v7900
    %8137 = vmatpush.bf16.msra.mxu0 %v7896
    %8138 = vmatpush.bf16.msra.mxu0 %v7892
    %8139 = vmatpush.bf16.msra.mxu0 %v7888
    %8140 = vmatpush.bf16.msra.mxu0 %v7884
    %8141 = vmatpush.bf16.msra.mxu0 %v7880
    %8142 = vmatpush.bf16.msra.mxu0 %v7876
    %8143 = vmatpush.bf16.msra.mxu0 %v7872
    %8144 = vmatmul.bf16.gmra.mxu0 %v2694
    %v8145 = vpop.f32.mrf.mxu0
    %v8146 = vadd.f32 %v8133, %v8145
    %v8147 = vpop.f32.mrf.mxu0
    %8148 = vdwg.mxu0
    %8149 = vmatpush.bf16.msra.mxu0 %v7932
    %8150 = vmatpush.bf16.msra.mxu0 %v7928
    %8151 = vmatpush.bf16.msra.mxu0 %v7924
    %8152 = vmatpush.bf16.msra.mxu0 %v7920
    %8153 = vmatpush.bf16.msra.mxu0 %v7916
    %8154 = vmatpush.bf16.msra.mxu0 %v7912
    %8155 = vmatpush.bf16.msra.mxu0 %v7908
    %8156 = vmatpush.bf16.msra.mxu0 %v7904
    %8157 = vmatmul.bf16.gmra.mxu0 %v2695
    %v8158 = vpop.f32.mrf.mxu0
    %v8159 = vadd.f32 %v8146, %v8158
    %v8160 = vpop.f32.mrf.mxu0
    %8161 = vdwg.mxu0
    %8162 = vmatpush.bf16.msra.mxu0 %v7964
    %8163 = vmatpush.bf16.msra.mxu0 %v7960
    %8164 = vmatpush.bf16.msra.mxu0 %v7956
    %8165 = vmatpush.bf16.msra.mxu0 %v7952
    %8166 = vmatpush.bf16.msra.mxu0 %v7948
    %8167 = vmatpush.bf16.msra.mxu0 %v7944
    %8168 = vmatpush.bf16.msra.mxu0 %v7940
    %8169 = vmatpush.bf16.msra.mxu0 %v7936
    %8170 = vmatmul.bf16.gmra.mxu0 %v2696
    %v8171 = vpop.f32.mrf.mxu0
    %v8172 = vadd.f32 %v8159, %v8171
    %v8173 = vpop.f32.mrf.mxu0
    %8174 = vdwg.mxu0
    %8175 = vmatpush.bf16.msra.mxu0 %v7741
    %8176 = vmatpush.bf16.msra.mxu0 %v7737
    %8177 = vmatpush.bf16.msra.mxu0 %v7733
    %8178 = vmatpush.bf16.msra.mxu0 %v7729
    %8179 = vmatpush.bf16.msra.mxu0 %v7725
    %8180 = vmatpush.bf16.msra.mxu0 %v7721
    %8181 = vmatpush.bf16.msra.mxu0 %v7717
    %8182 = vmatpush.bf16.msra.mxu0 %v7713
    %8183 = vmatmul.bf16.gmra.mxu0 %v2689
    %v8184 = vpop.f32.mrf.mxu0
    %v8185 = vadd.f32 0.0, %v8184
    %v8186 = vpop.f32.mrf.mxu0
    %8187 = vdwg.mxu0
    %8188 = vmatpush.bf16.msra.mxu0 %v7773
    %8189 = vmatpush.bf16.msra.mxu0 %v7769
    %8190 = vmatpush.bf16.msra.mxu0 %v7765
    %8191 = vmatpush.bf16.msra.mxu0 %v7761
    %8192 = vmatpush.bf16.msra.mxu0 %v7757
    %8193 = vmatpush.bf16.msra.mxu0 %v7753
    %8194 = vmatpush.bf16.msra.mxu0 %v7749
    %8195 = vmatpush.bf16.msra.mxu0 %v7745
    %8196 = vmatmul.bf16.gmra.mxu0 %v2690
    %v8197 = vpop.f32.mrf.mxu0
    %v8198 = vadd.f32 %v8185, %v8197
    %v8199 = vpop.f32.mrf.mxu0
    %8200 = vdwg.mxu0
    %8201 = vmatpush.bf16.msra.mxu0 %v7805
    %8202 = vmatpush.bf16.msra.mxu0 %v7801
    %8203 = vmatpush.bf16.msra.mxu0 %v7797
    %8204 = vmatpush.bf16.msra.mxu0 %v7793
    %8205 = vmatpush.bf16.msra.mxu0 %v7789
    %8206 = vmatpush.bf16.msra.mxu0 %v7785
    %8207 = vmatpush.bf16.msra.mxu0 %v7781
    %8208 = vmatpush.bf16.msra.mxu0 %v7777
    %8209 = vmatmul.bf16.gmra.mxu0 %v2691
    %v8210 = vpop.f32.mrf.mxu0
    %v8211 = vadd.f32 %v8198, %v8210
    %v8212 = vpop.f32.mrf.mxu0
    %8213 = vdwg.mxu0
    %8214 = vmatpush.bf16.msra.mxu0 %v7837
    %8215 = vmatpush.bf16.msra.mxu0 %v7833
    %8216 = vmatpush.bf16.msra.mxu0 %v7829
    %8217 = vmatpush.bf16.msra.mxu0 %v7825
    %8218 = vmatpush.bf16.msra.mxu0 %v7821
    %8219 = vmatpush.bf16.msra.mxu0 %v7817
    %8220 = vmatpush.bf16.msra.mxu0 %v7813
    %8221 = vmatpush.bf16.msra.mxu0 %v7809
    %8222 = vmatmul.bf16.gmra.mxu0 %v2692
    %v8223 = vpop.f32.mrf.mxu0
    %v8224 = vadd.f32 %v8211, %v8223
    %v8225 = vpop.f32.mrf.mxu0
    %8226 = vdwg.mxu0
    %8227 = vmatpush.bf16.msra.mxu0 %v7869
    %8228 = vmatpush.bf16.msra.mxu0 %v7865
    %8229 = vmatpush.bf16.msra.mxu0 %v7861
    %8230 = vmatpush.bf16.msra.mxu0 %v7857
    %8231 = vmatpush.bf16.msra.mxu0 %v7853
    %8232 = vmatpush.bf16.msra.mxu0 %v7849
    %8233 = vmatpush.bf16.msra.mxu0 %v7845
    %8234 = vmatpush.bf16.msra.mxu0 %v7841
    %8235 = vmatmul.bf16.gmra.mxu0 %v2693
    %v8236 = vpop.f32.mrf.mxu0
    %v8237 = vadd.f32 %v8224, %v8236
    %v8238 = vpop.f32.mrf.mxu0
    %8239 = vdwg.mxu0
    %8240 = vmatpush.bf16.msra.mxu0 %v7901
    %8241 = vmatpush.bf16.msra.mxu0 %v7897
    %8242 = vmatpush.bf16.msra.mxu0 %v7893
    %8243 = vmatpush.bf16.msra.mxu0 %v7889
    %8244 = vmatpush.bf16.msra.mxu0 %v7885
    %8245 = vmatpush.bf16.msra.mxu0 %v7881
    %8246 = vmatpush.bf16.msra.mxu0 %v7877
    %8247 = vmatpush.bf16.msra.mxu0 %v7873
    %8248 = vmatmul.bf16.gmra.mxu0 %v2694
    %v8249 = vpop.f32.mrf.mxu0
    %v8250 = vadd.f32 %v8237, %v8249
    %v8251 = vpop.f32.mrf.mxu0
    %8252 = vdwg.mxu0
    %8253 = vmatpush.bf16.msra.mxu0 %v7933
    %8254 = vmatpush.bf16.msra.mxu0 %v7929
    %8255 = vmatpush.bf16.msra.mxu0 %v7925
    %8256 = vmatpush.bf16.msra.mxu0 %v7921
    %8257 = vmatpush.bf16.msra.mxu0 %v7917
    %8258 = vmatpush.bf16.msra.mxu0 %v7913
    %8259 = vmatpush.bf16.msra.mxu0 %v7909
    %8260 = vmatpush.bf16.msra.mxu0 %v7905
    %8261 = vmatmul.bf16.gmra.mxu0 %v2695
    %v8262 = vpop.f32.mrf.mxu0
    %v8263 = vadd.f32 %v8250, %v8262
    %v8264 = vpop.f32.mrf.mxu0
    %8265 = vdwg.mxu0
    %8266 = vmatpush.bf16.msra.mxu0 %v7965
    %8267 = vmatpush.bf16.msra.mxu0 %v7961
    %8268 = vmatpush.bf16.msra.mxu0 %v7957
    %8269 = vmatpush.bf16.msra.mxu0 %v7953
    %8270 = vmatpush.bf16.msra.mxu0 %v7949
    %8271 = vmatpush.bf16.msra.mxu0 %v7945
    %8272 = vmatpush.bf16.msra.mxu0 %v7941
    %8273 = vmatpush.bf16.msra.mxu0 %v7937
    %8274 = vmatmul.bf16.gmra.mxu0 %v2696
    %v8275 = vpop.f32.mrf.mxu0
    %v8276 = vadd.f32 %v8263, %v8275
    %v8277 = vpop.f32.mrf.mxu0
    %8278 = vdwg.mxu0
    %8279 = vmatpush.bf16.msra.mxu0 %v7742
    %8280 = vmatpush.bf16.msra.mxu0 %v7738
    %8281 = vmatpush.bf16.msra.mxu0 %v7734
    %8282 = vmatpush.bf16.msra.mxu0 %v7730
    %8283 = vmatpush.bf16.msra.mxu0 %v7726
    %8284 = vmatpush.bf16.msra.mxu0 %v7722
    %8285 = vmatpush.bf16.msra.mxu0 %v7718
    %8286 = vmatpush.bf16.msra.mxu0 %v7714
    %8287 = vmatmul.bf16.gmra.mxu0 %v2689
    %v8288 = vpop.f32.mrf.mxu0
    %v8289 = vadd.f32 0.0, %v8288
    %v8290 = vpop.f32.mrf.mxu0
    %8291 = vdwg.mxu0
    %8292 = vmatpush.bf16.msra.mxu0 %v7774
    %8293 = vmatpush.bf16.msra.mxu0 %v7770
    %8294 = vmatpush.bf16.msra.mxu0 %v7766
    %8295 = vmatpush.bf16.msra.mxu0 %v7762
    %8296 = vmatpush.bf16.msra.mxu0 %v7758
    %8297 = vmatpush.bf16.msra.mxu0 %v7754
    %8298 = vmatpush.bf16.msra.mxu0 %v7750
    %8299 = vmatpush.bf16.msra.mxu0 %v7746
    %8300 = vmatmul.bf16.gmra.mxu0 %v2690
    %v8301 = vpop.f32.mrf.mxu0
    %v8302 = vadd.f32 %v8289, %v8301
    %v8303 = vpop.f32.mrf.mxu0
    %8304 = vdwg.mxu0
    %8305 = vmatpush.bf16.msra.mxu0 %v7806
    %8306 = vmatpush.bf16.msra.mxu0 %v7802
    %8307 = vmatpush.bf16.msra.mxu0 %v7798
    %8308 = vmatpush.bf16.msra.mxu0 %v7794
    %8309 = vmatpush.bf16.msra.mxu0 %v7790
    %8310 = vmatpush.bf16.msra.mxu0 %v7786
    %8311 = vmatpush.bf16.msra.mxu0 %v7782
    %8312 = vmatpush.bf16.msra.mxu0 %v7778
    %8313 = vmatmul.bf16.gmra.mxu0 %v2691
    %v8314 = vpop.f32.mrf.mxu0
    %v8315 = vadd.f32 %v8302, %v8314
    %v8316 = vpop.f32.mrf.mxu0
    %8317 = vdwg.mxu0
    %8318 = vmatpush.bf16.msra.mxu0 %v7838
    %8319 = vmatpush.bf16.msra.mxu0 %v7834
    %8320 = vmatpush.bf16.msra.mxu0 %v7830
    %8321 = vmatpush.bf16.msra.mxu0 %v7826
    %8322 = vmatpush.bf16.msra.mxu0 %v7822
    %8323 = vmatpush.bf16.msra.mxu0 %v7818
    %8324 = vmatpush.bf16.msra.mxu0 %v7814
    %8325 = vmatpush.bf16.msra.mxu0 %v7810
    %8326 = vmatmul.bf16.gmra.mxu0 %v2692
    %v8327 = vpop.f32.mrf.mxu0
    %v8328 = vadd.f32 %v8315, %v8327
    %v8329 = vpop.f32.mrf.mxu0
    %8330 = vdwg.mxu0
    %8331 = vmatpush.bf16.msra.mxu0 %v7870
    %8332 = vmatpush.bf16.msra.mxu0 %v7866
    %8333 = vmatpush.bf16.msra.mxu0 %v7862
    %8334 = vmatpush.bf16.msra.mxu0 %v7858
    %8335 = vmatpush.bf16.msra.mxu0 %v7854
    %8336 = vmatpush.bf16.msra.mxu0 %v7850
    %8337 = vmatpush.bf16.msra.mxu0 %v7846
    %8338 = vmatpush.bf16.msra.mxu0 %v7842
    %8339 = vmatmul.bf16.gmra.mxu0 %v2693
    %v8340 = vpop.f32.mrf.mxu0
    %v8341 = vadd.f32 %v8328, %v8340
    %v8342 = vpop.f32.mrf.mxu0
    %8343 = vdwg.mxu0
    %8344 = vmatpush.bf16.msra.mxu0 %v7902
    %8345 = vmatpush.bf16.msra.mxu0 %v7898
    %8346 = vmatpush.bf16.msra.mxu0 %v7894
    %8347 = vmatpush.bf16.msra.mxu0 %v7890
    %8348 = vmatpush.bf16.msra.mxu0 %v7886
    %8349 = vmatpush.bf16.msra.mxu0 %v7882
    %8350 = vmatpush.bf16.msra.mxu0 %v7878
    %8351 = vmatpush.bf16.msra.mxu0 %v7874
    %8352 = vmatmul.bf16.gmra.mxu0 %v2694
    %v8353 = vpop.f32.mrf.mxu0
    %v8354 = vadd.f32 %v8341, %v8353
    %v8355 = vpop.f32.mrf.mxu0
    %8356 = vdwg.mxu0
    %8357 = vmatpush.bf16.msra.mxu0 %v7934
    %8358 = vmatpush.bf16.msra.mxu0 %v7930
    %8359 = vmatpush.bf16.msra.mxu0 %v7926
    %8360 = vmatpush.bf16.msra.mxu0 %v7922
    %8361 = vmatpush.bf16.msra.mxu0 %v7918
    %8362 = vmatpush.bf16.msra.mxu0 %v7914
    %8363 = vmatpush.bf16.msra.mxu0 %v7910
    %8364 = vmatpush.bf16.msra.mxu0 %v7906
    %8365 = vmatmul.bf16.gmra.mxu0 %v2695
    %v8366 = vpop.f32.mrf.mxu0
    %v8367 = vadd.f32 %v8354, %v8366
    %v8368 = vpop.f32.mrf.mxu0
    %8369 = vdwg.mxu0
    %8370 = vmatpush.bf16.msra.mxu0 %v7966
    %8371 = vmatpush.bf16.msra.mxu0 %v7962
    %8372 = vmatpush.bf16.msra.mxu0 %v7958
    %8373 = vmatpush.bf16.msra.mxu0 %v7954
    %8374 = vmatpush.bf16.msra.mxu0 %v7950
    %8375 = vmatpush.bf16.msra.mxu0 %v7946
    %8376 = vmatpush.bf16.msra.mxu0 %v7942
    %8377 = vmatpush.bf16.msra.mxu0 %v7938
    %8378 = vmatmul.bf16.gmra.mxu0 %v2696
    %v8379 = vpop.f32.mrf.mxu0
    %v8380 = vadd.f32 %v8367, %v8379
    %v8381 = vpop.f32.mrf.mxu0
    %8382 = vdwg.mxu0
    %v8384 = vperm.slane %v2698, 0
    %v8385 = vperm.slane %v2698, 1
    %v8386 = vperm.slane %v2698, 2
    %v8387 = vperm.slane %v2698, 3
    %v8392 = vmul.f32 %v8068, %v8384
    %v8393 = vmul.f32 %v8172, %v8385
    %v8394 = vmul.f32 %v8276, %v8386
    %v8395 = vmul.f32 %v8380, %v8387
    %v8397 = vperm.slane %v2700, 0
    %v8398 = vperm.slane %v2700, 1
    %v8399 = vperm.slane %v2700, 2
    %v8400 = vperm.slane %v2700, 3
    %v8405 = vadd.f32 %v8392, %v8397
    %v8406 = vadd.f32 %v8393, %v8398
    %v8407 = vadd.f32 %v8394, %v8399
    %v8408 = vadd.f32 %v8395, %v8400
    %v8409 = vtanh.pop %v8405
    %v8410 = vtanh.pop %v8406
    %v8411 = vtanh.pop %v8407
    %v8412 = vtanh.pop %v8408
    %s8413 = sshll.u32 %s2702, 4
    %8414 = dma.done %s264, %s8413
    %v8415 = vld [vmem:[%s263] sm:$0xff]
    %v8416 = vld [vmem:[%s263 + $0x8] sm:$0xff]
    %v8417 = vld [vmem:[%s263 + $0x10] sm:$0xff]
    %v8418 = vld [vmem:[%s263 + $0x18] sm:$0xff]
    %v8419 = vld [vmem:[%s263 + $0x20] sm:$0xff]
    %v8420 = vld [vmem:[%s263 + $0x28] sm:$0xff]
    %v8421 = vld [vmem:[%s263 + $0x30] sm:$0xff]
    %v8422 = vld [vmem:[%s263 + $0x38] sm:$0xff]
    %v8423 = vld [vmem:[%s263 + $0x40] sm:$0xff]
    %v8424 = vld [vmem:[%s263 + $0x48] sm:$0xff]
    %v8425 = vld [vmem:[%s263 + $0x50] sm:$0xff]
    %v8426 = vld [vmem:[%s263 + $0x58] sm:$0xff]
    %v8427 = vld [vmem:[%s263 + $0x60] sm:$0xff]
    %v8428 = vld [vmem:[%s263 + $0x68] sm:$0xff]
    %v8429 = vld [vmem:[%s263 + $0x70] sm:$0xff]
    %v8430 = vld [vmem:[%s263 + $0x78] sm:$0xff]
    %v8431 = vld [vmem:[%s263 + $0x80] sm:$0xff]
    %v8432 = vld [vmem:[%s263 + $0x88] sm:$0xff]
    %v8433 = vld [vmem:[%s263 + $0x90] sm:$0xff]
    %v8434 = vld [vmem:[%s263 + $0x98] sm:$0xff]
    %v8435 = vld [vmem:[%s263 + $0xa0] sm:$0xff]
    %v8436 = vld [vmem:[%s263 + $0xa8] sm:$0xff]
    %v8437 = vld [vmem:[%s263 + $0xb0] sm:$0xff]
    %v8438 = vld [vmem:[%s263 + $0xb8] sm:$0xff]
    %v8439 = vld [vmem:[%s263 + $0xc0] sm:$0xff]
    %v8440 = vld [vmem:[%s263 + $0xc8] sm:$0xff]
    %v8441 = vld [vmem:[%s263 + $0xd0] sm:$0xff]
    %v8442 = vld [vmem:[%s263 + $0xd8] sm:$0xff]
    %v8443 = vld [vmem:[%s263 + $0xe0] sm:$0xff]
    %v8444 = vld [vmem:[%s263 + $0xe8] sm:$0xff]
    %v8445 = vld [vmem:[%s263 + $0xf0] sm:$0xff]
    %v8446 = vld [vmem:[%s263 + $0xf8] sm:$0xff]
    %v8447 = vld [vmem:[%s263 + $0x100] sm:$0xff]
    %v8448 = vld [vmem:[%s263 + $0x108] sm:$0xff]
    %v8449 = vld [vmem:[%s263 + $0x110] sm:$0xff]
    %v8450 = vld [vmem:[%s263 + $0x118] sm:$0xff]
    %v8451 = vld [vmem:[%s263 + $0x120] sm:$0xff]
    %v8452 = vld [vmem:[%s263 + $0x128] sm:$0xff]
    %v8453 = vld [vmem:[%s263 + $0x130] sm:$0xff]
    %v8454 = vld [vmem:[%s263 + $0x138] sm:$0xff]
    %v8455 = vld [vmem:[%s263 + $0x140] sm:$0xff]
    %v8456 = vld [vmem:[%s263 + $0x148] sm:$0xff]
    %v8457 = vld [vmem:[%s263 + $0x150] sm:$0xff]
    %v8458 = vld [vmem:[%s263 + $0x158] sm:$0xff]
    %v8459 = vld [vmem:[%s263 + $0x160] sm:$0xff]
    %v8460 = vld [vmem:[%s263 + $0x168] sm:$0xff]
    %v8461 = vld [vmem:[%s263 + $0x170] sm:$0xff]
    %v8462 = vld [vmem:[%s263 + $0x178] sm:$0xff]
    %v8463 = vld [vmem:[%s263 + $0x180] sm:$0xff]
    %v8464 = vld [vmem:[%s263 + $0x188] sm:$0xff]
    %v8465 = vld [vmem:[%s263 + $0x190] sm:$0xff]
    %v8466 = vld [vmem:[%s263 + $0x198] sm:$0xff]
    %v8467 = vld [vmem:[%s263 + $0x1a0] sm:$0xff]
    %v8468 = vld [vmem:[%s263 + $0x1a8] sm:$0xff]
    %v8469 = vld [vmem:[%s263 + $0x1b0] sm:$0xff]
    %v8470 = vld [vmem:[%s263 + $0x1b8] sm:$0xff]
    %v8471 = vld [vmem:[%s263 + $0x1c0] sm:$0xff]
    %v8472 = vld [vmem:[%s263 + $0x1c8] sm:$0xff]
    %v8473 = vld [vmem:[%s263 + $0x1d0] sm:$0xff]
    %v8474 = vld [vmem:[%s263 + $0x1d8] sm:$0xff]
    %v8475 = vld [vmem:[%s263 + $0x1e0] sm:$0xff]
    %v8476 = vld [vmem:[%s263 + $0x1e8] sm:$0xff]
    %v8477 = vld [vmem:[%s263 + $0x1f0] sm:$0xff]
    %v8478 = vld [vmem:[%s263 + $0x1f8] sm:$0xff]
    %v8479 = vld [vmem:[%s263 + $0x200] sm:$0xff]
    %v8480 = vld [vmem:[%s263 + $0x208] sm:$0xff]
    %v8481 = vld [vmem:[%s263 + $0x210] sm:$0xff]
    %v8482 = vld [vmem:[%s263 + $0x218] sm:$0xff]
    %v8483 = vld [vmem:[%s263 + $0x220] sm:$0xff]
    %v8484 = vld [vmem:[%s263 + $0x228] sm:$0xff]
    %v8485 = vld [vmem:[%s263 + $0x230] sm:$0xff]
    %v8486 = vld [vmem:[%s263 + $0x238] sm:$0xff]
    %v8487 = vld [vmem:[%s263 + $0x240] sm:$0xff]
    %v8488 = vld [vmem:[%s263 + $0x248] sm:$0xff]
    %v8489 = vld [vmem:[%s263 + $0x250] sm:$0xff]
    %v8490 = vld [vmem:[%s263 + $0x258] sm:$0xff]
    %v8491 = vld [vmem:[%s263 + $0x260] sm:$0xff]
    %v8492 = vld [vmem:[%s263 + $0x268] sm:$0xff]
    %v8493 = vld [vmem:[%s263 + $0x270] sm:$0xff]
    %v8494 = vld [vmem:[%s263 + $0x278] sm:$0xff]
    %v8495 = vld [vmem:[%s263 + $0x280] sm:$0xff]
    %v8496 = vld [vmem:[%s263 + $0x288] sm:$0xff]
    %v8497 = vld [vmem:[%s263 + $0x290] sm:$0xff]
    %v8498 = vld [vmem:[%s263 + $0x298] sm:$0xff]
    %v8499 = vld [vmem:[%s263 + $0x2a0] sm:$0xff]
    %v8500 = vld [vmem:[%s263 + $0x2a8] sm:$0xff]
    %v8501 = vld [vmem:[%s263 + $0x2b0] sm:$0xff]
    %v8502 = vld [vmem:[%s263 + $0x2b8] sm:$0xff]
    %v8503 = vld [vmem:[%s263 + $0x2c0] sm:$0xff]
    %v8504 = vld [vmem:[%s263 + $0x2c8] sm:$0xff]
    %v8505 = vld [vmem:[%s263 + $0x2d0] sm:$0xff]
    %v8506 = vld [vmem:[%s263 + $0x2d8] sm:$0xff]
    %v8507 = vld [vmem:[%s263 + $0x2e0] sm:$0xff]
    %v8508 = vld [vmem:[%s263 + $0x2e8] sm:$0xff]
    %v8509 = vld [vmem:[%s263 + $0x2f0] sm:$0xff]
    %v8510 = vld [vmem:[%s263 + $0x2f8] sm:$0xff]
    %v8511 = vld [vmem:[%s263 + $0x300] sm:$0xff]
    %v8512 = vld [vmem:[%s263 + $0x308] sm:$0xff]
    %v8513 = vld [vmem:[%s263 + $0x310] sm:$0xff]
    %v8514 = vld [vmem:[%s263 + $0x318] sm:$0xff]
    %v8515 = vld [vmem:[%s263 + $0x320] sm:$0xff]
    %v8516 = vld [vmem:[%s263 + $0x328] sm:$0xff]
    %v8517 = vld [vmem:[%s263 + $0x330] sm:$0xff]
    %v8518 = vld [vmem:[%s263 + $0x338] sm:$0xff]
    %v8519 = vld [vmem:[%s263 + $0x340] sm:$0xff]
    %v8520 = vld [vmem:[%s263 + $0x348] sm:$0xff]
    %v8521 = vld [vmem:[%s263 + $0x350] sm:$0xff]
    %v8522 = vld [vmem:[%s263 + $0x358] sm:$0xff]
    %v8523 = vld [vmem:[%s263 + $0x360] sm:$0xff]
    %v8524 = vld [vmem:[%s263 + $0x368] sm:$0xff]
    %v8525 = vld [vmem:[%s263 + $0x370] sm:$0xff]
    %v8526 = vld [vmem:[%s263 + $0x378] sm:$0xff]
    %v8527 = vld [vmem:[%s263 + $0x380] sm:$0xff]
    %v8528 = vld [vmem:[%s263 + $0x388] sm:$0xff]
    %v8529 = vld [vmem:[%s263 + $0x390] sm:$0xff]
    %v8530 = vld [vmem:[%s263 + $0x398] sm:$0xff]
    %v8531 = vld [vmem:[%s263 + $0x3a0] sm:$0xff]
    %v8532 = vld [vmem:[%s263 + $0x3a8] sm:$0xff]
    %v8533 = vld [vmem:[%s263 + $0x3b0] sm:$0xff]
    %v8534 = vld [vmem:[%s263 + $0x3b8] sm:$0xff]
    %v8535 = vld [vmem:[%s263 + $0x3c0] sm:$0xff]
    %v8536 = vld [vmem:[%s263 + $0x3c8] sm:$0xff]
    %v8537 = vld [vmem:[%s263 + $0x3d0] sm:$0xff]
    %v8538 = vld [vmem:[%s263 + $0x3d8] sm:$0xff]
    %v8539 = vld [vmem:[%s263 + $0x3e0] sm:$0xff]
    %v8540 = vld [vmem:[%s263 + $0x3e8] sm:$0xff]
    %v8541 = vld [vmem:[%s263 + $0x3f0] sm:$0xff]
    %v8542 = vld [vmem:[%s263 + $0x3f8] sm:$0xff]
    %v8543 = vunpack.c.0.s8 %v8415
    %v8544 = vunpack.c.0.s8 %v8416
    %v8545 = vunpack.c.0.s8 %v8417
    %v8546 = vunpack.c.0.s8 %v8418
    %v8547 = vunpack.c.1.s8 %v8415
    %v8548 = vunpack.c.1.s8 %v8416
    %v8549 = vunpack.c.1.s8 %v8417
    %v8550 = vunpack.c.1.s8 %v8418
    %v8551 = vunpack.c.2.s8 %v8415
    %v8552 = vunpack.c.2.s8 %v8416
    %v8553 = vunpack.c.2.s8 %v8417
    %v8554 = vunpack.c.2.s8 %v8418
    %v8555 = vunpack.c.3.s8 %v8415
    %v8556 = vunpack.c.3.s8 %v8416
    %v8557 = vunpack.c.3.s8 %v8417
    %v8558 = vunpack.c.3.s8 %v8418
    %v8559 = vunpack.c.0.s8 %v8419
    %v8560 = vunpack.c.0.s8 %v8420
    %v8561 = vunpack.c.0.s8 %v8421
    %v8562 = vunpack.c.0.s8 %v8422
    %v8563 = vunpack.c.1.s8 %v8419
    %v8564 = vunpack.c.1.s8 %v8420
    %v8565 = vunpack.c.1.s8 %v8421
    %v8566 = vunpack.c.1.s8 %v8422
    %v8567 = vunpack.c.2.s8 %v8419
    %v8568 = vunpack.c.2.s8 %v8420
    %v8569 = vunpack.c.2.s8 %v8421
    %v8570 = vunpack.c.2.s8 %v8422
    %v8571 = vunpack.c.3.s8 %v8419
    %v8572 = vunpack.c.3.s8 %v8420
    %v8573 = vunpack.c.3.s8 %v8421
    %v8574 = vunpack.c.3.s8 %v8422
    %v8575 = vunpack.c.0.s8 %v8423
    %v8576 = vunpack.c.0.s8 %v8424
    %v8577 = vunpack.c.0.s8 %v8425
    %v8578 = vunpack.c.0.s8 %v8426
    %v8579 = vunpack.c.1.s8 %v8423
    %v8580 = vunpack.c.1.s8 %v8424
    %v8581 = vunpack.c.1.s8 %v8425
    %v8582 = vunpack.c.1.s8 %v8426
    %v8583 = vunpack.c.2.s8 %v8423
    %v8584 = vunpack.c.2.s8 %v8424
    %v8585 = vunpack.c.2.s8 %v8425
    %v8586 = vunpack.c.2.s8 %v8426
    %v8587 = vunpack.c.3.s8 %v8423
    %v8588 = vunpack.c.3.s8 %v8424
    %v8589 = vunpack.c.3.s8 %v8425
    %v8590 = vunpack.c.3.s8 %v8426
    %v8591 = vunpack.c.0.s8 %v8427
    %v8592 = vunpack.c.0.s8 %v8428
    %v8593 = vunpack.c.0.s8 %v8429
    %v8594 = vunpack.c.0.s8 %v8430
    %v8595 = vunpack.c.1.s8 %v8427
    %v8596 = vunpack.c.1.s8 %v8428
    %v8597 = vunpack.c.1.s8 %v8429
    %v8598 = vunpack.c.1.s8 %v8430
    %v8599 = vunpack.c.2.s8 %v8427
    %v8600 = vunpack.c.2.s8 %v8428
    %v8601 = vunpack.c.2.s8 %v8429
    %v8602 = vunpack.c.2.s8 %v8430
    %v8603 = vunpack.c.3.s8 %v8427
    %v8604 = vunpack.c.3.s8 %v8428
    %v8605 = vunpack.c.3.s8 %v8429
    %v8606 = vunpack.c.3.s8 %v8430
    %v8607 = vunpack.c.0.s8 %v8431
    %v8608 = vunpack.c.0.s8 %v8432
    %v8609 = vunpack.c.0.s8 %v8433
    %v8610 = vunpack.c.0.s8 %v8434
    %v8611 = vunpack.c.1.s8 %v8431
    %v8612 = vunpack.c.1.s8 %v8432
    %v8613 = vunpack.c.1.s8 %v8433
    %v8614 = vunpack.c.1.s8 %v8434
    %v8615 = vunpack.c.2.s8 %v8431
    %v8616 = vunpack.c.2.s8 %v8432
    %v8617 = vunpack.c.2.s8 %v8433
    %v8618 = vunpack.c.2.s8 %v8434
    %v8619 = vunpack.c.3.s8 %v8431
    %v8620 = vunpack.c.3.s8 %v8432
    %v8621 = vunpack.c.3.s8 %v8433
    %v8622 = vunpack.c.3.s8 %v8434
    %v8623 = vunpack.c.0.s8 %v8435
    %v8624 = vunpack.c.0.s8 %v8436
    %v8625 = vunpack.c.0.s8 %v8437
    %v8626 = vunpack.c.0.s8 %v8438
    %v8627 = vunpack.c.1.s8 %v8435
    %v8628 = vunpack.c.1.s8 %v8436
    %v8629 = vunpack.c.1.s8 %v8437
    %v8630 = vunpack.c.1.s8 %v8438
    %v8631 = vunpack.c.2.s8 %v8435
    %v8632 = vunpack.c.2.s8 %v8436
    %v8633 = vunpack.c.2.s8 %v8437
    %v8634 = vunpack.c.2.s8 %v8438
    %v8635 = vunpack.c.3.s8 %v8435
    %v8636 = vunpack.c.3.s8 %v8436
    %v8637 = vunpack.c.3.s8 %v8437
    %v8638 = vunpack.c.3.s8 %v8438
    %v8639 = vunpack.c.0.s8 %v8439
    %v8640 = vunpack.c.0.s8 %v8440
    %v8641 = vunpack.c.0.s8 %v8441
    %v8642 = vunpack.c.0.s8 %v8442
    %v8643 = vunpack.c.1.s8 %v8439
    %v8644 = vunpack.c.1.s8 %v8440
    %v8645 = vunpack.c.1.s8 %v8441
    %v8646 = vunpack.c.1.s8 %v8442
    %v8647 = vunpack.c.2.s8 %v8439
    %v8648 = vunpack.c.2.s8 %v8440
    %v8649 = vunpack.c.2.s8 %v8441
    %v8650 = vunpack.c.2.s8 %v8442
    %v8651 = vunpack.c.3.s8 %v8439
    %v8652 = vunpack.c.3.s8 %v8440
    %v8653 = vunpack.c.3.s8 %v8441
    %v8654 = vunpack.c.3.s8 %v8442
    %v8655 = vunpack.c.0.s8 %v8443
    %v8656 = vunpack.c.0.s8 %v8444
    %v8657 = vunpack.c.0.s8 %v8445
    %v8658 = vunpack.c.0.s8 %v8446
    %v8659 = vunpack.c.1.s8 %v8443
    %v8660 = vunpack.c.1.s8 %v8444
    %v8661 = vunpack.c.1.s8 %v8445
    %v8662 = vunpack.c.1.s8 %v8446
    %v8663 = vunpack.c.2.s8 %v8443
    %v8664 = vunpack.c.2.s8 %v8444
    %v8665 = vunpack.c.2.s8 %v8445
    %v8666 = vunpack.c.2.s8 %v8446
    %v8667 = vunpack.c.3.s8 %v8443
    %v8668 = vunpack.c.3.s8 %v8444
    %v8669 = vunpack.c.3.s8 %v8445
    %v8670 = vunpack.c.3.s8 %v8446
    %v8671 = vunpack.c.0.s8 %v8447
    %v8672 = vunpack.c.0.s8 %v8448
    %v8673 = vunpack.c.0.s8 %v8449
    %v8674 = vunpack.c.0.s8 %v8450
    %v8675 = vunpack.c.1.s8 %v8447
    %v8676 = vunpack.c.1.s8 %v8448
    %v8677 = vunpack.c.1.s8 %v8449
    %v8678 = vunpack.c.1.s8 %v8450
    %v8679 = vunpack.c.2.s8 %v8447
    %v8680 = vunpack.c.2.s8 %v8448
    %v8681 = vunpack.c.2.s8 %v8449
    %v8682 = vunpack.c.2.s8 %v8450
    %v8683 = vunpack.c.3.s8 %v8447
    %v8684 = vunpack.c.3.s8 %v8448
    %v8685 = vunpack.c.3.s8 %v8449
    %v8686 = vunpack.c.3.s8 %v8450
    %v8687 = vunpack.c.0.s8 %v8451
    %v8688 = vunpack.c.0.s8 %v8452
    %v8689 = vunpack.c.0.s8 %v8453
    %v8690 = vunpack.c.0.s8 %v8454
    %v8691 = vunpack.c.1.s8 %v8451
    %v8692 = vunpack.c.1.s8 %v8452
    %v8693 = vunpack.c.1.s8 %v8453
    %v8694 = vunpack.c.1.s8 %v8454
    %v8695 = vunpack.c.2.s8 %v8451
    %v8696 = vunpack.c.2.s8 %v8452
    %v8697 = vunpack.c.2.s8 %v8453
    %v8698 = vunpack.c.2.s8 %v8454
    %v8699 = vunpack.c.3.s8 %v8451
    %v8700 = vunpack.c.3.s8 %v8452
    %v8701 = vunpack.c.3.s8 %v8453
    %v8702 = vunpack.c.3.s8 %v8454
    %v8703 = vunpack.c.0.s8 %v8455
    %v8704 = vunpack.c.0.s8 %v8456
    %v8705 = vunpack.c.0.s8 %v8457
    %v8706 = vunpack.c.0.s8 %v8458
    %v8707 = vunpack.c.1.s8 %v8455
    %v8708 = vunpack.c.1.s8 %v8456
    %v8709 = vunpack.c.1.s8 %v8457
    %v8710 = vunpack.c.1.s8 %v8458
    %v8711 = vunpack.c.2.s8 %v8455
    %v8712 = vunpack.c.2.s8 %v8456
    %v8713 = vunpack.c.2.s8 %v8457
    %v8714 = vunpack.c.2.s8 %v8458
    %v8715 = vunpack.c.3.s8 %v8455
    %v8716 = vunpack.c.3.s8 %v8456
    %v8717 = vunpack.c.3.s8 %v8457
    %v8718 = vunpack.c.3.s8 %v8458
    %v8719 = vunpack.c.0.s8 %v8459
    %v8720 = vunpack.c.0.s8 %v8460
    %v8721 = vunpack.c.0.s8 %v8461
    %v8722 = vunpack.c.0.s8 %v8462
    %v8723 = vunpack.c.1.s8 %v8459
    %v8724 = vunpack.c.1.s8 %v8460
    %v8725 = vunpack.c.1.s8 %v8461
    %v8726 = vunpack.c.1.s8 %v8462
    %v8727 = vunpack.c.2.s8 %v8459
    %v8728 = vunpack.c.2.s8 %v8460
    %v8729 = vunpack.c.2.s8 %v8461
    %v8730 = vunpack.c.2.s8 %v8462
    %v8731 = vunpack.c.3.s8 %v8459
    %v8732 = vunpack.c.3.s8 %v8460
    %v8733 = vunpack.c.3.s8 %v8461
    %v8734 = vunpack.c.3.s8 %v8462
    %v8735 = vunpack.c.0.s8 %v8463
    %v8736 = vunpack.c.0.s8 %v8464
    %v8737 = vunpack.c.0.s8 %v8465
    %v8738 = vunpack.c.0.s8 %v8466
    %v8739 = vunpack.c.1.s8 %v8463
    %v8740 = vunpack.c.1.s8 %v8464
    %v8741 = vunpack.c.1.s8 %v8465
    %v8742 = vunpack.c.1.s8 %v8466
    %v8743 = vunpack.c.2.s8 %v8463
    %v8744 = vunpack.c.2.s8 %v8464
    %v8745 = vunpack.c.2.s8 %v8465
    %v8746 = vunpack.c.2.s8 %v8466
    %v8747 = vunpack.c.3.s8 %v8463
    %v8748 = vunpack.c.3.s8 %v8464
    %v8749 = vunpack.c.3.s8 %v8465
    %v8750 = vunpack.c.3.s8 %v8466
    %v8751 = vunpack.c.0.s8 %v8467
    %v8752 = vunpack.c.0.s8 %v8468
    %v8753 = vunpack.c.0.s8 %v8469
    %v8754 = vunpack.c.0.s8 %v8470
    %v8755 = vunpack.c.1.s8 %v8467
    %v8756 = vunpack.c.1.s8 %v8468
    %v8757 = vunpack.c.1.s8 %v8469
    %v8758 = vunpack.c.1.s8 %v8470
    %v8759 = vunpack.c.2.s8 %v8467
    %v8760 = vunpack.c.2.s8 %v8468
    %v8761 = vunpack.c.2.s8 %v8469
    %v8762 = vunpack.c.2.s8 %v8470
    %v8763 = vunpack.c.3.s8 %v8467
    %v8764 = vunpack.c.3.s8 %v8468
    %v8765 = vunpack.c.3.s8 %v8469
    %v8766 = vunpack.c.3.s8 %v8470
    %v8767 = vunpack.c.0.s8 %v8471
    %v8768 = vunpack.c.0.s8 %v8472
    %v8769 = vunpack.c.0.s8 %v8473
    %v8770 = vunpack.c.0.s8 %v8474
    %v8771 = vunpack.c.1.s8 %v8471
    %v8772 = vunpack.c.1.s8 %v8472
    %v8773 = vunpack.c.1.s8 %v8473
    %v8774 = vunpack.c.1.s8 %v8474
    %v8775 = vunpack.c.2.s8 %v8471
    %v8776 = vunpack.c.2.s8 %v8472
    %v8777 = vunpack.c.2.s8 %v8473
    %v8778 = vunpack.c.2.s8 %v8474
    %v8779 = vunpack.c.3.s8 %v8471
    %v8780 = vunpack.c.3.s8 %v8472
    %v8781 = vunpack.c.3.s8 %v8473
    %v8782 = vunpack.c.3.s8 %v8474
    %v8783 = vunpack.c.0.s8 %v8475
    %v8784 = vunpack.c.0.s8 %v8476
    %v8785 = vunpack.c.0.s8 %v8477
    %v8786 = vunpack.c.0.s8 %v8478
    %v8787 = vunpack.c.1.s8 %v8475
    %v8788 = vunpack.c.1.s8 %v8476
    %v8789 = vunpack.c.1.s8 %v8477
    %v8790 = vunpack.c.1.s8 %v8478
    %v8791 = vunpack.c.2.s8 %v8475
    %v8792 = vunpack.c.2.s8 %v8476
    %v8793 = vunpack.c.2.s8 %v8477
    %v8794 = vunpack.c.2.s8 %v8478
    %v8795 = vunpack.c.3.s8 %v8475
    %v8796 = vunpack.c.3.s8 %v8476
    %v8797 = vunpack.c.3.s8 %v8477
    %v8798 = vunpack.c.3.s8 %v8478
    %v8799 = vunpack.c.0.s8 %v8479
    %v8800 = vunpack.c.0.s8 %v8480
    %v8801 = vunpack.c.0.s8 %v8481
    %v8802 = vunpack.c.0.s8 %v8482
    %v8803 = vunpack.c.1.s8 %v8479
    %v8804 = vunpack.c.1.s8 %v8480
    %v8805 = vunpack.c.1.s8 %v8481
    %v8806 = vunpack.c.1.s8 %v8482
    %v8807 = vunpack.c.2.s8 %v8479
    %v8808 = vunpack.c.2.s8 %v8480
    %v8809 = vunpack.c.2.s8 %v8481
    %v8810 = vunpack.c.2.s8 %v8482
    %v8811 = vunpack.c.3.s8 %v8479
    %v8812 = vunpack.c.3.s8 %v8480
    %v8813 = vunpack.c.3.s8 %v8481
    %v8814 = vunpack.c.3.s8 %v8482
    %v8815 = vunpack.c.0.s8 %v8483
    %v8816 = vunpack.c.0.s8 %v8484
    %v8817 = vunpack.c.0.s8 %v8485
    %v8818 = vunpack.c.0.s8 %v8486
    %v8819 = vunpack.c.1.s8 %v8483
    %v8820 = vunpack.c.1.s8 %v8484
    %v8821 = vunpack.c.1.s8 %v8485
    %v8822 = vunpack.c.1.s8 %v8486
    %v8823 = vunpack.c.2.s8 %v8483
    %v8824 = vunpack.c.2.s8 %v8484
    %v8825 = vunpack.c.2.s8 %v8485
    %v8826 = vunpack.c.2.s8 %v8486
    %v8827 = vunpack.c.3.s8 %v8483
    %v8828 = vunpack.c.3.s8 %v8484
    %v8829 = vunpack.c.3.s8 %v8485
    %v8830 = vunpack.c.3.s8 %v8486
    %v8831 = vunpack.c.0.s8 %v8487
    %v8832 = vunpack.c.0.s8 %v8488
    %v8833 = vunpack.c.0.s8 %v8489
    %v8834 = vunpack.c.0.s8 %v8490
    %v8835 = vunpack.c.1.s8 %v8487
    %v8836 = vunpack.c.1.s8 %v8488
    %v8837 = vunpack.c.1.s8 %v8489
    %v8838 = vunpack.c.1.s8 %v8490
    %v8839 = vunpack.c.2.s8 %v8487
    %v8840 = vunpack.c.2.s8 %v8488
    %v8841 = vunpack.c.2.s8 %v8489
    %v8842 = vunpack.c.2.s8 %v8490
    %v8843 = vunpack.c.3.s8 %v8487
    %v8844 = vunpack.c.3.s8 %v8488
    %v8845 = vunpack.c.3.s8 %v8489
    %v8846 = vunpack.c.3.s8 %v8490
    %v8847 = vunpack.c.0.s8 %v8491
    %v8848 = vunpack.c.0.s8 %v8492
    %v8849 = vunpack.c.0.s8 %v8493
    %v8850 = vunpack.c.0.s8 %v8494
    %v8851 = vunpack.c.1.s8 %v8491
    %v8852 = vunpack.c.1.s8 %v8492
    %v8853 = vunpack.c.1.s8 %v8493
    %v8854 = vunpack.c.1.s8 %v8494
    %v8855 = vunpack.c.2.s8 %v8491
    %v8856 = vunpack.c.2.s8 %v8492
    %v8857 = vunpack.c.2.s8 %v8493
    %v8858 = vunpack.c.2.s8 %v8494
    %v8859 = vunpack.c.3.s8 %v8491
    %v8860 = vunpack.c.3.s8 %v8492
    %v8861 = vunpack.c.3.s8 %v8493
    %v8862 = vunpack.c.3.s8 %v8494
    %v8863 = vunpack.c.0.s8 %v8495
    %v8864 = vunpack.c.0.s8 %v8496
    %v8865 = vunpack.c.0.s8 %v8497
    %v8866 = vunpack.c.0.s8 %v8498
    %v8867 = vunpack.c.1.s8 %v8495
    %v8868 = vunpack.c.1.s8 %v8496
    %v8869 = vunpack.c.1.s8 %v8497
    %v8870 = vunpack.c.1.s8 %v8498
    %v8871 = vunpack.c.2.s8 %v8495
    %v8872 = vunpack.c.2.s8 %v8496
    %v8873 = vunpack.c.2.s8 %v8497
    %v8874 = vunpack.c.2.s8 %v8498
    %v8875 = vunpack.c.3.s8 %v8495
    %v8876 = vunpack.c.3.s8 %v8496
    %v8877 = vunpack.c.3.s8 %v8497
    %v8878 = vunpack.c.3.s8 %v8498
    %v8879 = vunpack.c.0.s8 %v8499
    %v8880 = vunpack.c.0.s8 %v8500
    %v8881 = vunpack.c.0.s8 %v8501
    %v8882 = vunpack.c.0.s8 %v8502
    %v8883 = vunpack.c.1.s8 %v8499
    %v8884 = vunpack.c.1.s8 %v8500
    %v8885 = vunpack.c.1.s8 %v8501
    %v8886 = vunpack.c.1.s8 %v8502
    %v8887 = vunpack.c.2.s8 %v8499
    %v8888 = vunpack.c.2.s8 %v8500
    %v8889 = vunpack.c.2.s8 %v8501
    %v8890 = vunpack.c.2.s8 %v8502
    %v8891 = vunpack.c.3.s8 %v8499
    %v8892 = vunpack.c.3.s8 %v8500
    %v8893 = vunpack.c.3.s8 %v8501
    %v8894 = vunpack.c.3.s8 %v8502
    %v8895 = vunpack.c.0.s8 %v8503
    %v8896 = vunpack.c.0.s8 %v8504
    %v8897 = vunpack.c.0.s8 %v8505
    %v8898 = vunpack.c.0.s8 %v8506
    %v8899 = vunpack.c.1.s8 %v8503
    %v8900 = vunpack.c.1.s8 %v8504
    %v8901 = vunpack.c.1.s8 %v8505
    %v8902 = vunpack.c.1.s8 %v8506
    %v8903 = vunpack.c.2.s8 %v8503
    %v8904 = vunpack.c.2.s8 %v8504
    %v8905 = vunpack.c.2.s8 %v8505
    %v8906 = vunpack.c.2.s8 %v8506
    %v8907 = vunpack.c.3.s8 %v8503
    %v8908 = vunpack.c.3.s8 %v8504
    %v8909 = vunpack.c.3.s8 %v8505
    %v8910 = vunpack.c.3.s8 %v8506
    %v8911 = vunpack.c.0.s8 %v8507
    %v8912 = vunpack.c.0.s8 %v8508
    %v8913 = vunpack.c.0.s8 %v8509
    %v8914 = vunpack.c.0.s8 %v8510
    %v8915 = vunpack.c.1.s8 %v8507
    %v8916 = vunpack.c.1.s8 %v8508
    %v8917 = vunpack.c.1.s8 %v8509
    %v8918 = vunpack.c.1.s8 %v8510
    %v8919 = vunpack.c.2.s8 %v8507
    %v8920 = vunpack.c.2.s8 %v8508
    %v8921 = vunpack.c.2.s8 %v8509
    %v8922 = vunpack.c.2.s8 %v8510
    %v8923 = vunpack.c.3.s8 %v8507
    %v8924 = vunpack.c.3.s8 %v8508
    %v8925 = vunpack.c.3.s8 %v8509
    %v8926 = vunpack.c.3.s8 %v8510
    %v8927 = vunpack.c.0.s8 %v8511
    %v8928 = vunpack.c.0.s8 %v8512
    %v8929 = vunpack.c.0.s8 %v8513
    %v8930 = vunpack.c.0.s8 %v8514
    %v8931 = vunpack.c.1.s8 %v8511
    %v8932 = vunpack.c.1.s8 %v8512
    %v8933 = vunpack.c.1.s8 %v8513
    %v8934 = vunpack.c.1.s8 %v8514
    %v8935 = vunpack.c.2.s8 %v8511
    %v8936 = vunpack.c.2.s8 %v8512
    %v8937 = vunpack.c.2.s8 %v8513
    %v8938 = vunpack.c.2.s8 %v8514
    %v8939 = vunpack.c.3.s8 %v8511
    %v8940 = vunpack.c.3.s8 %v8512
    %v8941 = vunpack.c.3.s8 %v8513
    %v8942 = vunpack.c.3.s8 %v8514
    %v8943 = vunpack.c.0.s8 %v8515
    %v8944 = vunpack.c.0.s8 %v8516
    %v8945 = vunpack.c.0.s8 %v8517
    %v8946 = vunpack.c.0.s8 %v8518
    %v8947 = vunpack.c.1.s8 %v8515
    %v8948 = vunpack.c.1.s8 %v8516
    %v8949 = vunpack.c.1.s8 %v8517
    %v8950 = vunpack.c.1.s8 %v8518
    %v8951 = vunpack.c.2.s8 %v8515
    %v8952 = vunpack.c.2.s8 %v8516
    %v8953 = vunpack.c.2.s8 %v8517
    %v8954 = vunpack.c.2.s8 %v8518
    %v8955 = vunpack.c.3.s8 %v8515
    %v8956 = vunpack.c.3.s8 %v8516
    %v8957 = vunpack.c.3.s8 %v8517
    %v8958 = vunpack.c.3.s8 %v8518
    %v8959 = vunpack.c.0.s8 %v8519
    %v8960 = vunpack.c.0.s8 %v8520
    %v8961 = vunpack.c.0.s8 %v8521
    %v8962 = vunpack.c.0.s8 %v8522
    %v8963 = vunpack.c.1.s8 %v8519
    %v8964 = vunpack.c.1.s8 %v8520
    %v8965 = vunpack.c.1.s8 %v8521
    %v8966 = vunpack.c.1.s8 %v8522
    %v8967 = vunpack.c.2.s8 %v8519
    %v8968 = vunpack.c.2.s8 %v8520
    %v8969 = vunpack.c.2.s8 %v8521
    %v8970 = vunpack.c.2.s8 %v8522
    %v8971 = vunpack.c.3.s8 %v8519
    %v8972 = vunpack.c.3.s8 %v8520
    %v8973 = vunpack.c.3.s8 %v8521
    %v8974 = vunpack.c.3.s8 %v8522
    %v8975 = vunpack.c.0.s8 %v8523
    %v8976 = vunpack.c.0.s8 %v8524
    %v8977 = vunpack.c.0.s8 %v8525
    %v8978 = vunpack.c.0.s8 %v8526
    %v8979 = vunpack.c.1.s8 %v8523
    %v8980 = vunpack.c.1.s8 %v8524
    %v8981 = vunpack.c.1.s8 %v8525
    %v8982 = vunpack.c.1.s8 %v8526
    %v8983 = vunpack.c.2.s8 %v8523
    %v8984 = vunpack.c.2.s8 %v8524
    %v8985 = vunpack.c.2.s8 %v8525
    %v8986 = vunpack.c.2.s8 %v8526
    %v8987 = vunpack.c.3.s8 %v8523
    %v8988 = vunpack.c.3.s8 %v8524
    %v8989 = vunpack.c.3.s8 %v8525
    %v8990 = vunpack.c.3.s8 %v8526
    %v8991 = vunpack.c.0.s8 %v8527
    %v8992 = vunpack.c.0.s8 %v8528
    %v8993 = vunpack.c.0.s8 %v8529
    %v8994 = vunpack.c.0.s8 %v8530
    %v8995 = vunpack.c.1.s8 %v8527
    %v8996 = vunpack.c.1.s8 %v8528
    %v8997 = vunpack.c.1.s8 %v8529
    %v8998 = vunpack.c.1.s8 %v8530
    %v8999 = vunpack.c.2.s8 %v8527
    %v9000 = vunpack.c.2.s8 %v8528
    %v9001 = vunpack.c.2.s8 %v8529
    %v9002 = vunpack.c.2.s8 %v8530
    %v9003 = vunpack.c.3.s8 %v8527
    %v9004 = vunpack.c.3.s8 %v8528
    %v9005 = vunpack.c.3.s8 %v8529
    %v9006 = vunpack.c.3.s8 %v8530
    %v9007 = vunpack.c.0.s8 %v8531
    %v9008 = vunpack.c.0.s8 %v8532
    %v9009 = vunpack.c.0.s8 %v8533
    %v9010 = vunpack.c.0.s8 %v8534
    %v9011 = vunpack.c.1.s8 %v8531
    %v9012 = vunpack.c.1.s8 %v8532
    %v9013 = vunpack.c.1.s8 %v8533
    %v9014 = vunpack.c.1.s8 %v8534
    %v9015 = vunpack.c.2.s8 %v8531
    %v9016 = vunpack.c.2.s8 %v8532
    %v9017 = vunpack.c.2.s8 %v8533
    %v9018 = vunpack.c.2.s8 %v8534
    %v9019 = vunpack.c.3.s8 %v8531
    %v9020 = vunpack.c.3.s8 %v8532
    %v9021 = vunpack.c.3.s8 %v8533
    %v9022 = vunpack.c.3.s8 %v8534
    %v9023 = vunpack.c.0.s8 %v8535
    %v9024 = vunpack.c.0.s8 %v8536
    %v9025 = vunpack.c.0.s8 %v8537
    %v9026 = vunpack.c.0.s8 %v8538
    %v9027 = vunpack.c.1.s8 %v8535
    %v9028 = vunpack.c.1.s8 %v8536
    %v9029 = vunpack.c.1.s8 %v8537
    %v9030 = vunpack.c.1.s8 %v8538
    %v9031 = vunpack.c.2.s8 %v8535
    %v9032 = vunpack.c.2.s8 %v8536
    %v9033 = vunpack.c.2.s8 %v8537
    %v9034 = vunpack.c.2.s8 %v8538
    %v9035 = vunpack.c.3.s8 %v8535
    %v9036 = vunpack.c.3.s8 %v8536
    %v9037 = vunpack.c.3.s8 %v8537
    %v9038 = vunpack.c.3.s8 %v8538
    %v9039 = vunpack.c.0.s8 %v8539
    %v9040 = vunpack.c.0.s8 %v8540
    %v9041 = vunpack.c.0.s8 %v8541
    %v9042 = vunpack.c.0.s8 %v8542
    %v9043 = vunpack.c.1.s8 %v8539
    %v9044 = vunpack.c.1.s8 %v8540
    %v9045 = vunpack.c.1.s8 %v8541
    %v9046 = vunpack.c.1.s8 %v8542
    %v9047 = vunpack.c.2.s8 %v8539
    %v9048 = vunpack.c.2.s8 %v8540
    %v9049 = vunpack.c.2.s8 %v8541
    %v9050 = vunpack.c.2.s8 %v8542
    %v9051 = vunpack.c.3.s8 %v8539
    %v9052 = vunpack.c.3.s8 %v8540
    %v9053 = vunpack.c.3.s8 %v8541
    %v9054 = vunpack.c.3.s8 %v8542
    %v9055 = vcvt.s32.f32 %v8543
    %v9056 = vcvt.s32.f32 %v8544
    %v9057 = vcvt.s32.f32 %v8545
    %v9058 = vcvt.s32.f32 %v8546
    %v9059 = vcvt.s32.f32 %v8547
    %v9060 = vcvt.s32.f32 %v8548
    %v9061 = vcvt.s32.f32 %v8549
    %v9062 = vcvt.s32.f32 %v8550
    %v9063 = vcvt.s32.f32 %v8551
    %v9064 = vcvt.s32.f32 %v8552
    %v9065 = vcvt.s32.f32 %v8553
    %v9066 = vcvt.s32.f32 %v8554
    %v9067 = vcvt.s32.f32 %v8555
    %v9068 = vcvt.s32.f32 %v8556
    %v9069 = vcvt.s32.f32 %v8557
    %v9070 = vcvt.s32.f32 %v8558
    %v9071 = vcvt.s32.f32 %v8559
    %v9072 = vcvt.s32.f32 %v8560
    %v9073 = vcvt.s32.f32 %v8561
    %v9074 = vcvt.s32.f32 %v8562
    %v9075 = vcvt.s32.f32 %v8563
    %v9076 = vcvt.s32.f32 %v8564
    %v9077 = vcvt.s32.f32 %v8565
    %v9078 = vcvt.s32.f32 %v8566
    %v9079 = vcvt.s32.f32 %v8567
    %v9080 = vcvt.s32.f32 %v8568
    %v9081 = vcvt.s32.f32 %v8569
    %v9082 = vcvt.s32.f32 %v8570
    %v9083 = vcvt.s32.f32 %v8571
    %v9084 = vcvt.s32.f32 %v8572
    %v9085 = vcvt.s32.f32 %v8573
    %v9086 = vcvt.s32.f32 %v8574
    %v9087 = vcvt.s32.f32 %v8575
    %v9088 = vcvt.s32.f32 %v8576
    %v9089 = vcvt.s32.f32 %v8577
    %v9090 = vcvt.s32.f32 %v8578
    %v9091 = vcvt.s32.f32 %v8579
    %v9092 = vcvt.s32.f32 %v8580
    %v9093 = vcvt.s32.f32 %v8581
    %v9094 = vcvt.s32.f32 %v8582
    %v9095 = vcvt.s32.f32 %v8583
    %v9096 = vcvt.s32.f32 %v8584
    %v9097 = vcvt.s32.f32 %v8585
    %v9098 = vcvt.s32.f32 %v8586
    %v9099 = vcvt.s32.f32 %v8587
    %v9100 = vcvt.s32.f32 %v8588
    %v9101 = vcvt.s32.f32 %v8589
    %v9102 = vcvt.s32.f32 %v8590
    %v9103 = vcvt.s32.f32 %v8591
    %v9104 = vcvt.s32.f32 %v8592
    %v9105 = vcvt.s32.f32 %v8593
    %v9106 = vcvt.s32.f32 %v8594
    %v9107 = vcvt.s32.f32 %v8595
    %v9108 = vcvt.s32.f32 %v8596
    %v9109 = vcvt.s32.f32 %v8597
    %v9110 = vcvt.s32.f32 %v8598
    %v9111 = vcvt.s32.f32 %v8599
    %v9112 = vcvt.s32.f32 %v8600
    %v9113 = vcvt.s32.f32 %v8601
    %v9114 = vcvt.s32.f32 %v8602
    %v9115 = vcvt.s32.f32 %v8603
    %v9116 = vcvt.s32.f32 %v8604
    %v9117 = vcvt.s32.f32 %v8605
    %v9118 = vcvt.s32.f32 %v8606
    %v9119 = vcvt.s32.f32 %v8607
    %v9120 = vcvt.s32.f32 %v8608
    %v9121 = vcvt.s32.f32 %v8609
    %v9122 = vcvt.s32.f32 %v8610
    %v9123 = vcvt.s32.f32 %v8611
    %v9124 = vcvt.s32.f32 %v8612
    %v9125 = vcvt.s32.f32 %v8613
    %v9126 = vcvt.s32.f32 %v8614
    %v9127 = vcvt.s32.f32 %v8615
    %v9128 = vcvt.s32.f32 %v8616
    %v9129 = vcvt.s32.f32 %v8617
    %v9130 = vcvt.s32.f32 %v8618
    %v9131 = vcvt.s32.f32 %v8619
    %v9132 = vcvt.s32.f32 %v8620
    %v9133 = vcvt.s32.f32 %v8621
    %v9134 = vcvt.s32.f32 %v8622
    %v9135 = vcvt.s32.f32 %v8623
    %v9136 = vcvt.s32.f32 %v8624
    %v9137 = vcvt.s32.f32 %v8625
    %v9138 = vcvt.s32.f32 %v8626
    %v9139 = vcvt.s32.f32 %v8627
    %v9140 = vcvt.s32.f32 %v8628
    %v9141 = vcvt.s32.f32 %v8629
    %v9142 = vcvt.s32.f32 %v8630
    %v9143 = vcvt.s32.f32 %v8631
    %v9144 = vcvt.s32.f32 %v8632
    %v9145 = vcvt.s32.f32 %v8633
    %v9146 = vcvt.s32.f32 %v8634
    %v9147 = vcvt.s32.f32 %v8635
    %v9148 = vcvt.s32.f32 %v8636
    %v9149 = vcvt.s32.f32 %v8637
    %v9150 = vcvt.s32.f32 %v8638
    %v9151 = vcvt.s32.f32 %v8639
    %v9152 = vcvt.s32.f32 %v8640
    %v9153 = vcvt.s32.f32 %v8641
    %v9154 = vcvt.s32.f32 %v8642
    %v9155 = vcvt.s32.f32 %v8643
    %v9156 = vcvt.s32.f32 %v8644
    %v9157 = vcvt.s32.f32 %v8645
    %v9158 = vcvt.s32.f32 %v8646
    %v9159 = vcvt.s32.f32 %v8647
    %v9160 = vcvt.s32.f32 %v8648
    %v9161 = vcvt.s32.f32 %v8649
    %v9162 = vcvt.s32.f32 %v8650
    %v9163 = vcvt.s32.f32 %v8651
    %v9164 = vcvt.s32.f32 %v8652
    %v9165 = vcvt.s32.f32 %v8653
    %v9166 = vcvt.s32.f32 %v8654
    %v9167 = vcvt.s32.f32 %v8655
    %v9168 = vcvt.s32.f32 %v8656
    %v9169 = vcvt.s32.f32 %v8657
    %v9170 = vcvt.s32.f32 %v8658
    %v9171 = vcvt.s32.f32 %v8659
    %v9172 = vcvt.s32.f32 %v8660
    %v9173 = vcvt.s32.f32 %v8661
    %v9174 = vcvt.s32.f32 %v8662
    %v9175 = vcvt.s32.f32 %v8663
    %v9176 = vcvt.s32.f32 %v8664
    %v9177 = vcvt.s32.f32 %v8665
    %v9178 = vcvt.s32.f32 %v8666
    %v9179 = vcvt.s32.f32 %v8667
    %v9180 = vcvt.s32.f32 %v8668
    %v9181 = vcvt.s32.f32 %v8669
    %v9182 = vcvt.s32.f32 %v8670
    %v9183 = vcvt.s32.f32 %v8671
    %v9184 = vcvt.s32.f32 %v8672
    %v9185 = vcvt.s32.f32 %v8673
    %v9186 = vcvt.s32.f32 %v8674
    %v9187 = vcvt.s32.f32 %v8675
    %v9188 = vcvt.s32.f32 %v8676
    %v9189 = vcvt.s32.f32 %v8677
    %v9190 = vcvt.s32.f32 %v8678
    %v9191 = vcvt.s32.f32 %v8679
    %v9192 = vcvt.s32.f32 %v8680
    %v9193 = vcvt.s32.f32 %v8681
    %v9194 = vcvt.s32.f32 %v8682
    %v9195 = vcvt.s32.f32 %v8683
    %v9196 = vcvt.s32.f32 %v8684
    %v9197 = vcvt.s32.f32 %v8685
    %v9198 = vcvt.s32.f32 %v8686
    %v9199 = vcvt.s32.f32 %v8687
    %v9200 = vcvt.s32.f32 %v8688
    %v9201 = vcvt.s32.f32 %v8689
    %v9202 = vcvt.s32.f32 %v8690
    %v9203 = vcvt.s32.f32 %v8691
    %v9204 = vcvt.s32.f32 %v8692
    %v9205 = vcvt.s32.f32 %v8693
    %v9206 = vcvt.s32.f32 %v8694
    %v9207 = vcvt.s32.f32 %v8695
    %v9208 = vcvt.s32.f32 %v8696
    %v9209 = vcvt.s32.f32 %v8697
    %v9210 = vcvt.s32.f32 %v8698
    %v9211 = vcvt.s32.f32 %v8699
    %v9212 = vcvt.s32.f32 %v8700
    %v9213 = vcvt.s32.f32 %v8701
    %v9214 = vcvt.s32.f32 %v8702
    %v9215 = vcvt.s32.f32 %v8703
    %v9216 = vcvt.s32.f32 %v8704
    %v9217 = vcvt.s32.f32 %v8705
    %v9218 = vcvt.s32.f32 %v8706
    %v9219 = vcvt.s32.f32 %v8707
    %v9220 = vcvt.s32.f32 %v8708
    %v9221 = vcvt.s32.f32 %v8709
    %v9222 = vcvt.s32.f32 %v8710
    %v9223 = vcvt.s32.f32 %v8711
    %v9224 = vcvt.s32.f32 %v8712
    %v9225 = vcvt.s32.f32 %v8713
    %v9226 = vcvt.s32.f32 %v8714
    %v9227 = vcvt.s32.f32 %v8715
    %v9228 = vcvt.s32.f32 %v8716
    %v9229 = vcvt.s32.f32 %v8717
    %v9230 = vcvt.s32.f32 %v8718
    %v9231 = vcvt.s32.f32 %v8719
    %v9232 = vcvt.s32.f32 %v8720
    %v9233 = vcvt.s32.f32 %v8721
    %v9234 = vcvt.s32.f32 %v8722
    %v9235 = vcvt.s32.f32 %v8723
    %v9236 = vcvt.s32.f32 %v8724
    %v9237 = vcvt.s32.f32 %v8725
    %v9238 = vcvt.s32.f32 %v8726
    %v9239 = vcvt.s32.f32 %v8727
    %v9240 = vcvt.s32.f32 %v8728
    %v9241 = vcvt.s32.f32 %v8729
    %v9242 = vcvt.s32.f32 %v8730
    %v9243 = vcvt.s32.f32 %v8731
    %v9244 = vcvt.s32.f32 %v8732
    %v9245 = vcvt.s32.f32 %v8733
    %v9246 = vcvt.s32.f32 %v8734
    %v9247 = vcvt.s32.f32 %v8735
    %v9248 = vcvt.s32.f32 %v8736
    %v9249 = vcvt.s32.f32 %v8737
    %v9250 = vcvt.s32.f32 %v8738
    %v9251 = vcvt.s32.f32 %v8739
    %v9252 = vcvt.s32.f32 %v8740
    %v9253 = vcvt.s32.f32 %v8741
    %v9254 = vcvt.s32.f32 %v8742
    %v9255 = vcvt.s32.f32 %v8743
    %v9256 = vcvt.s32.f32 %v8744
    %v9257 = vcvt.s32.f32 %v8745
    %v9258 = vcvt.s32.f32 %v8746
    %v9259 = vcvt.s32.f32 %v8747
    %v9260 = vcvt.s32.f32 %v8748
    %v9261 = vcvt.s32.f32 %v8749
    %v9262 = vcvt.s32.f32 %v8750
    %v9263 = vcvt.s32.f32 %v8751
    %v9264 = vcvt.s32.f32 %v8752
    %v9265 = vcvt.s32.f32 %v8753
    %v9266 = vcvt.s32.f32 %v8754
    %v9267 = vcvt.s32.f32 %v8755
    %v9268 = vcvt.s32.f32 %v8756
    %v9269 = vcvt.s32.f32 %v8757
    %v9270 = vcvt.s32.f32 %v8758
    %v9271 = vcvt.s32.f32 %v8759
    %v9272 = vcvt.s32.f32 %v8760
    %v9273 = vcvt.s32.f32 %v8761
    %v9274 = vcvt.s32.f32 %v8762
    %v9275 = vcvt.s32.f32 %v8763
    %v9276 = vcvt.s32.f32 %v8764
    %v9277 = vcvt.s32.f32 %v8765
    %v9278 = vcvt.s32.f32 %v8766
    %v9279 = vcvt.s32.f32 %v8767
    %v9280 = vcvt.s32.f32 %v8768
    %v9281 = vcvt.s32.f32 %v8769
    %v9282 = vcvt.s32.f32 %v8770
    %v9283 = vcvt.s32.f32 %v8771
    %v9284 = vcvt.s32.f32 %v8772
    %v9285 = vcvt.s32.f32 %v8773
    %v9286 = vcvt.s32.f32 %v8774
    %v9287 = vcvt.s32.f32 %v8775
    %v9288 = vcvt.s32.f32 %v8776
    %v9289 = vcvt.s32.f32 %v8777
    %v9290 = vcvt.s32.f32 %v8778
    %v9291 = vcvt.s32.f32 %v8779
    %v9292 = vcvt.s32.f32 %v8780
    %v9293 = vcvt.s32.f32 %v8781
    %v9294 = vcvt.s32.f32 %v8782
    %v9295 = vcvt.s32.f32 %v8783
    %v9296 = vcvt.s32.f32 %v8784
    %v9297 = vcvt.s32.f32 %v8785
    %v9298 = vcvt.s32.f32 %v8786
    %v9299 = vcvt.s32.f32 %v8787
    %v9300 = vcvt.s32.f32 %v8788
    %v9301 = vcvt.s32.f32 %v8789
    %v9302 = vcvt.s32.f32 %v8790
    %v9303 = vcvt.s32.f32 %v8791
    %v9304 = vcvt.s32.f32 %v8792
    %v9305 = vcvt.s32.f32 %v8793
    %v9306 = vcvt.s32.f32 %v8794
    %v9307 = vcvt.s32.f32 %v8795
    %v9308 = vcvt.s32.f32 %v8796
    %v9309 = vcvt.s32.f32 %v8797
    %v9310 = vcvt.s32.f32 %v8798
    %v9311 = vcvt.s32.f32 %v8799
    %v9312 = vcvt.s32.f32 %v8800
    %v9313 = vcvt.s32.f32 %v8801
    %v9314 = vcvt.s32.f32 %v8802
    %v9315 = vcvt.s32.f32 %v8803
    %v9316 = vcvt.s32.f32 %v8804
    %v9317 = vcvt.s32.f32 %v8805
    %v9318 = vcvt.s32.f32 %v8806
    %v9319 = vcvt.s32.f32 %v8807
    %v9320 = vcvt.s32.f32 %v8808
    %v9321 = vcvt.s32.f32 %v8809
    %v9322 = vcvt.s32.f32 %v8810
    %v9323 = vcvt.s32.f32 %v8811
    %v9324 = vcvt.s32.f32 %v8812
    %v9325 = vcvt.s32.f32 %v8813
    %v9326 = vcvt.s32.f32 %v8814
    %v9327 = vcvt.s32.f32 %v8815
    %v9328 = vcvt.s32.f32 %v8816
    %v9329 = vcvt.s32.f32 %v8817
    %v9330 = vcvt.s32.f32 %v8818
    %v9331 = vcvt.s32.f32 %v8819
    %v9332 = vcvt.s32.f32 %v8820
    %v9333 = vcvt.s32.f32 %v8821
    %v9334 = vcvt.s32.f32 %v8822
    %v9335 = vcvt.s32.f32 %v8823
    %v9336 = vcvt.s32.f32 %v8824
    %v9337 = vcvt.s32.f32 %v8825
    %v9338 = vcvt.s32.f32 %v8826
    %v9339 = vcvt.s32.f32 %v8827
    %v9340 = vcvt.s32.f32 %v8828
    %v9341 = vcvt.s32.f32 %v8829
    %v9342 = vcvt.s32.f32 %v8830
    %v9343 = vcvt.s32.f32 %v8831
    %v9344 = vcvt.s32.f32 %v8832
    %v9345 = vcvt.s32.f32 %v8833
    %v9346 = vcvt.s32.f32 %v8834
    %v9347 = vcvt.s32.f32 %v8835
    %v9348 = vcvt.s32.f32 %v8836
    %v9349 = vcvt.s32.f32 %v8837
    %v9350 = vcvt.s32.f32 %v8838
    %v9351 = vcvt.s32.f32 %v8839
    %v9352 = vcvt.s32.f32 %v8840
    %v9353 = vcvt.s32.f32 %v8841
    %v9354 = vcvt.s32.f32 %v8842
    %v9355 = vcvt.s32.f32 %v8843
    %v9356 = vcvt.s32.f32 %v8844
    %v9357 = vcvt.s32.f32 %v8845
    %v9358 = vcvt.s32.f32 %v8846
    %v9359 = vcvt.s32.f32 %v8847
    %v9360 = vcvt.s32.f32 %v8848
    %v9361 = vcvt.s32.f32 %v8849
    %v9362 = vcvt.s32.f32 %v8850
    %v9363 = vcvt.s32.f32 %v8851
    %v9364 = vcvt.s32.f32 %v8852
    %v9365 = vcvt.s32.f32 %v8853
    %v9366 = vcvt.s32.f32 %v8854
    %v9367 = vcvt.s32.f32 %v8855
    %v9368 = vcvt.s32.f32 %v8856
    %v9369 = vcvt.s32.f32 %v8857
    %v9370 = vcvt.s32.f32 %v8858
    %v9371 = vcvt.s32.f32 %v8859
    %v9372 = vcvt.s32.f32 %v8860
    %v9373 = vcvt.s32.f32 %v8861
    %v9374 = vcvt.s32.f32 %v8862
    %v9375 = vcvt.s32.f32 %v8863
    %v9376 = vcvt.s32.f32 %v8864
    %v9377 = vcvt.s32.f32 %v8865
    %v9378 = vcvt.s32.f32 %v8866
    %v9379 = vcvt.s32.f32 %v8867
    %v9380 = vcvt.s32.f32 %v8868
    %v9381 = vcvt.s32.f32 %v8869
    %v9382 = vcvt.s32.f32 %v8870
    %v9383 = vcvt.s32.f32 %v8871
    %v9384 = vcvt.s32.f32 %v8872
    %v9385 = vcvt.s32.f32 %v8873
    %v9386 = vcvt.s32.f32 %v8874
    %v9387 = vcvt.s32.f32 %v8875
    %v9388 = vcvt.s32.f32 %v8876
    %v9389 = vcvt.s32.f32 %v8877
    %v9390 = vcvt.s32.f32 %v8878
    %v9391 = vcvt.s32.f32 %v8879
    %v9392 = vcvt.s32.f32 %v8880
    %v9393 = vcvt.s32.f32 %v8881
    %v9394 = vcvt.s32.f32 %v8882
    %v9395 = vcvt.s32.f32 %v8883
    %v9396 = vcvt.s32.f32 %v8884
    %v9397 = vcvt.s32.f32 %v8885
    %v9398 = vcvt.s32.f32 %v8886
    %v9399 = vcvt.s32.f32 %v8887
    %v9400 = vcvt.s32.f32 %v8888
    %v9401 = vcvt.s32.f32 %v8889
    %v9402 = vcvt.s32.f32 %v8890
    %v9403 = vcvt.s32.f32 %v8891
    %v9404 = vcvt.s32.f32 %v8892
    %v9405 = vcvt.s32.f32 %v8893
    %v9406 = vcvt.s32.f32 %v8894
    %v9407 = vcvt.s32.f32 %v8895
    %v9408 = vcvt.s32.f32 %v8896
    %v9409 = vcvt.s32.f32 %v8897
    %v9410 = vcvt.s32.f32 %v8898
    %v9411 = vcvt.s32.f32 %v8899
    %v9412 = vcvt.s32.f32 %v8900
    %v9413 = vcvt.s32.f32 %v8901
    %v9414 = vcvt.s32.f32 %v8902
    %v9415 = vcvt.s32.f32 %v8903
    %v9416 = vcvt.s32.f32 %v8904
    %v9417 = vcvt.s32.f32 %v8905
    %v9418 = vcvt.s32.f32 %v8906
    %v9419 = vcvt.s32.f32 %v8907
    %v9420 = vcvt.s32.f32 %v8908
    %v9421 = vcvt.s32.f32 %v8909
    %v9422 = vcvt.s32.f32 %v8910
    %v9423 = vcvt.s32.f32 %v8911
    %v9424 = vcvt.s32.f32 %v8912
    %v9425 = vcvt.s32.f32 %v8913
    %v9426 = vcvt.s32.f32 %v8914
    %v9427 = vcvt.s32.f32 %v8915
    %v9428 = vcvt.s32.f32 %v8916
    %v9429 = vcvt.s32.f32 %v8917
    %v9430 = vcvt.s32.f32 %v8918
    %v9431 = vcvt.s32.f32 %v8919
    %v9432 = vcvt.s32.f32 %v8920
    %v9433 = vcvt.s32.f32 %v8921
    %v9434 = vcvt.s32.f32 %v8922
    %v9435 = vcvt.s32.f32 %v8923
    %v9436 = vcvt.s32.f32 %v8924
    %v9437 = vcvt.s32.f32 %v8925
    %v9438 = vcvt.s32.f32 %v8926
    %v9439 = vcvt.s32.f32 %v8927
    %v9440 = vcvt.s32.f32 %v8928
    %v9441 = vcvt.s32.f32 %v8929
    %v9442 = vcvt.s32.f32 %v8930
    %v9443 = vcvt.s32.f32 %v8931
    %v9444 = vcvt.s32.f32 %v8932
    %v9445 = vcvt.s32.f32 %v8933
    %v9446 = vcvt.s32.f32 %v8934
    %v9447 = vcvt.s32.f32 %v8935
    %v9448 = vcvt.s32.f32 %v8936
    %v9449 = vcvt.s32.f32 %v8937
    %v9450 = vcvt.s32.f32 %v8938
    %v9451 = vcvt.s32.f32 %v8939
    %v9452 = vcvt.s32.f32 %v8940
    %v9453 = vcvt.s32.f32 %v8941
    %v9454 = vcvt.s32.f32 %v8942
    %v9455 = vcvt.s32.f32 %v8943
    %v9456 = vcvt.s32.f32 %v8944
    %v9457 = vcvt.s32.f32 %v8945
    %v9458 = vcvt.s32.f32 %v8946
    %v9459 = vcvt.s32.f32 %v8947
    %v9460 = vcvt.s32.f32 %v8948
    %v9461 = vcvt.s32.f32 %v8949
    %v9462 = vcvt.s32.f32 %v8950
    %v9463 = vcvt.s32.f32 %v8951
    %v9464 = vcvt.s32.f32 %v8952
    %v9465 = vcvt.s32.f32 %v8953
    %v9466 = vcvt.s32.f32 %v8954
    %v9467 = vcvt.s32.f32 %v8955
    %v9468 = vcvt.s32.f32 %v8956
    %v9469 = vcvt.s32.f32 %v8957
    %v9470 = vcvt.s32.f32 %v8958
    %v9471 = vcvt.s32.f32 %v8959
    %v9472 = vcvt.s32.f32 %v8960
    %v9473 = vcvt.s32.f32 %v8961
    %v9474 = vcvt.s32.f32 %v8962
    %v9475 = vcvt.s32.f32 %v8963
    %v9476 = vcvt.s32.f32 %v8964
    %v9477 = vcvt.s32.f32 %v8965
    %v9478 = vcvt.s32.f32 %v8966
    %v9479 = vcvt.s32.f32 %v8967
    %v9480 = vcvt.s32.f32 %v8968
    %v9481 = vcvt.s32.f32 %v8969
    %v9482 = vcvt.s32.f32 %v8970
    %v9483 = vcvt.s32.f32 %v8971
    %v9484 = vcvt.s32.f32 %v8972
    %v9485 = vcvt.s32.f32 %v8973
    %v9486 = vcvt.s32.f32 %v8974
    %v9487 = vcvt.s32.f32 %v8975
    %v9488 = vcvt.s32.f32 %v8976
    %v9489 = vcvt.s32.f32 %v8977
    %v9490 = vcvt.s32.f32 %v8978
    %v9491 = vcvt.s32.f32 %v8979
    %v9492 = vcvt.s32.f32 %v8980
    %v9493 = vcvt.s32.f32 %v8981
    %v9494 = vcvt.s32.f32 %v8982
    %v9495 = vcvt.s32.f32 %v8983
    %v9496 = vcvt.s32.f32 %v8984
    %v9497 = vcvt.s32.f32 %v8985
    %v9498 = vcvt.s32.f32 %v8986
    %v9499 = vcvt.s32.f32 %v8987
    %v9500 = vcvt.s32.f32 %v8988
    %v9501 = vcvt.s32.f32 %v8989
    %v9502 = vcvt.s32.f32 %v8990
    %v9503 = vcvt.s32.f32 %v8991
    %v9504 = vcvt.s32.f32 %v8992
    %v9505 = vcvt.s32.f32 %v8993
    %v9506 = vcvt.s32.f32 %v8994
    %v9507 = vcvt.s32.f32 %v8995
    %v9508 = vcvt.s32.f32 %v8996
    %v9509 = vcvt.s32.f32 %v8997
    %v9510 = vcvt.s32.f32 %v8998
    %v9511 = vcvt.s32.f32 %v8999
    %v9512 = vcvt.s32.f32 %v9000
    %v9513 = vcvt.s32.f32 %v9001
    %v9514 = vcvt.s32.f32 %v9002
    %v9515 = vcvt.s32.f32 %v9003
    %v9516 = vcvt.s32.f32 %v9004
    %v9517 = vcvt.s32.f32 %v9005
    %v9518 = vcvt.s32.f32 %v9006
    %v9519 = vcvt.s32.f32 %v9007
    %v9520 = vcvt.s32.f32 %v9008
    %v9521 = vcvt.s32.f32 %v9009
    %v9522 = vcvt.s32.f32 %v9010
    %v9523 = vcvt.s32.f32 %v9011
    %v9524 = vcvt.s32.f32 %v9012
    %v9525 = vcvt.s32.f32 %v9013
    %v9526 = vcvt.s32.f32 %v9014
    %v9527 = vcvt.s32.f32 %v9015
    %v9528 = vcvt.s32.f32 %v9016
    %v9529 = vcvt.s32.f32 %v9017
    %v9530 = vcvt.s32.f32 %v9018
    %v9531 = vcvt.s32.f32 %v9019
    %v9532 = vcvt.s32.f32 %v9020
    %v9533 = vcvt.s32.f32 %v9021
    %v9534 = vcvt.s32.f32 %v9022
    %v9535 = vcvt.s32.f32 %v9023
    %v9536 = vcvt.s32.f32 %v9024
    %v9537 = vcvt.s32.f32 %v9025
    %v9538 = vcvt.s32.f32 %v9026
    %v9539 = vcvt.s32.f32 %v9027
    %v9540 = vcvt.s32.f32 %v9028
    %v9541 = vcvt.s32.f32 %v9029
    %v9542 = vcvt.s32.f32 %v9030
    %v9543 = vcvt.s32.f32 %v9031
    %v9544 = vcvt.s32.f32 %v9032
    %v9545 = vcvt.s32.f32 %v9033
    %v9546 = vcvt.s32.f32 %v9034
    %v9547 = vcvt.s32.f32 %v9035
    %v9548 = vcvt.s32.f32 %v9036
    %v9549 = vcvt.s32.f32 %v9037
    %v9550 = vcvt.s32.f32 %v9038
    %v9551 = vcvt.s32.f32 %v9039
    %v9552 = vcvt.s32.f32 %v9040
    %v9553 = vcvt.s32.f32 %v9041
    %v9554 = vcvt.s32.f32 %v9042
    %v9555 = vcvt.s32.f32 %v9043
    %v9556 = vcvt.s32.f32 %v9044
    %v9557 = vcvt.s32.f32 %v9045
    %v9558 = vcvt.s32.f32 %v9046
    %v9559 = vcvt.s32.f32 %v9047
    %v9560 = vcvt.s32.f32 %v9048
    %v9561 = vcvt.s32.f32 %v9049
    %v9562 = vcvt.s32.f32 %v9050
    %v9563 = vcvt.s32.f32 %v9051
    %v9564 = vcvt.s32.f32 %v9052
    %v9565 = vcvt.s32.f32 %v9053
    %v9566 = vcvt.s32.f32 %v9054
    %v9567 = vpack.c.bf16 %v9059, %v9055
    %v9568 = vpack.c.bf16 %v9060, %v9056
    %v9569 = vpack.c.bf16 %v9061, %v9057
    %v9570 = vpack.c.bf16 %v9062, %v9058
    %v9571 = vpack.c.bf16 %v9067, %v9063
    %v9572 = vpack.c.bf16 %v9068, %v9064
    %v9573 = vpack.c.bf16 %v9069, %v9065
    %v9574 = vpack.c.bf16 %v9070, %v9066
    %v9575 = vpack.c.bf16 %v9075, %v9071
    %v9576 = vpack.c.bf16 %v9076, %v9072
    %v9577 = vpack.c.bf16 %v9077, %v9073
    %v9578 = vpack.c.bf16 %v9078, %v9074
    %v9579 = vpack.c.bf16 %v9083, %v9079
    %v9580 = vpack.c.bf16 %v9084, %v9080
    %v9581 = vpack.c.bf16 %v9085, %v9081
    %v9582 = vpack.c.bf16 %v9086, %v9082
    %v9583 = vpack.c.bf16 %v9091, %v9087
    %v9584 = vpack.c.bf16 %v9092, %v9088
    %v9585 = vpack.c.bf16 %v9093, %v9089
    %v9586 = vpack.c.bf16 %v9094, %v9090
    %v9587 = vpack.c.bf16 %v9099, %v9095
    %v9588 = vpack.c.bf16 %v9100, %v9096
    %v9589 = vpack.c.bf16 %v9101, %v9097
    %v9590 = vpack.c.bf16 %v9102, %v9098
    %v9591 = vpack.c.bf16 %v9107, %v9103
    %v9592 = vpack.c.bf16 %v9108, %v9104
    %v9593 = vpack.c.bf16 %v9109, %v9105
    %v9594 = vpack.c.bf16 %v9110, %v9106
    %v9595 = vpack.c.bf16 %v9115, %v9111
    %v9596 = vpack.c.bf16 %v9116, %v9112
    %v9597 = vpack.c.bf16 %v9117, %v9113
    %v9598 = vpack.c.bf16 %v9118, %v9114
    %v9599 = vpack.c.bf16 %v9123, %v9119
    %v9600 = vpack.c.bf16 %v9124, %v9120
    %v9601 = vpack.c.bf16 %v9125, %v9121
    %v9602 = vpack.c.bf16 %v9126, %v9122
    %v9603 = vpack.c.bf16 %v9131, %v9127
    %v9604 = vpack.c.bf16 %v9132, %v9128
    %v9605 = vpack.c.bf16 %v9133, %v9129
    %v9606 = vpack.c.bf16 %v9134, %v9130
    %v9607 = vpack.c.bf16 %v9139, %v9135
    %v9608 = vpack.c.bf16 %v9140, %v9136
    %v9609 = vpack.c.bf16 %v9141, %v9137
    %v9610 = vpack.c.bf16 %v9142, %v9138
    %v9611 = vpack.c.bf16 %v9147, %v9143
    %v9612 = vpack.c.bf16 %v9148, %v9144
    %v9613 = vpack.c.bf16 %v9149, %v9145
    %v9614 = vpack.c.bf16 %v9150, %v9146
    %v9615 = vpack.c.bf16 %v9155, %v9151
    %v9616 = vpack.c.bf16 %v9156, %v9152
    %v9617 = vpack.c.bf16 %v9157, %v9153
    %v9618 = vpack.c.bf16 %v9158, %v9154
    %v9619 = vpack.c.bf16 %v9163, %v9159
    %v9620 = vpack.c.bf16 %v9164, %v9160
    %v9621 = vpack.c.bf16 %v9165, %v9161
    %v9622 = vpack.c.bf16 %v9166, %v9162
    %v9623 = vpack.c.bf16 %v9171, %v9167
    %v9624 = vpack.c.bf16 %v9172, %v9168
    %v9625 = vpack.c.bf16 %v9173, %v9169
    %v9626 = vpack.c.bf16 %v9174, %v9170
    %v9627 = vpack.c.bf16 %v9179, %v9175
    %v9628 = vpack.c.bf16 %v9180, %v9176
    %v9629 = vpack.c.bf16 %v9181, %v9177
    %v9630 = vpack.c.bf16 %v9182, %v9178
    %v9631 = vpack.c.bf16 %v9187, %v9183
    %v9632 = vpack.c.bf16 %v9188, %v9184
    %v9633 = vpack.c.bf16 %v9189, %v9185
    %v9634 = vpack.c.bf16 %v9190, %v9186
    %v9635 = vpack.c.bf16 %v9195, %v9191
    %v9636 = vpack.c.bf16 %v9196, %v9192
    %v9637 = vpack.c.bf16 %v9197, %v9193
    %v9638 = vpack.c.bf16 %v9198, %v9194
    %v9639 = vpack.c.bf16 %v9203, %v9199
    %v9640 = vpack.c.bf16 %v9204, %v9200
    %v9641 = vpack.c.bf16 %v9205, %v9201
    %v9642 = vpack.c.bf16 %v9206, %v9202
    %v9643 = vpack.c.bf16 %v9211, %v9207
    %v9644 = vpack.c.bf16 %v9212, %v9208
    %v9645 = vpack.c.bf16 %v9213, %v9209
    %v9646 = vpack.c.bf16 %v9214, %v9210
    %v9647 = vpack.c.bf16 %v9219, %v9215
    %v9648 = vpack.c.bf16 %v9220, %v9216
    %v9649 = vpack.c.bf16 %v9221, %v9217
    %v9650 = vpack.c.bf16 %v9222, %v9218
    %v9651 = vpack.c.bf16 %v9227, %v9223
    %v9652 = vpack.c.bf16 %v9228, %v9224
    %v9653 = vpack.c.bf16 %v9229, %v9225
    %v9654 = vpack.c.bf16 %v9230, %v9226
    %v9655 = vpack.c.bf16 %v9235, %v9231
    %v9656 = vpack.c.bf16 %v9236, %v9232
    %v9657 = vpack.c.bf16 %v9237, %v9233
    %v9658 = vpack.c.bf16 %v9238, %v9234
    %v9659 = vpack.c.bf16 %v9243, %v9239
    %v9660 = vpack.c.bf16 %v9244, %v9240
    %v9661 = vpack.c.bf16 %v9245, %v9241
    %v9662 = vpack.c.bf16 %v9246, %v9242
    %v9663 = vpack.c.bf16 %v9251, %v9247
    %v9664 = vpack.c.bf16 %v9252, %v9248
    %v9665 = vpack.c.bf16 %v9253, %v9249
    %v9666 = vpack.c.bf16 %v9254, %v9250
    %v9667 = vpack.c.bf16 %v9259, %v9255
    %v9668 = vpack.c.bf16 %v9260, %v9256
    %v9669 = vpack.c.bf16 %v9261, %v9257
    %v9670 = vpack.c.bf16 %v9262, %v9258
    %v9671 = vpack.c.bf16 %v9267, %v9263
    %v9672 = vpack.c.bf16 %v9268, %v9264
    %v9673 = vpack.c.bf16 %v9269, %v9265
    %v9674 = vpack.c.bf16 %v9270, %v9266
    %v9675 = vpack.c.bf16 %v9275, %v9271
    %v9676 = vpack.c.bf16 %v9276, %v9272
    %v9677 = vpack.c.bf16 %v9277, %v9273
    %v9678 = vpack.c.bf16 %v9278, %v9274
    %v9679 = vpack.c.bf16 %v9283, %v9279
    %v9680 = vpack.c.bf16 %v9284, %v9280
    %v9681 = vpack.c.bf16 %v9285, %v9281
    %v9682 = vpack.c.bf16 %v9286, %v9282
    %v9683 = vpack.c.bf16 %v9291, %v9287
    %v9684 = vpack.c.bf16 %v9292, %v9288
    %v9685 = vpack.c.bf16 %v9293, %v9289
    %v9686 = vpack.c.bf16 %v9294, %v9290
    %v9687 = vpack.c.bf16 %v9299, %v9295
    %v9688 = vpack.c.bf16 %v9300, %v9296
    %v9689 = vpack.c.bf16 %v9301, %v9297
    %v9690 = vpack.c.bf16 %v9302, %v9298
    %v9691 = vpack.c.bf16 %v9307, %v9303
    %v9692 = vpack.c.bf16 %v9308, %v9304
    %v9693 = vpack.c.bf16 %v9309, %v9305
    %v9694 = vpack.c.bf16 %v9310, %v9306
    %v9695 = vpack.c.bf16 %v9315, %v9311
    %v9696 = vpack.c.bf16 %v9316, %v9312
    %v9697 = vpack.c.bf16 %v9317, %v9313
    %v9698 = vpack.c.bf16 %v9318, %v9314
    %v9699 = vpack.c.bf16 %v9323, %v9319
    %v9700 = vpack.c.bf16 %v9324, %v9320
    %v9701 = vpack.c.bf16 %v9325, %v9321
    %v9702 = vpack.c.bf16 %v9326, %v9322
    %v9703 = vpack.c.bf16 %v9331, %v9327
    %v9704 = vpack.c.bf16 %v9332, %v9328
    %v9705 = vpack.c.bf16 %v9333, %v9329
    %v9706 = vpack.c.bf16 %v9334, %v9330
    %v9707 = vpack.c.bf16 %v9339, %v9335
    %v9708 = vpack.c.bf16 %v9340, %v9336
    %v9709 = vpack.c.bf16 %v9341, %v9337
    %v9710 = vpack.c.bf16 %v9342, %v9338
    %v9711 = vpack.c.bf16 %v9347, %v9343
    %v9712 = vpack.c.bf16 %v9348, %v9344
    %v9713 = vpack.c.bf16 %v9349, %v9345
    %v9714 = vpack.c.bf16 %v9350, %v9346
    %v9715 = vpack.c.bf16 %v9355, %v9351
    %v9716 = vpack.c.bf16 %v9356, %v9352
    %v9717 = vpack.c.bf16 %v9357, %v9353
    %v9718 = vpack.c.bf16 %v9358, %v9354
    %v9719 = vpack.c.bf16 %v9363, %v9359
    %v9720 = vpack.c.bf16 %v9364, %v9360
    %v9721 = vpack.c.bf16 %v9365, %v9361
    %v9722 = vpack.c.bf16 %v9366, %v9362
    %v9723 = vpack.c.bf16 %v9371, %v9367
    %v9724 = vpack.c.bf16 %v9372, %v9368
    %v9725 = vpack.c.bf16 %v9373, %v9369
    %v9726 = vpack.c.bf16 %v9374, %v9370
    %v9727 = vpack.c.bf16 %v9379, %v9375
    %v9728 = vpack.c.bf16 %v9380, %v9376
    %v9729 = vpack.c.bf16 %v9381, %v9377
    %v9730 = vpack.c.bf16 %v9382, %v9378
    %v9731 = vpack.c.bf16 %v9387, %v9383
    %v9732 = vpack.c.bf16 %v9388, %v9384
    %v9733 = vpack.c.bf16 %v9389, %v9385
    %v9734 = vpack.c.bf16 %v9390, %v9386
    %v9735 = vpack.c.bf16 %v9395, %v9391
    %v9736 = vpack.c.bf16 %v9396, %v9392
    %v9737 = vpack.c.bf16 %v9397, %v9393
    %v9738 = vpack.c.bf16 %v9398, %v9394
    %v9739 = vpack.c.bf16 %v9403, %v9399
    %v9740 = vpack.c.bf16 %v9404, %v9400
    %v9741 = vpack.c.bf16 %v9405, %v9401
    %v9742 = vpack.c.bf16 %v9406, %v9402
    %v9743 = vpack.c.bf16 %v9411, %v9407
    %v9744 = vpack.c.bf16 %v9412, %v9408
    %v9745 = vpack.c.bf16 %v9413, %v9409
    %v9746 = vpack.c.bf16 %v9414, %v9410
    %v9747 = vpack.c.bf16 %v9419, %v9415
    %v9748 = vpack.c.bf16 %v9420, %v9416
    %v9749 = vpack.c.bf16 %v9421, %v9417
    %v9750 = vpack.c.bf16 %v9422, %v9418
    %v9751 = vpack.c.bf16 %v9427, %v9423
    %v9752 = vpack.c.bf16 %v9428, %v9424
    %v9753 = vpack.c.bf16 %v9429, %v9425
    %v9754 = vpack.c.bf16 %v9430, %v9426
    %v9755 = vpack.c.bf16 %v9435, %v9431
    %v9756 = vpack.c.bf16 %v9436, %v9432
    %v9757 = vpack.c.bf16 %v9437, %v9433
    %v9758 = vpack.c.bf16 %v9438, %v9434
    %v9759 = vpack.c.bf16 %v9443, %v9439
    %v9760 = vpack.c.bf16 %v9444, %v9440
    %v9761 = vpack.c.bf16 %v9445, %v9441
    %v9762 = vpack.c.bf16 %v9446, %v9442
    %v9763 = vpack.c.bf16 %v9451, %v9447
    %v9764 = vpack.c.bf16 %v9452, %v9448
    %v9765 = vpack.c.bf16 %v9453, %v9449
    %v9766 = vpack.c.bf16 %v9454, %v9450
    %v9767 = vpack.c.bf16 %v9459, %v9455
    %v9768 = vpack.c.bf16 %v9460, %v9456
    %v9769 = vpack.c.bf16 %v9461, %v9457
    %v9770 = vpack.c.bf16 %v9462, %v9458
    %v9771 = vpack.c.bf16 %v9467, %v9463
    %v9772 = vpack.c.bf16 %v9468, %v9464
    %v9773 = vpack.c.bf16 %v9469, %v9465
    %v9774 = vpack.c.bf16 %v9470, %v9466
    %v9775 = vpack.c.bf16 %v9475, %v9471
    %v9776 = vpack.c.bf16 %v9476, %v9472
    %v9777 = vpack.c.bf16 %v9477, %v9473
    %v9778 = vpack.c.bf16 %v9478, %v9474
    %v9779 = vpack.c.bf16 %v9483, %v9479
    %v9780 = vpack.c.bf16 %v9484, %v9480
    %v9781 = vpack.c.bf16 %v9485, %v9481
    %v9782 = vpack.c.bf16 %v9486, %v9482
    %v9783 = vpack.c.bf16 %v9491, %v9487
    %v9784 = vpack.c.bf16 %v9492, %v9488
    %v9785 = vpack.c.bf16 %v9493, %v9489
    %v9786 = vpack.c.bf16 %v9494, %v9490
    %v9787 = vpack.c.bf16 %v9499, %v9495
    %v9788 = vpack.c.bf16 %v9500, %v9496
    %v9789 = vpack.c.bf16 %v9501, %v9497
    %v9790 = vpack.c.bf16 %v9502, %v9498
    %v9791 = vpack.c.bf16 %v9507, %v9503
    %v9792 = vpack.c.bf16 %v9508, %v9504
    %v9793 = vpack.c.bf16 %v9509, %v9505
    %v9794 = vpack.c.bf16 %v9510, %v9506
    %v9795 = vpack.c.bf16 %v9515, %v9511
    %v9796 = vpack.c.bf16 %v9516, %v9512
    %v9797 = vpack.c.bf16 %v9517, %v9513
    %v9798 = vpack.c.bf16 %v9518, %v9514
    %v9799 = vpack.c.bf16 %v9523, %v9519
    %v9800 = vpack.c.bf16 %v9524, %v9520
    %v9801 = vpack.c.bf16 %v9525, %v9521
    %v9802 = vpack.c.bf16 %v9526, %v9522
    %v9803 = vpack.c.bf16 %v9531, %v9527
    %v9804 = vpack.c.bf16 %v9532, %v9528
    %v9805 = vpack.c.bf16 %v9533, %v9529
    %v9806 = vpack.c.bf16 %v9534, %v9530
    %v9807 = vpack.c.bf16 %v9539, %v9535
    %v9808 = vpack.c.bf16 %v9540, %v9536
    %v9809 = vpack.c.bf16 %v9541, %v9537
    %v9810 = vpack.c.bf16 %v9542, %v9538
    %v9811 = vpack.c.bf16 %v9547, %v9543
    %v9812 = vpack.c.bf16 %v9548, %v9544
    %v9813 = vpack.c.bf16 %v9549, %v9545
    %v9814 = vpack.c.bf16 %v9550, %v9546
    %v9815 = vpack.c.bf16 %v9555, %v9551
    %v9816 = vpack.c.bf16 %v9556, %v9552
    %v9817 = vpack.c.bf16 %v9557, %v9553
    %v9818 = vpack.c.bf16 %v9558, %v9554
    %v9819 = vpack.c.bf16 %v9563, %v9559
    %v9820 = vpack.c.bf16 %v9564, %v9560
    %v9821 = vpack.c.bf16 %v9565, %v9561
    %v9822 = vpack.c.bf16 %v9566, %v9562
    %9823 = vmatpush.bf16.msra.mxu0 %v9595
    %9824 = vmatpush.bf16.msra.mxu0 %v9591
    %9825 = vmatpush.bf16.msra.mxu0 %v9587
    %9826 = vmatpush.bf16.msra.mxu0 %v9583
    %9827 = vmatpush.bf16.msra.mxu0 %v9579
    %9828 = vmatpush.bf16.msra.mxu0 %v9575
    %9829 = vmatpush.bf16.msra.mxu0 %v9571
    %9830 = vmatpush.bf16.msra.mxu0 %v9567
    %9831 = vmatmul.bf16.gmra.mxu0 %v2689
    %v9832 = vpop.f32.mrf.mxu0
    %v9833 = vadd.f32 0.0, %v9832
    %v9834 = vpop.f32.mrf.mxu0
    %9835 = vdwg.mxu0
    %9836 = vmatpush.bf16.msra.mxu0 %v9627
    %9837 = vmatpush.bf16.msra.mxu0 %v9623
    %9838 = vmatpush.bf16.msra.mxu0 %v9619
    %9839 = vmatpush.bf16.msra.mxu0 %v9615
    %9840 = vmatpush.bf16.msra.mxu0 %v9611
    %9841 = vmatpush.bf16.msra.mxu0 %v9607
    %9842 = vmatpush.bf16.msra.mxu0 %v9603
    %9843 = vmatpush.bf16.msra.mxu0 %v9599
    %9844 = vmatmul.bf16.gmra.mxu0 %v2690
    %v9845 = vpop.f32.mrf.mxu0
    %v9846 = vadd.f32 %v9833, %v9845
    %v9847 = vpop.f32.mrf.mxu0
    %9848 = vdwg.mxu0
    %9849 = vmatpush.bf16.msra.mxu0 %v9659
    %9850 = vmatpush.bf16.msra.mxu0 %v9655
    %9851 = vmatpush.bf16.msra.mxu0 %v9651
    %9852 = vmatpush.bf16.msra.mxu0 %v9647
    %9853 = vmatpush.bf16.msra.mxu0 %v9643
    %9854 = vmatpush.bf16.msra.mxu0 %v9639
    %9855 = vmatpush.bf16.msra.mxu0 %v9635
    %9856 = vmatpush.bf16.msra.mxu0 %v9631
    %9857 = vmatmul.bf16.gmra.mxu0 %v2691
    %v9858 = vpop.f32.mrf.mxu0
    %v9859 = vadd.f32 %v9846, %v9858
    %v9860 = vpop.f32.mrf.mxu0
    %9861 = vdwg.mxu0
    %9862 = vmatpush.bf16.msra.mxu0 %v9691
    %9863 = vmatpush.bf16.msra.mxu0 %v9687
    %9864 = vmatpush.bf16.msra.mxu0 %v9683
    %9865 = vmatpush.bf16.msra.mxu0 %v9679
    %9866 = vmatpush.bf16.msra.mxu0 %v9675
    %9867 = vmatpush.bf16.msra.mxu0 %v9671
    %9868 = vmatpush.bf16.msra.mxu0 %v9667
    %9869 = vmatpush.bf16.msra.mxu0 %v9663
    %9870 = vmatmul.bf16.gmra.mxu0 %v2692
    %v9871 = vpop.f32.mrf.mxu0
    %v9872 = vadd.f32 %v9859, %v9871
    %v9873 = vpop.f32.mrf.mxu0
    %9874 = vdwg.mxu0
    %9875 = vmatpush.bf16.msra.mxu0 %v9723
    %9876 = vmatpush.bf16.msra.mxu0 %v9719
    %9877 = vmatpush.bf16.msra.mxu0 %v9715
    %9878 = vmatpush.bf16.msra.mxu0 %v9711
    %9879 = vmatpush.bf16.msra.mxu0 %v9707
    %9880 = vmatpush.bf16.msra.mxu0 %v9703
    %9881 = vmatpush.bf16.msra.mxu0 %v9699
    %9882 = vmatpush.bf16.msra.mxu0 %v9695
    %9883 = vmatmul.bf16.gmra.mxu0 %v2693
    %v9884 = vpop.f32.mrf.mxu0
    %v9885 = vadd.f32 %v9872, %v9884
    %v9886 = vpop.f32.mrf.mxu0
    %9887 = vdwg.mxu0
    %9888 = vmatpush.bf16.msra.mxu0 %v9755
    %9889 = vmatpush.bf16.msra.mxu0 %v9751
    %9890 = vmatpush.bf16.msra.mxu0 %v9747
    %9891 = vmatpush.bf16.msra.mxu0 %v9743
    %9892 = vmatpush.bf16.msra.mxu0 %v9739
    %9893 = vmatpush.bf16.msra.mxu0 %v9735
    %9894 = vmatpush.bf16.msra.mxu0 %v9731
    %9895 = vmatpush.bf16.msra.mxu0 %v9727
    %9896 = vmatmul.bf16.gmra.mxu0 %v2694
    %v9897 = vpop.f32.mrf.mxu0
    %v9898 = vadd.f32 %v9885, %v9897
    %v9899 = vpop.f32.mrf.mxu0
    %9900 = vdwg.mxu0
    %9901 = vmatpush.bf16.msra.mxu0 %v9787
    %9902 = vmatpush.bf16.msra.mxu0 %v9783
    %9903 = vmatpush.bf16.msra.mxu0 %v9779
    %9904 = vmatpush.bf16.msra.mxu0 %v9775
    %9905 = vmatpush.bf16.msra.mxu0 %v9771
    %9906 = vmatpush.bf16.msra.mxu0 %v9767
    %9907 = vmatpush.bf16.msra.mxu0 %v9763
    %9908 = vmatpush.bf16.msra.mxu0 %v9759
    %9909 = vmatmul.bf16.gmra.mxu0 %v2695
    %v9910 = vpop.f32.mrf.mxu0
    %v9911 = vadd.f32 %v9898, %v9910
    %v9912 = vpop.f32.mrf.mxu0
    %9913 = vdwg.mxu0
    %9914 = vmatpush.bf16.msra.mxu0 %v9819
    %9915 = vmatpush.bf16.msra.mxu0 %v9815
    %9916 = vmatpush.bf16.msra.mxu0 %v9811
    %9917 = vmatpush.bf16.msra.mxu0 %v9807
    %9918 = vmatpush.bf16.msra.mxu0 %v9803
    %9919 = vmatpush.bf16.msra.mxu0 %v9799
    %9920 = vmatpush.bf16.msra.mxu0 %v9795
    %9921 = vmatpush.bf16.msra.mxu0 %v9791
    %9922 = vmatmul.bf16.gmra.mxu0 %v2696
    %v9923 = vpop.f32.mrf.mxu0
    %v9924 = vadd.f32 %v9911, %v9923
    %v9925 = vpop.f32.mrf.mxu0
    %9926 = vdwg.mxu0
    %9927 = vmatpush.bf16.msra.mxu0 %v9596
    %9928 = vmatpush.bf16.msra.mxu0 %v9592
    %9929 = vmatpush.bf16.msra.mxu0 %v9588
    %9930 = vmatpush.bf16.msra.mxu0 %v9584
    %9931 = vmatpush.bf16.msra.mxu0 %v9580
    %9932 = vmatpush.bf16.msra.mxu0 %v9576
    %9933 = vmatpush.bf16.msra.mxu0 %v9572
    %9934 = vmatpush.bf16.msra.mxu0 %v9568
    %9935 = vmatmul.bf16.gmra.mxu0 %v2689
    %v9936 = vpop.f32.mrf.mxu0
    %v9937 = vadd.f32 0.0, %v9936
    %v9938 = vpop.f32.mrf.mxu0
    %9939 = vdwg.mxu0
    %9940 = vmatpush.bf16.msra.mxu0 %v9628
    %9941 = vmatpush.bf16.msra.mxu0 %v9624
    %9942 = vmatpush.bf16.msra.mxu0 %v9620
    %9943 = vmatpush.bf16.msra.mxu0 %v9616
    %9944 = vmatpush.bf16.msra.mxu0 %v9612
    %9945 = vmatpush.bf16.msra.mxu0 %v9608
    %9946 = vmatpush.bf16.msra.mxu0 %v9604
    %9947 = vmatpush.bf16.msra.mxu0 %v9600
    %9948 = vmatmul.bf16.gmra.mxu0 %v2690
    %v9949 = vpop.f32.mrf.mxu0
    %v9950 = vadd.f32 %v9937, %v9949
    %v9951 = vpop.f32.mrf.mxu0
    %9952 = vdwg.mxu0
    %9953 = vmatpush.bf16.msra.mxu0 %v9660
    %9954 = vmatpush.bf16.msra.mxu0 %v9656
    %9955 = vmatpush.bf16.msra.mxu0 %v9652
    %9956 = vmatpush.bf16.msra.mxu0 %v9648
    %9957 = vmatpush.bf16.msra.mxu0 %v9644
    %9958 = vmatpush.bf16.msra.mxu0 %v9640
    %9959 = vmatpush.bf16.msra.mxu0 %v9636
    %9960 = vmatpush.bf16.msra.mxu0 %v9632
    %9961 = vmatmul.bf16.gmra.mxu0 %v2691
    %v9962 = vpop.f32.mrf.mxu0
    %v9963 = vadd.f32 %v9950, %v9962
    %v9964 = vpop.f32.mrf.mxu0
    %9965 = vdwg.mxu0
    %9966 = vmatpush.bf16.msra.mxu0 %v9692
    %9967 = vmatpush.bf16.msra.mxu0 %v9688
    %9968 = vmatpush.bf16.msra.mxu0 %v9684
    %9969 = vmatpush.bf16.msra.mxu0 %v9680
    %9970 = vmatpush.bf16.msra.mxu0 %v9676
    %9971 = vmatpush.bf16.msra.mxu0 %v9672
    %9972 = vmatpush.bf16.msra.mxu0 %v9668
    %9973 = vmatpush.bf16.msra.mxu0 %v9664
    %9974 = vmatmul.bf16.gmra.mxu0 %v2692
    %v9975 = vpop.f32.mrf.mxu0
    %v9976 = vadd.f32 %v9963, %v9975
    %v9977 = vpop.f32.mrf.mxu0
    %9978 = vdwg.mxu0
    %9979 = vmatpush.bf16.msra.mxu0 %v9724
    %9980 = vmatpush.bf16.msra.mxu0 %v9720
    %9981 = vmatpush.bf16.msra.mxu0 %v9716
    %9982 = vmatpush.bf16.msra.mxu0 %v9712
    %9983 = vmatpush.bf16.msra.mxu0 %v9708
    %9984 = vmatpush.bf16.msra.mxu0 %v9704
    %9985 = vmatpush.bf16.msra.mxu0 %v9700
    %9986 = vmatpush.bf16.msra.mxu0 %v9696
    %9987 = vmatmul.bf16.gmra.mxu0 %v2693
    %v9988 = vpop.f32.mrf.mxu0
    %v9989 = vadd.f32 %v9976, %v9988
    %v9990 = vpop.f32.mrf.mxu0
    %9991 = vdwg.mxu0
    %9992 = vmatpush.bf16.msra.mxu0 %v9756
    %9993 = vmatpush.bf16.msra.mxu0 %v9752
    %9994 = vmatpush.bf16.msra.mxu0 %v9748
    %9995 = vmatpush.bf16.msra.mxu0 %v9744
    %9996 = vmatpush.bf16.msra.mxu0 %v9740
    %9997 = vmatpush.bf16.msra.mxu0 %v9736
    %9998 = vmatpush.bf16.msra.mxu0 %v9732
    %9999 = vmatpush.bf16.msra.mxu0 %v9728
    %10000 = vmatmul.bf16.gmra.mxu0 %v2694
    %v10001 = vpop.f32.mrf.mxu0
    %v10002 = vadd.f32 %v9989, %v10001
    %v10003 = vpop.f32.mrf.mxu0
    %10004 = vdwg.mxu0
    %10005 = vmatpush.bf16.msra.mxu0 %v9788
    %10006 = vmatpush.bf16.msra.mxu0 %v9784
    %10007 = vmatpush.bf16.msra.mxu0 %v9780
    %10008 = vmatpush.bf16.msra.mxu0 %v9776
    %10009 = vmatpush.bf16.msra.mxu0 %v9772
    %10010 = vmatpush.bf16.msra.mxu0 %v9768
    %10011 = vmatpush.bf16.msra.mxu0 %v9764
    %10012 = vmatpush.bf16.msra.mxu0 %v9760
    %10013 = vmatmul.bf16.gmra.mxu0 %v2695
    %v10014 = vpop.f32.mrf.mxu0
    %v10015 = vadd.f32 %v10002, %v10014
    %v10016 = vpop.f32.mrf.mxu0
    %10017 = vdwg.mxu0
    %10018 = vmatpush.bf16.msra.mxu0 %v9820
    %10019 = vmatpush.bf16.msra.mxu0 %v9816
    %10020 = vmatpush.bf16.msra.mxu0 %v9812
    %10021 = vmatpush.bf16.msra.mxu0 %v9808
    %10022 = vmatpush.bf16.msra.mxu0 %v9804
    %10023 = vmatpush.bf16.msra.mxu0 %v9800
    %10024 = vmatpush.bf16.msra.mxu0 %v9796
    %10025 = vmatpush.bf16.msra.mxu0 %v9792
    %10026 = vmatmul.bf16.gmra.mxu0 %v2696
    %v10027 = vpop.f32.mrf.mxu0
    %v10028 = vadd.f32 %v10015, %v10027
    %v10029 = vpop.f32.mrf.mxu0
    %10030 = vdwg.mxu0
    %10031 = vmatpush.bf16.msra.mxu0 %v9597
    %10032 = vmatpush.bf16.msra.mxu0 %v9593
    %10033 = vmatpush.bf16.msra.mxu0 %v9589
    %10034 = vmatpush.bf16.msra.mxu0 %v9585
    %10035 = vmatpush.bf16.msra.mxu0 %v9581
    %10036 = vmatpush.bf16.msra.mxu0 %v9577
    %10037 = vmatpush.bf16.msra.mxu0 %v9573
    %10038 = vmatpush.bf16.msra.mxu0 %v9569
    %10039 = vmatmul.bf16.gmra.mxu0 %v2689
    %v10040 = vpop.f32.mrf.mxu0
    %v10041 = vadd.f32 0.0, %v10040
    %v10042 = vpop.f32.mrf.mxu0
    %10043 = vdwg.mxu0
    %10044 = vmatpush.bf16.msra.mxu0 %v9629
    %10045 = vmatpush.bf16.msra.mxu0 %v9625
    %10046 = vmatpush.bf16.msra.mxu0 %v9621
    %10047 = vmatpush.bf16.msra.mxu0 %v9617
    %10048 = vmatpush.bf16.msra.mxu0 %v9613
    %10049 = vmatpush.bf16.msra.mxu0 %v9609
    %10050 = vmatpush.bf16.msra.mxu0 %v9605
    %10051 = vmatpush.bf16.msra.mxu0 %v9601
    %10052 = vmatmul.bf16.gmra.mxu0 %v2690
    %v10053 = vpop.f32.mrf.mxu0
    %v10054 = vadd.f32 %v10041, %v10053
    %v10055 = vpop.f32.mrf.mxu0
    %10056 = vdwg.mxu0
    %10057 = vmatpush.bf16.msra.mxu0 %v9661
    %10058 = vmatpush.bf16.msra.mxu0 %v9657
    %10059 = vmatpush.bf16.msra.mxu0 %v9653
    %10060 = vmatpush.bf16.msra.mxu0 %v9649
    %10061 = vmatpush.bf16.msra.mxu0 %v9645
    %10062 = vmatpush.bf16.msra.mxu0 %v9641
    %10063 = vmatpush.bf16.msra.mxu0 %v9637
    %10064 = vmatpush.bf16.msra.mxu0 %v9633
    %10065 = vmatmul.bf16.gmra.mxu0 %v2691
    %v10066 = vpop.f32.mrf.mxu0
    %v10067 = vadd.f32 %v10054, %v10066
    %v10068 = vpop.f32.mrf.mxu0
    %10069 = vdwg.mxu0
    %10070 = vmatpush.bf16.msra.mxu0 %v9693
    %10071 = vmatpush.bf16.msra.mxu0 %v9689
    %10072 = vmatpush.bf16.msra.mxu0 %v9685
    %10073 = vmatpush.bf16.msra.mxu0 %v9681
    %10074 = vmatpush.bf16.msra.mxu0 %v9677
    %10075 = vmatpush.bf16.msra.mxu0 %v9673
    %10076 = vmatpush.bf16.msra.mxu0 %v9669
    %10077 = vmatpush.bf16.msra.mxu0 %v9665
    %10078 = vmatmul.bf16.gmra.mxu0 %v2692
    %v10079 = vpop.f32.mrf.mxu0
    %v10080 = vadd.f32 %v10067, %v10079
    %v10081 = vpop.f32.mrf.mxu0
    %10082 = vdwg.mxu0
    %10083 = vmatpush.bf16.msra.mxu0 %v9725
    %10084 = vmatpush.bf16.msra.mxu0 %v9721
    %10085 = vmatpush.bf16.msra.mxu0 %v9717
    %10086 = vmatpush.bf16.msra.mxu0 %v9713
    %10087 = vmatpush.bf16.msra.mxu0 %v9709
    %10088 = vmatpush.bf16.msra.mxu0 %v9705
    %10089 = vmatpush.bf16.msra.mxu0 %v9701
    %10090 = vmatpush.bf16.msra.mxu0 %v9697
    %10091 = vmatmul.bf16.gmra.mxu0 %v2693
    %v10092 = vpop.f32.mrf.mxu0
    %v10093 = vadd.f32 %v10080, %v10092
    %v10094 = vpop.f32.mrf.mxu0
    %10095 = vdwg.mxu0
    %10096 = vmatpush.bf16.msra.mxu0 %v9757
    %10097 = vmatpush.bf16.msra.mxu0 %v9753
    %10098 = vmatpush.bf16.msra.mxu0 %v9749
    %10099 = vmatpush.bf16.msra.mxu0 %v9745
    %10100 = vmatpush.bf16.msra.mxu0 %v9741
    %10101 = vmatpush.bf16.msra.mxu0 %v9737
    %10102 = vmatpush.bf16.msra.mxu0 %v9733
    %10103 = vmatpush.bf16.msra.mxu0 %v9729
    %10104 = vmatmul.bf16.gmra.mxu0 %v2694
    %v10105 = vpop.f32.mrf.mxu0
    %v10106 = vadd.f32 %v10093, %v10105
    %v10107 = vpop.f32.mrf.mxu0
    %10108 = vdwg.mxu0
    %10109 = vmatpush.bf16.msra.mxu0 %v9789
    %10110 = vmatpush.bf16.msra.mxu0 %v9785
    %10111 = vmatpush.bf16.msra.mxu0 %v9781
    %10112 = vmatpush.bf16.msra.mxu0 %v9777
    %10113 = vmatpush.bf16.msra.mxu0 %v9773
    %10114 = vmatpush.bf16.msra.mxu0 %v9769
    %10115 = vmatpush.bf16.msra.mxu0 %v9765
    %10116 = vmatpush.bf16.msra.mxu0 %v9761
    %10117 = vmatmul.bf16.gmra.mxu0 %v2695
    %v10118 = vpop.f32.mrf.mxu0
    %v10119 = vadd.f32 %v10106, %v10118
    %v10120 = vpop.f32.mrf.mxu0
    %10121 = vdwg.mxu0
    %10122 = vmatpush.bf16.msra.mxu0 %v9821
    %10123 = vmatpush.bf16.msra.mxu0 %v9817
    %10124 = vmatpush.bf16.msra.mxu0 %v9813
    %10125 = vmatpush.bf16.msra.mxu0 %v9809
    %10126 = vmatpush.bf16.msra.mxu0 %v9805
    %10127 = vmatpush.bf16.msra.mxu0 %v9801
    %10128 = vmatpush.bf16.msra.mxu0 %v9797
    %10129 = vmatpush.bf16.msra.mxu0 %v9793
    %10130 = vmatmul.bf16.gmra.mxu0 %v2696
    %v10131 = vpop.f32.mrf.mxu0
    %v10132 = vadd.f32 %v10119, %v10131
    %v10133 = vpop.f32.mrf.mxu0
    %10134 = vdwg.mxu0
    %10135 = vmatpush.bf16.msra.mxu0 %v9598
    %10136 = vmatpush.bf16.msra.mxu0 %v9594
    %10137 = vmatpush.bf16.msra.mxu0 %v9590
    %10138 = vmatpush.bf16.msra.mxu0 %v9586
    %10139 = vmatpush.bf16.msra.mxu0 %v9582
    %10140 = vmatpush.bf16.msra.mxu0 %v9578
    %10141 = vmatpush.bf16.msra.mxu0 %v9574
    %10142 = vmatpush.bf16.msra.mxu0 %v9570
    %10143 = vmatmul.bf16.gmra.mxu0 %v2689
    %v10144 = vpop.f32.mrf.mxu0
    %v10145 = vadd.f32 0.0, %v10144
    %v10146 = vpop.f32.mrf.mxu0
    %10147 = vdwg.mxu0
    %10148 = vmatpush.bf16.msra.mxu0 %v9630
    %10149 = vmatpush.bf16.msra.mxu0 %v9626
    %10150 = vmatpush.bf16.msra.mxu0 %v9622
    %10151 = vmatpush.bf16.msra.mxu0 %v9618
    %10152 = vmatpush.bf16.msra.mxu0 %v9614
    %10153 = vmatpush.bf16.msra.mxu0 %v9610
    %10154 = vmatpush.bf16.msra.mxu0 %v9606
    %10155 = vmatpush.bf16.msra.mxu0 %v9602
    %10156 = vmatmul.bf16.gmra.mxu0 %v2690
    %v10157 = vpop.f32.mrf.mxu0
    %v10158 = vadd.f32 %v10145, %v10157
    %v10159 = vpop.f32.mrf.mxu0
    %10160 = vdwg.mxu0
    %10161 = vmatpush.bf16.msra.mxu0 %v9662
    %10162 = vmatpush.bf16.msra.mxu0 %v9658
    %10163 = vmatpush.bf16.msra.mxu0 %v9654
    %10164 = vmatpush.bf16.msra.mxu0 %v9650
    %10165 = vmatpush.bf16.msra.mxu0 %v9646
    %10166 = vmatpush.bf16.msra.mxu0 %v9642
    %10167 = vmatpush.bf16.msra.mxu0 %v9638
    %10168 = vmatpush.bf16.msra.mxu0 %v9634
    %10169 = vmatmul.bf16.gmra.mxu0 %v2691
    %v10170 = vpop.f32.mrf.mxu0
    %v10171 = vadd.f32 %v10158, %v10170
    %v10172 = vpop.f32.mrf.mxu0
    %10173 = vdwg.mxu0
    %10174 = vmatpush.bf16.msra.mxu0 %v9694
    %10175 = vmatpush.bf16.msra.mxu0 %v9690
    %10176 = vmatpush.bf16.msra.mxu0 %v9686
    %10177 = vmatpush.bf16.msra.mxu0 %v9682
    %10178 = vmatpush.bf16.msra.mxu0 %v9678
    %10179 = vmatpush.bf16.msra.mxu0 %v9674
    %10180 = vmatpush.bf16.msra.mxu0 %v9670
    %10181 = vmatpush.bf16.msra.mxu0 %v9666
    %10182 = vmatmul.bf16.gmra.mxu0 %v2692
    %v10183 = vpop.f32.mrf.mxu0
    %v10184 = vadd.f32 %v10171, %v10183
    %v10185 = vpop.f32.mrf.mxu0
    %10186 = vdwg.mxu0
    %10187 = vmatpush.bf16.msra.mxu0 %v9726
    %10188 = vmatpush.bf16.msra.mxu0 %v9722
    %10189 = vmatpush.bf16.msra.mxu0 %v9718
    %10190 = vmatpush.bf16.msra.mxu0 %v9714
    %10191 = vmatpush.bf16.msra.mxu0 %v9710
    %10192 = vmatpush.bf16.msra.mxu0 %v9706
    %10193 = vmatpush.bf16.msra.mxu0 %v9702
    %10194 = vmatpush.bf16.msra.mxu0 %v9698
    %10195 = vmatmul.bf16.gmra.mxu0 %v2693
    %v10196 = vpop.f32.mrf.mxu0
    %v10197 = vadd.f32 %v10184, %v10196
    %v10198 = vpop.f32.mrf.mxu0
    %10199 = vdwg.mxu0
    %10200 = vmatpush.bf16.msra.mxu0 %v9758
    %10201 = vmatpush.bf16.msra.mxu0 %v9754
    %10202 = vmatpush.bf16.msra.mxu0 %v9750
    %10203 = vmatpush.bf16.msra.mxu0 %v9746
    %10204 = vmatpush.bf16.msra.mxu0 %v9742
    %10205 = vmatpush.bf16.msra.mxu0 %v9738
    %10206 = vmatpush.bf16.msra.mxu0 %v9734
    %10207 = vmatpush.bf16.msra.mxu0 %v9730
    %10208 = vmatmul.bf16.gmra.mxu0 %v2694
    %v10209 = vpop.f32.mrf.mxu0
    %v10210 = vadd.f32 %v10197, %v10209
    %v10211 = vpop.f32.mrf.mxu0
    %10212 = vdwg.mxu0
    %10213 = vmatpush.bf16.msra.mxu0 %v9790
    %10214 = vmatpush.bf16.msra.mxu0 %v9786
    %10215 = vmatpush.bf16.msra.mxu0 %v9782
    %10216 = vmatpush.bf16.msra.mxu0 %v9778
    %10217 = vmatpush.bf16.msra.mxu0 %v9774
    %10218 = vmatpush.bf16.msra.mxu0 %v9770
    %10219 = vmatpush.bf16.msra.mxu0 %v9766
    %10220 = vmatpush.bf16.msra.mxu0 %v9762
    %10221 = vmatmul.bf16.gmra.mxu0 %v2695
    %v10222 = vpop.f32.mrf.mxu0
    %v10223 = vadd.f32 %v10210, %v10222
    %v10224 = vpop.f32.mrf.mxu0
    %10225 = vdwg.mxu0
    %10226 = vmatpush.bf16.msra.mxu0 %v9822
    %10227 = vmatpush.bf16.msra.mxu0 %v9818
    %10228 = vmatpush.bf16.msra.mxu0 %v9814
    %10229 = vmatpush.bf16.msra.mxu0 %v9810
    %10230 = vmatpush.bf16.msra.mxu0 %v9806
    %10231 = vmatpush.bf16.msra.mxu0 %v9802
    %10232 = vmatpush.bf16.msra.mxu0 %v9798
    %10233 = vmatpush.bf16.msra.mxu0 %v9794
    %10234 = vmatmul.bf16.gmra.mxu0 %v2696
    %v10235 = vpop.f32.mrf.mxu0
    %v10236 = vadd.f32 %v10223, %v10235
    %v10237 = vpop.f32.mrf.mxu0
    %10238 = vdwg.mxu0
    %v10239 = vperm.slane %v2698, 4
    %v10240 = vperm.slane %v2698, 5
    %v10241 = vperm.slane %v2698, 6
    %v10242 = vperm.slane %v2698, 7
    %v10247 = vmul.f32 %v9924, %v10239
    %v10248 = vmul.f32 %v10028, %v10240
    %v10249 = vmul.f32 %v10132, %v10241
    %v10250 = vmul.f32 %v10236, %v10242
    %v10251 = vperm.slane %v2700, 4
    %v10252 = vperm.slane %v2700, 5
    %v10253 = vperm.slane %v2700, 6
    %v10254 = vperm.slane %v2700, 7
    %v10259 = vadd.f32 %v10247, %v10251
    %v10260 = vadd.f32 %v10248, %v10252
    %v10261 = vadd.f32 %v10249, %v10253
    %v10262 = vadd.f32 %v10250, %v10254
    %v10263 = vxor.u32 %v10259, 2147483648
    %v10264 = vxor.u32 %v10260, 2147483648
    %v10265 = vxor.u32 %v10261, 2147483648
    %v10266 = vxor.u32 %v10262, 2147483648
    %v10267 = vmul.f32 %v10263, 1.442695
    %v10268 = vpow.pop %v10267
    %v10269 = vmul.f32 %v10264, 1.442695
    %v10270 = vpow.pop %v10269
    %v10271 = vmul.f32 %v10265, 1.442695
    %v10272 = vpow.pop %v10271
    %v10273 = vmul.f32 %v10266, 1.442695
    %v10274 = vpow.pop %v10273
    %v10275 = vadd.f32 %v10268, 1.0
    %v10276 = vadd.f32 %v10270, 1.0
    %v10277 = vadd.f32 %v10272, 1.0
    %v10278 = vadd.f32 %v10274, 1.0
    %v10279 = vrcp.pop %v10275
    %v10280 = vmul.f32 %v10275, %v10279
    %v10281 = vsub.f32 1.0, %v10280
    %v10282 = vmul.f32 %v10279, %v10281
    %v10283 = vadd.f32 %v10279, %v10282
    %vm10284 = vweird.f32 %v10275
    %vm10285 = vweird.f32 %v10279
    %vm10286 = vmor %vm10284, %vm10285
    %v10287 = vsel %vm10286, %v10279, %v10283
    %v10288 = vand.u32 2147483647, %v10275
    %vm10289 = vcmp.eq.f32.partialorder %v10288, 8.507059e+37
    %v10290 = vand.u32 %v10275, 2147483648
    %v10291 = vor.u32 1.1754944e-38, %v10290
    %v10292 = vsel %vm10289, %v10291, %v10287
    %v10293 = vmul.f32 1.0, %v10292
    %v10294 = vrcp.pop %v10276
    %v10295 = vmul.f32 %v10276, %v10294
    %v10296 = vsub.f32 1.0, %v10295
    %v10297 = vmul.f32 %v10294, %v10296
    %v10298 = vadd.f32 %v10294, %v10297
    %vm10299 = vweird.f32 %v10276
    %vm10300 = vweird.f32 %v10294
    %vm10301 = vmor %vm10299, %vm10300
    %v10302 = vsel %vm10301, %v10294, %v10298
    %v10303 = vand.u32 2147483647, %v10276
    %vm10304 = vcmp.eq.f32.partialorder %v10303, 8.507059e+37
    %v10305 = vand.u32 %v10276, 2147483648
    %v10306 = vor.u32 1.1754944e-38, %v10305
    %v10307 = vsel %vm10304, %v10306, %v10302
    %v10308 = vmul.f32 1.0, %v10307
    %v10309 = vrcp.pop %v10277
    %v10310 = vmul.f32 %v10277, %v10309
    %v10311 = vsub.f32 1.0, %v10310
    %v10312 = vmul.f32 %v10309, %v10311
    %v10313 = vadd.f32 %v10309, %v10312
    %vm10314 = vweird.f32 %v10277
    %vm10315 = vweird.f32 %v10309
    %vm10316 = vmor %vm10314, %vm10315
    %v10317 = vsel %vm10316, %v10309, %v10313
    %v10318 = vand.u32 2147483647, %v10277
    %vm10319 = vcmp.eq.f32.partialorder %v10318, 8.507059e+37
    %v10320 = vand.u32 %v10277, 2147483648
    %v10321 = vor.u32 1.1754944e-38, %v10320
    %v10322 = vsel %vm10319, %v10321, %v10317
    %v10323 = vmul.f32 1.0, %v10322
    %v10324 = vrcp.pop %v10278
    %v10325 = vmul.f32 %v10278, %v10324
    %v10326 = vsub.f32 1.0, %v10325
    %v10327 = vmul.f32 %v10324, %v10326
    %v10328 = vadd.f32 %v10324, %v10327
    %vm10329 = vweird.f32 %v10278
    %vm10330 = vweird.f32 %v10324
    %vm10331 = vmor %vm10329, %vm10330
    %v10332 = vsel %vm10331, %v10324, %v10328
    %v10333 = vand.u32 2147483647, %v10278
    %vm10334 = vcmp.eq.f32.partialorder %v10333, 8.507059e+37
    %v10335 = vand.u32 %v10278, 2147483648
    %v10336 = vor.u32 1.1754944e-38, %v10335
    %v10337 = vsel %vm10334, %v10336, %v10332
    %v10338 = vmul.f32 1.0, %v10337
    %v10339 = vld [vmem:[#allocation10] sm:$0xf]
    %v10341 = vperm.slane %v10339, 0
    %v10342 = vperm.slane %v10339, 1
    %v10343 = vperm.slane %v10339, 2
    %v10344 = vperm.slane %v10339, 3
    %v10349 = vmul.f32 %v6511, %v10341
    %v10350 = vmul.f32 %v6526, %v10342
    %v10351 = vmul.f32 %v6541, %v10343
    %v10352 = vmul.f32 %v6556, %v10344
    %v10353 = vmul.f32 %v4585, %v8409
    %v10354 = vmul.f32 %v4600, %v8410
    %v10355 = vmul.f32 %v4615, %v8411
    %v10356 = vmul.f32 %v4630, %v8412
    %v10357 = vadd.f32 %v10349, %v10353
    %v10358 = vadd.f32 %v10350, %v10354
    %v10359 = vadd.f32 %v10351, %v10355
    %v10360 = vadd.f32 %v10352, %v10356
    %v10361 = vtanh.pop %v10357
    %v10362 = vtanh.pop %v10358
    %v10363 = vtanh.pop %v10359
    %v10364 = vtanh.pop %v10360
    %v10365 = vmul.f32 %v10293, %v10361
    %v10366 = vmul.f32 %v10308, %v10362
    %v10367 = vmul.f32 %v10323, %v10363
    %v10368 = vmul.f32 %v10338, %v10364
    %v10373 = vrot.slane %v10366, 7
    %v10374 = vrot.slane %v10367, 6
    %v10375 = vrot.slane %v10368, 5
    %v10376 = vsel %vm326, %v10365, %v10373
    %v10377 = vsel %vm2669, %v10374, %v10375
    %v10378 = vsel %vm2671, %v10376, %v10377
    %10380 = vst.msk [vmem:[#allocation25] sm:$0xf] %vm2677, %v10378
    %v10385 = vrot.slane %v10358, 7
    %v10386 = vrot.slane %v10359, 6
    %v10387 = vrot.slane %v10360, 5
    %v10388 = vsel %vm326, %v10357, %v10385
    %v10389 = vsel %vm2669, %v10386, %v10387
    %v10390 = vsel %vm2671, %v10388, %v10389
    %10392 = vst.msk [vmem:[#allocation27] sm:$0xf] %vm2677, %v10390
    %v10393 = vpack.c.bf16 %v10365, %v10365
    %v10394 = vpack.c.bf16 %v10366, %v10366
    %v10395 = vpack.c.bf16 %v10367, %v10367
    %v10396 = vpack.c.bf16 %v10368, %v10368
    %v10397 = vld [vmem:[#allocation19] sm:$0xff]
    %v10398 = vld [vmem:[#allocation19 + $0x8] sm:$0xff]
    %v10399 = vld [vmem:[#allocation19 + $0x10] sm:$0xff]
    %v10400 = vld [vmem:[#allocation19 + $0x18] sm:$0xff]
    %v10401 = vld [vmem:[#allocation19 + $0x20] sm:$0xff]
    %v10402 = vld [vmem:[#allocation19 + $0x28] sm:$0xff]
    %v10403 = vld [vmem:[#allocation19 + $0x30] sm:$0xff]
    %v10404 = vld [vmem:[#allocation19 + $0x38] sm:$0xff]
    %v10405 = vld [vmem:[#allocation19 + $0x40] sm:$0xff]
    %v10406 = vld [vmem:[#allocation19 + $0x48] sm:$0xff]
    %v10407 = vld [vmem:[#allocation19 + $0x50] sm:$0xff]
    %v10408 = vld [vmem:[#allocation19 + $0x58] sm:$0xff]
    %v10409 = vld [vmem:[#allocation19 + $0x60] sm:$0xff]
    %v10410 = vld [vmem:[#allocation19 + $0x68] sm:$0xff]
    %v10411 = vld [vmem:[#allocation19 + $0x70] sm:$0xff]
    %v10412 = vld [vmem:[#allocation19 + $0x78] sm:$0xff]
    %v10413 = vunpack.c.0.s8 %v10397
    %v10414 = vunpack.c.1.s8 %v10397
    %v10415 = vunpack.c.2.s8 %v10397
    %v10416 = vunpack.c.3.s8 %v10397
    %v10417 = vunpack.c.0.s8 %v10398
    %v10418 = vunpack.c.1.s8 %v10398
    %v10419 = vunpack.c.2.s8 %v10398
    %v10420 = vunpack.c.3.s8 %v10398
    %v10421 = vunpack.c.0.s8 %v10399
    %v10422 = vunpack.c.1.s8 %v10399
    %v10423 = vunpack.c.2.s8 %v10399
    %v10424 = vunpack.c.3.s8 %v10399
    %v10425 = vunpack.c.0.s8 %v10400
    %v10426 = vunpack.c.1.s8 %v10400
    %v10427 = vunpack.c.2.s8 %v10400
    %v10428 = vunpack.c.3.s8 %v10400
    %v10429 = vunpack.c.0.s8 %v10401
    %v10430 = vunpack.c.1.s8 %v10401
    %v10431 = vunpack.c.2.s8 %v10401
    %v10432 = vunpack.c.3.s8 %v10401
    %v10433 = vunpack.c.0.s8 %v10402
    %v10434 = vunpack.c.1.s8 %v10402
    %v10435 = vunpack.c.2.s8 %v10402
    %v10436 = vunpack.c.3.s8 %v10402
    %v10437 = vunpack.c.0.s8 %v10403
    %v10438 = vunpack.c.1.s8 %v10403
    %v10439 = vunpack.c.2.s8 %v10403
    %v10440 = vunpack.c.3.s8 %v10403
    %v10441 = vunpack.c.0.s8 %v10404
    %v10442 = vunpack.c.1.s8 %v10404
    %v10443 = vunpack.c.2.s8 %v10404
    %v10444 = vunpack.c.3.s8 %v10404
    %v10445 = vunpack.c.0.s8 %v10405
    %v10446 = vunpack.c.1.s8 %v10405
    %v10447 = vunpack.c.2.s8 %v10405
    %v10448 = vunpack.c.3.s8 %v10405
    %v10449 = vunpack.c.0.s8 %v10406
    %v10450 = vunpack.c.1.s8 %v10406
    %v10451 = vunpack.c.2.s8 %v10406
    %v10452 = vunpack.c.3.s8 %v10406
    %v10453 = vunpack.c.0.s8 %v10407
    %v10454 = vunpack.c.1.s8 %v10407
    %v10455 = vunpack.c.2.s8 %v10407
    %v10456 = vunpack.c.3.s8 %v10407
    %v10457 = vunpack.c.0.s8 %v10408
    %v10458 = vunpack.c.1.s8 %v10408
    %v10459 = vunpack.c.2.s8 %v10408
    %v10460 = vunpack.c.3.s8 %v10408
    %v10461 = vunpack.c.0.s8 %v10409
    %v10462 = vunpack.c.1.s8 %v10409
    %v10463 = vunpack.c.2.s8 %v10409
    %v10464 = vunpack.c.3.s8 %v10409
    %v10465 = vunpack.c.0.s8 %v10410
    %v10466 = vunpack.c.1.s8 %v10410
    %v10467 = vunpack.c.2.s8 %v10410
    %v10468 = vunpack.c.3.s8 %v10410
    %v10469 = vunpack.c.0.s8 %v10411
    %v10470 = vunpack.c.1.s8 %v10411
    %v10471 = vunpack.c.2.s8 %v10411
    %v10472 = vunpack.c.3.s8 %v10411
    %v10473 = vunpack.c.0.s8 %v10412
    %v10474 = vunpack.c.1.s8 %v10412
    %v10475 = vunpack.c.2.s8 %v10412
    %v10476 = vunpack.c.3.s8 %v10412
    %v10477 = vcvt.s32.f32 %v10413
    %v10478 = vcvt.s32.f32 %v10414
    %v10479 = vcvt.s32.f32 %v10415
    %v10480 = vcvt.s32.f32 %v10416
    %v10481 = vcvt.s32.f32 %v10417
    %v10482 = vcvt.s32.f32 %v10418
    %v10483 = vcvt.s32.f32 %v10419
    %v10484 = vcvt.s32.f32 %v10420
    %v10485 = vcvt.s32.f32 %v10421
    %v10486 = vcvt.s32.f32 %v10422
    %v10487 = vcvt.s32.f32 %v10423
    %v10488 = vcvt.s32.f32 %v10424
    %v10489 = vcvt.s32.f32 %v10425
    %v10490 = vcvt.s32.f32 %v10426
    %v10491 = vcvt.s32.f32 %v10427
    %v10492 = vcvt.s32.f32 %v10428
    %v10493 = vcvt.s32.f32 %v10429
    %v10494 = vcvt.s32.f32 %v10430
    %v10495 = vcvt.s32.f32 %v10431
    %v10496 = vcvt.s32.f32 %v10432
    %v10497 = vcvt.s32.f32 %v10433
    %v10498 = vcvt.s32.f32 %v10434
    %v10499 = vcvt.s32.f32 %v10435
    %v10500 = vcvt.s32.f32 %v10436
    %v10501 = vcvt.s32.f32 %v10437
    %v10502 = vcvt.s32.f32 %v10438
    %v10503 = vcvt.s32.f32 %v10439
    %v10504 = vcvt.s32.f32 %v10440
    %v10505 = vcvt.s32.f32 %v10441
    %v10506 = vcvt.s32.f32 %v10442
    %v10507 = vcvt.s32.f32 %v10443
    %v10508 = vcvt.s32.f32 %v10444
    %v10509 = vcvt.s32.f32 %v10445
    %v10510 = vcvt.s32.f32 %v10446
    %v10511 = vcvt.s32.f32 %v10447
    %v10512 = vcvt.s32.f32 %v10448
    %v10513 = vcvt.s32.f32 %v10449
    %v10514 = vcvt.s32.f32 %v10450
    %v10515 = vcvt.s32.f32 %v10451
    %v10516 = vcvt.s32.f32 %v10452
    %v10517 = vcvt.s32.f32 %v10453
    %v10518 = vcvt.s32.f32 %v10454
    %v10519 = vcvt.s32.f32 %v10455
    %v10520 = vcvt.s32.f32 %v10456
    %v10521 = vcvt.s32.f32 %v10457
    %v10522 = vcvt.s32.f32 %v10458
    %v10523 = vcvt.s32.f32 %v10459
    %v10524 = vcvt.s32.f32 %v10460
    %v10525 = vcvt.s32.f32 %v10461
    %v10526 = vcvt.s32.f32 %v10462
    %v10527 = vcvt.s32.f32 %v10463
    %v10528 = vcvt.s32.f32 %v10464
    %v10529 = vcvt.s32.f32 %v10465
    %v10530 = vcvt.s32.f32 %v10466
    %v10531 = vcvt.s32.f32 %v10467
    %v10532 = vcvt.s32.f32 %v10468
    %v10533 = vcvt.s32.f32 %v10469
    %v10534 = vcvt.s32.f32 %v10470
    %v10535 = vcvt.s32.f32 %v10471
    %v10536 = vcvt.s32.f32 %v10472
    %v10537 = vcvt.s32.f32 %v10473
    %v10538 = vcvt.s32.f32 %v10474
    %v10539 = vcvt.s32.f32 %v10475
    %v10540 = vcvt.s32.f32 %v10476
    %v10541 = vpack.c.bf16 %v10478, %v10477
    %v10542 = vpack.c.bf16 %v10480, %v10479
    %v10543 = vpack.c.bf16 %v10482, %v10481
    %v10544 = vpack.c.bf16 %v10484, %v10483
    %v10545 = vpack.c.bf16 %v10486, %v10485
    %v10546 = vpack.c.bf16 %v10488, %v10487
    %v10547 = vpack.c.bf16 %v10490, %v10489
    %v10548 = vpack.c.bf16 %v10492, %v10491
    %v10549 = vpack.c.bf16 %v10494, %v10493
    %v10550 = vpack.c.bf16 %v10496, %v10495
    %v10551 = vpack.c.bf16 %v10498, %v10497
    %v10552 = vpack.c.bf16 %v10500, %v10499
    %v10553 = vpack.c.bf16 %v10502, %v10501
    %v10554 = vpack.c.bf16 %v10504, %v10503
    %v10555 = vpack.c.bf16 %v10506, %v10505
    %v10556 = vpack.c.bf16 %v10508, %v10507
    %v10557 = vpack.c.bf16 %v10510, %v10509
    %v10558 = vpack.c.bf16 %v10512, %v10511
    %v10559 = vpack.c.bf16 %v10514, %v10513
    %v10560 = vpack.c.bf16 %v10516, %v10515
    %v10561 = vpack.c.bf16 %v10518, %v10517
    %v10562 = vpack.c.bf16 %v10520, %v10519
    %v10563 = vpack.c.bf16 %v10522, %v10521
    %v10564 = vpack.c.bf16 %v10524, %v10523
    %v10565 = vpack.c.bf16 %v10526, %v10525
    %v10566 = vpack.c.bf16 %v10528, %v10527
    %v10567 = vpack.c.bf16 %v10530, %v10529
    %v10568 = vpack.c.bf16 %v10532, %v10531
    %v10569 = vpack.c.bf16 %v10534, %v10533
    %v10570 = vpack.c.bf16 %v10536, %v10535
    %v10571 = vpack.c.bf16 %v10538, %v10537
    %v10572 = vpack.c.bf16 %v10540, %v10539
    %10573 = vmatpush.bf16.msra.mxu0 %v10548
    %10574 = vmatpush.bf16.msra.mxu0 %v10547
    %10575 = vmatpush.bf16.msra.mxu0 %v10546
    %10576 = vmatpush.bf16.msra.mxu0 %v10545
    %10577 = vmatpush.bf16.msra.mxu0 %v10544
    %10578 = vmatpush.bf16.msra.mxu0 %v10543
    %10579 = vmatpush.bf16.msra.mxu0 %v10542
    %10580 = vmatpush.bf16.msra.mxu0 %v10541
    %10581 = vmatmul.bf16.gmra.mxu0 %v10393
    %v10582 = vpop.f32.mrf.mxu0
    %v10583 = vadd.f32 0.0, %v10582
    %v10584 = vpop.f32.mrf.mxu0
    %10585 = vdwg.mxu0
    %10586 = vmatpush.bf16.msra.mxu0 %v10556
    %10587 = vmatpush.bf16.msra.mxu0 %v10555
    %10588 = vmatpush.bf16.msra.mxu0 %v10554
    %10589 = vmatpush.bf16.msra.mxu0 %v10553
    %10590 = vmatpush.bf16.msra.mxu0 %v10552
    %10591 = vmatpush.bf16.msra.mxu0 %v10551
    %10592 = vmatpush.bf16.msra.mxu0 %v10550
    %10593 = vmatpush.bf16.msra.mxu0 %v10549
    %10594 = vmatmul.bf16.gmra.mxu0 %v10394
    %v10595 = vpop.f32.mrf.mxu0
    %v10596 = vadd.f32 %v10583, %v10595
    %v10597 = vpop.f32.mrf.mxu0
    %10598 = vdwg.mxu0
    %10599 = vmatpush.bf16.msra.mxu0 %v10564
    %10600 = vmatpush.bf16.msra.mxu0 %v10563
    %10601 = vmatpush.bf16.msra.mxu0 %v10562
    %10602 = vmatpush.bf16.msra.mxu0 %v10561
    %10603 = vmatpush.bf16.msra.mxu0 %v10560
    %10604 = vmatpush.bf16.msra.mxu0 %v10559
    %10605 = vmatpush.bf16.msra.mxu0 %v10558
    %10606 = vmatpush.bf16.msra.mxu0 %v10557
    %10607 = vmatmul.bf16.gmra.mxu0 %v10395
    %v10608 = vpop.f32.mrf.mxu0
    %v10609 = vadd.f32 %v10596, %v10608
    %v10610 = vpop.f32.mrf.mxu0
    %10611 = vdwg.mxu0
    %10612 = vmatpush.bf16.msra.mxu0 %v10572
    %10613 = vmatpush.bf16.msra.mxu0 %v10571
    %10614 = vmatpush.bf16.msra.mxu0 %v10570
    %10615 = vmatpush.bf16.msra.mxu0 %v10569
    %10616 = vmatpush.bf16.msra.mxu0 %v10568
    %10617 = vmatpush.bf16.msra.mxu0 %v10567
    %10618 = vmatpush.bf16.msra.mxu0 %v10566
    %10619 = vmatpush.bf16.msra.mxu0 %v10565
    %10620 = vmatmul.bf16.gmra.mxu0 %v10396
    %v10621 = vpop.f32.mrf.mxu0
    %v10622 = vadd.f32 %v10609, %v10621
    %v10623 = vpop.f32.mrf.mxu0
    %10624 = vdwg.mxu0
    %v10625 = vld [vmem:[#allocation21] sm:$0x1]
    %v10626 = vmul.f32 %v10622, %v10625
    %v10627 = vld [vmem:[#allocation22] sm:$0x1]
    %v10628 = vadd.f32 %v10626, %v10627
    %v10629 = vlaneseq
    %v10630 = vand.u32 %v10629, 127
    %vm10631 = vcmp.lt.s32.totalorder %v10630, 49
    %v10632 = vsel %vm10631, %v10628, -1e+30
    %v10633 = vsel %vm326, %v10632, -inf
    %10634 = vmax.xlane.f32.xlu0 %v10633
    %v10635 = vpop.xlane.xlu0 %10634
    %v10636 = vsub.f32 %v10632, %v10635
    %v10637 = vmul.f32 %v10636, 1.442695
    %v10638 = vpow.pop %v10637
    %v10639 = vsel %vm326, %v10638, 0.0
    %10640 = vadd.xlane.f32.xlu0 %v10639
    %v10641 = vpop.xlane.xlu0 %10640
    %v10642 = vrcp.pop %v10641
    %v10643 = vmul.f32 %v10641, %v10642
    %v10644 = vsub.f32 1.0, %v10643
    %v10645 = vmul.f32 %v10642, %v10644
    %v10646 = vadd.f32 %v10642, %v10645
    %vm10647 = vweird.f32 %v10641
    %vm10648 = vweird.f32 %v10642
    %vm10649 = vmor %vm10647, %vm10648
    %v10650 = vsel %vm10649, %v10642, %v10646
    %v10651 = vand.u32 2147483647, %v10641
    %vm10652 = vcmp.eq.f32.partialorder %v10651, 8.507059e+37
    %v10653 = vand.u32 %v10641, 2147483648
    %v10654 = vor.u32 1.1754944e-38, %v10653
    %v10655 = vsel %vm10652, %v10654, %v10650
    %v10656 = vmul.f32 %v10638, %v10655
    %v10657 = vlog2.pop %v10641
    %v10658 = vmul.f32 %v10657, 0.6931472
    %v10659 = vsub.f32 %v10636, %v10658
    %v10660 = vmul.f32 %v10656, %v10659
    %v10661 = vsel %vm10631, %v10660, 0.0
    %v10662 = vsel %vm326, %v10661, 0.0
    %10663 = vadd.xlane.f32.xlu0 %v10662
    %v10664 = vpop.xlane.xlu0 %10663
    %v10665 = vsub.f32 0.0, %v10664
    %v10666 = vsel %vm10631, %v10656, 0.0
    %vm10667 = vcmp.eq.s32.totalorder %v10630, 49
    %v10668 = vsel %vm10667, %v10665, %v10666
    %10669 = vst [vmem:[#allocation28] sm:$0x1] %v10668
    %v10670 = vsel %vm10631, %v10659, 0.0
    %10671 = vst [vmem:[#allocation30] sm:$0x1] %v10670
    // Predicated region
    $region114: #{tpu_custom_call.1} parent=1 // pred_check
      _
    $region115: #{tpu_custom_call.1} parent=1 // pred_check_branch
      %10673 = sbr.rel (0) target = $region117
    $region116: #{tpu_custom_call.1} parent=1 // pred_region
      %10675 = vsyncadd [#allocation6], 0
      %s10677 = sshll.u32 [#allocation24], 4
      %s10678 = int_to_ptr.vmem [resolvable:$true] %s10677
      %s10679 = sshll.u32 %s13, 4
      %s10680 = int_to_ptr.hbm [resolvable:$true] %s10679
      %10682 = dma.vmem_to_hbm [thread:$0]  %s10678, 64, %s10680, [#allocation6]
    $region117: #{tpu_custom_call.1} parent=1 // pred_fallthru
      _
    // Predicated region
    $region118: #{tpu_custom_call.1} parent=1 // pred_check
      _
    $region119: #{tpu_custom_call.1} parent=1 // pred_check_branch
      %10684 = sbr.rel (0) target = $region121
    $region120: #{tpu_custom_call.1} parent=1 // pred_region
      %10686 = vsyncadd [#allocation26], 0
      %s10688 = sshll.u32 [#allocation25], 4
      %s10689 = int_to_ptr.vmem [resolvable:$true] %s10688
      %s10690 = sshll.u32 %s14, 4
      %s10691 = int_to_ptr.hbm [resolvable:$true] %s10690
      %10693 = dma.vmem_to_hbm [thread:$0]  %s10689, 64, %s10691, [#allocation26]
    $region121: #{tpu_custom_call.1} parent=1 // pred_fallthru
      _
    // Predicated region
    $region122: #{tpu_custom_call.1} parent=1 // pred_check
      _
    $region123: #{tpu_custom_call.1} parent=1 // pred_check_branch
      %10695 = sbr.rel (0) target = $region125
    $region124: #{tpu_custom_call.1} parent=1 // pred_region
      %10697 = vsyncadd [#allocation26], 0
      %s10699 = sshll.u32 [#allocation27], 4
      %s10700 = int_to_ptr.vmem [resolvable:$true] %s10699
      %s10701 = sshll.u32 %s15, 4
      %s10702 = int_to_ptr.hbm [resolvable:$true] %s10701
      %10704 = dma.vmem_to_hbm [thread:$0]  %s10700, 64, %s10702, [#allocation26]
    $region125: #{tpu_custom_call.1} parent=1 // pred_fallthru
      _
    // Predicated region
    $region126: #{tpu_custom_call.1} parent=1 // pred_check
      _
    $region127: #{tpu_custom_call.1} parent=1 // pred_check_branch
      %10706 = sbr.rel (0) target = $region129
    $region128: #{tpu_custom_call.1} parent=1 // pred_region
      %10708 = vsyncadd [#allocation29], 0
      %s10710 = sshll.u32 [#allocation28], 4
      %s10711 = int_to_ptr.vmem [resolvable:$true] %s10710
      %s10712 = sshll.u32 %s16, 4
      %s10713 = int_to_ptr.hbm [resolvable:$true] %s10712
      %10715 = dma.vmem_to_hbm [thread:$0]  %s10711, 16, %s10713, [#allocation29]
    $region129: #{tpu_custom_call.1} parent=1 // pred_fallthru
      _
    // Predicated region
    $region130: #{tpu_custom_call.1} parent=1 // pred_check
      _
    $region131: #{tpu_custom_call.1} parent=1 // pred_check_branch
      %10717 = sbr.rel (0) target = $region133
    $region132: #{tpu_custom_call.1} parent=1 // pred_region
      %10719 = vsyncadd [#allocation29], 0
      %s10721 = sshll.u32 [#allocation30], 4
      %s10722 = int_to_ptr.vmem [resolvable:$true] %s10721
      %s10723 = sshll.u32 %s17, 4
      %s10724 = int_to_ptr.hbm [resolvable:$true] %s10723
      %10726 = dma.vmem_to_hbm [thread:$0]  %s10722, 16, %s10724, [#allocation29]
    $region133: #{tpu_custom_call.1} parent=1 // pred_fallthru
      _
    // Predicated region
    $region134: #{tpu_custom_call.1} parent=1 // pred_check
      _
    $region135: #{tpu_custom_call.1} parent=1 // pred_check_branch
      %10728 = sbr.rel (0) target = $region137
    $region136: #{tpu_custom_call.1} parent=1 // pred_region
      %10730 = dma.done [#allocation6], 64
    $region137: #{tpu_custom_call.1} parent=1 // pred_fallthru
      _
    // Predicated region
    $region138: #{tpu_custom_call.1} parent=1 // pred_check
      _
    $region139: #{tpu_custom_call.1} parent=1 // pred_check_branch
      %10732 = sbr.rel (0) target = $region141
    $region140: #{tpu_custom_call.1} parent=1 // pred_region
      %10734 = dma.done [#allocation26], 64
    $region141: #{tpu_custom_call.1} parent=1 // pred_fallthru
      _
    // Predicated region
    $region142: #{tpu_custom_call.1} parent=1 // pred_check
      _
    $region143: #{tpu_custom_call.1} parent=1 // pred_check_branch
      %10736 = sbr.rel (0) target = $region145
    $region144: #{tpu_custom_call.1} parent=1 // pred_region
      %10738 = dma.done [#allocation26], 64
    $region145: #{tpu_custom_call.1} parent=1 // pred_fallthru
      _
    // Predicated region
    $region146: #{tpu_custom_call.1} parent=1 // pred_check
      _
    $region147: #{tpu_custom_call.1} parent=1 // pred_check_branch
      %10740 = sbr.rel (0) target = $region149
    $region148: #{tpu_custom_call.1} parent=1 // pred_region
      %10742 = dma.done [#allocation29], 16
    $region149: #{tpu_custom_call.1} parent=1 // pred_fallthru
      _
    // Predicated region
    $region150: #{tpu_custom_call.1} parent=1 // pred_check
      _
    $region151: #{tpu_custom_call.1} parent=1 // pred_check_branch
      %10744 = sbr.rel (0) target = $region153
    $region152: #{tpu_custom_call.1} parent=1 // pred_region
      %10746 = dma.done [#allocation29], 16
    $region153: #{tpu_custom_call.1} parent=1 // pred_fallthru
      _
    %10747 = vsyncpa [#allocation5], 1
    %10748 = vsyncpa [#allocation8], 1
    %10749 = vsyncpa [#allocation11], 1
    %10750 = vsyncpa [#allocation14], 1
    %10751 = vsyncpa [#allocation17], 1
    %10752 = vsyncpa [#allocation20], 1
    %10753 = vsyncpa [#allocation23], 1
    %10754 = vsyncpa [#allocation6], 1
    %10755 = vsyncpa [#allocation26], 1
    %10756 = vsyncpa [#allocation29], 1
  %10757 = vsyncmov [#allocation3]
  %s10758 = vpop.sfrf %10757
  %p10759 = scmp.eq.s32.totalorder %s10758, 0
  %p10760 = pneg %p10759
  %10762 = shalt.err (%p10760)
  %s10763 = scalar_lea.sflag [#allocation3], 1
  %10764 = vsyncmov %s10763
  %s10765 = vpop.sfrf %10764
  %p10766 = scmp.eq.s32.totalorder %s10765, 0
  %p10767 = pneg %p10766
  %10769 = shalt.err (%p10767)
  %s10770 = scalar_lea.sflag [#allocation3], 2
  %10771 = vsyncmov %s10770
  %s10772 = vpop.sfrf %10771
  %p10773 = scmp.eq.s32.totalorder %s10772, 0
  %p10774 = pneg %p10773
  %10776 = shalt.err (%p10774)
  %s10777 = scalar_lea.sflag [#allocation3], 3
  %10778 = vsyncmov %s10777
  %s10779 = vpop.sfrf %10778
  %p10780 = scmp.eq.s32.totalorder %s10779, 0
  %p10781 = pneg %p10780
  %10783 = shalt.err (%p10781)

</llo_original>
